<compile_context>
chip_gen: v7x
topology: tpu7x:2x2x1
jax: 0.10.0
libtpu: 0.0.40
codegen_flags: <defaults>
</compile_context>

<pallas_src>
import functools

import jax
import jax.numpy as jnp
from jax import lax
from jax.experimental import pallas as pl
from jax.experimental.pallas import tpu as pltpu

F32 = jnp.float32
LN_EPS = 1e-5                 # torch.nn.LayerNorm default


# ---------------------------------------------------------------------------
# Fused decoder kernel: one grid step = one (batch block, layer)
# ---------------------------------------------------------------------------
def _decoder_kernel(
    tgt_ref, enc_ref, smem_ref, lmem_ref,
    a_win_ref, a_bin_ref, a_wo_ref, a_bo_ref, a_lng_ref, a_lnb_ref,
    f_w1_ref, f_b1_ref, f_w2_ref, f_b2_ref, f_lng_ref, f_lnb_ref,
    l_we_ref, l_wd_ref, l_b_ref,
    s_we_ref, s_wd_ref, s_b_ref,
    out_ref, *, num_heads, compute_dtype):
    layer = pl.program_id(1)
    bt, s, d = tgt_ref.shape
    dk = d // num_heads
    inv_scale = 1.0 / (dk ** 0.5)
    cd = compute_dtype

    @pl.when(layer == 0)
    def _init():
        out_ref[...] = tgt_ref[...]           # decoder stream lives in the out block

    # ---- in-kernel math helpers (bf16 MXU operands, f32 accumulation) ----
    def dotc(a, b):
        return jnp.dot(a.astype(cd), b.astype(cd), preferred_element_type=F32)

    def dot_qk(q, k):                          # q @ k.T, no explicit transpose
        return lax.dot_general(q.astype(cd), k.astype(cd), (((1,), (1,)), ((), ())),
                               preferred_element_type=F32)

    def softmax_last(x):
        m = jnp.max(x, axis=-1, keepdims=True)
        e = jnp.exp(x - m)
        return e * pl.reciprocal(jnp.sum(e, axis=-1, keepdims=True), approx=True)

    def add_ln(x, y, g, b):
        z = x + y
        mu = jnp.mean(z, axis=-1, keepdims=True)
        var = jnp.mean((z - mu) ** 2, axis=-1, keepdims=True)
        return (z - mu) * lax.rsqrt(var + LN_EPS) * g + b

    # Flattened (Bt*S, D) views: reshape only merges leading dims (no relayout).
    enc2 = enc_ref[...].reshape(bt * s, d)     # encoder output, f32, resident per batch block
    x2 = out_ref[...].reshape(bt * s, d)       # decoder stream carried across layers

    def residual_mha(a, xq2, xk2, xv2, fuse):
        w_in = a_win_ref[0, a]                 # (D, 3D) bf16  [Wq | Wk | Wv]
        b_in = a_bin_ref[0, a]                 # (1, 3D) f32
        if fuse == "qkv":                      # one MXU pass for q, k, v
            qkv = dotc(xq2, w_in) + b_in
            q2, k2, v2 = qkv[:, :d], qkv[:, d:2 * d], qkv[:, 2 * d:]
        elif fuse == "qk":                     # q and k share the same input
            qk = dotc(xq2, w_in[:, :2 * d]) + b_in[:, :2 * d]
            q2, k2 = qk[:, :d], qk[:, d:]
            v2 = dotc(xv2, w_in[:, 2 * d:]) + b_in[:, 2 * d:]
        else:
            q2 = dotc(xq2, w_in[:, :d]) + b_in[:, :d]
            k2 = dotc(xk2, w_in[:, d:2 * d]) + b_in[:, d:2 * d]
            v2 = dotc(xv2, w_in[:, 2 * d:]) + b_in[:, 2 * d:]
        w_o = a_wo_ref[0, a]                   # (D, D) bf16
        o_parts = []
        for b in range(bt):                    # static: the (S,S) core is per batch element
            rows = slice(b * s, (b + 1) * s)
            o_b = jnp.zeros((s, d), F32)
            for h in range(num_heads):         # static; accumulate each head into W_o
                lo, hi = h * dk, (h + 1) * dk
                sc = dot_qk(q2[rows, lo:hi], k2[rows, lo:hi]) * inv_scale
                p = softmax_last(sc)
                ctx = dotc(p, v2[rows, lo:hi])
                o_b = o_b + dotc(ctx, w_o[lo:hi, :])
            o_parts.append(o_b)
        o2 = jnp.concatenate(o_parts, axis=0) + a_bo_ref[0, a]
        # Residual adds the first (query) argument, matching the reference wiring.
        return add_ln(xq2, o2, a_lng_ref[0, a], a_lnb_ref[0, a])

    def residual_ffn(f, x_in):
        h = jnp.maximum(dotc(x_in, f_w1_ref[0, f]) + f_b1_ref[0, f], 0.0)
        y = dotc(h, f_w2_ref[0, f]) + f_b2_ref[0, f]
        return add_ln(x_in, y, f_lng_ref[0, f], f_lnb_ref[0, f])

    def memory_attention(dec2, mem_ref, we_ref, wd_ref, b_ref):
        # Linear(cat([enc, dec], -1)) == enc @ We + dec @ Wd + b, on the flat slab.
        combined = dotc(enc2, we_ref[0]) + dotc(dec2, wd_ref[0]) + b_ref[0]   # (Bt*S, M)
        n_mem = mem_ref.shape[1]
        parts = []
        for b in range(bt):
            rows = slice(b * s, (b + 1) * s)
            alpha = softmax_last(jnp.mean(combined[rows], axis=0, keepdims=True))  # (1, M)
            # VPU broadcast-MAC over the M bf16 memory slabs (never touches the MXU).
            out_b = alpha[:, 0:1] * mem_ref[b, 0].astype(F32)
            for m_i in range(1, n_mem):
                out_b = out_b + alpha[:, m_i:m_i + 1] * mem_ref[b, m_i].astype(F32)
            parts.append(out_b)
        return jnp.concatenate(parts, axis=0)                                  # (Bt*S, D)

    dec = residual_mha(0, x2, x2, x2, "qkv")                   # self-attn (tgt_mask=None)
    long_w = memory_attention(dec, lmem_ref, l_we_ref, l_wd_ref, l_b_ref)
    dec = residual_mha(1, long_w, long_w, dec, "qk")
    dec = residual_ffn(0, dec)
    short_w = memory_attention(dec, smem_ref, s_we_ref, s_wd_ref, s_b_ref)
    dec = residual_mha(2, enc2, short_w, dec, "none")
    dec = residual_mha(3, enc2, enc2, dec, "qk")               # src_mask=None
    dec = residual_ffn(1, dec)

    # Stays VMEM-resident; HBM writeback happens only when the batch-block changes.
    out_ref[...] = dec.reshape(bt, s, d)


# ---------------------------------------------------------------------------
# Wrapper: one pallas_call for the whole decoder
# ---------------------------------------------------------------------------
def _vmem_limit_bytes():
    cap = 64 * 1024 * 1024
    try:
        info = pltpu.get_tpu_info()
        cap = int(getattr(info, "vmem_capacity_bytes", cap) or cap)
    except Exception:
        pass
    # ~75% of physical VMEM (v5e/v6e: ~96 MiB, v7x: ~48 MiB), capped at 100 MiB.
    return int(min(cap * 3 // 4, 100 * 1024 * 1024))


def decoder_forward(params, tgt, enc, short_mem, long_mem, *, num_heads,
                    batch_block=1, compute_dtype=jnp.bfloat16, vmem_limit_bytes=None):
    bsz, s, d = tgt.shape
    n_layers = params['attn_w_in'].shape[0]
    m_short, m_long = short_mem.shape[1], long_mem.shape[1]
    d_ff = params['ffn_w1'].shape[-1]
    assert bsz % batch_block == 0, "batch size must be divisible by batch_block"
    nb = bsz // batch_block                    # keep >= 2 on v7x so both TCs get work
    bt = batch_block
    cd = compute_dtype

    # Weight matrices + memory slabs stored in the compute dtype (bf16 by default):
    # halves their HBM DMA and VMEM residency.  Biases / LayerNorm params stay f32.
    wc = lambda name: params[name].astype(cd)

    act_map = lambda b, l: (b, 0, 0)           # per-batch-block activations (resident over l)
    mem_map = lambda b, l: (b, 0, 0, 0)        # per-batch-block memory slabs (resident over l)
    w4_map = lambda b, l: (l, 0, 0, 0)         # per-layer weight blocks (prefetched over l)
    w3_map = lambda b, l: (l, 0, 0)

    in_specs = [
        pl.BlockSpec((bt, s, d), act_map),                # tgt
        pl.BlockSpec((bt, s, d), act_map),                # encoder_output
        pl.BlockSpec((bt, m_short, s, d), mem_map),       # short_memory (bf16)
        pl.BlockSpec((bt, m_long, s, d), mem_map),        # long_memory  (bf16)
        pl.BlockSpec((1, 4, d, 3 * d), w4_map),           # attn W_qkv (packed, bf16)
        pl.BlockSpec((1, 4, 1, 3 * d), w4_map),           # attn b_qkv
        pl.BlockSpec((1, 4, d, d), w4_map),               # attn W_o (bf16)
        pl.BlockSpec((1, 4, 1, d), w4_map),               # attn b_o
        pl.BlockSpec((1, 4, 1, d), w4_map),               # attn LN gamma
        pl.BlockSpec((1, 4, 1, d), w4_map),               # attn LN beta
        pl.BlockSpec((1, 2, d, d_ff), w4_map),            # ffn W1 (bf16)
        pl.BlockSpec((1, 2, 1, d_ff), w4_map),            # ffn b1
        pl.BlockSpec((1, 2, d_ff, d), w4_map),            # ffn W2 (bf16)
        pl.BlockSpec((1, 2, 1, d), w4_map),               # ffn b2
        pl.BlockSpec((1, 2, 1, d), w4_map),               # ffn LN gamma
        pl.BlockSpec((1, 2, 1, d), w4_map),               # ffn LN beta
        pl.BlockSpec((1, d, m_long), w3_map),             # long  We (bf16)
        pl.BlockSpec((1, d, m_long), w3_map),             # long  Wd (bf16)
        pl.BlockSpec((1, 1, m_long), w3_map),             # long  b
        pl.BlockSpec((1, d, m_short), w3_map),            # short We (bf16)
        pl.BlockSpec((1, d, m_short), w3_map),            # short Wd (bf16)
        pl.BlockSpec((1, 1, m_short), w3_map),            # short b
    ]

    return pl.pallas_call(
        functools.partial(_decoder_kernel, num_heads=num_heads, compute_dtype=cd),
        out_shape=jax.ShapeDtypeStruct((bsz, s, d), F32),
        grid=(nb, n_layers),
        in_specs=in_specs,
        out_specs=pl.BlockSpec((bt, s, d), act_map),      # carries the decoder stream
        compiler_params=pltpu.CompilerParams(
            dimension_semantics=("parallel", "arbitrary"),
            vmem_limit_bytes=vmem_limit_bytes or _vmem_limit_bytes()),
    )(tgt, enc, short_mem.astype(cd), long_mem.astype(cd),
      wc('attn_w_in'), params['attn_b_in'], wc('attn_w_o'), params['attn_b_o'],
      params['attn_ln_g'], params['attn_ln_b'],
      wc('ffn_w1'), params['ffn_b1'], wc('ffn_w2'), params['ffn_b2'],
      params['ffn_ln_g'], params['ffn_ln_b'],
      wc('long_we'), wc('long_wd'), params['long_b'],
      wc('short_we'), wc('short_wd'), params['short_b'])


# ---------------------------------------------------------------------------
# Deterministic synthetic parameters (layer-stacked for the fused kernel)
# ---------------------------------------------------------------------------
def init_decoder_params(key, num_layers, d, d_ff, m_short, m_long, scale=0.05):
    ks = jax.random.split(key, 14)
    dense = lambda k, shape: jax.random.normal(k, shape, F32) * scale
    n_attn, n_ffn = 4, 2
    return dict(
        attn_w_in=dense(ks[0], (num_layers, n_attn, d, 3 * d)),
        attn_b_in=dense(ks[1], (num_layers, n_attn, 1, 3 * d)),
        attn_w_o=dense(ks[2], (num_layers, n_attn, d, d)),
        attn_b_o=dense(ks[3], (num_layers, n_attn, 1, d)),
        attn_ln_g=jnp.ones((num_layers, n_attn, 1, d), F32),
        attn_ln_b=jnp.zeros((num_layers, n_attn, 1, d), F32),
        ffn_w1=dense(ks[4], (num_layers, n_ffn, d, d_ff)),
        ffn_b1=dense(ks[5], (num_layers, n_ffn, 1, d_ff)),
        ffn_w2=dense(ks[6], (num_layers, n_ffn, d_ff, d)),
        ffn_b2=dense(ks[7], (num_layers, n_ffn, 1, d)),
        ffn_ln_g=jnp.ones((num_layers, n_ffn, 1, d), F32),
        ffn_ln_b=jnp.zeros((num_layers, n_ffn, 1, d), F32),
        long_we=dense(ks[8], (num_layers, d, m_long)),
        long_wd=dense(ks[9], (num_layers, d, m_long)),
        long_b=dense(ks[10], (num_layers, 1, m_long)),
        short_we=dense(ks[11], (num_layers, d, m_short)),
        short_wd=dense(ks[12], (num_layers, d, m_short)),
        short_b=dense(ks[13], (num_layers, 1, m_short)),
    )


# ---------------------------------------------------------------------------
# Pure-JAX reference (f32 / HIGHEST precision) for correctness check
# ---------------------------------------------------------------------------
def reference_forward(params, tgt, enc, short_mem, long_mem, *, num_heads):
    hi = lax.Precision.HIGHEST

    def ln(z, g, b):
        mu = jnp.mean(z, axis=-1, keepdims=True)
        var = jnp.mean((z - mu) ** 2, axis=-1, keepdims=True)
        return (z - mu) * lax.rsqrt(var + LN_EPS) * g + b

    def mha(l, a, xq, xk, xv):
        w_in = params['attn_w_in'][l, a]
        b_in = params['attn_b_in'][l, a]
        d = xq.shape[-1]
        dk = d // num_heads
        q = jnp.einsum('bsd,de->bse', xq, w_in[:, :d], precision=hi) + b_in[:, :d]
        k = jnp.einsum('bsd,de->bse', xk, w_in[:, d:2 * d], precision=hi) + b_in[:, d:2 * d]
        v = jnp.einsum('bsd,de->bse', xv, w_in[:, 2 * d:], precision=hi) + b_in[:, 2 * d:]
        bq, sq, _ = xq.shape
        sk = xk.shape[1]
        qh = q.reshape(bq, sq, num_heads, dk)
        kh = k.reshape(bq, sk, num_heads, dk)
        vh = v.reshape(bq, sk, num_heads, dk)
        s = jnp.einsum('bqhd,bkhd->bhqk', qh, kh, precision=hi) / (dk ** 0.5)
        p = jax.nn.softmax(s, axis=-1)
        o = jnp.einsum('bhqk,bkhd->bqhd', p, vh, precision=hi).reshape(bq, sq, d)
        o = jnp.einsum('bsd,de->bse', o, params['attn_w_o'][l, a], precision=hi) \
            + params['attn_b_o'][l, a]
        return ln(xq + o, params['attn_ln_g'][l, a], params['attn_ln_b'][l, a])

    def ffn(l, f, x):
        h = jax.nn.relu(jnp.einsum('bsd,df->bsf', x, params['ffn_w1'][l, f], precision=hi)
                        + params['ffn_b1'][l, f])
        y = jnp.einsum('bsf,fd->bsd', h, params['ffn_w2'][l, f], precision=hi) \
            + params['ffn_b2'][l, f]
        return ln(x + y, params['ffn_ln_g'][l, f], params['ffn_ln_b'][l, f])

    def mem_attn(l, prefix, enc_x, dec_x, mem):
        we = params[prefix + '_we'][l]
        wd = params[prefix + '_wd'][l]
        b = params[prefix + '_b'][l]
        combined = (jnp.einsum('bsd,dm->bsm', enc_x, we, precision=hi)
                    + jnp.einsum('bsd,dm->bsm', dec_x, wd, precision=hi) + b)
        alpha = jax.nn.softmax(jnp.mean(combined, axis=1), axis=-1)   # (B, M)
        return jnp.einsum('bm,bmsd->bsd', alpha, mem, precision=hi)

    x = tgt
    for l in range(params['attn_w_in'].shape[0]):
        dec = mha(l, 0, x, x, x)
        long_w = mem_attn(l, 'long', enc, dec, long_mem)
        dec = mha(l, 1, long_w, long_w, dec)
        dec = ffn(l, 0, dec)
        short_w = mem_attn(l, 'short', enc, dec, short_mem)
        dec = mha(l, 2, enc, short_w, dec)
        dec = mha(l, 3, enc, enc, dec)
        x = ffn(l, 1, dec)
    return x


if __name__ == "__main__":
    NUM_LAYERS = 2
    D_MODEL, NUM_HEADS, DIM_FF = 32, 4, 64
    M_SHORT, M_LONG = 3, 5
    B, S = 4, 8          # enc/dec seq lengths must match (MemoryAttention concats on dim=2)
    BATCH_BLOCK = 2      # weights DMA'd once per 2 batch elems; batch grid extent = 2 (megacore)

    key = jax.random.PRNGKey(0)
    k_par, k_tgt, k_enc, k_sm, k_lm = jax.random.split(key, 5)
    params = init_decoder_params(k_par, NUM_LAYERS, D_MODEL, DIM_FF, M_SHORT, M_LONG)

    tgt = jax.random.normal(k_tgt, (B, S, D_MODEL), F32)
    encoder_output = jax.random.normal(k_enc, (B, S, D_MODEL), F32)
    short_memory = jax.random.normal(k_sm, (B, M_SHORT, S, D_MODEL), F32)
    long_memory = jax.random.normal(k_lm, (B, M_LONG, S, D_MODEL), F32)

    fwd = jax.jit(functools.partial(decoder_forward, num_heads=NUM_HEADS,
                                    batch_block=BATCH_BLOCK))
    out = fwd(params, tgt, encoder_output, short_memory, long_memory)
    jax.block_until_ready(out)
    assert out.shape == (B, S, D_MODEL) and out.dtype == F32

    ref = reference_forward(params, tgt, encoder_output, short_memory, long_memory,
                            num_heads=NUM_HEADS)
    # bf16 MXU operands / bf16 memory slabs / approx reciprocal vs f32 HIGHEST reference.
    assert bool(jnp.allclose(out, ref, rtol=5e-2, atol=5e-2)), "kernel/reference mismatch"
    print("KERNEL_OK")
</pallas_src>

<mosaic_0001>
module attributes {stable_mosaic.version = 11 : i64} {
  func.func @_decoder_kernel(%arg0: i32, %arg1: i32, %arg2: memref<2x8x32xf32, #tpu.memory_space<vmem>>, %arg3: memref<2x8x32xf32, #tpu.memory_space<vmem>>, %arg4: memref<2x3x8x32xbf16, #tpu.memory_space<vmem>>, %arg5: memref<2x5x8x32xbf16, #tpu.memory_space<vmem>>, %arg6: memref<1x4x32x96xbf16, #tpu.memory_space<vmem>>, %arg7: memref<1x4x1x96xf32, #tpu.memory_space<vmem>>, %arg8: memref<1x4x32x32xbf16, #tpu.memory_space<vmem>>, %arg9: memref<1x4x1x32xf32, #tpu.memory_space<vmem>>, %arg10: memref<1x4x1x32xf32, #tpu.memory_space<vmem>>, %arg11: memref<1x4x1x32xf32, #tpu.memory_space<vmem>>, %arg12: memref<1x2x32x64xbf16, #tpu.memory_space<vmem>>, %arg13: memref<1x2x1x64xf32, #tpu.memory_space<vmem>>, %arg14: memref<1x2x64x32xbf16, #tpu.memory_space<vmem>>, %arg15: memref<1x2x1x32xf32, #tpu.memory_space<vmem>>, %arg16: memref<1x2x1x32xf32, #tpu.memory_space<vmem>>, %arg17: memref<1x2x1x32xf32, #tpu.memory_space<vmem>>, %arg18: memref<1x32x5xbf16, #tpu.memory_space<vmem>>, %arg19: memref<1x32x5xbf16, #tpu.memory_space<vmem>>, %arg20: memref<1x1x5xf32, #tpu.memory_space<vmem>>, %arg21: memref<1x32x3xbf16, #tpu.memory_space<vmem>>, %arg22: memref<1x32x3xbf16, #tpu.memory_space<vmem>>, %arg23: memref<1x1x3xf32, #tpu.memory_space<vmem>>, %arg24: memref<2x8x32xf32, #tpu.memory_space<vmem>>) attributes {dimension_semantics = [#tpu.dimension_semantics<parallel>, #tpu.dimension_semantics<arbitrary>], iteration_bounds = array<i64: 2, 2>, scalar_prefetch = 0 : i64, scratch_operands = 0 : i64, tpu.core_type = #tpu.core_type<tc>, window_params = [{transform_indices = @transform_0, window_bounds = array<i64: 2, 8, 32>}, {transform_indices = @transform_1, window_bounds = array<i64: 2, 8, 32>}, {transform_indices = @transform_2, window_bounds = array<i64: 2, 3, 8, 32>}, {transform_indices = @transform_3, window_bounds = array<i64: 2, 5, 8, 32>}, {transform_indices = @transform_4, window_bounds = array<i64: 1, 4, 32, 96>}, {transform_indices = @transform_5, window_bounds = array<i64: 1, 4, 1, 96>}, {transform_indices = @transform_6, window_bounds = array<i64: 1, 4, 32, 32>}, {transform_indices = @transform_7, window_bounds = array<i64: 1, 4, 1, 32>}, {transform_indices = @transform_8, window_bounds = array<i64: 1, 4, 1, 32>}, {transform_indices = @transform_9, window_bounds = array<i64: 1, 4, 1, 32>}, {transform_indices = @transform_10, window_bounds = array<i64: 1, 2, 32, 64>}, {transform_indices = @transform_11, window_bounds = array<i64: 1, 2, 1, 64>}, {transform_indices = @transform_12, window_bounds = array<i64: 1, 2, 64, 32>}, {transform_indices = @transform_13, window_bounds = array<i64: 1, 2, 1, 32>}, {transform_indices = @transform_14, window_bounds = array<i64: 1, 2, 1, 32>}, {transform_indices = @transform_15, window_bounds = array<i64: 1, 2, 1, 32>}, {transform_indices = @transform_16, window_bounds = array<i64: 1, 32, 5>}, {transform_indices = @transform_17, window_bounds = array<i64: 1, 32, 5>}, {transform_indices = @transform_18, window_bounds = array<i64: 1, 1, 5>}, {transform_indices = @transform_19, window_bounds = array<i64: 1, 32, 3>}, {transform_indices = @transform_20, window_bounds = array<i64: 1, 32, 3>}, {transform_indices = @transform_21, window_bounds = array<i64: 1, 1, 3>}, {transform_indices = @transform_22, window_bounds = array<i64: 2, 8, 32>}]} {
    %c0_i32 = arith.constant 0 : i32
    %0 = arith.cmpi eq, %arg1, %c0_i32 : i32
    %1 = arith.extui %0 : i1 to i32
    %c0_i32_0 = arith.constant 0 : i32
    %2 = arith.cmpi ne, %1, %c0_i32_0 : i32
    scf.if %2 {
      %c0_494 = arith.constant 0 : index
      %c0_495 = arith.constant 0 : index
      %c0_496 = arith.constant 0 : index
      %1308 = vector.load %arg2[%c0_494, %c0_495, %c0_496] : memref<2x8x32xf32, #tpu.memory_space<vmem>>, vector<2x8x32xf32>
      %c0_497 = arith.constant 0 : index
      %c0_498 = arith.constant 0 : index
      %c0_499 = arith.constant 0 : index
      %1309 = vector.load %arg24[%c0_497, %c0_498, %c0_499] : memref<2x8x32xf32, #tpu.memory_space<vmem>>, vector<2x8x32xf32>
      tpu.vector_store %arg24[%c0_497, %c0_498, %c0_499], %1308 {strides = array<i32>} : memref<2x8x32xf32, #tpu.memory_space<vmem>>, vector<2x8x32xf32>,
    } else {
    }
    %c0 = arith.constant 0 : index
    %c0_1 = arith.constant 0 : index
    %c0_2 = arith.constant 0 : index
    %3 = vector.load %arg3[%c0, %c0_1, %c0_2] : memref<2x8x32xf32, #tpu.memory_space<vmem>>, vector<2x8x32xf32>
    %4 = vector.shape_cast %3 : vector<2x8x32xf32> to vector<16x32xf32>
    %c0_3 = arith.constant 0 : index
    %c0_4 = arith.constant 0 : index
    %c0_5 = arith.constant 0 : index
    %5 = vector.load %arg24[%c0_3, %c0_4, %c0_5] : memref<2x8x32xf32, #tpu.memory_space<vmem>>, vector<2x8x32xf32>
    %6 = vector.shape_cast %5 : vector<2x8x32xf32> to vector<16x32xf32>
    %c0_6 = arith.constant 0 : index
    %c0_7 = arith.constant 0 : index
    %c0_8 = arith.constant 0 : index
    %c0_9 = arith.constant 0 : index
    %7 = vector.load %arg6[%c0_6, %c0_7, %c0_8, %c0_9] : memref<1x4x32x96xbf16, #tpu.memory_space<vmem>>, vector<1x1x32x96xbf16>
    %8 = vector.shape_cast %7 : vector<1x1x32x96xbf16> to vector<32x96xbf16>
    %c0_10 = arith.constant 0 : index
    %c0_11 = arith.constant 0 : index
    %c0_12 = arith.constant 0 : index
    %c0_13 = arith.constant 0 : index
    %9 = vector.load %arg7[%c0_10, %c0_11, %c0_12, %c0_13] : memref<1x4x1x96xf32, #tpu.memory_space<vmem>>, vector<1x1x1x96xf32>
    %10 = vector.shape_cast %9 : vector<1x1x1x96xf32> to vector<1x96xf32>
    %11 = arith.truncf %6 : vector<16x32xf32> to vector<16x32xbf16>
    %cst = arith.constant dense<0.000000e+00> : vector<16x96xf32>
    %12 = tpu.matmul %11, %8, %cst {dimension_numbers = #tpu.dot_dimension_numbers<[1], [0], [0], [1], [0, 0, 1, 1], [], []>} : vector<16x32xbf16>, vector<32x96xbf16>, vector<16x96xf32> -> vector<16x96xf32>
    %13 = vector.broadcast %10 : vector<1x96xf32> to vector<16x96xf32>
    %14 = arith.addf %12, %13 : vector<16x96xf32>
    %15 = vector.extract_strided_slice %14 {offsets = [0, 0], sizes = [16, 32], strides = [1, 1]} : vector<16x96xf32> to vector<16x32xf32>
    %16 = vector.extract_strided_slice %14 {offsets = [0, 32], sizes = [16, 32], strides = [1, 1]} : vector<16x96xf32> to vector<16x32xf32>
    %17 = vector.extract_strided_slice %14 {offsets = [0, 64], sizes = [16, 32], strides = [1, 1]} : vector<16x96xf32> to vector<16x32xf32>
    %c0_14 = arith.constant 0 : index
    %c0_15 = arith.constant 0 : index
    %c0_16 = arith.constant 0 : index
    %c0_17 = arith.constant 0 : index
    %18 = vector.load %arg8[%c0_14, %c0_15, %c0_16, %c0_17] : memref<1x4x32x32xbf16, #tpu.memory_space<vmem>>, vector<1x1x32x32xbf16>
    %19 = vector.shape_cast %18 : vector<1x1x32x32xbf16> to vector<32x32xbf16>
    %cst_18 = arith.constant 0.000000e+00 : f32
    %20 = vector.broadcast %cst_18 : f32 to vector<8x32xf32>
    %21 = vector.extract_strided_slice %15 {offsets = [0, 0], sizes = [8, 8], strides = [1, 1]} : vector<16x32xf32> to vector<8x8xf32>
    %22 = vector.extract_strided_slice %16 {offsets = [0, 0], sizes = [8, 8], strides = [1, 1]} : vector<16x32xf32> to vector<8x8xf32>
    %23 = arith.truncf %21 : vector<8x8xf32> to vector<8x8xbf16>
    %24 = arith.truncf %22 : vector<8x8xf32> to vector<8x8xbf16>
    %cst_19 = arith.constant dense<0.000000e+00> : vector<8x8xf32>
    %25 = tpu.matmul %23, %24, %cst_19 {dimension_numbers = #tpu.dot_dimension_numbers<[1], [1], [0], [0], [0, 0, 1, 0], [], []>} : vector<8x8xbf16>, vector<8x8xbf16>, vector<8x8xf32> -> vector<8x8xf32>
    %cst_20 = arith.constant 0.353553385 : f32
    %26 = vector.broadcast %cst_20 : f32 to vector<8x8xf32>
    %27 = arith.mulf %25, %26 : vector<8x8xf32>
    %cst_21 = arith.constant dense<0xFF800000> : vector<8xf32>
    %28 = vector.multi_reduction <maximumf>, %27, %cst_21 [1] : vector<8x8xf32> to vector<8xf32>
    %29 = vector.shape_cast %28 : vector<8xf32> to vector<8x1xf32>
    %30 = vector.broadcast %29 : vector<8x1xf32> to vector<8x8xf32>
    %31 = arith.subf %27, %30 : vector<8x8xf32>
    %32 = math.exp %31 : vector<8x8xf32>
    %cst_22 = arith.constant dense<0.000000e+00> : vector<8xf32>
    %33 = vector.multi_reduction <add>, %32, %cst_22 [1] : vector<8x8xf32> to vector<8xf32>
    %34 = vector.shape_cast %33 : vector<8xf32> to vector<8x1xf32>
    %35 = tpu.reciprocal %34 {approx = true} : vector<8x1xf32> -> vector<8x1xf32>
    %36 = vector.broadcast %35 : vector<8x1xf32> to vector<8x8xf32>
    %37 = arith.mulf %32, %36 : vector<8x8xf32>
    %38 = vector.extract_strided_slice %17 {offsets = [0, 0], sizes = [8, 8], strides = [1, 1]} : vector<16x32xf32> to vector<8x8xf32>
    %39 = arith.truncf %37 : vector<8x8xf32> to vector<8x8xbf16>
    %40 = arith.truncf %38 : vector<8x8xf32> to vector<8x8xbf16>
    %cst_23 = arith.constant dense<0.000000e+00> : vector<8x8xf32>
    %41 = tpu.matmul %39, %40, %cst_23 {dimension_numbers = #tpu.dot_dimension_numbers<[1], [0], [0], [1], [0, 0, 1, 1], [], []>} : vector<8x8xbf16>, vector<8x8xbf16>, vector<8x8xf32> -> vector<8x8xf32>
    %42 = vector.extract_strided_slice %19 {offsets = [0, 0], sizes = [8, 32], strides = [1, 1]} : vector<32x32xbf16> to vector<8x32xbf16>
    %43 = arith.truncf %41 : vector<8x8xf32> to vector<8x8xbf16>
    %cst_24 = arith.constant dense<0.000000e+00> : vector<8x32xf32>
    %44 = tpu.matmul %43, %42, %cst_24 {dimension_numbers = #tpu.dot_dimension_numbers<[1], [0], [0], [1], [0, 0, 1, 1], [], []>} : vector<8x8xbf16>, vector<8x32xbf16>, vector<8x32xf32> -> vector<8x32xf32>
    %45 = arith.addf %20, %44 : vector<8x32xf32>
    %46 = vector.extract_strided_slice %15 {offsets = [0, 8], sizes = [8, 8], strides = [1, 1]} : vector<16x32xf32> to vector<8x8xf32>
    %47 = vector.extract_strided_slice %16 {offsets = [0, 8], sizes = [8, 8], strides = [1, 1]} : vector<16x32xf32> to vector<8x8xf32>
    %48 = arith.truncf %46 : vector<8x8xf32> to vector<8x8xbf16>
    %49 = arith.truncf %47 : vector<8x8xf32> to vector<8x8xbf16>
    %cst_25 = arith.constant dense<0.000000e+00> : vector<8x8xf32>
    %50 = tpu.matmul %48, %49, %cst_25 {dimension_numbers = #tpu.dot_dimension_numbers<[1], [1], [0], [0], [0, 0, 1, 0], [], []>} : vector<8x8xbf16>, vector<8x8xbf16>, vector<8x8xf32> -> vector<8x8xf32>
    %cst_26 = arith.constant 0.353553385 : f32
    %51 = vector.broadcast %cst_26 : f32 to vector<8x8xf32>
    %52 = arith.mulf %50, %51 : vector<8x8xf32>
    %cst_27 = arith.constant dense<0xFF800000> : vector<8xf32>
    %53 = vector.multi_reduction <maximumf>, %52, %cst_27 [1] : vector<8x8xf32> to vector<8xf32>
    %54 = vector.shape_cast %53 : vector<8xf32> to vector<8x1xf32>
    %55 = vector.broadcast %54 : vector<8x1xf32> to vector<8x8xf32>
    %56 = arith.subf %52, %55 : vector<8x8xf32>
    %57 = math.exp %56 : vector<8x8xf32>
    %cst_28 = arith.constant dense<0.000000e+00> : vector<8xf32>
    %58 = vector.multi_reduction <add>, %57, %cst_28 [1] : vector<8x8xf32> to vector<8xf32>
    %59 = vector.shape_cast %58 : vector<8xf32> to vector<8x1xf32>
    %60 = tpu.reciprocal %59 {approx = true} : vector<8x1xf32> -> vector<8x1xf32>
    %61 = vector.broadcast %60 : vector<8x1xf32> to vector<8x8xf32>
    %62 = arith.mulf %57, %61 : vector<8x8xf32>
    %63 = vector.extract_strided_slice %17 {offsets = [0, 8], sizes = [8, 8], strides = [1, 1]} : vector<16x32xf32> to vector<8x8xf32>
    %64 = arith.truncf %62 : vector<8x8xf32> to vector<8x8xbf16>
    %65 = arith.truncf %63 : vector<8x8xf32> to vector<8x8xbf16>
    %cst_29 = arith.constant dense<0.000000e+00> : vector<8x8xf32>
    %66 = tpu.matmul %64, %65, %cst_29 {dimension_numbers = #tpu.dot_dimension_numbers<[1], [0], [0], [1], [0, 0, 1, 1], [], []>} : vector<8x8xbf16>, vector<8x8xbf16>, vector<8x8xf32> -> vector<8x8xf32>
    %67 = vector.extract_strided_slice %19 {offsets = [8, 0], sizes = [8, 32], strides = [1, 1]} : vector<32x32xbf16> to vector<8x32xbf16>
    %68 = arith.truncf %66 : vector<8x8xf32> to vector<8x8xbf16>
    %cst_30 = arith.constant dense<0.000000e+00> : vector<8x32xf32>
    %69 = tpu.matmul %68, %67, %cst_30 {dimension_numbers = #tpu.dot_dimension_numbers<[1], [0], [0], [1], [0, 0, 1, 1], [], []>} : vector<8x8xbf16>, vector<8x32xbf16>, vector<8x32xf32> -> vector<8x32xf32>
    %70 = arith.addf %45, %69 : vector<8x32xf32>
    %71 = vector.extract_strided_slice %15 {offsets = [0, 16], sizes = [8, 8], strides = [1, 1]} : vector<16x32xf32> to vector<8x8xf32>
    %72 = vector.extract_strided_slice %16 {offsets = [0, 16], sizes = [8, 8], strides = [1, 1]} : vector<16x32xf32> to vector<8x8xf32>
    %73 = arith.truncf %71 : vector<8x8xf32> to vector<8x8xbf16>
    %74 = arith.truncf %72 : vector<8x8xf32> to vector<8x8xbf16>
    %cst_31 = arith.constant dense<0.000000e+00> : vector<8x8xf32>
    %75 = tpu.matmul %73, %74, %cst_31 {dimension_numbers = #tpu.dot_dimension_numbers<[1], [1], [0], [0], [0, 0, 1, 0], [], []>} : vector<8x8xbf16>, vector<8x8xbf16>, vector<8x8xf32> -> vector<8x8xf32>
    %cst_32 = arith.constant 0.353553385 : f32
    %76 = vector.broadcast %cst_32 : f32 to vector<8x8xf32>
    %77 = arith.mulf %75, %76 : vector<8x8xf32>
    %cst_33 = arith.constant dense<0xFF800000> : vector<8xf32>
    %78 = vector.multi_reduction <maximumf>, %77, %cst_33 [1] : vector<8x8xf32> to vector<8xf32>
    %79 = vector.shape_cast %78 : vector<8xf32> to vector<8x1xf32>
    %80 = vector.broadcast %79 : vector<8x1xf32> to vector<8x8xf32>
    %81 = arith.subf %77, %80 : vector<8x8xf32>
    %82 = math.exp %81 : vector<8x8xf32>
    %cst_34 = arith.constant dense<0.000000e+00> : vector<8xf32>
    %83 = vector.multi_reduction <add>, %82, %cst_34 [1] : vector<8x8xf32> to vector<8xf32>
    %84 = vector.shape_cast %83 : vector<8xf32> to vector<8x1xf32>
    %85 = tpu.reciprocal %84 {approx = true} : vector<8x1xf32> -> vector<8x1xf32>
    %86 = vector.broadcast %85 : vector<8x1xf32> to vector<8x8xf32>
    %87 = arith.mulf %82, %86 : vector<8x8xf32>
    %88 = vector.extract_strided_slice %17 {offsets = [0, 16], sizes = [8, 8], strides = [1, 1]} : vector<16x32xf32> to vector<8x8xf32>
    %89 = arith.truncf %87 : vector<8x8xf32> to vector<8x8xbf16>
    %90 = arith.truncf %88 : vector<8x8xf32> to vector<8x8xbf16>
    %cst_35 = arith.constant dense<0.000000e+00> : vector<8x8xf32>
    %91 = tpu.matmul %89, %90, %cst_35 {dimension_numbers = #tpu.dot_dimension_numbers<[1], [0], [0], [1], [0, 0, 1, 1], [], []>} : vector<8x8xbf16>, vector<8x8xbf16>, vector<8x8xf32> -> vector<8x8xf32>
    %92 = vector.extract_strided_slice %19 {offsets = [16, 0], sizes = [8, 32], strides = [1, 1]} : vector<32x32xbf16> to vector<8x32xbf16>
    %93 = arith.truncf %91 : vector<8x8xf32> to vector<8x8xbf16>
    %cst_36 = arith.constant dense<0.000000e+00> : vector<8x32xf32>
    %94 = tpu.matmul %93, %92, %cst_36 {dimension_numbers = #tpu.dot_dimension_numbers<[1], [0], [0], [1], [0, 0, 1, 1], [], []>} : vector<8x8xbf16>, vector<8x32xbf16>, vector<8x32xf32> -> vector<8x32xf32>
    %95 = arith.addf %70, %94 : vector<8x32xf32>
    %96 = vector.extract_strided_slice %15 {offsets = [0, 24], sizes = [8, 8], strides = [1, 1]} : vector<16x32xf32> to vector<8x8xf32>
    %97 = vector.extract_strided_slice %16 {offsets = [0, 24], sizes = [8, 8], strides = [1, 1]} : vector<16x32xf32> to vector<8x8xf32>
    %98 = arith.truncf %96 : vector<8x8xf32> to vector<8x8xbf16>
    %99 = arith.truncf %97 : vector<8x8xf32> to vector<8x8xbf16>
    %cst_37 = arith.constant dense<0.000000e+00> : vector<8x8xf32>
    %100 = tpu.matmul %98, %99, %cst_37 {dimension_numbers = #tpu.dot_dimension_numbers<[1], [1], [0], [0], [0, 0, 1, 0], [], []>} : vector<8x8xbf16>, vector<8x8xbf16>, vector<8x8xf32> -> vector<8x8xf32>
    %cst_38 = arith.constant 0.353553385 : f32
    %101 = vector.broadcast %cst_38 : f32 to vector<8x8xf32>
    %102 = arith.mulf %100, %101 : vector<8x8xf32>
    %cst_39 = arith.constant dense<0xFF800000> : vector<8xf32>
    %103 = vector.multi_reduction <maximumf>, %102, %cst_39 [1] : vector<8x8xf32> to vector<8xf32>
    %104 = vector.shape_cast %103 : vector<8xf32> to vector<8x1xf32>
    %105 = vector.broadcast %104 : vector<8x1xf32> to vector<8x8xf32>
    %106 = arith.subf %102, %105 : vector<8x8xf32>
    %107 = math.exp %106 : vector<8x8xf32>
    %cst_40 = arith.constant dense<0.000000e+00> : vector<8xf32>
    %108 = vector.multi_reduction <add>, %107, %cst_40 [1] : vector<8x8xf32> to vector<8xf32>
    %109 = vector.shape_cast %108 : vector<8xf32> to vector<8x1xf32>
    %110 = tpu.reciprocal %109 {approx = true} : vector<8x1xf32> -> vector<8x1xf32>
    %111 = vector.broadcast %110 : vector<8x1xf32> to vector<8x8xf32>
    %112 = arith.mulf %107, %111 : vector<8x8xf32>
    %113 = vector.extract_strided_slice %17 {offsets = [0, 24], sizes = [8, 8], strides = [1, 1]} : vector<16x32xf32> to vector<8x8xf32>
    %114 = arith.truncf %112 : vector<8x8xf32> to vector<8x8xbf16>
    %115 = arith.truncf %113 : vector<8x8xf32> to vector<8x8xbf16>
    %cst_41 = arith.constant dense<0.000000e+00> : vector<8x8xf32>
    %116 = tpu.matmul %114, %115, %cst_41 {dimension_numbers = #tpu.dot_dimension_numbers<[1], [0], [0], [1], [0, 0, 1, 1], [], []>} : vector<8x8xbf16>, vector<8x8xbf16>, vector<8x8xf32> -> vector<8x8xf32>
    %117 = vector.extract_strided_slice %19 {offsets = [24, 0], sizes = [8, 32], strides = [1, 1]} : vector<32x32xbf16> to vector<8x32xbf16>
    %118 = arith.truncf %116 : vector<8x8xf32> to vector<8x8xbf16>
    %cst_42 = arith.constant dense<0.000000e+00> : vector<8x32xf32>
    %119 = tpu.matmul %118, %117, %cst_42 {dimension_numbers = #tpu.dot_dimension_numbers<[1], [0], [0], [1], [0, 0, 1, 1], [], []>} : vector<8x8xbf16>, vector<8x32xbf16>, vector<8x32xf32> -> vector<8x32xf32>
    %120 = arith.addf %95, %119 : vector<8x32xf32>
    %cst_43 = arith.constant 0.000000e+00 : f32
    %121 = vector.broadcast %cst_43 : f32 to vector<8x32xf32>
    %122 = vector.extract_strided_slice %15 {offsets = [8, 0], sizes = [8, 8], strides = [1, 1]} : vector<16x32xf32> to vector<8x8xf32>
    %123 = vector.extract_strided_slice %16 {offsets = [8, 0], sizes = [8, 8], strides = [1, 1]} : vector<16x32xf32> to vector<8x8xf32>
    %124 = arith.truncf %122 : vector<8x8xf32> to vector<8x8xbf16>
    %125 = arith.truncf %123 : vector<8x8xf32> to vector<8x8xbf16>
    %cst_44 = arith.constant dense<0.000000e+00> : vector<8x8xf32>
    %126 = tpu.matmul %124, %125, %cst_44 {dimension_numbers = #tpu.dot_dimension_numbers<[1], [1], [0], [0], [0, 0, 1, 0], [], []>} : vector<8x8xbf16>, vector<8x8xbf16>, vector<8x8xf32> -> vector<8x8xf32>
    %cst_45 = arith.constant 0.353553385 : f32
    %127 = vector.broadcast %cst_45 : f32 to vector<8x8xf32>
    %128 = arith.mulf %126, %127 : vector<8x8xf32>
    %cst_46 = arith.constant dense<0xFF800000> : vector<8xf32>
    %129 = vector.multi_reduction <maximumf>, %128, %cst_46 [1] : vector<8x8xf32> to vector<8xf32>
    %130 = vector.shape_cast %129 : vector<8xf32> to vector<8x1xf32>
    %131 = vector.broadcast %130 : vector<8x1xf32> to vector<8x8xf32>
    %132 = arith.subf %128, %131 : vector<8x8xf32>
    %133 = math.exp %132 : vector<8x8xf32>
    %cst_47 = arith.constant dense<0.000000e+00> : vector<8xf32>
    %134 = vector.multi_reduction <add>, %133, %cst_47 [1] : vector<8x8xf32> to vector<8xf32>
    %135 = vector.shape_cast %134 : vector<8xf32> to vector<8x1xf32>
    %136 = tpu.reciprocal %135 {approx = true} : vector<8x1xf32> -> vector<8x1xf32>
    %137 = vector.broadcast %136 : vector<8x1xf32> to vector<8x8xf32>
    %138 = arith.mulf %133, %137 : vector<8x8xf32>
    %139 = vector.extract_strided_slice %17 {offsets = [8, 0], sizes = [8, 8], strides = [1, 1]} : vector<16x32xf32> to vector<8x8xf32>
    %140 = arith.truncf %138 : vector<8x8xf32> to vector<8x8xbf16>
    %141 = arith.truncf %139 : vector<8x8xf32> to vector<8x8xbf16>
    %cst_48 = arith.constant dense<0.000000e+00> : vector<8x8xf32>
    %142 = tpu.matmul %140, %141, %cst_48 {dimension_numbers = #tpu.dot_dimension_numbers<[1], [0], [0], [1], [0, 0, 1, 1], [], []>} : vector<8x8xbf16>, vector<8x8xbf16>, vector<8x8xf32> -> vector<8x8xf32>
    %143 = vector.extract_strided_slice %19 {offsets = [0, 0], sizes = [8, 32], strides = [1, 1]} : vector<32x32xbf16> to vector<8x32xbf16>
    %144 = arith.truncf %142 : vector<8x8xf32> to vector<8x8xbf16>
    %cst_49 = arith.constant dense<0.000000e+00> : vector<8x32xf32>
    %145 = tpu.matmul %144, %143, %cst_49 {dimension_numbers = #tpu.dot_dimension_numbers<[1], [0], [0], [1], [0, 0, 1, 1], [], []>} : vector<8x8xbf16>, vector<8x32xbf16>, vector<8x32xf32> -> vector<8x32xf32>
    %146 = arith.addf %121, %145 : vector<8x32xf32>
    %147 = vector.extract_strided_slice %15 {offsets = [8, 8], sizes = [8, 8], strides = [1, 1]} : vector<16x32xf32> to vector<8x8xf32>
    %148 = vector.extract_strided_slice %16 {offsets = [8, 8], sizes = [8, 8], strides = [1, 1]} : vector<16x32xf32> to vector<8x8xf32>
    %149 = arith.truncf %147 : vector<8x8xf32> to vector<8x8xbf16>
    %150 = arith.truncf %148 : vector<8x8xf32> to vector<8x8xbf16>
    %cst_50 = arith.constant dense<0.000000e+00> : vector<8x8xf32>
    %151 = tpu.matmul %149, %150, %cst_50 {dimension_numbers = #tpu.dot_dimension_numbers<[1], [1], [0], [0], [0, 0, 1, 0], [], []>} : vector<8x8xbf16>, vector<8x8xbf16>, vector<8x8xf32> -> vector<8x8xf32>
    %cst_51 = arith.constant 0.353553385 : f32
    %152 = vector.broadcast %cst_51 : f32 to vector<8x8xf32>
    %153 = arith.mulf %151, %152 : vector<8x8xf32>
    %cst_52 = arith.constant dense<0xFF800000> : vector<8xf32>
    %154 = vector.multi_reduction <maximumf>, %153, %cst_52 [1] : vector<8x8xf32> to vector<8xf32>
    %155 = vector.shape_cast %154 : vector<8xf32> to vector<8x1xf32>
    %156 = vector.broadcast %155 : vector<8x1xf32> to vector<8x8xf32>
    %157 = arith.subf %153, %156 : vector<8x8xf32>
    %158 = math.exp %157 : vector<8x8xf32>
    %cst_53 = arith.constant dense<0.000000e+00> : vector<8xf32>
    %159 = vector.multi_reduction <add>, %158, %cst_53 [1] : vector<8x8xf32> to vector<8xf32>
    %160 = vector.shape_cast %159 : vector<8xf32> to vector<8x1xf32>
    %161 = tpu.reciprocal %160 {approx = true} : vector<8x1xf32> -> vector<8x1xf32>
    %162 = vector.broadcast %161 : vector<8x1xf32> to vector<8x8xf32>
    %163 = arith.mulf %158, %162 : vector<8x8xf32>
    %164 = vector.extract_strided_slice %17 {offsets = [8, 8], sizes = [8, 8], strides = [1, 1]} : vector<16x32xf32> to vector<8x8xf32>
    %165 = arith.truncf %163 : vector<8x8xf32> to vector<8x8xbf16>
    %166 = arith.truncf %164 : vector<8x8xf32> to vector<8x8xbf16>
    %cst_54 = arith.constant dense<0.000000e+00> : vector<8x8xf32>
    %167 = tpu.matmul %165, %166, %cst_54 {dimension_numbers = #tpu.dot_dimension_numbers<[1], [0], [0], [1], [0, 0, 1, 1], [], []>} : vector<8x8xbf16>, vector<8x8xbf16>, vector<8x8xf32> -> vector<8x8xf32>
    %168 = vector.extract_strided_slice %19 {offsets = [8, 0], sizes = [8, 32], strides = [1, 1]} : vector<32x32xbf16> to vector<8x32xbf16>
    %169 = arith.truncf %167 : vector<8x8xf32> to vector<8x8xbf16>
    %cst_55 = arith.constant dense<0.000000e+00> : vector<8x32xf32>
    %170 = tpu.matmul %169, %168, %cst_55 {dimension_numbers = #tpu.dot_dimension_numbers<[1], [0], [0], [1], [0, 0, 1, 1], [], []>} : vector<8x8xbf16>, vector<8x32xbf16>, vector<8x32xf32> -> vector<8x32xf32>
    %171 = arith.addf %146, %170 : vector<8x32xf32>
    %172 = vector.extract_strided_slice %15 {offsets = [8, 16], sizes = [8, 8], strides = [1, 1]} : vector<16x32xf32> to vector<8x8xf32>
    %173 = vector.extract_strided_slice %16 {offsets = [8, 16], sizes = [8, 8], strides = [1, 1]} : vector<16x32xf32> to vector<8x8xf32>
    %174 = arith.truncf %172 : vector<8x8xf32> to vector<8x8xbf16>
    %175 = arith.truncf %173 : vector<8x8xf32> to vector<8x8xbf16>
    %cst_56 = arith.constant dense<0.000000e+00> : vector<8x8xf32>
    %176 = tpu.matmul %174, %175, %cst_56 {dimension_numbers = #tpu.dot_dimension_numbers<[1], [1], [0], [0], [0, 0, 1, 0], [], []>} : vector<8x8xbf16>, vector<8x8xbf16>, vector<8x8xf32> -> vector<8x8xf32>
    %cst_57 = arith.constant 0.353553385 : f32
    %177 = vector.broadcast %cst_57 : f32 to vector<8x8xf32>
    %178 = arith.mulf %176, %177 : vector<8x8xf32>
    %cst_58 = arith.constant dense<0xFF800000> : vector<8xf32>
    %179 = vector.multi_reduction <maximumf>, %178, %cst_58 [1] : vector<8x8xf32> to vector<8xf32>
    %180 = vector.shape_cast %179 : vector<8xf32> to vector<8x1xf32>
    %181 = vector.broadcast %180 : vector<8x1xf32> to vector<8x8xf32>
    %182 = arith.subf %178, %181 : vector<8x8xf32>
    %183 = math.exp %182 : vector<8x8xf32>
    %cst_59 = arith.constant dense<0.000000e+00> : vector<8xf32>
    %184 = vector.multi_reduction <add>, %183, %cst_59 [1] : vector<8x8xf32> to vector<8xf32>
    %185 = vector.shape_cast %184 : vector<8xf32> to vector<8x1xf32>
    %186 = tpu.reciprocal %185 {approx = true} : vector<8x1xf32> -> vector<8x1xf32>
    %187 = vector.broadcast %186 : vector<8x1xf32> to vector<8x8xf32>
    %188 = arith.mulf %183, %187 : vector<8x8xf32>
    %189 = vector.extract_strided_slice %17 {offsets = [8, 16], sizes = [8, 8], strides = [1, 1]} : vector<16x32xf32> to vector<8x8xf32>
    %190 = arith.truncf %188 : vector<8x8xf32> to vector<8x8xbf16>
    %191 = arith.truncf %189 : vector<8x8xf32> to vector<8x8xbf16>
    %cst_60 = arith.constant dense<0.000000e+00> : vector<8x8xf32>
    %192 = tpu.matmul %190, %191, %cst_60 {dimension_numbers = #tpu.dot_dimension_numbers<[1], [0], [0], [1], [0, 0, 1, 1], [], []>} : vector<8x8xbf16>, vector<8x8xbf16>, vector<8x8xf32> -> vector<8x8xf32>
    %193 = vector.extract_strided_slice %19 {offsets = [16, 0], sizes = [8, 32], strides = [1, 1]} : vector<32x32xbf16> to vector<8x32xbf16>
    %194 = arith.truncf %192 : vector<8x8xf32> to vector<8x8xbf16>
    %cst_61 = arith.constant dense<0.000000e+00> : vector<8x32xf32>
    %195 = tpu.matmul %194, %193, %cst_61 {dimension_numbers = #tpu.dot_dimension_numbers<[1], [0], [0], [1], [0, 0, 1, 1], [], []>} : vector<8x8xbf16>, vector<8x32xbf16>, vector<8x32xf32> -> vector<8x32xf32>
    %196 = arith.addf %171, %195 : vector<8x32xf32>
    %197 = vector.extract_strided_slice %15 {offsets = [8, 24], sizes = [8, 8], strides = [1, 1]} : vector<16x32xf32> to vector<8x8xf32>
    %198 = vector.extract_strided_slice %16 {offsets = [8, 24], sizes = [8, 8], strides = [1, 1]} : vector<16x32xf32> to vector<8x8xf32>
    %199 = arith.truncf %197 : vector<8x8xf32> to vector<8x8xbf16>
    %200 = arith.truncf %198 : vector<8x8xf32> to vector<8x8xbf16>
    %cst_62 = arith.constant dense<0.000000e+00> : vector<8x8xf32>
    %201 = tpu.matmul %199, %200, %cst_62 {dimension_numbers = #tpu.dot_dimension_numbers<[1], [1], [0], [0], [0, 0, 1, 0], [], []>} : vector<8x8xbf16>, vector<8x8xbf16>, vector<8x8xf32> -> vector<8x8xf32>
    %cst_63 = arith.constant 0.353553385 : f32
    %202 = vector.broadcast %cst_63 : f32 to vector<8x8xf32>
    %203 = arith.mulf %201, %202 : vector<8x8xf32>
    %cst_64 = arith.constant dense<0xFF800000> : vector<8xf32>
    %204 = vector.multi_reduction <maximumf>, %203, %cst_64 [1] : vector<8x8xf32> to vector<8xf32>
    %205 = vector.shape_cast %204 : vector<8xf32> to vector<8x1xf32>
    %206 = vector.broadcast %205 : vector<8x1xf32> to vector<8x8xf32>
    %207 = arith.subf %203, %206 : vector<8x8xf32>
    %208 = math.exp %207 : vector<8x8xf32>
    %cst_65 = arith.constant dense<0.000000e+00> : vector<8xf32>
    %209 = vector.multi_reduction <add>, %208, %cst_65 [1] : vector<8x8xf32> to vector<8xf32>
    %210 = vector.shape_cast %209 : vector<8xf32> to vector<8x1xf32>
    %211 = tpu.reciprocal %210 {approx = true} : vector<8x1xf32> -> vector<8x1xf32>
    %212 = vector.broadcast %211 : vector<8x1xf32> to vector<8x8xf32>
    %213 = arith.mulf %208, %212 : vector<8x8xf32>
    %214 = vector.extract_strided_slice %17 {offsets = [8, 24], sizes = [8, 8], strides = [1, 1]} : vector<16x32xf32> to vector<8x8xf32>
    %215 = arith.truncf %213 : vector<8x8xf32> to vector<8x8xbf16>
    %216 = arith.truncf %214 : vector<8x8xf32> to vector<8x8xbf16>
    %cst_66 = arith.constant dense<0.000000e+00> : vector<8x8xf32>
    %217 = tpu.matmul %215, %216, %cst_66 {dimension_numbers = #tpu.dot_dimension_numbers<[1], [0], [0], [1], [0, 0, 1, 1], [], []>} : vector<8x8xbf16>, vector<8x8xbf16>, vector<8x8xf32> -> vector<8x8xf32>
    %218 = vector.extract_strided_slice %19 {offsets = [24, 0], sizes = [8, 32], strides = [1, 1]} : vector<32x32xbf16> to vector<8x32xbf16>
    %219 = arith.truncf %217 : vector<8x8xf32> to vector<8x8xbf16>
    %cst_67 = arith.constant dense<0.000000e+00> : vector<8x32xf32>
    %220 = tpu.matmul %219, %218, %cst_67 {dimension_numbers = #tpu.dot_dimension_numbers<[1], [0], [0], [1], [0, 0, 1, 1], [], []>} : vector<8x8xbf16>, vector<8x32xbf16>, vector<8x32xf32> -> vector<8x32xf32>
    %221 = arith.addf %196, %220 : vector<8x32xf32>
    %222 = tpu.concatenate %120, %221 in 0 : vector<8x32xf32>, vector<8x32xf32> -> vector<16x32xf32>
    %c0_68 = arith.constant 0 : index
    %c0_69 = arith.constant 0 : index
    %c0_70 = arith.constant 0 : index
    %c0_71 = arith.constant 0 : index
    %223 = vector.load %arg9[%c0_68, %c0_69, %c0_70, %c0_71] : memref<1x4x1x32xf32, #tpu.memory_space<vmem>>, vector<1x1x1x32xf32>
    %224 = vector.shape_cast %223 : vector<1x1x1x32xf32> to vector<1x32xf32>
    %225 = vector.broadcast %224 : vector<1x32xf32> to vector<16x32xf32>
    %226 = arith.addf %222, %225 : vector<16x32xf32>
    %c0_72 = arith.constant 0 : index
    %c0_73 = arith.constant 0 : index
    %c0_74 = arith.constant 0 : index
    %c0_75 = arith.constant 0 : index
    %227 = vector.load %arg10[%c0_72, %c0_73, %c0_74, %c0_75] : memref<1x4x1x32xf32, #tpu.memory_space<vmem>>, vector<1x1x1x32xf32>
    %228 = vector.shape_cast %227 : vector<1x1x1x32xf32> to vector<1x32xf32>
    %c0_76 = arith.constant 0 : index
    %c0_77 = arith.constant 0 : index
    %c0_78 = arith.constant 0 : index
    %c0_79 = arith.constant 0 : index
    %229 = vector.load %arg11[%c0_76, %c0_77, %c0_78, %c0_79] : memref<1x4x1x32xf32, #tpu.memory_space<vmem>>, vector<1x1x1x32xf32>
    %230 = vector.shape_cast %229 : vector<1x1x1x32xf32> to vector<1x32xf32>
    %231 = arith.addf %6, %226 : vector<16x32xf32>
    %cst_80 = arith.constant dense<0.000000e+00> : vector<16xf32>
    %232 = vector.multi_reduction <add>, %231, %cst_80 [1] : vector<16x32xf32> to vector<16xf32>
    %233 = vector.shape_cast %232 : vector<16xf32> to vector<16x1xf32>
    %cst_81 = arith.constant 3.200000e+01 : f32
    %234 = vector.broadcast %cst_81 : f32 to vector<16x1xf32>
    %235 = arith.divf %233, %234 : vector<16x1xf32>
    %236 = vector.broadcast %235 : vector<16x1xf32> to vector<16x32xf32>
    %237 = arith.subf %231, %236 : vector<16x32xf32>
    %238 = arith.mulf %237, %237 : vector<16x32xf32>
    %cst_82 = arith.constant dense<0.000000e+00> : vector<16xf32>
    %239 = vector.multi_reduction <add>, %238, %cst_82 [1] : vector<16x32xf32> to vector<16xf32>
    %240 = vector.shape_cast %239 : vector<16xf32> to vector<16x1xf32>
    %cst_83 = arith.constant 3.200000e+01 : f32
    %241 = vector.broadcast %cst_83 : f32 to vector<16x1xf32>
    %242 = arith.divf %240, %241 : vector<16x1xf32>
    %243 = vector.broadcast %235 : vector<16x1xf32> to vector<16x32xf32>
    %244 = arith.subf %231, %243 : vector<16x32xf32>
    %cst_84 = arith.constant 9.99999974E-6 : f32
    %245 = vector.broadcast %cst_84 : f32 to vector<16x1xf32>
    %246 = arith.addf %242, %245 : vector<16x1xf32>
    %247 = math.rsqrt %246 : vector<16x1xf32>
    %248 = vector.broadcast %247 : vector<16x1xf32> to vector<16x32xf32>
    %249 = arith.mulf %244, %248 : vector<16x32xf32>
    %250 = vector.broadcast %228 : vector<1x32xf32> to vector<16x32xf32>
    %251 = arith.mulf %249, %250 : vector<16x32xf32>
    %252 = vector.broadcast %230 : vector<1x32xf32> to vector<16x32xf32>
    %253 = arith.addf %251, %252 : vector<16x32xf32>
    %c0_85 = arith.constant 0 : index
    %c0_86 = arith.constant 0 : index
    %c0_87 = arith.constant 0 : index
    %254 = vector.load %arg18[%c0_85, %c0_86, %c0_87] : memref<1x32x5xbf16, #tpu.memory_space<vmem>>, vector<1x32x5xbf16>
    %255 = vector.shape_cast %254 : vector<1x32x5xbf16> to vector<32x5xbf16>
    %256 = arith.truncf %4 : vector<16x32xf32> to vector<16x32xbf16>
    %cst_88 = arith.constant dense<0.000000e+00> : vector<16x5xf32>
    %257 = tpu.matmul %256, %255, %cst_88 {dimension_numbers = #tpu.dot_dimension_numbers<[1], [0], [0], [1], [0, 0, 1, 1], [], []>} : vector<16x32xbf16>, vector<32x5xbf16>, vector<16x5xf32> -> vector<16x5xf32>
    %c0_89 = arith.constant 0 : index
    %c0_90 = arith.constant 0 : index
    %c0_91 = arith.constant 0 : index
    %258 = vector.load %arg19[%c0_89, %c0_90, %c0_91] : memref<1x32x5xbf16, #tpu.memory_space<vmem>>, vector<1x32x5xbf16>
    %259 = vector.shape_cast %258 : vector<1x32x5xbf16> to vector<32x5xbf16>
    %260 = arith.truncf %253 : vector<16x32xf32> to vector<16x32xbf16>
    %cst_92 = arith.constant dense<0.000000e+00> : vector<16x5xf32>
    %261 = tpu.matmul %260, %259, %cst_92 {dimension_numbers = #tpu.dot_dimension_numbers<[1], [0], [0], [1], [0, 0, 1, 1], [], []>} : vector<16x32xbf16>, vector<32x5xbf16>, vector<16x5xf32> -> vector<16x5xf32>
    %262 = arith.addf %257, %261 : vector<16x5xf32>
    %c0_93 = arith.constant 0 : index
    %c0_94 = arith.constant 0 : index
    %c0_95 = arith.constant 0 : index
    %263 = vector.load %arg20[%c0_93, %c0_94, %c0_95] : memref<1x1x5xf32, #tpu.memory_space<vmem>>, vector<1x1x5xf32>
    %264 = vector.shape_cast %263 : vector<1x1x5xf32> to vector<1x5xf32>
    %265 = vector.broadcast %264 : vector<1x5xf32> to vector<16x5xf32>
    %266 = arith.addf %262, %265 : vector<16x5xf32>
    %267 = vector.extract_strided_slice %266 {offsets = [0, 0], sizes = [8, 5], strides = [1, 1]} : vector<16x5xf32> to vector<8x5xf32>
    %cst_96 = arith.constant dense<0.000000e+00> : vector<5xf32>
    %268 = vector.multi_reduction <add>, %267, %cst_96 [0] : vector<8x5xf32> to vector<5xf32>
    %269 = vector.shape_cast %268 : vector<5xf32> to vector<1x5xf32>
    %cst_97 = arith.constant 8.000000e+00 : f32
    %270 = vector.broadcast %cst_97 : f32 to vector<1x5xf32>
    %271 = arith.divf %269, %270 : vector<1x5xf32>
    %cst_98 = arith.constant dense<0xFF800000> : vector<1xf32>
    %272 = vector.multi_reduction <maximumf>, %271, %cst_98 [1] : vector<1x5xf32> to vector<1xf32>
    %273 = vector.shape_cast %272 : vector<1xf32> to vector<1x1xf32>
    %274 = vector.broadcast %273 : vector<1x1xf32> to vector<1x5xf32>
    %275 = arith.subf %271, %274 : vector<1x5xf32>
    %276 = math.exp %275 : vector<1x5xf32>
    %cst_99 = arith.constant dense<0.000000e+00> : vector<1xf32>
    %277 = vector.multi_reduction <add>, %276, %cst_99 [1] : vector<1x5xf32> to vector<1xf32>
    %278 = vector.shape_cast %277 : vector<1xf32> to vector<1x1xf32>
    %279 = tpu.reciprocal %278 {approx = true} : vector<1x1xf32> -> vector<1x1xf32>
    %280 = vector.broadcast %279 : vector<1x1xf32> to vector<1x5xf32>
    %281 = arith.mulf %276, %280 : vector<1x5xf32>
    %282 = vector.extract_strided_slice %281 {offsets = [0, 0], sizes = [1, 1], strides = [1, 1]} : vector<1x5xf32> to vector<1x1xf32>
    %c0_100 = arith.constant 0 : index
    %c0_101 = arith.constant 0 : index
    %c0_102 = arith.constant 0 : index
    %c0_103 = arith.constant 0 : index
    %283 = vector.load %arg5[%c0_100, %c0_101, %c0_102, %c0_103] : memref<2x5x8x32xbf16, #tpu.memory_space<vmem>>, vector<1x1x8x32xbf16>
    %284 = vector.shape_cast %283 : vector<1x1x8x32xbf16> to vector<8x32xbf16>
    %285 = arith.extf %284 : vector<8x32xbf16> to vector<8x32xf32>
    %286 = vector.broadcast %282 : vector<1x1xf32> to vector<8x32xf32>
    %287 = arith.mulf %286, %285 : vector<8x32xf32>
    %288 = vector.extract_strided_slice %281 {offsets = [0, 1], sizes = [1, 1], strides = [1, 1]} : vector<1x5xf32> to vector<1x1xf32>
    %c0_104 = arith.constant 0 : index
    %c1 = arith.constant 1 : index
    %c0_105 = arith.constant 0 : index
    %c0_106 = arith.constant 0 : index
    %289 = vector.load %arg5[%c0_104, %c1, %c0_105, %c0_106] : memref<2x5x8x32xbf16, #tpu.memory_space<vmem>>, vector<1x1x8x32xbf16>
    %290 = vector.shape_cast %289 : vector<1x1x8x32xbf16> to vector<8x32xbf16>
    %291 = arith.extf %290 : vector<8x32xbf16> to vector<8x32xf32>
    %292 = vector.broadcast %288 : vector<1x1xf32> to vector<8x32xf32>
    %293 = arith.mulf %292, %291 : vector<8x32xf32>
    %294 = arith.addf %287, %293 : vector<8x32xf32>
    %295 = vector.extract_strided_slice %281 {offsets = [0, 2], sizes = [1, 1], strides = [1, 1]} : vector<1x5xf32> to vector<1x1xf32>
    %c0_107 = arith.constant 0 : index
    %c2 = arith.constant 2 : index
    %c0_108 = arith.constant 0 : index
    %c0_109 = arith.constant 0 : index
    %296 = vector.load %arg5[%c0_107, %c2, %c0_108, %c0_109] : memref<2x5x8x32xbf16, #tpu.memory_space<vmem>>, vector<1x1x8x32xbf16>
    %297 = vector.shape_cast %296 : vector<1x1x8x32xbf16> to vector<8x32xbf16>
    %298 = arith.extf %297 : vector<8x32xbf16> to vector<8x32xf32>
    %299 = vector.broadcast %295 : vector<1x1xf32> to vector<8x32xf32>
    %300 = arith.mulf %299, %298 : vector<8x32xf32>
    %301 = arith.addf %294, %300 : vector<8x32xf32>
    %302 = vector.extract_strided_slice %281 {offsets = [0, 3], sizes = [1, 1], strides = [1, 1]} : vector<1x5xf32> to vector<1x1xf32>
    %c0_110 = arith.constant 0 : index
    %c3 = arith.constant 3 : index
    %c0_111 = arith.constant 0 : index
    %c0_112 = arith.constant 0 : index
    %303 = vector.load %arg5[%c0_110, %c3, %c0_111, %c0_112] : memref<2x5x8x32xbf16, #tpu.memory_space<vmem>>, vector<1x1x8x32xbf16>
    %304 = vector.shape_cast %303 : vector<1x1x8x32xbf16> to vector<8x32xbf16>
    %305 = arith.extf %304 : vector<8x32xbf16> to vector<8x32xf32>
    %306 = vector.broadcast %302 : vector<1x1xf32> to vector<8x32xf32>
    %307 = arith.mulf %306, %305 : vector<8x32xf32>
    %308 = arith.addf %301, %307 : vector<8x32xf32>
    %309 = vector.extract_strided_slice %281 {offsets = [0, 4], sizes = [1, 1], strides = [1, 1]} : vector<1x5xf32> to vector<1x1xf32>
    %c0_113 = arith.constant 0 : index
    %c4 = arith.constant 4 : index
    %c0_114 = arith.constant 0 : index
    %c0_115 = arith.constant 0 : index
    %310 = vector.load %arg5[%c0_113, %c4, %c0_114, %c0_115] : memref<2x5x8x32xbf16, #tpu.memory_space<vmem>>, vector<1x1x8x32xbf16>
    %311 = vector.shape_cast %310 : vector<1x1x8x32xbf16> to vector<8x32xbf16>
    %312 = arith.extf %311 : vector<8x32xbf16> to vector<8x32xf32>
    %313 = vector.broadcast %309 : vector<1x1xf32> to vector<8x32xf32>
    %314 = arith.mulf %313, %312 : vector<8x32xf32>
    %315 = arith.addf %308, %314 : vector<8x32xf32>
    %316 = vector.extract_strided_slice %266 {offsets = [8, 0], sizes = [8, 5], strides = [1, 1]} : vector<16x5xf32> to vector<8x5xf32>
    %cst_116 = arith.constant dense<0.000000e+00> : vector<5xf32>
    %317 = vector.multi_reduction <add>, %316, %cst_116 [0] : vector<8x5xf32> to vector<5xf32>
    %318 = vector.shape_cast %317 : vector<5xf32> to vector<1x5xf32>
    %cst_117 = arith.constant 8.000000e+00 : f32
    %319 = vector.broadcast %cst_117 : f32 to vector<1x5xf32>
    %320 = arith.divf %318, %319 : vector<1x5xf32>
    %cst_118 = arith.constant dense<0xFF800000> : vector<1xf32>
    %321 = vector.multi_reduction <maximumf>, %320, %cst_118 [1] : vector<1x5xf32> to vector<1xf32>
    %322 = vector.shape_cast %321 : vector<1xf32> to vector<1x1xf32>
    %323 = vector.broadcast %322 : vector<1x1xf32> to vector<1x5xf32>
    %324 = arith.subf %320, %323 : vector<1x5xf32>
    %325 = math.exp %324 : vector<1x5xf32>
    %cst_119 = arith.constant dense<0.000000e+00> : vector<1xf32>
    %326 = vector.multi_reduction <add>, %325, %cst_119 [1] : vector<1x5xf32> to vector<1xf32>
    %327 = vector.shape_cast %326 : vector<1xf32> to vector<1x1xf32>
    %328 = tpu.reciprocal %327 {approx = true} : vector<1x1xf32> -> vector<1x1xf32>
    %329 = vector.broadcast %328 : vector<1x1xf32> to vector<1x5xf32>
    %330 = arith.mulf %325, %329 : vector<1x5xf32>
    %331 = vector.extract_strided_slice %330 {offsets = [0, 0], sizes = [1, 1], strides = [1, 1]} : vector<1x5xf32> to vector<1x1xf32>
    %c1_120 = arith.constant 1 : index
    %c0_121 = arith.constant 0 : index
    %c0_122 = arith.constant 0 : index
    %c0_123 = arith.constant 0 : index
    %332 = vector.load %arg5[%c1_120, %c0_121, %c0_122, %c0_123] : memref<2x5x8x32xbf16, #tpu.memory_space<vmem>>, vector<1x1x8x32xbf16>
    %333 = vector.shape_cast %332 : vector<1x1x8x32xbf16> to vector<8x32xbf16>
    %334 = arith.extf %333 : vector<8x32xbf16> to vector<8x32xf32>
    %335 = vector.broadcast %331 : vector<1x1xf32> to vector<8x32xf32>
    %336 = arith.mulf %335, %334 : vector<8x32xf32>
    %337 = vector.extract_strided_slice %330 {offsets = [0, 1], sizes = [1, 1], strides = [1, 1]} : vector<1x5xf32> to vector<1x1xf32>
    %c1_124 = arith.constant 1 : index
    %c1_125 = arith.constant 1 : index
    %c0_126 = arith.constant 0 : index
    %c0_127 = arith.constant 0 : index
    %338 = vector.load %arg5[%c1_124, %c1_125, %c0_126, %c0_127] : memref<2x5x8x32xbf16, #tpu.memory_space<vmem>>, vector<1x1x8x32xbf16>
    %339 = vector.shape_cast %338 : vector<1x1x8x32xbf16> to vector<8x32xbf16>
    %340 = arith.extf %339 : vector<8x32xbf16> to vector<8x32xf32>
    %341 = vector.broadcast %337 : vector<1x1xf32> to vector<8x32xf32>
    %342 = arith.mulf %341, %340 : vector<8x32xf32>
    %343 = arith.addf %336, %342 : vector<8x32xf32>
    %344 = vector.extract_strided_slice %330 {offsets = [0, 2], sizes = [1, 1], strides = [1, 1]} : vector<1x5xf32> to vector<1x1xf32>
    %c1_128 = arith.constant 1 : index
    %c2_129 = arith.constant 2 : index
    %c0_130 = arith.constant 0 : index
    %c0_131 = arith.constant 0 : index
    %345 = vector.load %arg5[%c1_128, %c2_129, %c0_130, %c0_131] : memref<2x5x8x32xbf16, #tpu.memory_space<vmem>>, vector<1x1x8x32xbf16>
    %346 = vector.shape_cast %345 : vector<1x1x8x32xbf16> to vector<8x32xbf16>
    %347 = arith.extf %346 : vector<8x32xbf16> to vector<8x32xf32>
    %348 = vector.broadcast %344 : vector<1x1xf32> to vector<8x32xf32>
    %349 = arith.mulf %348, %347 : vector<8x32xf32>
    %350 = arith.addf %343, %349 : vector<8x32xf32>
    %351 = vector.extract_strided_slice %330 {offsets = [0, 3], sizes = [1, 1], strides = [1, 1]} : vector<1x5xf32> to vector<1x1xf32>
    %c1_132 = arith.constant 1 : index
    %c3_133 = arith.constant 3 : index
    %c0_134 = arith.constant 0 : index
    %c0_135 = arith.constant 0 : index
    %352 = vector.load %arg5[%c1_132, %c3_133, %c0_134, %c0_135] : memref<2x5x8x32xbf16, #tpu.memory_space<vmem>>, vector<1x1x8x32xbf16>
    %353 = vector.shape_cast %352 : vector<1x1x8x32xbf16> to vector<8x32xbf16>
    %354 = arith.extf %353 : vector<8x32xbf16> to vector<8x32xf32>
    %355 = vector.broadcast %351 : vector<1x1xf32> to vector<8x32xf32>
    %356 = arith.mulf %355, %354 : vector<8x32xf32>
    %357 = arith.addf %350, %356 : vector<8x32xf32>
    %358 = vector.extract_strided_slice %330 {offsets = [0, 4], sizes = [1, 1], strides = [1, 1]} : vector<1x5xf32> to vector<1x1xf32>
    %c1_136 = arith.constant 1 : index
    %c4_137 = arith.constant 4 : index
    %c0_138 = arith.constant 0 : index
    %c0_139 = arith.constant 0 : index
    %359 = vector.load %arg5[%c1_136, %c4_137, %c0_138, %c0_139] : memref<2x5x8x32xbf16, #tpu.memory_space<vmem>>, vector<1x1x8x32xbf16>
    %360 = vector.shape_cast %359 : vector<1x1x8x32xbf16> to vector<8x32xbf16>
    %361 = arith.extf %360 : vector<8x32xbf16> to vector<8x32xf32>
    %362 = vector.broadcast %358 : vector<1x1xf32> to vector<8x32xf32>
    %363 = arith.mulf %362, %361 : vector<8x32xf32>
    %364 = arith.addf %357, %363 : vector<8x32xf32>
    %365 = tpu.concatenate %315, %364 in 0 : vector<8x32xf32>, vector<8x32xf32> -> vector<16x32xf32>
    %c0_140 = arith.constant 0 : index
    %c1_141 = arith.constant 1 : index
    %c0_142 = arith.constant 0 : index
    %c0_143 = arith.constant 0 : index
    %366 = vector.load %arg6[%c0_140, %c1_141, %c0_142, %c0_143] : memref<1x4x32x96xbf16, #tpu.memory_space<vmem>>, vector<1x1x32x96xbf16>
    %367 = vector.shape_cast %366 : vector<1x1x32x96xbf16> to vector<32x96xbf16>
    %c0_144 = arith.constant 0 : index
    %c1_145 = arith.constant 1 : index
    %c0_146 = arith.constant 0 : index
    %c0_147 = arith.constant 0 : index
    %368 = vector.load %arg7[%c0_144, %c1_145, %c0_146, %c0_147] : memref<1x4x1x96xf32, #tpu.memory_space<vmem>>, vector<1x1x1x96xf32>
    %369 = vector.shape_cast %368 : vector<1x1x1x96xf32> to vector<1x96xf32>
    %370 = vector.extract_strided_slice %367 {offsets = [0, 0], sizes = [32, 64], strides = [1, 1]} : vector<32x96xbf16> to vector<32x64xbf16>
    %371 = arith.truncf %365 : vector<16x32xf32> to vector<16x32xbf16>
    %cst_148 = arith.constant dense<0.000000e+00> : vector<16x64xf32>
    %372 = tpu.matmul %371, %370, %cst_148 {dimension_numbers = #tpu.dot_dimension_numbers<[1], [0], [0], [1], [0, 0, 1, 1], [], []>} : vector<16x32xbf16>, vector<32x64xbf16>, vector<16x64xf32> -> vector<16x64xf32>
    %373 = vector.extract_strided_slice %369 {offsets = [0, 0], sizes = [1, 64], strides = [1, 1]} : vector<1x96xf32> to vector<1x64xf32>
    %374 = vector.broadcast %373 : vector<1x64xf32> to vector<16x64xf32>
    %375 = arith.addf %372, %374 : vector<16x64xf32>
    %376 = vector.extract_strided_slice %375 {offsets = [0, 0], sizes = [16, 32], strides = [1, 1]} : vector<16x64xf32> to vector<16x32xf32>
    %377 = vector.extract_strided_slice %375 {offsets = [0, 32], sizes = [16, 32], strides = [1, 1]} : vector<16x64xf32> to vector<16x32xf32>
    %378 = vector.extract_strided_slice %367 {offsets = [0, 64], sizes = [32, 32], strides = [1, 1]} : vector<32x96xbf16> to vector<32x32xbf16>
    %379 = arith.truncf %253 : vector<16x32xf32> to vector<16x32xbf16>
    %cst_149 = arith.constant dense<0.000000e+00> : vector<16x32xf32>
    %380 = tpu.matmul %379, %378, %cst_149 {dimension_numbers = #tpu.dot_dimension_numbers<[1], [0], [0], [1], [0, 0, 1, 1], [], []>} : vector<16x32xbf16>, vector<32x32xbf16>, vector<16x32xf32> -> vector<16x32xf32>
    %381 = vector.extract_strided_slice %369 {offsets = [0, 64], sizes = [1, 32], strides = [1, 1]} : vector<1x96xf32> to vector<1x32xf32>
    %382 = vector.broadcast %381 : vector<1x32xf32> to vector<16x32xf32>
    %383 = arith.addf %380, %382 : vector<16x32xf32>
    %c0_150 = arith.constant 0 : index
    %c1_151 = arith.constant 1 : index
    %c0_152 = arith.constant 0 : index
    %c0_153 = arith.constant 0 : index
    %384 = vector.load %arg8[%c0_150, %c1_151, %c0_152, %c0_153] : memref<1x4x32x32xbf16, #tpu.memory_space<vmem>>, vector<1x1x32x32xbf16>
    %385 = vector.shape_cast %384 : vector<1x1x32x32xbf16> to vector<32x32xbf16>
    %cst_154 = arith.constant 0.000000e+00 : f32
    %386 = vector.broadcast %cst_154 : f32 to vector<8x32xf32>
    %387 = vector.extract_strided_slice %376 {offsets = [0, 0], sizes = [8, 8], strides = [1, 1]} : vector<16x32xf32> to vector<8x8xf32>
    %388 = vector.extract_strided_slice %377 {offsets = [0, 0], sizes = [8, 8], strides = [1, 1]} : vector<16x32xf32> to vector<8x8xf32>
    %389 = arith.truncf %387 : vector<8x8xf32> to vector<8x8xbf16>
    %390 = arith.truncf %388 : vector<8x8xf32> to vector<8x8xbf16>
    %cst_155 = arith.constant dense<0.000000e+00> : vector<8x8xf32>
    %391 = tpu.matmul %389, %390, %cst_155 {dimension_numbers = #tpu.dot_dimension_numbers<[1], [1], [0], [0], [0, 0, 1, 0], [], []>} : vector<8x8xbf16>, vector<8x8xbf16>, vector<8x8xf32> -> vector<8x8xf32>
    %cst_156 = arith.constant 0.353553385 : f32
    %392 = vector.broadcast %cst_156 : f32 to vector<8x8xf32>
    %393 = arith.mulf %391, %392 : vector<8x8xf32>
    %cst_157 = arith.constant dense<0xFF800000> : vector<8xf32>
    %394 = vector.multi_reduction <maximumf>, %393, %cst_157 [1] : vector<8x8xf32> to vector<8xf32>
    %395 = vector.shape_cast %394 : vector<8xf32> to vector<8x1xf32>
    %396 = vector.broadcast %395 : vector<8x1xf32> to vector<8x8xf32>
    %397 = arith.subf %393, %396 : vector<8x8xf32>
    %398 = math.exp %397 : vector<8x8xf32>
    %cst_158 = arith.constant dense<0.000000e+00> : vector<8xf32>
    %399 = vector.multi_reduction <add>, %398, %cst_158 [1] : vector<8x8xf32> to vector<8xf32>
    %400 = vector.shape_cast %399 : vector<8xf32> to vector<8x1xf32>
    %401 = tpu.reciprocal %400 {approx = true} : vector<8x1xf32> -> vector<8x1xf32>
    %402 = vector.broadcast %401 : vector<8x1xf32> to vector<8x8xf32>
    %403 = arith.mulf %398, %402 : vector<8x8xf32>
    %404 = vector.extract_strided_slice %383 {offsets = [0, 0], sizes = [8, 8], strides = [1, 1]} : vector<16x32xf32> to vector<8x8xf32>
    %405 = arith.truncf %403 : vector<8x8xf32> to vector<8x8xbf16>
    %406 = arith.truncf %404 : vector<8x8xf32> to vector<8x8xbf16>
    %cst_159 = arith.constant dense<0.000000e+00> : vector<8x8xf32>
    %407 = tpu.matmul %405, %406, %cst_159 {dimension_numbers = #tpu.dot_dimension_numbers<[1], [0], [0], [1], [0, 0, 1, 1], [], []>} : vector<8x8xbf16>, vector<8x8xbf16>, vector<8x8xf32> -> vector<8x8xf32>
    %408 = vector.extract_strided_slice %385 {offsets = [0, 0], sizes = [8, 32], strides = [1, 1]} : vector<32x32xbf16> to vector<8x32xbf16>
    %409 = arith.truncf %407 : vector<8x8xf32> to vector<8x8xbf16>
    %cst_160 = arith.constant dense<0.000000e+00> : vector<8x32xf32>
    %410 = tpu.matmul %409, %408, %cst_160 {dimension_numbers = #tpu.dot_dimension_numbers<[1], [0], [0], [1], [0, 0, 1, 1], [], []>} : vector<8x8xbf16>, vector<8x32xbf16>, vector<8x32xf32> -> vector<8x32xf32>
    %411 = arith.addf %386, %410 : vector<8x32xf32>
    %412 = vector.extract_strided_slice %376 {offsets = [0, 8], sizes = [8, 8], strides = [1, 1]} : vector<16x32xf32> to vector<8x8xf32>
    %413 = vector.extract_strided_slice %377 {offsets = [0, 8], sizes = [8, 8], strides = [1, 1]} : vector<16x32xf32> to vector<8x8xf32>
    %414 = arith.truncf %412 : vector<8x8xf32> to vector<8x8xbf16>
    %415 = arith.truncf %413 : vector<8x8xf32> to vector<8x8xbf16>
    %cst_161 = arith.constant dense<0.000000e+00> : vector<8x8xf32>
    %416 = tpu.matmul %414, %415, %cst_161 {dimension_numbers = #tpu.dot_dimension_numbers<[1], [1], [0], [0], [0, 0, 1, 0], [], []>} : vector<8x8xbf16>, vector<8x8xbf16>, vector<8x8xf32> -> vector<8x8xf32>
    %cst_162 = arith.constant 0.353553385 : f32
    %417 = vector.broadcast %cst_162 : f32 to vector<8x8xf32>
    %418 = arith.mulf %416, %417 : vector<8x8xf32>
    %cst_163 = arith.constant dense<0xFF800000> : vector<8xf32>
    %419 = vector.multi_reduction <maximumf>, %418, %cst_163 [1] : vector<8x8xf32> to vector<8xf32>
    %420 = vector.shape_cast %419 : vector<8xf32> to vector<8x1xf32>
    %421 = vector.broadcast %420 : vector<8x1xf32> to vector<8x8xf32>
    %422 = arith.subf %418, %421 : vector<8x8xf32>
    %423 = math.exp %422 : vector<8x8xf32>
    %cst_164 = arith.constant dense<0.000000e+00> : vector<8xf32>
    %424 = vector.multi_reduction <add>, %423, %cst_164 [1] : vector<8x8xf32> to vector<8xf32>
    %425 = vector.shape_cast %424 : vector<8xf32> to vector<8x1xf32>
    %426 = tpu.reciprocal %425 {approx = true} : vector<8x1xf32> -> vector<8x1xf32>
    %427 = vector.broadcast %426 : vector<8x1xf32> to vector<8x8xf32>
    %428 = arith.mulf %423, %427 : vector<8x8xf32>
    %429 = vector.extract_strided_slice %383 {offsets = [0, 8], sizes = [8, 8], strides = [1, 1]} : vector<16x32xf32> to vector<8x8xf32>
    %430 = arith.truncf %428 : vector<8x8xf32> to vector<8x8xbf16>
    %431 = arith.truncf %429 : vector<8x8xf32> to vector<8x8xbf16>
    %cst_165 = arith.constant dense<0.000000e+00> : vector<8x8xf32>
    %432 = tpu.matmul %430, %431, %cst_165 {dimension_numbers = #tpu.dot_dimension_numbers<[1], [0], [0], [1], [0, 0, 1, 1], [], []>} : vector<8x8xbf16>, vector<8x8xbf16>, vector<8x8xf32> -> vector<8x8xf32>
    %433 = vector.extract_strided_slice %385 {offsets = [8, 0], sizes = [8, 32], strides = [1, 1]} : vector<32x32xbf16> to vector<8x32xbf16>
    %434 = arith.truncf %432 : vector<8x8xf32> to vector<8x8xbf16>
    %cst_166 = arith.constant dense<0.000000e+00> : vector<8x32xf32>
    %435 = tpu.matmul %434, %433, %cst_166 {dimension_numbers = #tpu.dot_dimension_numbers<[1], [0], [0], [1], [0, 0, 1, 1], [], []>} : vector<8x8xbf16>, vector<8x32xbf16>, vector<8x32xf32> -> vector<8x32xf32>
    %436 = arith.addf %411, %435 : vector<8x32xf32>
    %437 = vector.extract_strided_slice %376 {offsets = [0, 16], sizes = [8, 8], strides = [1, 1]} : vector<16x32xf32> to vector<8x8xf32>
    %438 = vector.extract_strided_slice %377 {offsets = [0, 16], sizes = [8, 8], strides = [1, 1]} : vector<16x32xf32> to vector<8x8xf32>
    %439 = arith.truncf %437 : vector<8x8xf32> to vector<8x8xbf16>
    %440 = arith.truncf %438 : vector<8x8xf32> to vector<8x8xbf16>
    %cst_167 = arith.constant dense<0.000000e+00> : vector<8x8xf32>
    %441 = tpu.matmul %439, %440, %cst_167 {dimension_numbers = #tpu.dot_dimension_numbers<[1], [1], [0], [0], [0, 0, 1, 0], [], []>} : vector<8x8xbf16>, vector<8x8xbf16>, vector<8x8xf32> -> vector<8x8xf32>
    %cst_168 = arith.constant 0.353553385 : f32
    %442 = vector.broadcast %cst_168 : f32 to vector<8x8xf32>
    %443 = arith.mulf %441, %442 : vector<8x8xf32>
    %cst_169 = arith.constant dense<0xFF800000> : vector<8xf32>
    %444 = vector.multi_reduction <maximumf>, %443, %cst_169 [1] : vector<8x8xf32> to vector<8xf32>
    %445 = vector.shape_cast %444 : vector<8xf32> to vector<8x1xf32>
    %446 = vector.broadcast %445 : vector<8x1xf32> to vector<8x8xf32>
    %447 = arith.subf %443, %446 : vector<8x8xf32>
    %448 = math.exp %447 : vector<8x8xf32>
    %cst_170 = arith.constant dense<0.000000e+00> : vector<8xf32>
    %449 = vector.multi_reduction <add>, %448, %cst_170 [1] : vector<8x8xf32> to vector<8xf32>
    %450 = vector.shape_cast %449 : vector<8xf32> to vector<8x1xf32>
    %451 = tpu.reciprocal %450 {approx = true} : vector<8x1xf32> -> vector<8x1xf32>
    %452 = vector.broadcast %451 : vector<8x1xf32> to vector<8x8xf32>
    %453 = arith.mulf %448, %452 : vector<8x8xf32>
    %454 = vector.extract_strided_slice %383 {offsets = [0, 16], sizes = [8, 8], strides = [1, 1]} : vector<16x32xf32> to vector<8x8xf32>
    %455 = arith.truncf %453 : vector<8x8xf32> to vector<8x8xbf16>
    %456 = arith.truncf %454 : vector<8x8xf32> to vector<8x8xbf16>
    %cst_171 = arith.constant dense<0.000000e+00> : vector<8x8xf32>
    %457 = tpu.matmul %455, %456, %cst_171 {dimension_numbers = #tpu.dot_dimension_numbers<[1], [0], [0], [1], [0, 0, 1, 1], [], []>} : vector<8x8xbf16>, vector<8x8xbf16>, vector<8x8xf32> -> vector<8x8xf32>
    %458 = vector.extract_strided_slice %385 {offsets = [16, 0], sizes = [8, 32], strides = [1, 1]} : vector<32x32xbf16> to vector<8x32xbf16>
    %459 = arith.truncf %457 : vector<8x8xf32> to vector<8x8xbf16>
    %cst_172 = arith.constant dense<0.000000e+00> : vector<8x32xf32>
    %460 = tpu.matmul %459, %458, %cst_172 {dimension_numbers = #tpu.dot_dimension_numbers<[1], [0], [0], [1], [0, 0, 1, 1], [], []>} : vector<8x8xbf16>, vector<8x32xbf16>, vector<8x32xf32> -> vector<8x32xf32>
    %461 = arith.addf %436, %460 : vector<8x32xf32>
    %462 = vector.extract_strided_slice %376 {offsets = [0, 24], sizes = [8, 8], strides = [1, 1]} : vector<16x32xf32> to vector<8x8xf32>
    %463 = vector.extract_strided_slice %377 {offsets = [0, 24], sizes = [8, 8], strides = [1, 1]} : vector<16x32xf32> to vector<8x8xf32>
    %464 = arith.truncf %462 : vector<8x8xf32> to vector<8x8xbf16>
    %465 = arith.truncf %463 : vector<8x8xf32> to vector<8x8xbf16>
    %cst_173 = arith.constant dense<0.000000e+00> : vector<8x8xf32>
    %466 = tpu.matmul %464, %465, %cst_173 {dimension_numbers = #tpu.dot_dimension_numbers<[1], [1], [0], [0], [0, 0, 1, 0], [], []>} : vector<8x8xbf16>, vector<8x8xbf16>, vector<8x8xf32> -> vector<8x8xf32>
    %cst_174 = arith.constant 0.353553385 : f32
    %467 = vector.broadcast %cst_174 : f32 to vector<8x8xf32>
    %468 = arith.mulf %466, %467 : vector<8x8xf32>
    %cst_175 = arith.constant dense<0xFF800000> : vector<8xf32>
    %469 = vector.multi_reduction <maximumf>, %468, %cst_175 [1] : vector<8x8xf32> to vector<8xf32>
    %470 = vector.shape_cast %469 : vector<8xf32> to vector<8x1xf32>
    %471 = vector.broadcast %470 : vector<8x1xf32> to vector<8x8xf32>
    %472 = arith.subf %468, %471 : vector<8x8xf32>
    %473 = math.exp %472 : vector<8x8xf32>
    %cst_176 = arith.constant dense<0.000000e+00> : vector<8xf32>
    %474 = vector.multi_reduction <add>, %473, %cst_176 [1] : vector<8x8xf32> to vector<8xf32>
    %475 = vector.shape_cast %474 : vector<8xf32> to vector<8x1xf32>
    %476 = tpu.reciprocal %475 {approx = true} : vector<8x1xf32> -> vector<8x1xf32>
    %477 = vector.broadcast %476 : vector<8x1xf32> to vector<8x8xf32>
    %478 = arith.mulf %473, %477 : vector<8x8xf32>
    %479 = vector.extract_strided_slice %383 {offsets = [0, 24], sizes = [8, 8], strides = [1, 1]} : vector<16x32xf32> to vector<8x8xf32>
    %480 = arith.truncf %478 : vector<8x8xf32> to vector<8x8xbf16>
    %481 = arith.truncf %479 : vector<8x8xf32> to vector<8x8xbf16>
    %cst_177 = arith.constant dense<0.000000e+00> : vector<8x8xf32>
    %482 = tpu.matmul %480, %481, %cst_177 {dimension_numbers = #tpu.dot_dimension_numbers<[1], [0], [0], [1], [0, 0, 1, 1], [], []>} : vector<8x8xbf16>, vector<8x8xbf16>, vector<8x8xf32> -> vector<8x8xf32>
    %483 = vector.extract_strided_slice %385 {offsets = [24, 0], sizes = [8, 32], strides = [1, 1]} : vector<32x32xbf16> to vector<8x32xbf16>
    %484 = arith.truncf %482 : vector<8x8xf32> to vector<8x8xbf16>
    %cst_178 = arith.constant dense<0.000000e+00> : vector<8x32xf32>
    %485 = tpu.matmul %484, %483, %cst_178 {dimension_numbers = #tpu.dot_dimension_numbers<[1], [0], [0], [1], [0, 0, 1, 1], [], []>} : vector<8x8xbf16>, vector<8x32xbf16>, vector<8x32xf32> -> vector<8x32xf32>
    %486 = arith.addf %461, %485 : vector<8x32xf32>
    %cst_179 = arith.constant 0.000000e+00 : f32
    %487 = vector.broadcast %cst_179 : f32 to vector<8x32xf32>
    %488 = vector.extract_strided_slice %376 {offsets = [8, 0], sizes = [8, 8], strides = [1, 1]} : vector<16x32xf32> to vector<8x8xf32>
    %489 = vector.extract_strided_slice %377 {offsets = [8, 0], sizes = [8, 8], strides = [1, 1]} : vector<16x32xf32> to vector<8x8xf32>
    %490 = arith.truncf %488 : vector<8x8xf32> to vector<8x8xbf16>
    %491 = arith.truncf %489 : vector<8x8xf32> to vector<8x8xbf16>
    %cst_180 = arith.constant dense<0.000000e+00> : vector<8x8xf32>
    %492 = tpu.matmul %490, %491, %cst_180 {dimension_numbers = #tpu.dot_dimension_numbers<[1], [1], [0], [0], [0, 0, 1, 0], [], []>} : vector<8x8xbf16>, vector<8x8xbf16>, vector<8x8xf32> -> vector<8x8xf32>
    %cst_181 = arith.constant 0.353553385 : f32
    %493 = vector.broadcast %cst_181 : f32 to vector<8x8xf32>
    %494 = arith.mulf %492, %493 : vector<8x8xf32>
    %cst_182 = arith.constant dense<0xFF800000> : vector<8xf32>
    %495 = vector.multi_reduction <maximumf>, %494, %cst_182 [1] : vector<8x8xf32> to vector<8xf32>
    %496 = vector.shape_cast %495 : vector<8xf32> to vector<8x1xf32>
    %497 = vector.broadcast %496 : vector<8x1xf32> to vector<8x8xf32>
    %498 = arith.subf %494, %497 : vector<8x8xf32>
    %499 = math.exp %498 : vector<8x8xf32>
    %cst_183 = arith.constant dense<0.000000e+00> : vector<8xf32>
    %500 = vector.multi_reduction <add>, %499, %cst_183 [1] : vector<8x8xf32> to vector<8xf32>
    %501 = vector.shape_cast %500 : vector<8xf32> to vector<8x1xf32>
    %502 = tpu.reciprocal %501 {approx = true} : vector<8x1xf32> -> vector<8x1xf32>
    %503 = vector.broadcast %502 : vector<8x1xf32> to vector<8x8xf32>
    %504 = arith.mulf %499, %503 : vector<8x8xf32>
    %505 = vector.extract_strided_slice %383 {offsets = [8, 0], sizes = [8, 8], strides = [1, 1]} : vector<16x32xf32> to vector<8x8xf32>
    %506 = arith.truncf %504 : vector<8x8xf32> to vector<8x8xbf16>
    %507 = arith.truncf %505 : vector<8x8xf32> to vector<8x8xbf16>
    %cst_184 = arith.constant dense<0.000000e+00> : vector<8x8xf32>
    %508 = tpu.matmul %506, %507, %cst_184 {dimension_numbers = #tpu.dot_dimension_numbers<[1], [0], [0], [1], [0, 0, 1, 1], [], []>} : vector<8x8xbf16>, vector<8x8xbf16>, vector<8x8xf32> -> vector<8x8xf32>
    %509 = vector.extract_strided_slice %385 {offsets = [0, 0], sizes = [8, 32], strides = [1, 1]} : vector<32x32xbf16> to vector<8x32xbf16>
    %510 = arith.truncf %508 : vector<8x8xf32> to vector<8x8xbf16>
    %cst_185 = arith.constant dense<0.000000e+00> : vector<8x32xf32>
    %511 = tpu.matmul %510, %509, %cst_185 {dimension_numbers = #tpu.dot_dimension_numbers<[1], [0], [0], [1], [0, 0, 1, 1], [], []>} : vector<8x8xbf16>, vector<8x32xbf16>, vector<8x32xf32> -> vector<8x32xf32>
    %512 = arith.addf %487, %511 : vector<8x32xf32>
    %513 = vector.extract_strided_slice %376 {offsets = [8, 8], sizes = [8, 8], strides = [1, 1]} : vector<16x32xf32> to vector<8x8xf32>
    %514 = vector.extract_strided_slice %377 {offsets = [8, 8], sizes = [8, 8], strides = [1, 1]} : vector<16x32xf32> to vector<8x8xf32>
    %515 = arith.truncf %513 : vector<8x8xf32> to vector<8x8xbf16>
    %516 = arith.truncf %514 : vector<8x8xf32> to vector<8x8xbf16>
    %cst_186 = arith.constant dense<0.000000e+00> : vector<8x8xf32>
    %517 = tpu.matmul %515, %516, %cst_186 {dimension_numbers = #tpu.dot_dimension_numbers<[1], [1], [0], [0], [0, 0, 1, 0], [], []>} : vector<8x8xbf16>, vector<8x8xbf16>, vector<8x8xf32> -> vector<8x8xf32>
    %cst_187 = arith.constant 0.353553385 : f32
    %518 = vector.broadcast %cst_187 : f32 to vector<8x8xf32>
    %519 = arith.mulf %517, %518 : vector<8x8xf32>
    %cst_188 = arith.constant dense<0xFF800000> : vector<8xf32>
    %520 = vector.multi_reduction <maximumf>, %519, %cst_188 [1] : vector<8x8xf32> to vector<8xf32>
    %521 = vector.shape_cast %520 : vector<8xf32> to vector<8x1xf32>
    %522 = vector.broadcast %521 : vector<8x1xf32> to vector<8x8xf32>
    %523 = arith.subf %519, %522 : vector<8x8xf32>
    %524 = math.exp %523 : vector<8x8xf32>
    %cst_189 = arith.constant dense<0.000000e+00> : vector<8xf32>
    %525 = vector.multi_reduction <add>, %524, %cst_189 [1] : vector<8x8xf32> to vector<8xf32>
    %526 = vector.shape_cast %525 : vector<8xf32> to vector<8x1xf32>
    %527 = tpu.reciprocal %526 {approx = true} : vector<8x1xf32> -> vector<8x1xf32>
    %528 = vector.broadcast %527 : vector<8x1xf32> to vector<8x8xf32>
    %529 = arith.mulf %524, %528 : vector<8x8xf32>
    %530 = vector.extract_strided_slice %383 {offsets = [8, 8], sizes = [8, 8], strides = [1, 1]} : vector<16x32xf32> to vector<8x8xf32>
    %531 = arith.truncf %529 : vector<8x8xf32> to vector<8x8xbf16>
    %532 = arith.truncf %530 : vector<8x8xf32> to vector<8x8xbf16>
    %cst_190 = arith.constant dense<0.000000e+00> : vector<8x8xf32>
    %533 = tpu.matmul %531, %532, %cst_190 {dimension_numbers = #tpu.dot_dimension_numbers<[1], [0], [0], [1], [0, 0, 1, 1], [], []>} : vector<8x8xbf16>, vector<8x8xbf16>, vector<8x8xf32> -> vector<8x8xf32>
    %534 = vector.extract_strided_slice %385 {offsets = [8, 0], sizes = [8, 32], strides = [1, 1]} : vector<32x32xbf16> to vector<8x32xbf16>
    %535 = arith.truncf %533 : vector<8x8xf32> to vector<8x8xbf16>
    %cst_191 = arith.constant dense<0.000000e+00> : vector<8x32xf32>
    %536 = tpu.matmul %535, %534, %cst_191 {dimension_numbers = #tpu.dot_dimension_numbers<[1], [0], [0], [1], [0, 0, 1, 1], [], []>} : vector<8x8xbf16>, vector<8x32xbf16>, vector<8x32xf32> -> vector<8x32xf32>
    %537 = arith.addf %512, %536 : vector<8x32xf32>
    %538 = vector.extract_strided_slice %376 {offsets = [8, 16], sizes = [8, 8], strides = [1, 1]} : vector<16x32xf32> to vector<8x8xf32>
    %539 = vector.extract_strided_slice %377 {offsets = [8, 16], sizes = [8, 8], strides = [1, 1]} : vector<16x32xf32> to vector<8x8xf32>
    %540 = arith.truncf %538 : vector<8x8xf32> to vector<8x8xbf16>
    %541 = arith.truncf %539 : vector<8x8xf32> to vector<8x8xbf16>
    %cst_192 = arith.constant dense<0.000000e+00> : vector<8x8xf32>
    %542 = tpu.matmul %540, %541, %cst_192 {dimension_numbers = #tpu.dot_dimension_numbers<[1], [1], [0], [0], [0, 0, 1, 0], [], []>} : vector<8x8xbf16>, vector<8x8xbf16>, vector<8x8xf32> -> vector<8x8xf32>
    %cst_193 = arith.constant 0.353553385 : f32
    %543 = vector.broadcast %cst_193 : f32 to vector<8x8xf32>
    %544 = arith.mulf %542, %543 : vector<8x8xf32>
    %cst_194 = arith.constant dense<0xFF800000> : vector<8xf32>
    %545 = vector.multi_reduction <maximumf>, %544, %cst_194 [1] : vector<8x8xf32> to vector<8xf32>
    %546 = vector.shape_cast %545 : vector<8xf32> to vector<8x1xf32>
    %547 = vector.broadcast %546 : vector<8x1xf32> to vector<8x8xf32>
    %548 = arith.subf %544, %547 : vector<8x8xf32>
    %549 = math.exp %548 : vector<8x8xf32>
    %cst_195 = arith.constant dense<0.000000e+00> : vector<8xf32>
    %550 = vector.multi_reduction <add>, %549, %cst_195 [1] : vector<8x8xf32> to vector<8xf32>
    %551 = vector.shape_cast %550 : vector<8xf32> to vector<8x1xf32>
    %552 = tpu.reciprocal %551 {approx = true} : vector<8x1xf32> -> vector<8x1xf32>
    %553 = vector.broadcast %552 : vector<8x1xf32> to vector<8x8xf32>
    %554 = arith.mulf %549, %553 : vector<8x8xf32>
    %555 = vector.extract_strided_slice %383 {offsets = [8, 16], sizes = [8, 8], strides = [1, 1]} : vector<16x32xf32> to vector<8x8xf32>
    %556 = arith.truncf %554 : vector<8x8xf32> to vector<8x8xbf16>
    %557 = arith.truncf %555 : vector<8x8xf32> to vector<8x8xbf16>
    %cst_196 = arith.constant dense<0.000000e+00> : vector<8x8xf32>
    %558 = tpu.matmul %556, %557, %cst_196 {dimension_numbers = #tpu.dot_dimension_numbers<[1], [0], [0], [1], [0, 0, 1, 1], [], []>} : vector<8x8xbf16>, vector<8x8xbf16>, vector<8x8xf32> -> vector<8x8xf32>
    %559 = vector.extract_strided_slice %385 {offsets = [16, 0], sizes = [8, 32], strides = [1, 1]} : vector<32x32xbf16> to vector<8x32xbf16>
    %560 = arith.truncf %558 : vector<8x8xf32> to vector<8x8xbf16>
    %cst_197 = arith.constant dense<0.000000e+00> : vector<8x32xf32>
    %561 = tpu.matmul %560, %559, %cst_197 {dimension_numbers = #tpu.dot_dimension_numbers<[1], [0], [0], [1], [0, 0, 1, 1], [], []>} : vector<8x8xbf16>, vector<8x32xbf16>, vector<8x32xf32> -> vector<8x32xf32>
    %562 = arith.addf %537, %561 : vector<8x32xf32>
    %563 = vector.extract_strided_slice %376 {offsets = [8, 24], sizes = [8, 8], strides = [1, 1]} : vector<16x32xf32> to vector<8x8xf32>
    %564 = vector.extract_strided_slice %377 {offsets = [8, 24], sizes = [8, 8], strides = [1, 1]} : vector<16x32xf32> to vector<8x8xf32>
    %565 = arith.truncf %563 : vector<8x8xf32> to vector<8x8xbf16>
    %566 = arith.truncf %564 : vector<8x8xf32> to vector<8x8xbf16>
    %cst_198 = arith.constant dense<0.000000e+00> : vector<8x8xf32>
    %567 = tpu.matmul %565, %566, %cst_198 {dimension_numbers = #tpu.dot_dimension_numbers<[1], [1], [0], [0], [0, 0, 1, 0], [], []>} : vector<8x8xbf16>, vector<8x8xbf16>, vector<8x8xf32> -> vector<8x8xf32>
    %cst_199 = arith.constant 0.353553385 : f32
    %568 = vector.broadcast %cst_199 : f32 to vector<8x8xf32>
    %569 = arith.mulf %567, %568 : vector<8x8xf32>
    %cst_200 = arith.constant dense<0xFF800000> : vector<8xf32>
    %570 = vector.multi_reduction <maximumf>, %569, %cst_200 [1] : vector<8x8xf32> to vector<8xf32>
    %571 = vector.shape_cast %570 : vector<8xf32> to vector<8x1xf32>
    %572 = vector.broadcast %571 : vector<8x1xf32> to vector<8x8xf32>
    %573 = arith.subf %569, %572 : vector<8x8xf32>
    %574 = math.exp %573 : vector<8x8xf32>
    %cst_201 = arith.constant dense<0.000000e+00> : vector<8xf32>
    %575 = vector.multi_reduction <add>, %574, %cst_201 [1] : vector<8x8xf32> to vector<8xf32>
    %576 = vector.shape_cast %575 : vector<8xf32> to vector<8x1xf32>
    %577 = tpu.reciprocal %576 {approx = true} : vector<8x1xf32> -> vector<8x1xf32>
    %578 = vector.broadcast %577 : vector<8x1xf32> to vector<8x8xf32>
    %579 = arith.mulf %574, %578 : vector<8x8xf32>
    %580 = vector.extract_strided_slice %383 {offsets = [8, 24], sizes = [8, 8], strides = [1, 1]} : vector<16x32xf32> to vector<8x8xf32>
    %581 = arith.truncf %579 : vector<8x8xf32> to vector<8x8xbf16>
    %582 = arith.truncf %580 : vector<8x8xf32> to vector<8x8xbf16>
    %cst_202 = arith.constant dense<0.000000e+00> : vector<8x8xf32>
    %583 = tpu.matmul %581, %582, %cst_202 {dimension_numbers = #tpu.dot_dimension_numbers<[1], [0], [0], [1], [0, 0, 1, 1], [], []>} : vector<8x8xbf16>, vector<8x8xbf16>, vector<8x8xf32> -> vector<8x8xf32>
    %584 = vector.extract_strided_slice %385 {offsets = [24, 0], sizes = [8, 32], strides = [1, 1]} : vector<32x32xbf16> to vector<8x32xbf16>
    %585 = arith.truncf %583 : vector<8x8xf32> to vector<8x8xbf16>
    %cst_203 = arith.constant dense<0.000000e+00> : vector<8x32xf32>
    %586 = tpu.matmul %585, %584, %cst_203 {dimension_numbers = #tpu.dot_dimension_numbers<[1], [0], [0], [1], [0, 0, 1, 1], [], []>} : vector<8x8xbf16>, vector<8x32xbf16>, vector<8x32xf32> -> vector<8x32xf32>
    %587 = arith.addf %562, %586 : vector<8x32xf32>
    %588 = tpu.concatenate %486, %587 in 0 : vector<8x32xf32>, vector<8x32xf32> -> vector<16x32xf32>
    %c0_204 = arith.constant 0 : index
    %c1_205 = arith.constant 1 : index
    %c0_206 = arith.constant 0 : index
    %c0_207 = arith.constant 0 : index
    %589 = vector.load %arg9[%c0_204, %c1_205, %c0_206, %c0_207] : memref<1x4x1x32xf32, #tpu.memory_space<vmem>>, vector<1x1x1x32xf32>
    %590 = vector.shape_cast %589 : vector<1x1x1x32xf32> to vector<1x32xf32>
    %591 = vector.broadcast %590 : vector<1x32xf32> to vector<16x32xf32>
    %592 = arith.addf %588, %591 : vector<16x32xf32>
    %c0_208 = arith.constant 0 : index
    %c1_209 = arith.constant 1 : index
    %c0_210 = arith.constant 0 : index
    %c0_211 = arith.constant 0 : index
    %593 = vector.load %arg10[%c0_208, %c1_209, %c0_210, %c0_211] : memref<1x4x1x32xf32, #tpu.memory_space<vmem>>, vector<1x1x1x32xf32>
    %594 = vector.shape_cast %593 : vector<1x1x1x32xf32> to vector<1x32xf32>
    %c0_212 = arith.constant 0 : index
    %c1_213 = arith.constant 1 : index
    %c0_214 = arith.constant 0 : index
    %c0_215 = arith.constant 0 : index
    %595 = vector.load %arg11[%c0_212, %c1_213, %c0_214, %c0_215] : memref<1x4x1x32xf32, #tpu.memory_space<vmem>>, vector<1x1x1x32xf32>
    %596 = vector.shape_cast %595 : vector<1x1x1x32xf32> to vector<1x32xf32>
    %597 = arith.addf %365, %592 : vector<16x32xf32>
    %cst_216 = arith.constant dense<0.000000e+00> : vector<16xf32>
    %598 = vector.multi_reduction <add>, %597, %cst_216 [1] : vector<16x32xf32> to vector<16xf32>
    %599 = vector.shape_cast %598 : vector<16xf32> to vector<16x1xf32>
    %cst_217 = arith.constant 3.200000e+01 : f32
    %600 = vector.broadcast %cst_217 : f32 to vector<16x1xf32>
    %601 = arith.divf %599, %600 : vector<16x1xf32>
    %602 = vector.broadcast %601 : vector<16x1xf32> to vector<16x32xf32>
    %603 = arith.subf %597, %602 : vector<16x32xf32>
    %604 = arith.mulf %603, %603 : vector<16x32xf32>
    %cst_218 = arith.constant dense<0.000000e+00> : vector<16xf32>
    %605 = vector.multi_reduction <add>, %604, %cst_218 [1] : vector<16x32xf32> to vector<16xf32>
    %606 = vector.shape_cast %605 : vector<16xf32> to vector<16x1xf32>
    %cst_219 = arith.constant 3.200000e+01 : f32
    %607 = vector.broadcast %cst_219 : f32 to vector<16x1xf32>
    %608 = arith.divf %606, %607 : vector<16x1xf32>
    %609 = vector.broadcast %601 : vector<16x1xf32> to vector<16x32xf32>
    %610 = arith.subf %597, %609 : vector<16x32xf32>
    %cst_220 = arith.constant 9.99999974E-6 : f32
    %611 = vector.broadcast %cst_220 : f32 to vector<16x1xf32>
    %612 = arith.addf %608, %611 : vector<16x1xf32>
    %613 = math.rsqrt %612 : vector<16x1xf32>
    %614 = vector.broadcast %613 : vector<16x1xf32> to vector<16x32xf32>
    %615 = arith.mulf %610, %614 : vector<16x32xf32>
    %616 = vector.broadcast %594 : vector<1x32xf32> to vector<16x32xf32>
    %617 = arith.mulf %615, %616 : vector<16x32xf32>
    %618 = vector.broadcast %596 : vector<1x32xf32> to vector<16x32xf32>
    %619 = arith.addf %617, %618 : vector<16x32xf32>
    %c0_221 = arith.constant 0 : index
    %c0_222 = arith.constant 0 : index
    %c0_223 = arith.constant 0 : index
    %c0_224 = arith.constant 0 : index
    %620 = vector.load %arg12[%c0_221, %c0_222, %c0_223, %c0_224] : memref<1x2x32x64xbf16, #tpu.memory_space<vmem>>, vector<1x1x32x64xbf16>
    %621 = vector.shape_cast %620 : vector<1x1x32x64xbf16> to vector<32x64xbf16>
    %622 = arith.truncf %619 : vector<16x32xf32> to vector<16x32xbf16>
    %cst_225 = arith.constant dense<0.000000e+00> : vector<16x64xf32>
    %623 = tpu.matmul %622, %621, %cst_225 {dimension_numbers = #tpu.dot_dimension_numbers<[1], [0], [0], [1], [0, 0, 1, 1], [], []>} : vector<16x32xbf16>, vector<32x64xbf16>, vector<16x64xf32> -> vector<16x64xf32>
    %c0_226 = arith.constant 0 : index
    %c0_227 = arith.constant 0 : index
    %c0_228 = arith.constant 0 : index
    %c0_229 = arith.constant 0 : index
    %624 = vector.load %arg13[%c0_226, %c0_227, %c0_228, %c0_229] : memref<1x2x1x64xf32, #tpu.memory_space<vmem>>, vector<1x1x1x64xf32>
    %625 = vector.shape_cast %624 : vector<1x1x1x64xf32> to vector<1x64xf32>
    %626 = vector.broadcast %625 : vector<1x64xf32> to vector<16x64xf32>
    %627 = arith.addf %623, %626 : vector<16x64xf32>
    %cst_230 = arith.constant 0.000000e+00 : f32
    %628 = vector.broadcast %cst_230 : f32 to vector<16x64xf32>
    %629 = arith.maximumf %627, %628 : vector<16x64xf32>
    %c0_231 = arith.constant 0 : index
    %c0_232 = arith.constant 0 : index
    %c0_233 = arith.constant 0 : index
    %c0_234 = arith.constant 0 : index
    %630 = vector.load %arg14[%c0_231, %c0_232, %c0_233, %c0_234] : memref<1x2x64x32xbf16, #tpu.memory_space<vmem>>, vector<1x1x64x32xbf16>
    %631 = vector.shape_cast %630 : vector<1x1x64x32xbf16> to vector<64x32xbf16>
    %632 = arith.truncf %629 : vector<16x64xf32> to vector<16x64xbf16>
    %cst_235 = arith.constant dense<0.000000e+00> : vector<16x32xf32>
    %633 = tpu.matmul %632, %631, %cst_235 {dimension_numbers = #tpu.dot_dimension_numbers<[1], [0], [0], [1], [0, 0, 1, 1], [], []>} : vector<16x64xbf16>, vector<64x32xbf16>, vector<16x32xf32> -> vector<16x32xf32>
    %c0_236 = arith.constant 0 : index
    %c0_237 = arith.constant 0 : index
    %c0_238 = arith.constant 0 : index
    %c0_239 = arith.constant 0 : index
    %634 = vector.load %arg15[%c0_236, %c0_237, %c0_238, %c0_239] : memref<1x2x1x32xf32, #tpu.memory_space<vmem>>, vector<1x1x1x32xf32>
    %635 = vector.shape_cast %634 : vector<1x1x1x32xf32> to vector<1x32xf32>
    %636 = vector.broadcast %635 : vector<1x32xf32> to vector<16x32xf32>
    %637 = arith.addf %633, %636 : vector<16x32xf32>
    %c0_240 = arith.constant 0 : index
    %c0_241 = arith.constant 0 : index
    %c0_242 = arith.constant 0 : index
    %c0_243 = arith.constant 0 : index
    %638 = vector.load %arg16[%c0_240, %c0_241, %c0_242, %c0_243] : memref<1x2x1x32xf32, #tpu.memory_space<vmem>>, vector<1x1x1x32xf32>
    %639 = vector.shape_cast %638 : vector<1x1x1x32xf32> to vector<1x32xf32>
    %c0_244 = arith.constant 0 : index
    %c0_245 = arith.constant 0 : index
    %c0_246 = arith.constant 0 : index
    %c0_247 = arith.constant 0 : index
    %640 = vector.load %arg17[%c0_244, %c0_245, %c0_246, %c0_247] : memref<1x2x1x32xf32, #tpu.memory_space<vmem>>, vector<1x1x1x32xf32>
    %641 = vector.shape_cast %640 : vector<1x1x1x32xf32> to vector<1x32xf32>
    %642 = arith.addf %619, %637 : vector<16x32xf32>
    %cst_248 = arith.constant dense<0.000000e+00> : vector<16xf32>
    %643 = vector.multi_reduction <add>, %642, %cst_248 [1] : vector<16x32xf32> to vector<16xf32>
    %644 = vector.shape_cast %643 : vector<16xf32> to vector<16x1xf32>
    %cst_249 = arith.constant 3.200000e+01 : f32
    %645 = vector.broadcast %cst_249 : f32 to vector<16x1xf32>
    %646 = arith.divf %644, %645 : vector<16x1xf32>
    %647 = vector.broadcast %646 : vector<16x1xf32> to vector<16x32xf32>
    %648 = arith.subf %642, %647 : vector<16x32xf32>
    %649 = arith.mulf %648, %648 : vector<16x32xf32>
    %cst_250 = arith.constant dense<0.000000e+00> : vector<16xf32>
    %650 = vector.multi_reduction <add>, %649, %cst_250 [1] : vector<16x32xf32> to vector<16xf32>
    %651 = vector.shape_cast %650 : vector<16xf32> to vector<16x1xf32>
    %cst_251 = arith.constant 3.200000e+01 : f32
    %652 = vector.broadcast %cst_251 : f32 to vector<16x1xf32>
    %653 = arith.divf %651, %652 : vector<16x1xf32>
    %654 = vector.broadcast %646 : vector<16x1xf32> to vector<16x32xf32>
    %655 = arith.subf %642, %654 : vector<16x32xf32>
    %cst_252 = arith.constant 9.99999974E-6 : f32
    %656 = vector.broadcast %cst_252 : f32 to vector<16x1xf32>
    %657 = arith.addf %653, %656 : vector<16x1xf32>
    %658 = math.rsqrt %657 : vector<16x1xf32>
    %659 = vector.broadcast %658 : vector<16x1xf32> to vector<16x32xf32>
    %660 = arith.mulf %655, %659 : vector<16x32xf32>
    %661 = vector.broadcast %639 : vector<1x32xf32> to vector<16x32xf32>
    %662 = arith.mulf %660, %661 : vector<16x32xf32>
    %663 = vector.broadcast %641 : vector<1x32xf32> to vector<16x32xf32>
    %664 = arith.addf %662, %663 : vector<16x32xf32>
    %c0_253 = arith.constant 0 : index
    %c0_254 = arith.constant 0 : index
    %c0_255 = arith.constant 0 : index
    %665 = vector.load %arg21[%c0_253, %c0_254, %c0_255] : memref<1x32x3xbf16, #tpu.memory_space<vmem>>, vector<1x32x3xbf16>
    %666 = vector.shape_cast %665 : vector<1x32x3xbf16> to vector<32x3xbf16>
    %667 = arith.truncf %4 : vector<16x32xf32> to vector<16x32xbf16>
    %cst_256 = arith.constant dense<0.000000e+00> : vector<16x3xf32>
    %668 = tpu.matmul %667, %666, %cst_256 {dimension_numbers = #tpu.dot_dimension_numbers<[1], [0], [0], [1], [0, 0, 1, 1], [], []>} : vector<16x32xbf16>, vector<32x3xbf16>, vector<16x3xf32> -> vector<16x3xf32>
    %c0_257 = arith.constant 0 : index
    %c0_258 = arith.constant 0 : index
    %c0_259 = arith.constant 0 : index
    %669 = vector.load %arg22[%c0_257, %c0_258, %c0_259] : memref<1x32x3xbf16, #tpu.memory_space<vmem>>, vector<1x32x3xbf16>
    %670 = vector.shape_cast %669 : vector<1x32x3xbf16> to vector<32x3xbf16>
    %671 = arith.truncf %664 : vector<16x32xf32> to vector<16x32xbf16>
    %cst_260 = arith.constant dense<0.000000e+00> : vector<16x3xf32>
    %672 = tpu.matmul %671, %670, %cst_260 {dimension_numbers = #tpu.dot_dimension_numbers<[1], [0], [0], [1], [0, 0, 1, 1], [], []>} : vector<16x32xbf16>, vector<32x3xbf16>, vector<16x3xf32> -> vector<16x3xf32>
    %673 = arith.addf %668, %672 : vector<16x3xf32>
    %c0_261 = arith.constant 0 : index
    %c0_262 = arith.constant 0 : index
    %c0_263 = arith.constant 0 : index
    %674 = vector.load %arg23[%c0_261, %c0_262, %c0_263] : memref<1x1x3xf32, #tpu.memory_space<vmem>>, vector<1x1x3xf32>
    %675 = vector.shape_cast %674 : vector<1x1x3xf32> to vector<1x3xf32>
    %676 = vector.broadcast %675 : vector<1x3xf32> to vector<16x3xf32>
    %677 = arith.addf %673, %676 : vector<16x3xf32>
    %678 = vector.extract_strided_slice %677 {offsets = [0, 0], sizes = [8, 3], strides = [1, 1]} : vector<16x3xf32> to vector<8x3xf32>
    %cst_264 = arith.constant dense<0.000000e+00> : vector<3xf32>
    %679 = vector.multi_reduction <add>, %678, %cst_264 [0] : vector<8x3xf32> to vector<3xf32>
    %680 = vector.shape_cast %679 : vector<3xf32> to vector<1x3xf32>
    %cst_265 = arith.constant 8.000000e+00 : f32
    %681 = vector.broadcast %cst_265 : f32 to vector<1x3xf32>
    %682 = arith.divf %680, %681 : vector<1x3xf32>
    %cst_266 = arith.constant dense<0xFF800000> : vector<1xf32>
    %683 = vector.multi_reduction <maximumf>, %682, %cst_266 [1] : vector<1x3xf32> to vector<1xf32>
    %684 = vector.shape_cast %683 : vector<1xf32> to vector<1x1xf32>
    %685 = vector.broadcast %684 : vector<1x1xf32> to vector<1x3xf32>
    %686 = arith.subf %682, %685 : vector<1x3xf32>
    %687 = math.exp %686 : vector<1x3xf32>
    %cst_267 = arith.constant dense<0.000000e+00> : vector<1xf32>
    %688 = vector.multi_reduction <add>, %687, %cst_267 [1] : vector<1x3xf32> to vector<1xf32>
    %689 = vector.shape_cast %688 : vector<1xf32> to vector<1x1xf32>
    %690 = tpu.reciprocal %689 {approx = true} : vector<1x1xf32> -> vector<1x1xf32>
    %691 = vector.broadcast %690 : vector<1x1xf32> to vector<1x3xf32>
    %692 = arith.mulf %687, %691 : vector<1x3xf32>
    %693 = vector.extract_strided_slice %692 {offsets = [0, 0], sizes = [1, 1], strides = [1, 1]} : vector<1x3xf32> to vector<1x1xf32>
    %c0_268 = arith.constant 0 : index
    %c0_269 = arith.constant 0 : index
    %c0_270 = arith.constant 0 : index
    %c0_271 = arith.constant 0 : index
    %694 = vector.load %arg4[%c0_268, %c0_269, %c0_270, %c0_271] : memref<2x3x8x32xbf16, #tpu.memory_space<vmem>>, vector<1x1x8x32xbf16>
    %695 = vector.shape_cast %694 : vector<1x1x8x32xbf16> to vector<8x32xbf16>
    %696 = arith.extf %695 : vector<8x32xbf16> to vector<8x32xf32>
    %697 = vector.broadcast %693 : vector<1x1xf32> to vector<8x32xf32>
    %698 = arith.mulf %697, %696 : vector<8x32xf32>
    %699 = vector.extract_strided_slice %692 {offsets = [0, 1], sizes = [1, 1], strides = [1, 1]} : vector<1x3xf32> to vector<1x1xf32>
    %c0_272 = arith.constant 0 : index
    %c1_273 = arith.constant 1 : index
    %c0_274 = arith.constant 0 : index
    %c0_275 = arith.constant 0 : index
    %700 = vector.load %arg4[%c0_272, %c1_273, %c0_274, %c0_275] : memref<2x3x8x32xbf16, #tpu.memory_space<vmem>>, vector<1x1x8x32xbf16>
    %701 = vector.shape_cast %700 : vector<1x1x8x32xbf16> to vector<8x32xbf16>
    %702 = arith.extf %701 : vector<8x32xbf16> to vector<8x32xf32>
    %703 = vector.broadcast %699 : vector<1x1xf32> to vector<8x32xf32>
    %704 = arith.mulf %703, %702 : vector<8x32xf32>
    %705 = arith.addf %698, %704 : vector<8x32xf32>
    %706 = vector.extract_strided_slice %692 {offsets = [0, 2], sizes = [1, 1], strides = [1, 1]} : vector<1x3xf32> to vector<1x1xf32>
    %c0_276 = arith.constant 0 : index
    %c2_277 = arith.constant 2 : index
    %c0_278 = arith.constant 0 : index
    %c0_279 = arith.constant 0 : index
    %707 = vector.load %arg4[%c0_276, %c2_277, %c0_278, %c0_279] : memref<2x3x8x32xbf16, #tpu.memory_space<vmem>>, vector<1x1x8x32xbf16>
    %708 = vector.shape_cast %707 : vector<1x1x8x32xbf16> to vector<8x32xbf16>
    %709 = arith.extf %708 : vector<8x32xbf16> to vector<8x32xf32>
    %710 = vector.broadcast %706 : vector<1x1xf32> to vector<8x32xf32>
    %711 = arith.mulf %710, %709 : vector<8x32xf32>
    %712 = arith.addf %705, %711 : vector<8x32xf32>
    %713 = vector.extract_strided_slice %677 {offsets = [8, 0], sizes = [8, 3], strides = [1, 1]} : vector<16x3xf32> to vector<8x3xf32>
    %cst_280 = arith.constant dense<0.000000e+00> : vector<3xf32>
    %714 = vector.multi_reduction <add>, %713, %cst_280 [0] : vector<8x3xf32> to vector<3xf32>
    %715 = vector.shape_cast %714 : vector<3xf32> to vector<1x3xf32>
    %cst_281 = arith.constant 8.000000e+00 : f32
    %716 = vector.broadcast %cst_281 : f32 to vector<1x3xf32>
    %717 = arith.divf %715, %716 : vector<1x3xf32>
    %cst_282 = arith.constant dense<0xFF800000> : vector<1xf32>
    %718 = vector.multi_reduction <maximumf>, %717, %cst_282 [1] : vector<1x3xf32> to vector<1xf32>
    %719 = vector.shape_cast %718 : vector<1xf32> to vector<1x1xf32>
    %720 = vector.broadcast %719 : vector<1x1xf32> to vector<1x3xf32>
    %721 = arith.subf %717, %720 : vector<1x3xf32>
    %722 = math.exp %721 : vector<1x3xf32>
    %cst_283 = arith.constant dense<0.000000e+00> : vector<1xf32>
    %723 = vector.multi_reduction <add>, %722, %cst_283 [1] : vector<1x3xf32> to vector<1xf32>
    %724 = vector.shape_cast %723 : vector<1xf32> to vector<1x1xf32>
    %725 = tpu.reciprocal %724 {approx = true} : vector<1x1xf32> -> vector<1x1xf32>
    %726 = vector.broadcast %725 : vector<1x1xf32> to vector<1x3xf32>
    %727 = arith.mulf %722, %726 : vector<1x3xf32>
    %728 = vector.extract_strided_slice %727 {offsets = [0, 0], sizes = [1, 1], strides = [1, 1]} : vector<1x3xf32> to vector<1x1xf32>
    %c1_284 = arith.constant 1 : index
    %c0_285 = arith.constant 0 : index
    %c0_286 = arith.constant 0 : index
    %c0_287 = arith.constant 0 : index
    %729 = vector.load %arg4[%c1_284, %c0_285, %c0_286, %c0_287] : memref<2x3x8x32xbf16, #tpu.memory_space<vmem>>, vector<1x1x8x32xbf16>
    %730 = vector.shape_cast %729 : vector<1x1x8x32xbf16> to vector<8x32xbf16>
    %731 = arith.extf %730 : vector<8x32xbf16> to vector<8x32xf32>
    %732 = vector.broadcast %728 : vector<1x1xf32> to vector<8x32xf32>
    %733 = arith.mulf %732, %731 : vector<8x32xf32>
    %734 = vector.extract_strided_slice %727 {offsets = [0, 1], sizes = [1, 1], strides = [1, 1]} : vector<1x3xf32> to vector<1x1xf32>
    %c1_288 = arith.constant 1 : index
    %c1_289 = arith.constant 1 : index
    %c0_290 = arith.constant 0 : index
    %c0_291 = arith.constant 0 : index
    %735 = vector.load %arg4[%c1_288, %c1_289, %c0_290, %c0_291] : memref<2x3x8x32xbf16, #tpu.memory_space<vmem>>, vector<1x1x8x32xbf16>
    %736 = vector.shape_cast %735 : vector<1x1x8x32xbf16> to vector<8x32xbf16>
    %737 = arith.extf %736 : vector<8x32xbf16> to vector<8x32xf32>
    %738 = vector.broadcast %734 : vector<1x1xf32> to vector<8x32xf32>
    %739 = arith.mulf %738, %737 : vector<8x32xf32>
    %740 = arith.addf %733, %739 : vector<8x32xf32>
    %741 = vector.extract_strided_slice %727 {offsets = [0, 2], sizes = [1, 1], strides = [1, 1]} : vector<1x3xf32> to vector<1x1xf32>
    %c1_292 = arith.constant 1 : index
    %c2_293 = arith.constant 2 : index
    %c0_294 = arith.constant 0 : index
    %c0_295 = arith.constant 0 : index
    %742 = vector.load %arg4[%c1_292, %c2_293, %c0_294, %c0_295] : memref<2x3x8x32xbf16, #tpu.memory_space<vmem>>, vector<1x1x8x32xbf16>
    %743 = vector.shape_cast %742 : vector<1x1x8x32xbf16> to vector<8x32xbf16>
    %744 = arith.extf %743 : vector<8x32xbf16> to vector<8x32xf32>
    %745 = vector.broadcast %741 : vector<1x1xf32> to vector<8x32xf32>
    %746 = arith.mulf %745, %744 : vector<8x32xf32>
    %747 = arith.addf %740, %746 : vector<8x32xf32>
    %748 = tpu.concatenate %712, %747 in 0 : vector<8x32xf32>, vector<8x32xf32> -> vector<16x32xf32>
    %c0_296 = arith.constant 0 : index
    %c2_297 = arith.constant 2 : index
    %c0_298 = arith.constant 0 : index
    %c0_299 = arith.constant 0 : index
    %749 = vector.load %arg6[%c0_296, %c2_297, %c0_298, %c0_299] : memref<1x4x32x96xbf16, #tpu.memory_space<vmem>>, vector<1x1x32x96xbf16>
    %750 = vector.shape_cast %749 : vector<1x1x32x96xbf16> to vector<32x96xbf16>
    %c0_300 = arith.constant 0 : index
    %c2_301 = arith.constant 2 : index
    %c0_302 = arith.constant 0 : index
    %c0_303 = arith.constant 0 : index
    %751 = vector.load %arg7[%c0_300, %c2_301, %c0_302, %c0_303] : memref<1x4x1x96xf32, #tpu.memory_space<vmem>>, vector<1x1x1x96xf32>
    %752 = vector.shape_cast %751 : vector<1x1x1x96xf32> to vector<1x96xf32>
    %753 = vector.extract_strided_slice %750 {offsets = [0, 0], sizes = [32, 32], strides = [1, 1]} : vector<32x96xbf16> to vector<32x32xbf16>
    %754 = arith.truncf %4 : vector<16x32xf32> to vector<16x32xbf16>
    %cst_304 = arith.constant dense<0.000000e+00> : vector<16x32xf32>
    %755 = tpu.matmul %754, %753, %cst_304 {dimension_numbers = #tpu.dot_dimension_numbers<[1], [0], [0], [1], [0, 0, 1, 1], [], []>} : vector<16x32xbf16>, vector<32x32xbf16>, vector<16x32xf32> -> vector<16x32xf32>
    %756 = vector.extract_strided_slice %752 {offsets = [0, 0], sizes = [1, 32], strides = [1, 1]} : vector<1x96xf32> to vector<1x32xf32>
    %757 = vector.broadcast %756 : vector<1x32xf32> to vector<16x32xf32>
    %758 = arith.addf %755, %757 : vector<16x32xf32>
    %759 = vector.extract_strided_slice %750 {offsets = [0, 32], sizes = [32, 32], strides = [1, 1]} : vector<32x96xbf16> to vector<32x32xbf16>
    %760 = arith.truncf %748 : vector<16x32xf32> to vector<16x32xbf16>
    %cst_305 = arith.constant dense<0.000000e+00> : vector<16x32xf32>
    %761 = tpu.matmul %760, %759, %cst_305 {dimension_numbers = #tpu.dot_dimension_numbers<[1], [0], [0], [1], [0, 0, 1, 1], [], []>} : vector<16x32xbf16>, vector<32x32xbf16>, vector<16x32xf32> -> vector<16x32xf32>
    %762 = vector.extract_strided_slice %752 {offsets = [0, 32], sizes = [1, 32], strides = [1, 1]} : vector<1x96xf32> to vector<1x32xf32>
    %763 = vector.broadcast %762 : vector<1x32xf32> to vector<16x32xf32>
    %764 = arith.addf %761, %763 : vector<16x32xf32>
    %765 = vector.extract_strided_slice %750 {offsets = [0, 64], sizes = [32, 32], strides = [1, 1]} : vector<32x96xbf16> to vector<32x32xbf16>
    %766 = arith.truncf %664 : vector<16x32xf32> to vector<16x32xbf16>
    %cst_306 = arith.constant dense<0.000000e+00> : vector<16x32xf32>
    %767 = tpu.matmul %766, %765, %cst_306 {dimension_numbers = #tpu.dot_dimension_numbers<[1], [0], [0], [1], [0, 0, 1, 1], [], []>} : vector<16x32xbf16>, vector<32x32xbf16>, vector<16x32xf32> -> vector<16x32xf32>
    %768 = vector.extract_strided_slice %752 {offsets = [0, 64], sizes = [1, 32], strides = [1, 1]} : vector<1x96xf32> to vector<1x32xf32>
    %769 = vector.broadcast %768 : vector<1x32xf32> to vector<16x32xf32>
    %770 = arith.addf %767, %769 : vector<16x32xf32>
    %c0_307 = arith.constant 0 : index
    %c2_308 = arith.constant 2 : index
    %c0_309 = arith.constant 0 : index
    %c0_310 = arith.constant 0 : index
    %771 = vector.load %arg8[%c0_307, %c2_308, %c0_309, %c0_310] : memref<1x4x32x32xbf16, #tpu.memory_space<vmem>>, vector<1x1x32x32xbf16>
    %772 = vector.shape_cast %771 : vector<1x1x32x32xbf16> to vector<32x32xbf16>
    %cst_311 = arith.constant 0.000000e+00 : f32
    %773 = vector.broadcast %cst_311 : f32 to vector<8x32xf32>
    %774 = vector.extract_strided_slice %758 {offsets = [0, 0], sizes = [8, 8], strides = [1, 1]} : vector<16x32xf32> to vector<8x8xf32>
    %775 = vector.extract_strided_slice %764 {offsets = [0, 0], sizes = [8, 8], strides = [1, 1]} : vector<16x32xf32> to vector<8x8xf32>
    %776 = arith.truncf %774 : vector<8x8xf32> to vector<8x8xbf16>
    %777 = arith.truncf %775 : vector<8x8xf32> to vector<8x8xbf16>
    %cst_312 = arith.constant dense<0.000000e+00> : vector<8x8xf32>
    %778 = tpu.matmul %776, %777, %cst_312 {dimension_numbers = #tpu.dot_dimension_numbers<[1], [1], [0], [0], [0, 0, 1, 0], [], []>} : vector<8x8xbf16>, vector<8x8xbf16>, vector<8x8xf32> -> vector<8x8xf32>
    %cst_313 = arith.constant 0.353553385 : f32
    %779 = vector.broadcast %cst_313 : f32 to vector<8x8xf32>
    %780 = arith.mulf %778, %779 : vector<8x8xf32>
    %cst_314 = arith.constant dense<0xFF800000> : vector<8xf32>
    %781 = vector.multi_reduction <maximumf>, %780, %cst_314 [1] : vector<8x8xf32> to vector<8xf32>
    %782 = vector.shape_cast %781 : vector<8xf32> to vector<8x1xf32>
    %783 = vector.broadcast %782 : vector<8x1xf32> to vector<8x8xf32>
    %784 = arith.subf %780, %783 : vector<8x8xf32>
    %785 = math.exp %784 : vector<8x8xf32>
    %cst_315 = arith.constant dense<0.000000e+00> : vector<8xf32>
    %786 = vector.multi_reduction <add>, %785, %cst_315 [1] : vector<8x8xf32> to vector<8xf32>
    %787 = vector.shape_cast %786 : vector<8xf32> to vector<8x1xf32>
    %788 = tpu.reciprocal %787 {approx = true} : vector<8x1xf32> -> vector<8x1xf32>
    %789 = vector.broadcast %788 : vector<8x1xf32> to vector<8x8xf32>
    %790 = arith.mulf %785, %789 : vector<8x8xf32>
    %791 = vector.extract_strided_slice %770 {offsets = [0, 0], sizes = [8, 8], strides = [1, 1]} : vector<16x32xf32> to vector<8x8xf32>
    %792 = arith.truncf %790 : vector<8x8xf32> to vector<8x8xbf16>
    %793 = arith.truncf %791 : vector<8x8xf32> to vector<8x8xbf16>
    %cst_316 = arith.constant dense<0.000000e+00> : vector<8x8xf32>
    %794 = tpu.matmul %792, %793, %cst_316 {dimension_numbers = #tpu.dot_dimension_numbers<[1], [0], [0], [1], [0, 0, 1, 1], [], []>} : vector<8x8xbf16>, vector<8x8xbf16>, vector<8x8xf32> -> vector<8x8xf32>
    %795 = vector.extract_strided_slice %772 {offsets = [0, 0], sizes = [8, 32], strides = [1, 1]} : vector<32x32xbf16> to vector<8x32xbf16>
    %796 = arith.truncf %794 : vector<8x8xf32> to vector<8x8xbf16>
    %cst_317 = arith.constant dense<0.000000e+00> : vector<8x32xf32>
    %797 = tpu.matmul %796, %795, %cst_317 {dimension_numbers = #tpu.dot_dimension_numbers<[1], [0], [0], [1], [0, 0, 1, 1], [], []>} : vector<8x8xbf16>, vector<8x32xbf16>, vector<8x32xf32> -> vector<8x32xf32>
    %798 = arith.addf %773, %797 : vector<8x32xf32>
    %799 = vector.extract_strided_slice %758 {offsets = [0, 8], sizes = [8, 8], strides = [1, 1]} : vector<16x32xf32> to vector<8x8xf32>
    %800 = vector.extract_strided_slice %764 {offsets = [0, 8], sizes = [8, 8], strides = [1, 1]} : vector<16x32xf32> to vector<8x8xf32>
    %801 = arith.truncf %799 : vector<8x8xf32> to vector<8x8xbf16>
    %802 = arith.truncf %800 : vector<8x8xf32> to vector<8x8xbf16>
    %cst_318 = arith.constant dense<0.000000e+00> : vector<8x8xf32>
    %803 = tpu.matmul %801, %802, %cst_318 {dimension_numbers = #tpu.dot_dimension_numbers<[1], [1], [0], [0], [0, 0, 1, 0], [], []>} : vector<8x8xbf16>, vector<8x8xbf16>, vector<8x8xf32> -> vector<8x8xf32>
    %cst_319 = arith.constant 0.353553385 : f32
    %804 = vector.broadcast %cst_319 : f32 to vector<8x8xf32>
    %805 = arith.mulf %803, %804 : vector<8x8xf32>
    %cst_320 = arith.constant dense<0xFF800000> : vector<8xf32>
    %806 = vector.multi_reduction <maximumf>, %805, %cst_320 [1] : vector<8x8xf32> to vector<8xf32>
    %807 = vector.shape_cast %806 : vector<8xf32> to vector<8x1xf32>
    %808 = vector.broadcast %807 : vector<8x1xf32> to vector<8x8xf32>
    %809 = arith.subf %805, %808 : vector<8x8xf32>
    %810 = math.exp %809 : vector<8x8xf32>
    %cst_321 = arith.constant dense<0.000000e+00> : vector<8xf32>
    %811 = vector.multi_reduction <add>, %810, %cst_321 [1] : vector<8x8xf32> to vector<8xf32>
    %812 = vector.shape_cast %811 : vector<8xf32> to vector<8x1xf32>
    %813 = tpu.reciprocal %812 {approx = true} : vector<8x1xf32> -> vector<8x1xf32>
    %814 = vector.broadcast %813 : vector<8x1xf32> to vector<8x8xf32>
    %815 = arith.mulf %810, %814 : vector<8x8xf32>
    %816 = vector.extract_strided_slice %770 {offsets = [0, 8], sizes = [8, 8], strides = [1, 1]} : vector<16x32xf32> to vector<8x8xf32>
    %817 = arith.truncf %815 : vector<8x8xf32> to vector<8x8xbf16>
    %818 = arith.truncf %816 : vector<8x8xf32> to vector<8x8xbf16>
    %cst_322 = arith.constant dense<0.000000e+00> : vector<8x8xf32>
    %819 = tpu.matmul %817, %818, %cst_322 {dimension_numbers = #tpu.dot_dimension_numbers<[1], [0], [0], [1], [0, 0, 1, 1], [], []>} : vector<8x8xbf16>, vector<8x8xbf16>, vector<8x8xf32> -> vector<8x8xf32>
    %820 = vector.extract_strided_slice %772 {offsets = [8, 0], sizes = [8, 32], strides = [1, 1]} : vector<32x32xbf16> to vector<8x32xbf16>
    %821 = arith.truncf %819 : vector<8x8xf32> to vector<8x8xbf16>
    %cst_323 = arith.constant dense<0.000000e+00> : vector<8x32xf32>
    %822 = tpu.matmul %821, %820, %cst_323 {dimension_numbers = #tpu.dot_dimension_numbers<[1], [0], [0], [1], [0, 0, 1, 1], [], []>} : vector<8x8xbf16>, vector<8x32xbf16>, vector<8x32xf32> -> vector<8x32xf32>
    %823 = arith.addf %798, %822 : vector<8x32xf32>
    %824 = vector.extract_strided_slice %758 {offsets = [0, 16], sizes = [8, 8], strides = [1, 1]} : vector<16x32xf32> to vector<8x8xf32>
    %825 = vector.extract_strided_slice %764 {offsets = [0, 16], sizes = [8, 8], strides = [1, 1]} : vector<16x32xf32> to vector<8x8xf32>
    %826 = arith.truncf %824 : vector<8x8xf32> to vector<8x8xbf16>
    %827 = arith.truncf %825 : vector<8x8xf32> to vector<8x8xbf16>
    %cst_324 = arith.constant dense<0.000000e+00> : vector<8x8xf32>
    %828 = tpu.matmul %826, %827, %cst_324 {dimension_numbers = #tpu.dot_dimension_numbers<[1], [1], [0], [0], [0, 0, 1, 0], [], []>} : vector<8x8xbf16>, vector<8x8xbf16>, vector<8x8xf32> -> vector<8x8xf32>
    %cst_325 = arith.constant 0.353553385 : f32
    %829 = vector.broadcast %cst_325 : f32 to vector<8x8xf32>
    %830 = arith.mulf %828, %829 : vector<8x8xf32>
    %cst_326 = arith.constant dense<0xFF800000> : vector<8xf32>
    %831 = vector.multi_reduction <maximumf>, %830, %cst_326 [1] : vector<8x8xf32> to vector<8xf32>
    %832 = vector.shape_cast %831 : vector<8xf32> to vector<8x1xf32>
    %833 = vector.broadcast %832 : vector<8x1xf32> to vector<8x8xf32>
    %834 = arith.subf %830, %833 : vector<8x8xf32>
    %835 = math.exp %834 : vector<8x8xf32>
    %cst_327 = arith.constant dense<0.000000e+00> : vector<8xf32>
    %836 = vector.multi_reduction <add>, %835, %cst_327 [1] : vector<8x8xf32> to vector<8xf32>
    %837 = vector.shape_cast %836 : vector<8xf32> to vector<8x1xf32>
    %838 = tpu.reciprocal %837 {approx = true} : vector<8x1xf32> -> vector<8x1xf32>
    %839 = vector.broadcast %838 : vector<8x1xf32> to vector<8x8xf32>
    %840 = arith.mulf %835, %839 : vector<8x8xf32>
    %841 = vector.extract_strided_slice %770 {offsets = [0, 16], sizes = [8, 8], strides = [1, 1]} : vector<16x32xf32> to vector<8x8xf32>
    %842 = arith.truncf %840 : vector<8x8xf32> to vector<8x8xbf16>
    %843 = arith.truncf %841 : vector<8x8xf32> to vector<8x8xbf16>
    %cst_328 = arith.constant dense<0.000000e+00> : vector<8x8xf32>
    %844 = tpu.matmul %842, %843, %cst_328 {dimension_numbers = #tpu.dot_dimension_numbers<[1], [0], [0], [1], [0, 0, 1, 1], [], []>} : vector<8x8xbf16>, vector<8x8xbf16>, vector<8x8xf32> -> vector<8x8xf32>
    %845 = vector.extract_strided_slice %772 {offsets = [16, 0], sizes = [8, 32], strides = [1, 1]} : vector<32x32xbf16> to vector<8x32xbf16>
    %846 = arith.truncf %844 : vector<8x8xf32> to vector<8x8xbf16>
    %cst_329 = arith.constant dense<0.000000e+00> : vector<8x32xf32>
    %847 = tpu.matmul %846, %845, %cst_329 {dimension_numbers = #tpu.dot_dimension_numbers<[1], [0], [0], [1], [0, 0, 1, 1], [], []>} : vector<8x8xbf16>, vector<8x32xbf16>, vector<8x32xf32> -> vector<8x32xf32>
    %848 = arith.addf %823, %847 : vector<8x32xf32>
    %849 = vector.extract_strided_slice %758 {offsets = [0, 24], sizes = [8, 8], strides = [1, 1]} : vector<16x32xf32> to vector<8x8xf32>
    %850 = vector.extract_strided_slice %764 {offsets = [0, 24], sizes = [8, 8], strides = [1, 1]} : vector<16x32xf32> to vector<8x8xf32>
    %851 = arith.truncf %849 : vector<8x8xf32> to vector<8x8xbf16>
    %852 = arith.truncf %850 : vector<8x8xf32> to vector<8x8xbf16>
    %cst_330 = arith.constant dense<0.000000e+00> : vector<8x8xf32>
    %853 = tpu.matmul %851, %852, %cst_330 {dimension_numbers = #tpu.dot_dimension_numbers<[1], [1], [0], [0], [0, 0, 1, 0], [], []>} : vector<8x8xbf16>, vector<8x8xbf16>, vector<8x8xf32> -> vector<8x8xf32>
    %cst_331 = arith.constant 0.353553385 : f32
    %854 = vector.broadcast %cst_331 : f32 to vector<8x8xf32>
    %855 = arith.mulf %853, %854 : vector<8x8xf32>
    %cst_332 = arith.constant dense<0xFF800000> : vector<8xf32>
    %856 = vector.multi_reduction <maximumf>, %855, %cst_332 [1] : vector<8x8xf32> to vector<8xf32>
    %857 = vector.shape_cast %856 : vector<8xf32> to vector<8x1xf32>
    %858 = vector.broadcast %857 : vector<8x1xf32> to vector<8x8xf32>
    %859 = arith.subf %855, %858 : vector<8x8xf32>
    %860 = math.exp %859 : vector<8x8xf32>
    %cst_333 = arith.constant dense<0.000000e+00> : vector<8xf32>
    %861 = vector.multi_reduction <add>, %860, %cst_333 [1] : vector<8x8xf32> to vector<8xf32>
    %862 = vector.shape_cast %861 : vector<8xf32> to vector<8x1xf32>
    %863 = tpu.reciprocal %862 {approx = true} : vector<8x1xf32> -> vector<8x1xf32>
    %864 = vector.broadcast %863 : vector<8x1xf32> to vector<8x8xf32>
    %865 = arith.mulf %860, %864 : vector<8x8xf32>
    %866 = vector.extract_strided_slice %770 {offsets = [0, 24], sizes = [8, 8], strides = [1, 1]} : vector<16x32xf32> to vector<8x8xf32>
    %867 = arith.truncf %865 : vector<8x8xf32> to vector<8x8xbf16>
    %868 = arith.truncf %866 : vector<8x8xf32> to vector<8x8xbf16>
    %cst_334 = arith.constant dense<0.000000e+00> : vector<8x8xf32>
    %869 = tpu.matmul %867, %868, %cst_334 {dimension_numbers = #tpu.dot_dimension_numbers<[1], [0], [0], [1], [0, 0, 1, 1], [], []>} : vector<8x8xbf16>, vector<8x8xbf16>, vector<8x8xf32> -> vector<8x8xf32>
    %870 = vector.extract_strided_slice %772 {offsets = [24, 0], sizes = [8, 32], strides = [1, 1]} : vector<32x32xbf16> to vector<8x32xbf16>
    %871 = arith.truncf %869 : vector<8x8xf32> to vector<8x8xbf16>
    %cst_335 = arith.constant dense<0.000000e+00> : vector<8x32xf32>
    %872 = tpu.matmul %871, %870, %cst_335 {dimension_numbers = #tpu.dot_dimension_numbers<[1], [0], [0], [1], [0, 0, 1, 1], [], []>} : vector<8x8xbf16>, vector<8x32xbf16>, vector<8x32xf32> -> vector<8x32xf32>
    %873 = arith.addf %848, %872 : vector<8x32xf32>
    %cst_336 = arith.constant 0.000000e+00 : f32
    %874 = vector.broadcast %cst_336 : f32 to vector<8x32xf32>
    %875 = vector.extract_strided_slice %758 {offsets = [8, 0], sizes = [8, 8], strides = [1, 1]} : vector<16x32xf32> to vector<8x8xf32>
    %876 = vector.extract_strided_slice %764 {offsets = [8, 0], sizes = [8, 8], strides = [1, 1]} : vector<16x32xf32> to vector<8x8xf32>
    %877 = arith.truncf %875 : vector<8x8xf32> to vector<8x8xbf16>
    %878 = arith.truncf %876 : vector<8x8xf32> to vector<8x8xbf16>
    %cst_337 = arith.constant dense<0.000000e+00> : vector<8x8xf32>
    %879 = tpu.matmul %877, %878, %cst_337 {dimension_numbers = #tpu.dot_dimension_numbers<[1], [1], [0], [0], [0, 0, 1, 0], [], []>} : vector<8x8xbf16>, vector<8x8xbf16>, vector<8x8xf32> -> vector<8x8xf32>
    %cst_338 = arith.constant 0.353553385 : f32
    %880 = vector.broadcast %cst_338 : f32 to vector<8x8xf32>
    %881 = arith.mulf %879, %880 : vector<8x8xf32>
    %cst_339 = arith.constant dense<0xFF800000> : vector<8xf32>
    %882 = vector.multi_reduction <maximumf>, %881, %cst_339 [1] : vector<8x8xf32> to vector<8xf32>
    %883 = vector.shape_cast %882 : vector<8xf32> to vector<8x1xf32>
    %884 = vector.broadcast %883 : vector<8x1xf32> to vector<8x8xf32>
    %885 = arith.subf %881, %884 : vector<8x8xf32>
    %886 = math.exp %885 : vector<8x8xf32>
    %cst_340 = arith.constant dense<0.000000e+00> : vector<8xf32>
    %887 = vector.multi_reduction <add>, %886, %cst_340 [1] : vector<8x8xf32> to vector<8xf32>
    %888 = vector.shape_cast %887 : vector<8xf32> to vector<8x1xf32>
    %889 = tpu.reciprocal %888 {approx = true} : vector<8x1xf32> -> vector<8x1xf32>
    %890 = vector.broadcast %889 : vector<8x1xf32> to vector<8x8xf32>
    %891 = arith.mulf %886, %890 : vector<8x8xf32>
    %892 = vector.extract_strided_slice %770 {offsets = [8, 0], sizes = [8, 8], strides = [1, 1]} : vector<16x32xf32> to vector<8x8xf32>
    %893 = arith.truncf %891 : vector<8x8xf32> to vector<8x8xbf16>
    %894 = arith.truncf %892 : vector<8x8xf32> to vector<8x8xbf16>
    %cst_341 = arith.constant dense<0.000000e+00> : vector<8x8xf32>
    %895 = tpu.matmul %893, %894, %cst_341 {dimension_numbers = #tpu.dot_dimension_numbers<[1], [0], [0], [1], [0, 0, 1, 1], [], []>} : vector<8x8xbf16>, vector<8x8xbf16>, vector<8x8xf32> -> vector<8x8xf32>
    %896 = vector.extract_strided_slice %772 {offsets = [0, 0], sizes = [8, 32], strides = [1, 1]} : vector<32x32xbf16> to vector<8x32xbf16>
    %897 = arith.truncf %895 : vector<8x8xf32> to vector<8x8xbf16>
    %cst_342 = arith.constant dense<0.000000e+00> : vector<8x32xf32>
    %898 = tpu.matmul %897, %896, %cst_342 {dimension_numbers = #tpu.dot_dimension_numbers<[1], [0], [0], [1], [0, 0, 1, 1], [], []>} : vector<8x8xbf16>, vector<8x32xbf16>, vector<8x32xf32> -> vector<8x32xf32>
    %899 = arith.addf %874, %898 : vector<8x32xf32>
    %900 = vector.extract_strided_slice %758 {offsets = [8, 8], sizes = [8, 8], strides = [1, 1]} : vector<16x32xf32> to vector<8x8xf32>
    %901 = vector.extract_strided_slice %764 {offsets = [8, 8], sizes = [8, 8], strides = [1, 1]} : vector<16x32xf32> to vector<8x8xf32>
    %902 = arith.truncf %900 : vector<8x8xf32> to vector<8x8xbf16>
    %903 = arith.truncf %901 : vector<8x8xf32> to vector<8x8xbf16>
    %cst_343 = arith.constant dense<0.000000e+00> : vector<8x8xf32>
    %904 = tpu.matmul %902, %903, %cst_343 {dimension_numbers = #tpu.dot_dimension_numbers<[1], [1], [0], [0], [0, 0, 1, 0], [], []>} : vector<8x8xbf16>, vector<8x8xbf16>, vector<8x8xf32> -> vector<8x8xf32>
    %cst_344 = arith.constant 0.353553385 : f32
    %905 = vector.broadcast %cst_344 : f32 to vector<8x8xf32>
    %906 = arith.mulf %904, %905 : vector<8x8xf32>
    %cst_345 = arith.constant dense<0xFF800000> : vector<8xf32>
    %907 = vector.multi_reduction <maximumf>, %906, %cst_345 [1] : vector<8x8xf32> to vector<8xf32>
    %908 = vector.shape_cast %907 : vector<8xf32> to vector<8x1xf32>
    %909 = vector.broadcast %908 : vector<8x1xf32> to vector<8x8xf32>
    %910 = arith.subf %906, %909 : vector<8x8xf32>
    %911 = math.exp %910 : vector<8x8xf32>
    %cst_346 = arith.constant dense<0.000000e+00> : vector<8xf32>
    %912 = vector.multi_reduction <add>, %911, %cst_346 [1] : vector<8x8xf32> to vector<8xf32>
    %913 = vector.shape_cast %912 : vector<8xf32> to vector<8x1xf32>
    %914 = tpu.reciprocal %913 {approx = true} : vector<8x1xf32> -> vector<8x1xf32>
    %915 = vector.broadcast %914 : vector<8x1xf32> to vector<8x8xf32>
    %916 = arith.mulf %911, %915 : vector<8x8xf32>
    %917 = vector.extract_strided_slice %770 {offsets = [8, 8], sizes = [8, 8], strides = [1, 1]} : vector<16x32xf32> to vector<8x8xf32>
    %918 = arith.truncf %916 : vector<8x8xf32> to vector<8x8xbf16>
    %919 = arith.truncf %917 : vector<8x8xf32> to vector<8x8xbf16>
    %cst_347 = arith.constant dense<0.000000e+00> : vector<8x8xf32>
    %920 = tpu.matmul %918, %919, %cst_347 {dimension_numbers = #tpu.dot_dimension_numbers<[1], [0], [0], [1], [0, 0, 1, 1], [], []>} : vector<8x8xbf16>, vector<8x8xbf16>, vector<8x8xf32> -> vector<8x8xf32>
    %921 = vector.extract_strided_slice %772 {offsets = [8, 0], sizes = [8, 32], strides = [1, 1]} : vector<32x32xbf16> to vector<8x32xbf16>
    %922 = arith.truncf %920 : vector<8x8xf32> to vector<8x8xbf16>
    %cst_348 = arith.constant dense<0.000000e+00> : vector<8x32xf32>
    %923 = tpu.matmul %922, %921, %cst_348 {dimension_numbers = #tpu.dot_dimension_numbers<[1], [0], [0], [1], [0, 0, 1, 1], [], []>} : vector<8x8xbf16>, vector<8x32xbf16>, vector<8x32xf32> -> vector<8x32xf32>
    %924 = arith.addf %899, %923 : vector<8x32xf32>
    %925 = vector.extract_strided_slice %758 {offsets = [8, 16], sizes = [8, 8], strides = [1, 1]} : vector<16x32xf32> to vector<8x8xf32>
    %926 = vector.extract_strided_slice %764 {offsets = [8, 16], sizes = [8, 8], strides = [1, 1]} : vector<16x32xf32> to vector<8x8xf32>
    %927 = arith.truncf %925 : vector<8x8xf32> to vector<8x8xbf16>
    %928 = arith.truncf %926 : vector<8x8xf32> to vector<8x8xbf16>
    %cst_349 = arith.constant dense<0.000000e+00> : vector<8x8xf32>
    %929 = tpu.matmul %927, %928, %cst_349 {dimension_numbers = #tpu.dot_dimension_numbers<[1], [1], [0], [0], [0, 0, 1, 0], [], []>} : vector<8x8xbf16>, vector<8x8xbf16>, vector<8x8xf32> -> vector<8x8xf32>
    %cst_350 = arith.constant 0.353553385 : f32
    %930 = vector.broadcast %cst_350 : f32 to vector<8x8xf32>
    %931 = arith.mulf %929, %930 : vector<8x8xf32>
    %cst_351 = arith.constant dense<0xFF800000> : vector<8xf32>
    %932 = vector.multi_reduction <maximumf>, %931, %cst_351 [1] : vector<8x8xf32> to vector<8xf32>
    %933 = vector.shape_cast %932 : vector<8xf32> to vector<8x1xf32>
    %934 = vector.broadcast %933 : vector<8x1xf32> to vector<8x8xf32>
    %935 = arith.subf %931, %934 : vector<8x8xf32>
    %936 = math.exp %935 : vector<8x8xf32>
    %cst_352 = arith.constant dense<0.000000e+00> : vector<8xf32>
    %937 = vector.multi_reduction <add>, %936, %cst_352 [1] : vector<8x8xf32> to vector<8xf32>
    %938 = vector.shape_cast %937 : vector<8xf32> to vector<8x1xf32>
    %939 = tpu.reciprocal %938 {approx = true} : vector<8x1xf32> -> vector<8x1xf32>
    %940 = vector.broadcast %939 : vector<8x1xf32> to vector<8x8xf32>
    %941 = arith.mulf %936, %940 : vector<8x8xf32>
    %942 = vector.extract_strided_slice %770 {offsets = [8, 16], sizes = [8, 8], strides = [1, 1]} : vector<16x32xf32> to vector<8x8xf32>
    %943 = arith.truncf %941 : vector<8x8xf32> to vector<8x8xbf16>
    %944 = arith.truncf %942 : vector<8x8xf32> to vector<8x8xbf16>
    %cst_353 = arith.constant dense<0.000000e+00> : vector<8x8xf32>
    %945 = tpu.matmul %943, %944, %cst_353 {dimension_numbers = #tpu.dot_dimension_numbers<[1], [0], [0], [1], [0, 0, 1, 1], [], []>} : vector<8x8xbf16>, vector<8x8xbf16>, vector<8x8xf32> -> vector<8x8xf32>
    %946 = vector.extract_strided_slice %772 {offsets = [16, 0], sizes = [8, 32], strides = [1, 1]} : vector<32x32xbf16> to vector<8x32xbf16>
    %947 = arith.truncf %945 : vector<8x8xf32> to vector<8x8xbf16>
    %cst_354 = arith.constant dense<0.000000e+00> : vector<8x32xf32>
    %948 = tpu.matmul %947, %946, %cst_354 {dimension_numbers = #tpu.dot_dimension_numbers<[1], [0], [0], [1], [0, 0, 1, 1], [], []>} : vector<8x8xbf16>, vector<8x32xbf16>, vector<8x32xf32> -> vector<8x32xf32>
    %949 = arith.addf %924, %948 : vector<8x32xf32>
    %950 = vector.extract_strided_slice %758 {offsets = [8, 24], sizes = [8, 8], strides = [1, 1]} : vector<16x32xf32> to vector<8x8xf32>
    %951 = vector.extract_strided_slice %764 {offsets = [8, 24], sizes = [8, 8], strides = [1, 1]} : vector<16x32xf32> to vector<8x8xf32>
    %952 = arith.truncf %950 : vector<8x8xf32> to vector<8x8xbf16>
    %953 = arith.truncf %951 : vector<8x8xf32> to vector<8x8xbf16>
    %cst_355 = arith.constant dense<0.000000e+00> : vector<8x8xf32>
    %954 = tpu.matmul %952, %953, %cst_355 {dimension_numbers = #tpu.dot_dimension_numbers<[1], [1], [0], [0], [0, 0, 1, 0], [], []>} : vector<8x8xbf16>, vector<8x8xbf16>, vector<8x8xf32> -> vector<8x8xf32>
    %cst_356 = arith.constant 0.353553385 : f32
    %955 = vector.broadcast %cst_356 : f32 to vector<8x8xf32>
    %956 = arith.mulf %954, %955 : vector<8x8xf32>
    %cst_357 = arith.constant dense<0xFF800000> : vector<8xf32>
    %957 = vector.multi_reduction <maximumf>, %956, %cst_357 [1] : vector<8x8xf32> to vector<8xf32>
    %958 = vector.shape_cast %957 : vector<8xf32> to vector<8x1xf32>
    %959 = vector.broadcast %958 : vector<8x1xf32> to vector<8x8xf32>
    %960 = arith.subf %956, %959 : vector<8x8xf32>
    %961 = math.exp %960 : vector<8x8xf32>
    %cst_358 = arith.constant dense<0.000000e+00> : vector<8xf32>
    %962 = vector.multi_reduction <add>, %961, %cst_358 [1] : vector<8x8xf32> to vector<8xf32>
    %963 = vector.shape_cast %962 : vector<8xf32> to vector<8x1xf32>
    %964 = tpu.reciprocal %963 {approx = true} : vector<8x1xf32> -> vector<8x1xf32>
    %965 = vector.broadcast %964 : vector<8x1xf32> to vector<8x8xf32>
    %966 = arith.mulf %961, %965 : vector<8x8xf32>
    %967 = vector.extract_strided_slice %770 {offsets = [8, 24], sizes = [8, 8], strides = [1, 1]} : vector<16x32xf32> to vector<8x8xf32>
    %968 = arith.truncf %966 : vector<8x8xf32> to vector<8x8xbf16>
    %969 = arith.truncf %967 : vector<8x8xf32> to vector<8x8xbf16>
    %cst_359 = arith.constant dense<0.000000e+00> : vector<8x8xf32>
    %970 = tpu.matmul %968, %969, %cst_359 {dimension_numbers = #tpu.dot_dimension_numbers<[1], [0], [0], [1], [0, 0, 1, 1], [], []>} : vector<8x8xbf16>, vector<8x8xbf16>, vector<8x8xf32> -> vector<8x8xf32>
    %971 = vector.extract_strided_slice %772 {offsets = [24, 0], sizes = [8, 32], strides = [1, 1]} : vector<32x32xbf16> to vector<8x32xbf16>
    %972 = arith.truncf %970 : vector<8x8xf32> to vector<8x8xbf16>
    %cst_360 = arith.constant dense<0.000000e+00> : vector<8x32xf32>
    %973 = tpu.matmul %972, %971, %cst_360 {dimension_numbers = #tpu.dot_dimension_numbers<[1], [0], [0], [1], [0, 0, 1, 1], [], []>} : vector<8x8xbf16>, vector<8x32xbf16>, vector<8x32xf32> -> vector<8x32xf32>
    %974 = arith.addf %949, %973 : vector<8x32xf32>
    %975 = tpu.concatenate %873, %974 in 0 : vector<8x32xf32>, vector<8x32xf32> -> vector<16x32xf32>
    %c0_361 = arith.constant 0 : index
    %c2_362 = arith.constant 2 : index
    %c0_363 = arith.constant 0 : index
    %c0_364 = arith.constant 0 : index
    %976 = vector.load %arg9[%c0_361, %c2_362, %c0_363, %c0_364] : memref<1x4x1x32xf32, #tpu.memory_space<vmem>>, vector<1x1x1x32xf32>
    %977 = vector.shape_cast %976 : vector<1x1x1x32xf32> to vector<1x32xf32>
    %978 = vector.broadcast %977 : vector<1x32xf32> to vector<16x32xf32>
    %979 = arith.addf %975, %978 : vector<16x32xf32>
    %c0_365 = arith.constant 0 : index
    %c2_366 = arith.constant 2 : index
    %c0_367 = arith.constant 0 : index
    %c0_368 = arith.constant 0 : index
    %980 = vector.load %arg10[%c0_365, %c2_366, %c0_367, %c0_368] : memref<1x4x1x32xf32, #tpu.memory_space<vmem>>, vector<1x1x1x32xf32>
    %981 = vector.shape_cast %980 : vector<1x1x1x32xf32> to vector<1x32xf32>
    %c0_369 = arith.constant 0 : index
    %c2_370 = arith.constant 2 : index
    %c0_371 = arith.constant 0 : index
    %c0_372 = arith.constant 0 : index
    %982 = vector.load %arg11[%c0_369, %c2_370, %c0_371, %c0_372] : memref<1x4x1x32xf32, #tpu.memory_space<vmem>>, vector<1x1x1x32xf32>
    %983 = vector.shape_cast %982 : vector<1x1x1x32xf32> to vector<1x32xf32>
    %984 = arith.addf %4, %979 : vector<16x32xf32>
    %cst_373 = arith.constant dense<0.000000e+00> : vector<16xf32>
    %985 = vector.multi_reduction <add>, %984, %cst_373 [1] : vector<16x32xf32> to vector<16xf32>
    %986 = vector.shape_cast %985 : vector<16xf32> to vector<16x1xf32>
    %cst_374 = arith.constant 3.200000e+01 : f32
    %987 = vector.broadcast %cst_374 : f32 to vector<16x1xf32>
    %988 = arith.divf %986, %987 : vector<16x1xf32>
    %989 = vector.broadcast %988 : vector<16x1xf32> to vector<16x32xf32>
    %990 = arith.subf %984, %989 : vector<16x32xf32>
    %991 = arith.mulf %990, %990 : vector<16x32xf32>
    %cst_375 = arith.constant dense<0.000000e+00> : vector<16xf32>
    %992 = vector.multi_reduction <add>, %991, %cst_375 [1] : vector<16x32xf32> to vector<16xf32>
    %993 = vector.shape_cast %992 : vector<16xf32> to vector<16x1xf32>
    %cst_376 = arith.constant 3.200000e+01 : f32
    %994 = vector.broadcast %cst_376 : f32 to vector<16x1xf32>
    %995 = arith.divf %993, %994 : vector<16x1xf32>
    %996 = vector.broadcast %988 : vector<16x1xf32> to vector<16x32xf32>
    %997 = arith.subf %984, %996 : vector<16x32xf32>
    %cst_377 = arith.constant 9.99999974E-6 : f32
    %998 = vector.broadcast %cst_377 : f32 to vector<16x1xf32>
    %999 = arith.addf %995, %998 : vector<16x1xf32>
    %1000 = math.rsqrt %999 : vector<16x1xf32>
    %1001 = vector.broadcast %1000 : vector<16x1xf32> to vector<16x32xf32>
    %1002 = arith.mulf %997, %1001 : vector<16x32xf32>
    %1003 = vector.broadcast %981 : vector<1x32xf32> to vector<16x32xf32>
    %1004 = arith.mulf %1002, %1003 : vector<16x32xf32>
    %1005 = vector.broadcast %983 : vector<1x32xf32> to vector<16x32xf32>
    %1006 = arith.addf %1004, %1005 : vector<16x32xf32>
    %c0_378 = arith.constant 0 : index
    %c3_379 = arith.constant 3 : index
    %c0_380 = arith.constant 0 : index
    %c0_381 = arith.constant 0 : index
    %1007 = vector.load %arg6[%c0_378, %c3_379, %c0_380, %c0_381] : memref<1x4x32x96xbf16, #tpu.memory_space<vmem>>, vector<1x1x32x96xbf16>
    %1008 = vector.shape_cast %1007 : vector<1x1x32x96xbf16> to vector<32x96xbf16>
    %c0_382 = arith.constant 0 : index
    %c3_383 = arith.constant 3 : index
    %c0_384 = arith.constant 0 : index
    %c0_385 = arith.constant 0 : index
    %1009 = vector.load %arg7[%c0_382, %c3_383, %c0_384, %c0_385] : memref<1x4x1x96xf32, #tpu.memory_space<vmem>>, vector<1x1x1x96xf32>
    %1010 = vector.shape_cast %1009 : vector<1x1x1x96xf32> to vector<1x96xf32>
    %1011 = vector.extract_strided_slice %1008 {offsets = [0, 0], sizes = [32, 64], strides = [1, 1]} : vector<32x96xbf16> to vector<32x64xbf16>
    %1012 = arith.truncf %4 : vector<16x32xf32> to vector<16x32xbf16>
    %cst_386 = arith.constant dense<0.000000e+00> : vector<16x64xf32>
    %1013 = tpu.matmul %1012, %1011, %cst_386 {dimension_numbers = #tpu.dot_dimension_numbers<[1], [0], [0], [1], [0, 0, 1, 1], [], []>} : vector<16x32xbf16>, vector<32x64xbf16>, vector<16x64xf32> -> vector<16x64xf32>
    %1014 = vector.extract_strided_slice %1010 {offsets = [0, 0], sizes = [1, 64], strides = [1, 1]} : vector<1x96xf32> to vector<1x64xf32>
    %1015 = vector.broadcast %1014 : vector<1x64xf32> to vector<16x64xf32>
    %1016 = arith.addf %1013, %1015 : vector<16x64xf32>
    %1017 = vector.extract_strided_slice %1016 {offsets = [0, 0], sizes = [16, 32], strides = [1, 1]} : vector<16x64xf32> to vector<16x32xf32>
    %1018 = vector.extract_strided_slice %1016 {offsets = [0, 32], sizes = [16, 32], strides = [1, 1]} : vector<16x64xf32> to vector<16x32xf32>
    %1019 = vector.extract_strided_slice %1008 {offsets = [0, 64], sizes = [32, 32], strides = [1, 1]} : vector<32x96xbf16> to vector<32x32xbf16>
    %1020 = arith.truncf %1006 : vector<16x32xf32> to vector<16x32xbf16>
    %cst_387 = arith.constant dense<0.000000e+00> : vector<16x32xf32>
    %1021 = tpu.matmul %1020, %1019, %cst_387 {dimension_numbers = #tpu.dot_dimension_numbers<[1], [0], [0], [1], [0, 0, 1, 1], [], []>} : vector<16x32xbf16>, vector<32x32xbf16>, vector<16x32xf32> -> vector<16x32xf32>
    %1022 = vector.extract_strided_slice %1010 {offsets = [0, 64], sizes = [1, 32], strides = [1, 1]} : vector<1x96xf32> to vector<1x32xf32>
    %1023 = vector.broadcast %1022 : vector<1x32xf32> to vector<16x32xf32>
    %1024 = arith.addf %1021, %1023 : vector<16x32xf32>
    %c0_388 = arith.constant 0 : index
    %c3_389 = arith.constant 3 : index
    %c0_390 = arith.constant 0 : index
    %c0_391 = arith.constant 0 : index
    %1025 = vector.load %arg8[%c0_388, %c3_389, %c0_390, %c0_391] : memref<1x4x32x32xbf16, #tpu.memory_space<vmem>>, vector<1x1x32x32xbf16>
    %1026 = vector.shape_cast %1025 : vector<1x1x32x32xbf16> to vector<32x32xbf16>
    %cst_392 = arith.constant 0.000000e+00 : f32
    %1027 = vector.broadcast %cst_392 : f32 to vector<8x32xf32>
    %1028 = vector.extract_strided_slice %1017 {offsets = [0, 0], sizes = [8, 8], strides = [1, 1]} : vector<16x32xf32> to vector<8x8xf32>
    %1029 = vector.extract_strided_slice %1018 {offsets = [0, 0], sizes = [8, 8], strides = [1, 1]} : vector<16x32xf32> to vector<8x8xf32>
    %1030 = arith.truncf %1028 : vector<8x8xf32> to vector<8x8xbf16>
    %1031 = arith.truncf %1029 : vector<8x8xf32> to vector<8x8xbf16>
    %cst_393 = arith.constant dense<0.000000e+00> : vector<8x8xf32>
    %1032 = tpu.matmul %1030, %1031, %cst_393 {dimension_numbers = #tpu.dot_dimension_numbers<[1], [1], [0], [0], [0, 0, 1, 0], [], []>} : vector<8x8xbf16>, vector<8x8xbf16>, vector<8x8xf32> -> vector<8x8xf32>
    %cst_394 = arith.constant 0.353553385 : f32
    %1033 = vector.broadcast %cst_394 : f32 to vector<8x8xf32>
    %1034 = arith.mulf %1032, %1033 : vector<8x8xf32>
    %cst_395 = arith.constant dense<0xFF800000> : vector<8xf32>
    %1035 = vector.multi_reduction <maximumf>, %1034, %cst_395 [1] : vector<8x8xf32> to vector<8xf32>
    %1036 = vector.shape_cast %1035 : vector<8xf32> to vector<8x1xf32>
    %1037 = vector.broadcast %1036 : vector<8x1xf32> to vector<8x8xf32>
    %1038 = arith.subf %1034, %1037 : vector<8x8xf32>
    %1039 = math.exp %1038 : vector<8x8xf32>
    %cst_396 = arith.constant dense<0.000000e+00> : vector<8xf32>
    %1040 = vector.multi_reduction <add>, %1039, %cst_396 [1] : vector<8x8xf32> to vector<8xf32>
    %1041 = vector.shape_cast %1040 : vector<8xf32> to vector<8x1xf32>
    %1042 = tpu.reciprocal %1041 {approx = true} : vector<8x1xf32> -> vector<8x1xf32>
    %1043 = vector.broadcast %1042 : vector<8x1xf32> to vector<8x8xf32>
    %1044 = arith.mulf %1039, %1043 : vector<8x8xf32>
    %1045 = vector.extract_strided_slice %1024 {offsets = [0, 0], sizes = [8, 8], strides = [1, 1]} : vector<16x32xf32> to vector<8x8xf32>
    %1046 = arith.truncf %1044 : vector<8x8xf32> to vector<8x8xbf16>
    %1047 = arith.truncf %1045 : vector<8x8xf32> to vector<8x8xbf16>
    %cst_397 = arith.constant dense<0.000000e+00> : vector<8x8xf32>
    %1048 = tpu.matmul %1046, %1047, %cst_397 {dimension_numbers = #tpu.dot_dimension_numbers<[1], [0], [0], [1], [0, 0, 1, 1], [], []>} : vector<8x8xbf16>, vector<8x8xbf16>, vector<8x8xf32> -> vector<8x8xf32>
    %1049 = vector.extract_strided_slice %1026 {offsets = [0, 0], sizes = [8, 32], strides = [1, 1]} : vector<32x32xbf16> to vector<8x32xbf16>
    %1050 = arith.truncf %1048 : vector<8x8xf32> to vector<8x8xbf16>
    %cst_398 = arith.constant dense<0.000000e+00> : vector<8x32xf32>
    %1051 = tpu.matmul %1050, %1049, %cst_398 {dimension_numbers = #tpu.dot_dimension_numbers<[1], [0], [0], [1], [0, 0, 1, 1], [], []>} : vector<8x8xbf16>, vector<8x32xbf16>, vector<8x32xf32> -> vector<8x32xf32>
    %1052 = arith.addf %1027, %1051 : vector<8x32xf32>
    %1053 = vector.extract_strided_slice %1017 {offsets = [0, 8], sizes = [8, 8], strides = [1, 1]} : vector<16x32xf32> to vector<8x8xf32>
    %1054 = vector.extract_strided_slice %1018 {offsets = [0, 8], sizes = [8, 8], strides = [1, 1]} : vector<16x32xf32> to vector<8x8xf32>
    %1055 = arith.truncf %1053 : vector<8x8xf32> to vector<8x8xbf16>
    %1056 = arith.truncf %1054 : vector<8x8xf32> to vector<8x8xbf16>
    %cst_399 = arith.constant dense<0.000000e+00> : vector<8x8xf32>
    %1057 = tpu.matmul %1055, %1056, %cst_399 {dimension_numbers = #tpu.dot_dimension_numbers<[1], [1], [0], [0], [0, 0, 1, 0], [], []>} : vector<8x8xbf16>, vector<8x8xbf16>, vector<8x8xf32> -> vector<8x8xf32>
    %cst_400 = arith.constant 0.353553385 : f32
    %1058 = vector.broadcast %cst_400 : f32 to vector<8x8xf32>
    %1059 = arith.mulf %1057, %1058 : vector<8x8xf32>
    %cst_401 = arith.constant dense<0xFF800000> : vector<8xf32>
    %1060 = vector.multi_reduction <maximumf>, %1059, %cst_401 [1] : vector<8x8xf32> to vector<8xf32>
    %1061 = vector.shape_cast %1060 : vector<8xf32> to vector<8x1xf32>
    %1062 = vector.broadcast %1061 : vector<8x1xf32> to vector<8x8xf32>
    %1063 = arith.subf %1059, %1062 : vector<8x8xf32>
    %1064 = math.exp %1063 : vector<8x8xf32>
    %cst_402 = arith.constant dense<0.000000e+00> : vector<8xf32>
    %1065 = vector.multi_reduction <add>, %1064, %cst_402 [1] : vector<8x8xf32> to vector<8xf32>
    %1066 = vector.shape_cast %1065 : vector<8xf32> to vector<8x1xf32>
    %1067 = tpu.reciprocal %1066 {approx = true} : vector<8x1xf32> -> vector<8x1xf32>
    %1068 = vector.broadcast %1067 : vector<8x1xf32> to vector<8x8xf32>
    %1069 = arith.mulf %1064, %1068 : vector<8x8xf32>
    %1070 = vector.extract_strided_slice %1024 {offsets = [0, 8], sizes = [8, 8], strides = [1, 1]} : vector<16x32xf32> to vector<8x8xf32>
    %1071 = arith.truncf %1069 : vector<8x8xf32> to vector<8x8xbf16>
    %1072 = arith.truncf %1070 : vector<8x8xf32> to vector<8x8xbf16>
    %cst_403 = arith.constant dense<0.000000e+00> : vector<8x8xf32>
    %1073 = tpu.matmul %1071, %1072, %cst_403 {dimension_numbers = #tpu.dot_dimension_numbers<[1], [0], [0], [1], [0, 0, 1, 1], [], []>} : vector<8x8xbf16>, vector<8x8xbf16>, vector<8x8xf32> -> vector<8x8xf32>
    %1074 = vector.extract_strided_slice %1026 {offsets = [8, 0], sizes = [8, 32], strides = [1, 1]} : vector<32x32xbf16> to vector<8x32xbf16>
    %1075 = arith.truncf %1073 : vector<8x8xf32> to vector<8x8xbf16>
    %cst_404 = arith.constant dense<0.000000e+00> : vector<8x32xf32>
    %1076 = tpu.matmul %1075, %1074, %cst_404 {dimension_numbers = #tpu.dot_dimension_numbers<[1], [0], [0], [1], [0, 0, 1, 1], [], []>} : vector<8x8xbf16>, vector<8x32xbf16>, vector<8x32xf32> -> vector<8x32xf32>
    %1077 = arith.addf %1052, %1076 : vector<8x32xf32>
    %1078 = vector.extract_strided_slice %1017 {offsets = [0, 16], sizes = [8, 8], strides = [1, 1]} : vector<16x32xf32> to vector<8x8xf32>
    %1079 = vector.extract_strided_slice %1018 {offsets = [0, 16], sizes = [8, 8], strides = [1, 1]} : vector<16x32xf32> to vector<8x8xf32>
    %1080 = arith.truncf %1078 : vector<8x8xf32> to vector<8x8xbf16>
    %1081 = arith.truncf %1079 : vector<8x8xf32> to vector<8x8xbf16>
    %cst_405 = arith.constant dense<0.000000e+00> : vector<8x8xf32>
    %1082 = tpu.matmul %1080, %1081, %cst_405 {dimension_numbers = #tpu.dot_dimension_numbers<[1], [1], [0], [0], [0, 0, 1, 0], [], []>} : vector<8x8xbf16>, vector<8x8xbf16>, vector<8x8xf32> -> vector<8x8xf32>
    %cst_406 = arith.constant 0.353553385 : f32
    %1083 = vector.broadcast %cst_406 : f32 to vector<8x8xf32>
    %1084 = arith.mulf %1082, %1083 : vector<8x8xf32>
    %cst_407 = arith.constant dense<0xFF800000> : vector<8xf32>
    %1085 = vector.multi_reduction <maximumf>, %1084, %cst_407 [1] : vector<8x8xf32> to vector<8xf32>
    %1086 = vector.shape_cast %1085 : vector<8xf32> to vector<8x1xf32>
    %1087 = vector.broadcast %1086 : vector<8x1xf32> to vector<8x8xf32>
    %1088 = arith.subf %1084, %1087 : vector<8x8xf32>
    %1089 = math.exp %1088 : vector<8x8xf32>
    %cst_408 = arith.constant dense<0.000000e+00> : vector<8xf32>
    %1090 = vector.multi_reduction <add>, %1089, %cst_408 [1] : vector<8x8xf32> to vector<8xf32>
    %1091 = vector.shape_cast %1090 : vector<8xf32> to vector<8x1xf32>
    %1092 = tpu.reciprocal %1091 {approx = true} : vector<8x1xf32> -> vector<8x1xf32>
    %1093 = vector.broadcast %1092 : vector<8x1xf32> to vector<8x8xf32>
    %1094 = arith.mulf %1089, %1093 : vector<8x8xf32>
    %1095 = vector.extract_strided_slice %1024 {offsets = [0, 16], sizes = [8, 8], strides = [1, 1]} : vector<16x32xf32> to vector<8x8xf32>
    %1096 = arith.truncf %1094 : vector<8x8xf32> to vector<8x8xbf16>
    %1097 = arith.truncf %1095 : vector<8x8xf32> to vector<8x8xbf16>
    %cst_409 = arith.constant dense<0.000000e+00> : vector<8x8xf32>
    %1098 = tpu.matmul %1096, %1097, %cst_409 {dimension_numbers = #tpu.dot_dimension_numbers<[1], [0], [0], [1], [0, 0, 1, 1], [], []>} : vector<8x8xbf16>, vector<8x8xbf16>, vector<8x8xf32> -> vector<8x8xf32>
    %1099 = vector.extract_strided_slice %1026 {offsets = [16, 0], sizes = [8, 32], strides = [1, 1]} : vector<32x32xbf16> to vector<8x32xbf16>
    %1100 = arith.truncf %1098 : vector<8x8xf32> to vector<8x8xbf16>
    %cst_410 = arith.constant dense<0.000000e+00> : vector<8x32xf32>
    %1101 = tpu.matmul %1100, %1099, %cst_410 {dimension_numbers = #tpu.dot_dimension_numbers<[1], [0], [0], [1], [0, 0, 1, 1], [], []>} : vector<8x8xbf16>, vector<8x32xbf16>, vector<8x32xf32> -> vector<8x32xf32>
    %1102 = arith.addf %1077, %1101 : vector<8x32xf32>
    %1103 = vector.extract_strided_slice %1017 {offsets = [0, 24], sizes = [8, 8], strides = [1, 1]} : vector<16x32xf32> to vector<8x8xf32>
    %1104 = vector.extract_strided_slice %1018 {offsets = [0, 24], sizes = [8, 8], strides = [1, 1]} : vector<16x32xf32> to vector<8x8xf32>
    %1105 = arith.truncf %1103 : vector<8x8xf32> to vector<8x8xbf16>
    %1106 = arith.truncf %1104 : vector<8x8xf32> to vector<8x8xbf16>
    %cst_411 = arith.constant dense<0.000000e+00> : vector<8x8xf32>
    %1107 = tpu.matmul %1105, %1106, %cst_411 {dimension_numbers = #tpu.dot_dimension_numbers<[1], [1], [0], [0], [0, 0, 1, 0], [], []>} : vector<8x8xbf16>, vector<8x8xbf16>, vector<8x8xf32> -> vector<8x8xf32>
    %cst_412 = arith.constant 0.353553385 : f32
    %1108 = vector.broadcast %cst_412 : f32 to vector<8x8xf32>
    %1109 = arith.mulf %1107, %1108 : vector<8x8xf32>
    %cst_413 = arith.constant dense<0xFF800000> : vector<8xf32>
    %1110 = vector.multi_reduction <maximumf>, %1109, %cst_413 [1] : vector<8x8xf32> to vector<8xf32>
    %1111 = vector.shape_cast %1110 : vector<8xf32> to vector<8x1xf32>
    %1112 = vector.broadcast %1111 : vector<8x1xf32> to vector<8x8xf32>
    %1113 = arith.subf %1109, %1112 : vector<8x8xf32>
    %1114 = math.exp %1113 : vector<8x8xf32>
    %cst_414 = arith.constant dense<0.000000e+00> : vector<8xf32>
    %1115 = vector.multi_reduction <add>, %1114, %cst_414 [1] : vector<8x8xf32> to vector<8xf32>
    %1116 = vector.shape_cast %1115 : vector<8xf32> to vector<8x1xf32>
    %1117 = tpu.reciprocal %1116 {approx = true} : vector<8x1xf32> -> vector<8x1xf32>
    %1118 = vector.broadcast %1117 : vector<8x1xf32> to vector<8x8xf32>
    %1119 = arith.mulf %1114, %1118 : vector<8x8xf32>
    %1120 = vector.extract_strided_slice %1024 {offsets = [0, 24], sizes = [8, 8], strides = [1, 1]} : vector<16x32xf32> to vector<8x8xf32>
    %1121 = arith.truncf %1119 : vector<8x8xf32> to vector<8x8xbf16>
    %1122 = arith.truncf %1120 : vector<8x8xf32> to vector<8x8xbf16>
    %cst_415 = arith.constant dense<0.000000e+00> : vector<8x8xf32>
    %1123 = tpu.matmul %1121, %1122, %cst_415 {dimension_numbers = #tpu.dot_dimension_numbers<[1], [0], [0], [1], [0, 0, 1, 1], [], []>} : vector<8x8xbf16>, vector<8x8xbf16>, vector<8x8xf32> -> vector<8x8xf32>
    %1124 = vector.extract_strided_slice %1026 {offsets = [24, 0], sizes = [8, 32], strides = [1, 1]} : vector<32x32xbf16> to vector<8x32xbf16>
    %1125 = arith.truncf %1123 : vector<8x8xf32> to vector<8x8xbf16>
    %cst_416 = arith.constant dense<0.000000e+00> : vector<8x32xf32>
    %1126 = tpu.matmul %1125, %1124, %cst_416 {dimension_numbers = #tpu.dot_dimension_numbers<[1], [0], [0], [1], [0, 0, 1, 1], [], []>} : vector<8x8xbf16>, vector<8x32xbf16>, vector<8x32xf32> -> vector<8x32xf32>
    %1127 = arith.addf %1102, %1126 : vector<8x32xf32>
    %cst_417 = arith.constant 0.000000e+00 : f32
    %1128 = vector.broadcast %cst_417 : f32 to vector<8x32xf32>
    %1129 = vector.extract_strided_slice %1017 {offsets = [8, 0], sizes = [8, 8], strides = [1, 1]} : vector<16x32xf32> to vector<8x8xf32>
    %1130 = vector.extract_strided_slice %1018 {offsets = [8, 0], sizes = [8, 8], strides = [1, 1]} : vector<16x32xf32> to vector<8x8xf32>
    %1131 = arith.truncf %1129 : vector<8x8xf32> to vector<8x8xbf16>
    %1132 = arith.truncf %1130 : vector<8x8xf32> to vector<8x8xbf16>
    %cst_418 = arith.constant dense<0.000000e+00> : vector<8x8xf32>
    %1133 = tpu.matmul %1131, %1132, %cst_418 {dimension_numbers = #tpu.dot_dimension_numbers<[1], [1], [0], [0], [0, 0, 1, 0], [], []>} : vector<8x8xbf16>, vector<8x8xbf16>, vector<8x8xf32> -> vector<8x8xf32>
    %cst_419 = arith.constant 0.353553385 : f32
    %1134 = vector.broadcast %cst_419 : f32 to vector<8x8xf32>
    %1135 = arith.mulf %1133, %1134 : vector<8x8xf32>
    %cst_420 = arith.constant dense<0xFF800000> : vector<8xf32>
    %1136 = vector.multi_reduction <maximumf>, %1135, %cst_420 [1] : vector<8x8xf32> to vector<8xf32>
    %1137 = vector.shape_cast %1136 : vector<8xf32> to vector<8x1xf32>
    %1138 = vector.broadcast %1137 : vector<8x1xf32> to vector<8x8xf32>
    %1139 = arith.subf %1135, %1138 : vector<8x8xf32>
    %1140 = math.exp %1139 : vector<8x8xf32>
    %cst_421 = arith.constant dense<0.000000e+00> : vector<8xf32>
    %1141 = vector.multi_reduction <add>, %1140, %cst_421 [1] : vector<8x8xf32> to vector<8xf32>
    %1142 = vector.shape_cast %1141 : vector<8xf32> to vector<8x1xf32>
    %1143 = tpu.reciprocal %1142 {approx = true} : vector<8x1xf32> -> vector<8x1xf32>
    %1144 = vector.broadcast %1143 : vector<8x1xf32> to vector<8x8xf32>
    %1145 = arith.mulf %1140, %1144 : vector<8x8xf32>
    %1146 = vector.extract_strided_slice %1024 {offsets = [8, 0], sizes = [8, 8], strides = [1, 1]} : vector<16x32xf32> to vector<8x8xf32>
    %1147 = arith.truncf %1145 : vector<8x8xf32> to vector<8x8xbf16>
    %1148 = arith.truncf %1146 : vector<8x8xf32> to vector<8x8xbf16>
    %cst_422 = arith.constant dense<0.000000e+00> : vector<8x8xf32>
    %1149 = tpu.matmul %1147, %1148, %cst_422 {dimension_numbers = #tpu.dot_dimension_numbers<[1], [0], [0], [1], [0, 0, 1, 1], [], []>} : vector<8x8xbf16>, vector<8x8xbf16>, vector<8x8xf32> -> vector<8x8xf32>
    %1150 = vector.extract_strided_slice %1026 {offsets = [0, 0], sizes = [8, 32], strides = [1, 1]} : vector<32x32xbf16> to vector<8x32xbf16>
    %1151 = arith.truncf %1149 : vector<8x8xf32> to vector<8x8xbf16>
    %cst_423 = arith.constant dense<0.000000e+00> : vector<8x32xf32>
    %1152 = tpu.matmul %1151, %1150, %cst_423 {dimension_numbers = #tpu.dot_dimension_numbers<[1], [0], [0], [1], [0, 0, 1, 1], [], []>} : vector<8x8xbf16>, vector<8x32xbf16>, vector<8x32xf32> -> vector<8x32xf32>
    %1153 = arith.addf %1128, %1152 : vector<8x32xf32>
    %1154 = vector.extract_strided_slice %1017 {offsets = [8, 8], sizes = [8, 8], strides = [1, 1]} : vector<16x32xf32> to vector<8x8xf32>
    %1155 = vector.extract_strided_slice %1018 {offsets = [8, 8], sizes = [8, 8], strides = [1, 1]} : vector<16x32xf32> to vector<8x8xf32>
    %1156 = arith.truncf %1154 : vector<8x8xf32> to vector<8x8xbf16>
    %1157 = arith.truncf %1155 : vector<8x8xf32> to vector<8x8xbf16>
    %cst_424 = arith.constant dense<0.000000e+00> : vector<8x8xf32>
    %1158 = tpu.matmul %1156, %1157, %cst_424 {dimension_numbers = #tpu.dot_dimension_numbers<[1], [1], [0], [0], [0, 0, 1, 0], [], []>} : vector<8x8xbf16>, vector<8x8xbf16>, vector<8x8xf32> -> vector<8x8xf32>
    %cst_425 = arith.constant 0.353553385 : f32
    %1159 = vector.broadcast %cst_425 : f32 to vector<8x8xf32>
    %1160 = arith.mulf %1158, %1159 : vector<8x8xf32>
    %cst_426 = arith.constant dense<0xFF800000> : vector<8xf32>
    %1161 = vector.multi_reduction <maximumf>, %1160, %cst_426 [1] : vector<8x8xf32> to vector<8xf32>
    %1162 = vector.shape_cast %1161 : vector<8xf32> to vector<8x1xf32>
    %1163 = vector.broadcast %1162 : vector<8x1xf32> to vector<8x8xf32>
    %1164 = arith.subf %1160, %1163 : vector<8x8xf32>
    %1165 = math.exp %1164 : vector<8x8xf32>
    %cst_427 = arith.constant dense<0.000000e+00> : vector<8xf32>
    %1166 = vector.multi_reduction <add>, %1165, %cst_427 [1] : vector<8x8xf32> to vector<8xf32>
    %1167 = vector.shape_cast %1166 : vector<8xf32> to vector<8x1xf32>
    %1168 = tpu.reciprocal %1167 {approx = true} : vector<8x1xf32> -> vector<8x1xf32>
    %1169 = vector.broadcast %1168 : vector<8x1xf32> to vector<8x8xf32>
    %1170 = arith.mulf %1165, %1169 : vector<8x8xf32>
    %1171 = vector.extract_strided_slice %1024 {offsets = [8, 8], sizes = [8, 8], strides = [1, 1]} : vector<16x32xf32> to vector<8x8xf32>
    %1172 = arith.truncf %1170 : vector<8x8xf32> to vector<8x8xbf16>
    %1173 = arith.truncf %1171 : vector<8x8xf32> to vector<8x8xbf16>
    %cst_428 = arith.constant dense<0.000000e+00> : vector<8x8xf32>
    %1174 = tpu.matmul %1172, %1173, %cst_428 {dimension_numbers = #tpu.dot_dimension_numbers<[1], [0], [0], [1], [0, 0, 1, 1], [], []>} : vector<8x8xbf16>, vector<8x8xbf16>, vector<8x8xf32> -> vector<8x8xf32>
    %1175 = vector.extract_strided_slice %1026 {offsets = [8, 0], sizes = [8, 32], strides = [1, 1]} : vector<32x32xbf16> to vector<8x32xbf16>
    %1176 = arith.truncf %1174 : vector<8x8xf32> to vector<8x8xbf16>
    %cst_429 = arith.constant dense<0.000000e+00> : vector<8x32xf32>
    %1177 = tpu.matmul %1176, %1175, %cst_429 {dimension_numbers = #tpu.dot_dimension_numbers<[1], [0], [0], [1], [0, 0, 1, 1], [], []>} : vector<8x8xbf16>, vector<8x32xbf16>, vector<8x32xf32> -> vector<8x32xf32>
    %1178 = arith.addf %1153, %1177 : vector<8x32xf32>
    %1179 = vector.extract_strided_slice %1017 {offsets = [8, 16], sizes = [8, 8], strides = [1, 1]} : vector<16x32xf32> to vector<8x8xf32>
    %1180 = vector.extract_strided_slice %1018 {offsets = [8, 16], sizes = [8, 8], strides = [1, 1]} : vector<16x32xf32> to vector<8x8xf32>
    %1181 = arith.truncf %1179 : vector<8x8xf32> to vector<8x8xbf16>
    %1182 = arith.truncf %1180 : vector<8x8xf32> to vector<8x8xbf16>
    %cst_430 = arith.constant dense<0.000000e+00> : vector<8x8xf32>
    %1183 = tpu.matmul %1181, %1182, %cst_430 {dimension_numbers = #tpu.dot_dimension_numbers<[1], [1], [0], [0], [0, 0, 1, 0], [], []>} : vector<8x8xbf16>, vector<8x8xbf16>, vector<8x8xf32> -> vector<8x8xf32>
    %cst_431 = arith.constant 0.353553385 : f32
    %1184 = vector.broadcast %cst_431 : f32 to vector<8x8xf32>
    %1185 = arith.mulf %1183, %1184 : vector<8x8xf32>
    %cst_432 = arith.constant dense<0xFF800000> : vector<8xf32>
    %1186 = vector.multi_reduction <maximumf>, %1185, %cst_432 [1] : vector<8x8xf32> to vector<8xf32>
    %1187 = vector.shape_cast %1186 : vector<8xf32> to vector<8x1xf32>
    %1188 = vector.broadcast %1187 : vector<8x1xf32> to vector<8x8xf32>
    %1189 = arith.subf %1185, %1188 : vector<8x8xf32>
    %1190 = math.exp %1189 : vector<8x8xf32>
    %cst_433 = arith.constant dense<0.000000e+00> : vector<8xf32>
    %1191 = vector.multi_reduction <add>, %1190, %cst_433 [1] : vector<8x8xf32> to vector<8xf32>
    %1192 = vector.shape_cast %1191 : vector<8xf32> to vector<8x1xf32>
    %1193 = tpu.reciprocal %1192 {approx = true} : vector<8x1xf32> -> vector<8x1xf32>
    %1194 = vector.broadcast %1193 : vector<8x1xf32> to vector<8x8xf32>
    %1195 = arith.mulf %1190, %1194 : vector<8x8xf32>
    %1196 = vector.extract_strided_slice %1024 {offsets = [8, 16], sizes = [8, 8], strides = [1, 1]} : vector<16x32xf32> to vector<8x8xf32>
    %1197 = arith.truncf %1195 : vector<8x8xf32> to vector<8x8xbf16>
    %1198 = arith.truncf %1196 : vector<8x8xf32> to vector<8x8xbf16>
    %cst_434 = arith.constant dense<0.000000e+00> : vector<8x8xf32>
    %1199 = tpu.matmul %1197, %1198, %cst_434 {dimension_numbers = #tpu.dot_dimension_numbers<[1], [0], [0], [1], [0, 0, 1, 1], [], []>} : vector<8x8xbf16>, vector<8x8xbf16>, vector<8x8xf32> -> vector<8x8xf32>
    %1200 = vector.extract_strided_slice %1026 {offsets = [16, 0], sizes = [8, 32], strides = [1, 1]} : vector<32x32xbf16> to vector<8x32xbf16>
    %1201 = arith.truncf %1199 : vector<8x8xf32> to vector<8x8xbf16>
    %cst_435 = arith.constant dense<0.000000e+00> : vector<8x32xf32>
    %1202 = tpu.matmul %1201, %1200, %cst_435 {dimension_numbers = #tpu.dot_dimension_numbers<[1], [0], [0], [1], [0, 0, 1, 1], [], []>} : vector<8x8xbf16>, vector<8x32xbf16>, vector<8x32xf32> -> vector<8x32xf32>
    %1203 = arith.addf %1178, %1202 : vector<8x32xf32>
    %1204 = vector.extract_strided_slice %1017 {offsets = [8, 24], sizes = [8, 8], strides = [1, 1]} : vector<16x32xf32> to vector<8x8xf32>
    %1205 = vector.extract_strided_slice %1018 {offsets = [8, 24], sizes = [8, 8], strides = [1, 1]} : vector<16x32xf32> to vector<8x8xf32>
    %1206 = arith.truncf %1204 : vector<8x8xf32> to vector<8x8xbf16>
    %1207 = arith.truncf %1205 : vector<8x8xf32> to vector<8x8xbf16>
    %cst_436 = arith.constant dense<0.000000e+00> : vector<8x8xf32>
    %1208 = tpu.matmul %1206, %1207, %cst_436 {dimension_numbers = #tpu.dot_dimension_numbers<[1], [1], [0], [0], [0, 0, 1, 0], [], []>} : vector<8x8xbf16>, vector<8x8xbf16>, vector<8x8xf32> -> vector<8x8xf32>
    %cst_437 = arith.constant 0.353553385 : f32
    %1209 = vector.broadcast %cst_437 : f32 to vector<8x8xf32>
    %1210 = arith.mulf %1208, %1209 : vector<8x8xf32>
    %cst_438 = arith.constant dense<0xFF800000> : vector<8xf32>
    %1211 = vector.multi_reduction <maximumf>, %1210, %cst_438 [1] : vector<8x8xf32> to vector<8xf32>
    %1212 = vector.shape_cast %1211 : vector<8xf32> to vector<8x1xf32>
    %1213 = vector.broadcast %1212 : vector<8x1xf32> to vector<8x8xf32>
    %1214 = arith.subf %1210, %1213 : vector<8x8xf32>
    %1215 = math.exp %1214 : vector<8x8xf32>
    %cst_439 = arith.constant dense<0.000000e+00> : vector<8xf32>
    %1216 = vector.multi_reduction <add>, %1215, %cst_439 [1] : vector<8x8xf32> to vector<8xf32>
    %1217 = vector.shape_cast %1216 : vector<8xf32> to vector<8x1xf32>
    %1218 = tpu.reciprocal %1217 {approx = true} : vector<8x1xf32> -> vector<8x1xf32>
    %1219 = vector.broadcast %1218 : vector<8x1xf32> to vector<8x8xf32>
    %1220 = arith.mulf %1215, %1219 : vector<8x8xf32>
    %1221 = vector.extract_strided_slice %1024 {offsets = [8, 24], sizes = [8, 8], strides = [1, 1]} : vector<16x32xf32> to vector<8x8xf32>
    %1222 = arith.truncf %1220 : vector<8x8xf32> to vector<8x8xbf16>
    %1223 = arith.truncf %1221 : vector<8x8xf32> to vector<8x8xbf16>
    %cst_440 = arith.constant dense<0.000000e+00> : vector<8x8xf32>
    %1224 = tpu.matmul %1222, %1223, %cst_440 {dimension_numbers = #tpu.dot_dimension_numbers<[1], [0], [0], [1], [0, 0, 1, 1], [], []>} : vector<8x8xbf16>, vector<8x8xbf16>, vector<8x8xf32> -> vector<8x8xf32>
    %1225 = vector.extract_strided_slice %1026 {offsets = [24, 0], sizes = [8, 32], strides = [1, 1]} : vector<32x32xbf16> to vector<8x32xbf16>
    %1226 = arith.truncf %1224 : vector<8x8xf32> to vector<8x8xbf16>
    %cst_441 = arith.constant dense<0.000000e+00> : vector<8x32xf32>
    %1227 = tpu.matmul %1226, %1225, %cst_441 {dimension_numbers = #tpu.dot_dimension_numbers<[1], [0], [0], [1], [0, 0, 1, 1], [], []>} : vector<8x8xbf16>, vector<8x32xbf16>, vector<8x32xf32> -> vector<8x32xf32>
    %1228 = arith.addf %1203, %1227 : vector<8x32xf32>
    %1229 = tpu.concatenate %1127, %1228 in 0 : vector<8x32xf32>, vector<8x32xf32> -> vector<16x32xf32>
    %c0_442 = arith.constant 0 : index
    %c3_443 = arith.constant 3 : index
    %c0_444 = arith.constant 0 : index
    %c0_445 = arith.constant 0 : index
    %1230 = vector.load %arg9[%c0_442, %c3_443, %c0_444, %c0_445] : memref<1x4x1x32xf32, #tpu.memory_space<vmem>>, vector<1x1x1x32xf32>
    %1231 = vector.shape_cast %1230 : vector<1x1x1x32xf32> to vector<1x32xf32>
    %1232 = vector.broadcast %1231 : vector<1x32xf32> to vector<16x32xf32>
    %1233 = arith.addf %1229, %1232 : vector<16x32xf32>
    %c0_446 = arith.constant 0 : index
    %c3_447 = arith.constant 3 : index
    %c0_448 = arith.constant 0 : index
    %c0_449 = arith.constant 0 : index
    %1234 = vector.load %arg10[%c0_446, %c3_447, %c0_448, %c0_449] : memref<1x4x1x32xf32, #tpu.memory_space<vmem>>, vector<1x1x1x32xf32>
    %1235 = vector.shape_cast %1234 : vector<1x1x1x32xf32> to vector<1x32xf32>
    %c0_450 = arith.constant 0 : index
    %c3_451 = arith.constant 3 : index
    %c0_452 = arith.constant 0 : index
    %c0_453 = arith.constant 0 : index
    %1236 = vector.load %arg11[%c0_450, %c3_451, %c0_452, %c0_453] : memref<1x4x1x32xf32, #tpu.memory_space<vmem>>, vector<1x1x1x32xf32>
    %1237 = vector.shape_cast %1236 : vector<1x1x1x32xf32> to vector<1x32xf32>
    %1238 = arith.addf %4, %1233 : vector<16x32xf32>
    %cst_454 = arith.constant dense<0.000000e+00> : vector<16xf32>
    %1239 = vector.multi_reduction <add>, %1238, %cst_454 [1] : vector<16x32xf32> to vector<16xf32>
    %1240 = vector.shape_cast %1239 : vector<16xf32> to vector<16x1xf32>
    %cst_455 = arith.constant 3.200000e+01 : f32
    %1241 = vector.broadcast %cst_455 : f32 to vector<16x1xf32>
    %1242 = arith.divf %1240, %1241 : vector<16x1xf32>
    %1243 = vector.broadcast %1242 : vector<16x1xf32> to vector<16x32xf32>
    %1244 = arith.subf %1238, %1243 : vector<16x32xf32>
    %1245 = arith.mulf %1244, %1244 : vector<16x32xf32>
    %cst_456 = arith.constant dense<0.000000e+00> : vector<16xf32>
    %1246 = vector.multi_reduction <add>, %1245, %cst_456 [1] : vector<16x32xf32> to vector<16xf32>
    %1247 = vector.shape_cast %1246 : vector<16xf32> to vector<16x1xf32>
    %cst_457 = arith.constant 3.200000e+01 : f32
    %1248 = vector.broadcast %cst_457 : f32 to vector<16x1xf32>
    %1249 = arith.divf %1247, %1248 : vector<16x1xf32>
    %1250 = vector.broadcast %1242 : vector<16x1xf32> to vector<16x32xf32>
    %1251 = arith.subf %1238, %1250 : vector<16x32xf32>
    %cst_458 = arith.constant 9.99999974E-6 : f32
    %1252 = vector.broadcast %cst_458 : f32 to vector<16x1xf32>
    %1253 = arith.addf %1249, %1252 : vector<16x1xf32>
    %1254 = math.rsqrt %1253 : vector<16x1xf32>
    %1255 = vector.broadcast %1254 : vector<16x1xf32> to vector<16x32xf32>
    %1256 = arith.mulf %1251, %1255 : vector<16x32xf32>
    %1257 = vector.broadcast %1235 : vector<1x32xf32> to vector<16x32xf32>
    %1258 = arith.mulf %1256, %1257 : vector<16x32xf32>
    %1259 = vector.broadcast %1237 : vector<1x32xf32> to vector<16x32xf32>
    %1260 = arith.addf %1258, %1259 : vector<16x32xf32>
    %c0_459 = arith.constant 0 : index
    %c1_460 = arith.constant 1 : index
    %c0_461 = arith.constant 0 : index
    %c0_462 = arith.constant 0 : index
    %1261 = vector.load %arg12[%c0_459, %c1_460, %c0_461, %c0_462] : memref<1x2x32x64xbf16, #tpu.memory_space<vmem>>, vector<1x1x32x64xbf16>
    %1262 = vector.shape_cast %1261 : vector<1x1x32x64xbf16> to vector<32x64xbf16>
    %1263 = arith.truncf %1260 : vector<16x32xf32> to vector<16x32xbf16>
    %cst_463 = arith.constant dense<0.000000e+00> : vector<16x64xf32>
    %1264 = tpu.matmul %1263, %1262, %cst_463 {dimension_numbers = #tpu.dot_dimension_numbers<[1], [0], [0], [1], [0, 0, 1, 1], [], []>} : vector<16x32xbf16>, vector<32x64xbf16>, vector<16x64xf32> -> vector<16x64xf32>
    %c0_464 = arith.constant 0 : index
    %c1_465 = arith.constant 1 : index
    %c0_466 = arith.constant 0 : index
    %c0_467 = arith.constant 0 : index
    %1265 = vector.load %arg13[%c0_464, %c1_465, %c0_466, %c0_467] : memref<1x2x1x64xf32, #tpu.memory_space<vmem>>, vector<1x1x1x64xf32>
    %1266 = vector.shape_cast %1265 : vector<1x1x1x64xf32> to vector<1x64xf32>
    %1267 = vector.broadcast %1266 : vector<1x64xf32> to vector<16x64xf32>
    %1268 = arith.addf %1264, %1267 : vector<16x64xf32>
    %cst_468 = arith.constant 0.000000e+00 : f32
    %1269 = vector.broadcast %cst_468 : f32 to vector<16x64xf32>
    %1270 = arith.maximumf %1268, %1269 : vector<16x64xf32>
    %c0_469 = arith.constant 0 : index
    %c1_470 = arith.constant 1 : index
    %c0_471 = arith.constant 0 : index
    %c0_472 = arith.constant 0 : index
    %1271 = vector.load %arg14[%c0_469, %c1_470, %c0_471, %c0_472] : memref<1x2x64x32xbf16, #tpu.memory_space<vmem>>, vector<1x1x64x32xbf16>
    %1272 = vector.shape_cast %1271 : vector<1x1x64x32xbf16> to vector<64x32xbf16>
    %1273 = arith.truncf %1270 : vector<16x64xf32> to vector<16x64xbf16>
    %cst_473 = arith.constant dense<0.000000e+00> : vector<16x32xf32>
    %1274 = tpu.matmul %1273, %1272, %cst_473 {dimension_numbers = #tpu.dot_dimension_numbers<[1], [0], [0], [1], [0, 0, 1, 1], [], []>} : vector<16x64xbf16>, vector<64x32xbf16>, vector<16x32xf32> -> vector<16x32xf32>
    %c0_474 = arith.constant 0 : index
    %c1_475 = arith.constant 1 : index
    %c0_476 = arith.constant 0 : index
    %c0_477 = arith.constant 0 : index
    %1275 = vector.load %arg15[%c0_474, %c1_475, %c0_476, %c0_477] : memref<1x2x1x32xf32, #tpu.memory_space<vmem>>, vector<1x1x1x32xf32>
    %1276 = vector.shape_cast %1275 : vector<1x1x1x32xf32> to vector<1x32xf32>
    %1277 = vector.broadcast %1276 : vector<1x32xf32> to vector<16x32xf32>
    %1278 = arith.addf %1274, %1277 : vector<16x32xf32>
    %c0_478 = arith.constant 0 : index
    %c1_479 = arith.constant 1 : index
    %c0_480 = arith.constant 0 : index
    %c0_481 = arith.constant 0 : index
    %1279 = vector.load %arg16[%c0_478, %c1_479, %c0_480, %c0_481] : memref<1x2x1x32xf32, #tpu.memory_space<vmem>>, vector<1x1x1x32xf32>
    %1280 = vector.shape_cast %1279 : vector<1x1x1x32xf32> to vector<1x32xf32>
    %c0_482 = arith.constant 0 : index
    %c1_483 = arith.constant 1 : index
    %c0_484 = arith.constant 0 : index
    %c0_485 = arith.constant 0 : index
    %1281 = vector.load %arg17[%c0_482, %c1_483, %c0_484, %c0_485] : memref<1x2x1x32xf32, #tpu.memory_space<vmem>>, vector<1x1x1x32xf32>
    %1282 = vector.shape_cast %1281 : vector<1x1x1x32xf32> to vector<1x32xf32>
    %1283 = arith.addf %1260, %1278 : vector<16x32xf32>
    %cst_486 = arith.constant dense<0.000000e+00> : vector<16xf32>
    %1284 = vector.multi_reduction <add>, %1283, %cst_486 [1] : vector<16x32xf32> to vector<16xf32>
    %1285 = vector.shape_cast %1284 : vector<16xf32> to vector<16x1xf32>
    %cst_487 = arith.constant 3.200000e+01 : f32
    %1286 = vector.broadcast %cst_487 : f32 to vector<16x1xf32>
    %1287 = arith.divf %1285, %1286 : vector<16x1xf32>
    %1288 = vector.broadcast %1287 : vector<16x1xf32> to vector<16x32xf32>
    %1289 = arith.subf %1283, %1288 : vector<16x32xf32>
    %1290 = arith.mulf %1289, %1289 : vector<16x32xf32>
    %cst_488 = arith.constant dense<0.000000e+00> : vector<16xf32>
    %1291 = vector.multi_reduction <add>, %1290, %cst_488 [1] : vector<16x32xf32> to vector<16xf32>
    %1292 = vector.shape_cast %1291 : vector<16xf32> to vector<16x1xf32>
    %cst_489 = arith.constant 3.200000e+01 : f32
    %1293 = vector.broadcast %cst_489 : f32 to vector<16x1xf32>
    %1294 = arith.divf %1292, %1293 : vector<16x1xf32>
    %1295 = vector.broadcast %1287 : vector<16x1xf32> to vector<16x32xf32>
    %1296 = arith.subf %1283, %1295 : vector<16x32xf32>
    %cst_490 = arith.constant 9.99999974E-6 : f32
    %1297 = vector.broadcast %cst_490 : f32 to vector<16x1xf32>
    %1298 = arith.addf %1294, %1297 : vector<16x1xf32>
    %1299 = math.rsqrt %1298 : vector<16x1xf32>
    %1300 = vector.broadcast %1299 : vector<16x1xf32> to vector<16x32xf32>
    %1301 = arith.mulf %1296, %1300 : vector<16x32xf32>
    %1302 = vector.broadcast %1280 : vector<1x32xf32> to vector<16x32xf32>
    %1303 = arith.mulf %1301, %1302 : vector<16x32xf32>
    %1304 = vector.broadcast %1282 : vector<1x32xf32> to vector<16x32xf32>
    %1305 = arith.addf %1303, %1304 : vector<16x32xf32>
    %1306 = vector.shape_cast %1305 : vector<16x32xf32> to vector<2x8x32xf32>
    %c0_491 = arith.constant 0 : index
    %c0_492 = arith.constant 0 : index
    %c0_493 = arith.constant 0 : index
    %1307 = vector.load %arg24[%c0_491, %c0_492, %c0_493] : memref<2x8x32xf32, #tpu.memory_space<vmem>>, vector<2x8x32xf32>
    tpu.vector_store %arg24[%c0_491, %c0_492, %c0_493], %1306 {strides = array<i32>} : memref<2x8x32xf32, #tpu.memory_space<vmem>>, vector<2x8x32xf32>,
    return
  }
  func.func @transform_0(%arg0: i32, %arg1: i32) -> (i32, i32, i32) {
    %c0_i32 = arith.constant 0 : i32
    %c0_i32_0 = arith.constant 0 : i32
    %c0_i32_1 = arith.constant 0 : i32
    return %arg0, %c0_i32, %c0_i32_0 : i32, i32, i32
  }
  func.func @transform_1(%arg0: i32, %arg1: i32) -> (i32, i32, i32) {
    %c0_i32 = arith.constant 0 : i32
    %c0_i32_0 = arith.constant 0 : i32
    %c0_i32_1 = arith.constant 0 : i32
    return %arg0, %c0_i32, %c0_i32_0 : i32, i32, i32
  }
  func.func @transform_2(%arg0: i32, %arg1: i32) -> (i32, i32, i32, i32) {
    %c0_i32 = arith.constant 0 : i32
    %c0_i32_0 = arith.constant 0 : i32
    %c0_i32_1 = arith.constant 0 : i32
    %c0_i32_2 = arith.constant 0 : i32
    return %arg0, %c0_i32, %c0_i32_0, %c0_i32_1 : i32, i32, i32, i32
  }
  func.func @transform_3(%arg0: i32, %arg1: i32) -> (i32, i32, i32, i32) {
    %c0_i32 = arith.constant 0 : i32
    %c0_i32_0 = arith.constant 0 : i32
    %c0_i32_1 = arith.constant 0 : i32
    %c0_i32_2 = arith.constant 0 : i32
    return %arg0, %c0_i32, %c0_i32_0, %c0_i32_1 : i32, i32, i32, i32
  }
  func.func @transform_4(%arg0: i32, %arg1: i32) -> (i32, i32, i32, i32) {
    %c0_i32 = arith.constant 0 : i32
    %c0_i32_0 = arith.constant 0 : i32
    %c0_i32_1 = arith.constant 0 : i32
    %c0_i32_2 = arith.constant 0 : i32
    return %arg1, %c0_i32, %c0_i32_0, %c0_i32_1 : i32, i32, i32, i32
  }
  func.func @transform_5(%arg0: i32, %arg1: i32) -> (i32, i32, i32, i32) {
    %c0_i32 = arith.constant 0 : i32
    %c0_i32_0 = arith.constant 0 : i32
    %c0_i32_1 = arith.constant 0 : i32
    %c0_i32_2 = arith.constant 0 : i32
    return %arg1, %c0_i32, %c0_i32_0, %c0_i32_1 : i32, i32, i32, i32
  }
  func.func @transform_6(%arg0: i32, %arg1: i32) -> (i32, i32, i32, i32) {
    %c0_i32 = arith.constant 0 : i32
    %c0_i32_0 = arith.constant 0 : i32
    %c0_i32_1 = arith.constant 0 : i32
    %c0_i32_2 = arith.constant 0 : i32
    return %arg1, %c0_i32, %c0_i32_0, %c0_i32_1 : i32, i32, i32, i32
  }
  func.func @transform_7(%arg0: i32, %arg1: i32) -> (i32, i32, i32, i32) {
    %c0_i32 = arith.constant 0 : i32
    %c0_i32_0 = arith.constant 0 : i32
    %c0_i32_1 = arith.constant 0 : i32
    %c0_i32_2 = arith.constant 0 : i32
    return %arg1, %c0_i32, %c0_i32_0, %c0_i32_1 : i32, i32, i32, i32
  }
  func.func @transform_8(%arg0: i32, %arg1: i32) -> (i32, i32, i32, i32) {
    %c0_i32 = arith.constant 0 : i32
    %c0_i32_0 = arith.constant 0 : i32
    %c0_i32_1 = arith.constant 0 : i32
    %c0_i32_2 = arith.constant 0 : i32
    return %arg1, %c0_i32, %c0_i32_0, %c0_i32_1 : i32, i32, i32, i32
  }
  func.func @transform_9(%arg0: i32, %arg1: i32) -> (i32, i32, i32, i32) {
    %c0_i32 = arith.constant 0 : i32
    %c0_i32_0 = arith.constant 0 : i32
    %c0_i32_1 = arith.constant 0 : i32
    %c0_i32_2 = arith.constant 0 : i32
    return %arg1, %c0_i32, %c0_i32_0, %c0_i32_1 : i32, i32, i32, i32
  }
  func.func @transform_10(%arg0: i32, %arg1: i32) -> (i32, i32, i32, i32) {
    %c0_i32 = arith.constant 0 : i32
    %c0_i32_0 = arith.constant 0 : i32
    %c0_i32_1 = arith.constant 0 : i32
    %c0_i32_2 = arith.constant 0 : i32
    return %arg1, %c0_i32, %c0_i32_0, %c0_i32_1 : i32, i32, i32, i32
  }
  func.func @transform_11(%arg0: i32, %arg1: i32) -> (i32, i32, i32, i32) {
    %c0_i32 = arith.constant 0 : i32
    %c0_i32_0 = arith.constant 0 : i32
    %c0_i32_1 = arith.constant 0 : i32
    %c0_i32_2 = arith.constant 0 : i32
    return %arg1, %c0_i32, %c0_i32_0, %c0_i32_1 : i32, i32, i32, i32
  }
  func.func @transform_12(%arg0: i32, %arg1: i32) -> (i32, i32, i32, i32) {
    %c0_i32 = arith.constant 0 : i32
    %c0_i32_0 = arith.constant 0 : i32
    %c0_i32_1 = arith.constant 0 : i32
    %c0_i32_2 = arith.constant 0 : i32
    return %arg1, %c0_i32, %c0_i32_0, %c0_i32_1 : i32, i32, i32, i32
  }
  func.func @transform_13(%arg0: i32, %arg1: i32) -> (i32, i32, i32, i32) {
    %c0_i32 = arith.constant 0 : i32
    %c0_i32_0 = arith.constant 0 : i32
    %c0_i32_1 = arith.constant 0 : i32
    %c0_i32_2 = arith.constant 0 : i32
    return %arg1, %c0_i32, %c0_i32_0, %c0_i32_1 : i32, i32, i32, i32
  }
  func.func @transform_14(%arg0: i32, %arg1: i32) -> (i32, i32, i32, i32) {
    %c0_i32 = arith.constant 0 : i32
    %c0_i32_0 = arith.constant 0 : i32
    %c0_i32_1 = arith.constant 0 : i32
    %c0_i32_2 = arith.constant 0 : i32
    return %arg1, %c0_i32, %c0_i32_0, %c0_i32_1 : i32, i32, i32, i32
  }
  func.func @transform_15(%arg0: i32, %arg1: i32) -> (i32, i32, i32, i32) {
    %c0_i32 = arith.constant 0 : i32
    %c0_i32_0 = arith.constant 0 : i32
    %c0_i32_1 = arith.constant 0 : i32
    %c0_i32_2 = arith.constant 0 : i32
    return %arg1, %c0_i32, %c0_i32_0, %c0_i32_1 : i32, i32, i32, i32
  }
  func.func @transform_16(%arg0: i32, %arg1: i32) -> (i32, i32, i32) {
    %c0_i32 = arith.constant 0 : i32
    %c0_i32_0 = arith.constant 0 : i32
    %c0_i32_1 = arith.constant 0 : i32
    return %arg1, %c0_i32, %c0_i32_0 : i32, i32, i32
  }
  func.func @transform_17(%arg0: i32, %arg1: i32) -> (i32, i32, i32) {
    %c0_i32 = arith.constant 0 : i32
    %c0_i32_0 = arith.constant 0 : i32
    %c0_i32_1 = arith.constant 0 : i32
    return %arg1, %c0_i32, %c0_i32_0 : i32, i32, i32
  }
  func.func @transform_18(%arg0: i32, %arg1: i32) -> (i32, i32, i32) {
    %c0_i32 = arith.constant 0 : i32
    %c0_i32_0 = arith.constant 0 : i32
    %c0_i32_1 = arith.constant 0 : i32
    return %arg1, %c0_i32, %c0_i32_0 : i32, i32, i32
  }
  func.func @transform_19(%arg0: i32, %arg1: i32) -> (i32, i32, i32) {
    %c0_i32 = arith.constant 0 : i32
    %c0_i32_0 = arith.constant 0 : i32
    %c0_i32_1 = arith.constant 0 : i32
    return %arg1, %c0_i32, %c0_i32_0 : i32, i32, i32
  }
  func.func @transform_20(%arg0: i32, %arg1: i32) -> (i32, i32, i32) {
    %c0_i32 = arith.constant 0 : i32
    %c0_i32_0 = arith.constant 0 : i32
    %c0_i32_1 = arith.constant 0 : i32
    return %arg1, %c0_i32, %c0_i32_0 : i32, i32, i32
  }
  func.func @transform_21(%arg0: i32, %arg1: i32) -> (i32, i32, i32) {
    %c0_i32 = arith.constant 0 : i32
    %c0_i32_0 = arith.constant 0 : i32
    %c0_i32_1 = arith.constant 0 : i32
    return %arg1, %c0_i32, %c0_i32_0 : i32, i32, i32
  }
  func.func @transform_22(%arg0: i32, %arg1: i32) -> (i32, i32, i32) {
    %c0_i32 = arith.constant 0 : i32
    %c0_i32_0 = arith.constant 0 : i32
    %c0_i32_1 = arith.constant 0 : i32
    return %arg0, %c0_i32, %c0_i32_0 : i32, i32, i32
  }
}

</mosaic_0001>

<llo_original>
// kernel: decoder_forward.1
$region0: #{decoder_forward.1}
  #allocation0 [shape = 'u32[]', space=smem, size = 0x4, offset = 0x4, fixed_abs, tag = 'smem constant byte address 0x4 - core index']
  #allocation1 [shape = 'u32[144,128]{1,0:T(1,128)}', space=vmem, size = 0x12000, scoped, tag = 'internal scratch']
  %s0 = inlined_call_operand.vmem [shape: f32[4,8,32], index: 0, kind: input, shape index: {}]
  %s1 = inlined_call_operand.vmem [shape: f32[4,8,32], index: 1, kind: input, shape index: {}]
  %s2 = inlined_call_operand.vmem [shape: bf16[4,3,8,32], index: 2, kind: input, shape index: {}]
  %s3 = inlined_call_operand.vmem [shape: bf16[4,5,8,32], index: 3, kind: input, shape index: {}]
  %s4 = inlined_call_operand.vmem [shape: bf16[2,4,32,96], index: 4, kind: input, shape index: {}]
  %s5 = inlined_call_operand.vmem [shape: f32[2,4,1,96], index: 5, kind: input, shape index: {}]
  %s6 = inlined_call_operand.vmem [shape: bf16[2,4,32,32], index: 6, kind: input, shape index: {}]
  %s7 = inlined_call_operand.vmem [shape: f32[2,4,1,32], index: 7, kind: input, shape index: {}]
  %s8 = inlined_call_operand.vmem [shape: f32[2,4,1,32], index: 8, kind: input, shape index: {}]
  %s9 = inlined_call_operand.vmem [shape: f32[2,4,1,32], index: 9, kind: input, shape index: {}]
  %s10 = inlined_call_operand.vmem [shape: bf16[2,2,32,64], index: 10, kind: input, shape index: {}]
  %s11 = inlined_call_operand.vmem [shape: f32[2,2,1,64], index: 11, kind: input, shape index: {}]
  %s12 = inlined_call_operand.vmem [shape: bf16[2,2,64,32], index: 12, kind: input, shape index: {}]
  %s13 = inlined_call_operand.vmem [shape: f32[2,2,1,32], index: 13, kind: input, shape index: {}]
  %s14 = inlined_call_operand.vmem [shape: f32[2,2,1,32], index: 14, kind: input, shape index: {}]
  %s15 = inlined_call_operand.vmem [shape: f32[2,2,1,32], index: 15, kind: input, shape index: {}]
  %s16 = inlined_call_operand.vmem [shape: bf16[2,32,5], index: 16, kind: input, shape index: {}]
  %s17 = inlined_call_operand.vmem [shape: bf16[2,32,5], index: 17, kind: input, shape index: {}]
  %s18 = inlined_call_operand.vmem [shape: f32[2,1,5], index: 18, kind: input, shape index: {}]
  %s19 = inlined_call_operand.vmem [shape: bf16[2,32,3], index: 19, kind: input, shape index: {}]
  %s20 = inlined_call_operand.vmem [shape: bf16[2,32,3], index: 20, kind: input, shape index: {}]
  %s21 = inlined_call_operand.vmem [shape: f32[2,1,3], index: 21, kind: input, shape index: {}]
  %s22 = inlined_call_operand.hbm [shape: f32[4,8,32], index: 22, kind: output, shape index: {}]
  %s23 = sld [smem:[#allocation0]]
  $region125: #{decoder_forward.1} parent=0
    _
  %s25 = ssub.s32 1, %s23
  %s26 = scalar_select 0, %s25, %s23
  $region1: #{decoder_forward.1} parent=0
    #allocation2 [shape = 'u8[16384]{0}', space=vmem, size = 0x4000, scoped, tag = 'output window, operand 0']
    #allocation3 [shape = 's32[2]{0}', space=sflag, size = 0x8, scoped, tag = 'scoped memory for decoder_forward.1']
    %27 = vsyncpa [#allocation3], 0
    %s28 = scalar_lea.sflag [#allocation3], 1
    %29 = vsyncpa %s28, 0
    loop: start=0, step=1, limit=6
    $region2: #{decoder_forward.1} parent=1 // loop_pre_header
      _
    $region3: #{decoder_forward.1} parent=1 // loop_header
      %s31 = sphi 0, %s35
      %p32 = scmp.ge.s32.totalorder %s31, 6
      %s38 = sphi 0, %s50
      %s39 = sphi 0, %s46
      %s40 = sphi 0, %s38
      %s41 = sphi 0, %s39
      %s42 = sphi 0, %s40
      %s43 = sphi 0, %s41
      %s53 = sphi 0, %s55
      %s56 = sphi 0, %s53
      %s57 = sphi 0, %s56
      %s73 = sphi 0, %s57
      %s79 = sphi 0, %s81
      %s82 = sphi 0, %s79
      %s83 = sphi 0, %s82
      %s99 = sphi 0, %s83
      %s105 = sphi 0, %s107
      %s108 = sphi 0, %s105
      %s109 = sphi 0, %s108
      %s125 = sphi 0, %s109
      %s131 = sphi 0, %s133
      %s134 = sphi 0, %s131
      %s135 = sphi 0, %s134
      %s151 = sphi 0, %s135
      %s157 = sphi 0, %s159
      %s160 = sphi 0, %s157
      %s161 = sphi 0, %s160
      %s177 = sphi 0, %s161
      %s183 = sphi 0, %s185
      %s186 = sphi 0, %s183
      %s187 = sphi 0, %s186
      %s203 = sphi 0, %s187
      %s209 = sphi 0, %s211
      %s212 = sphi 0, %s209
      %s213 = sphi 0, %s212
      %s229 = sphi 0, %s213
      %s235 = sphi 0, %s237
      %s238 = sphi 0, %s235
      %s239 = sphi 0, %s238
      %s255 = sphi 0, %s239
      %s261 = sphi 0, %s263
      %s264 = sphi 0, %s261
      %s265 = sphi 0, %s264
      %s281 = sphi 0, %s265
      %s287 = sphi 0, %s289
      %s290 = sphi 0, %s287
      %s291 = sphi 0, %s290
      %s307 = sphi 0, %s291
      %s313 = sphi 0, %s315
      %s316 = sphi 0, %s313
      %s317 = sphi 0, %s316
      %s333 = sphi 0, %s317
      %s339 = sphi 0, %s341
      %s342 = sphi 0, %s339
      %s343 = sphi 0, %s342
      %s359 = sphi 0, %s343
      %s365 = sphi 0, %s367
      %s368 = sphi 0, %s365
      %s369 = sphi 0, %s368
      %s385 = sphi 0, %s369
      %s391 = sphi 0, %s393
      %s394 = sphi 0, %s391
      %s395 = sphi 0, %s394
      %s411 = sphi 0, %s395
      %s417 = sphi 0, %s419
      %s420 = sphi 0, %s417
      %s421 = sphi 0, %s420
      %s437 = sphi 0, %s421
      %s443 = sphi 0, %s445
      %s446 = sphi 0, %s443
      %s447 = sphi 0, %s446
      %s463 = sphi 0, %s447
      %s469 = sphi 0, %s471
      %s472 = sphi 0, %s469
      %s473 = sphi 0, %s472
      %s489 = sphi 0, %s473
      %s495 = sphi 0, %s497
      %s498 = sphi 0, %s495
      %s499 = sphi 0, %s498
      %s515 = sphi 0, %s499
      %s521 = sphi 0, %s523
      %s524 = sphi 0, %s521
      %s525 = sphi 0, %s524
      %s541 = sphi 0, %s525
      %s547 = sphi 0, %s549
      %s550 = sphi 0, %s547
      %s551 = sphi 0, %s550
      %s567 = sphi 0, %s551
      %s573 = sphi 0, %s575
      %s576 = sphi 0, %s573
      %s577 = sphi 0, %s576
      %s593 = sphi 0, %s577
      %s599 = sphi 0, %s601
      %s602 = sphi 0, %s599
      %s603 = sphi 0, %s602
      %s619 = sphi 0, %s603
      %s625 = sphi 0, %s627
      %s628 = sphi 0, %s625
      %s629 = sphi 0, %s628
      %s645 = sphi 0, %s629
    $region4: #{decoder_forward.1} parent=1 // loop_header_branch
      %34 = sbr.rel (%p32) target = $region8
    $region5: #{decoder_forward.1} parent=1 // loop_body
      %s36 = ssub.s32 %s31, 1
      %s37 = ssub.s32 %s31, 2
      %s44 = sadd.s32 1, %s39
      %p45 = scmp.ge.s32.totalorder %s44, 2
      %s46 = scalar_select %p45, 0, %s44
      %s47 = sadd.s32 1, %s38
      %s48 = scalar_select %p45, %s47, %s38
      %p49 = scmp.ge.s32.totalorder %s48, 2
      %s50 = scalar_select %p49, 0, %s48
      %s51 = ssub.s32 %s38, %s50
      %p52 = scmp.eq.s32.totalorder %s51, 0
      %s54 = sadd.s32 %s53, 1
      %s55 = scalar_select %p52, %s53, %s54
      %p58 = pneg %p52
      %p59 = scmp.eq.s32.totalorder %s31, 3
      %p60 = por %p58, %p59
      %p61 = scmp.ne.s32.totalorder %s53, %s56
      %p62 = scmp.eq.s32.totalorder %s31, 0
      %p63 = por %p61, %p62
      %p64 = scmp.ne.s32.totalorder %s53, %s56
      %p65 = scmp.eq.s32.totalorder %s36, 3
      %p66 = por %p64, %p65
      %p67 = scmp.ne.s32.totalorder %s56, %s57
      %p68 = scmp.eq.s32.totalorder %s36, 0
      %p69 = por %p67, %p68
      %p70 = scmp.ne.s32.totalorder %s56, %s57
      %p71 = scmp.eq.s32.totalorder %s37, 3
      %p72 = por %p70, %p71
      %p74 = scmp.ne.s32.totalorder %s57, %s73
      %p75 = scmp.eq.s32.totalorder %s37, 0
      %p76 = por %p74, %p75
      %s77 = ssub.s32 %s38, %s50
      %p78 = scmp.eq.s32.totalorder %s77, 0
      %s80 = sadd.s32 %s79, 1
      %s81 = scalar_select %p78, %s79, %s80
      %p84 = pneg %p78
      %p85 = scmp.eq.s32.totalorder %s31, 3
      %p86 = por %p84, %p85
      %p87 = scmp.ne.s32.totalorder %s79, %s82
      %p88 = scmp.eq.s32.totalorder %s31, 0
      %p89 = por %p87, %p88
      %p90 = scmp.ne.s32.totalorder %s79, %s82
      %p91 = scmp.eq.s32.totalorder %s36, 3
      %p92 = por %p90, %p91
      %p93 = scmp.ne.s32.totalorder %s82, %s83
      %p94 = scmp.eq.s32.totalorder %s36, 0
      %p95 = por %p93, %p94
      %p96 = scmp.ne.s32.totalorder %s82, %s83
      %p97 = scmp.eq.s32.totalorder %s37, 3
      %p98 = por %p96, %p97
      %p100 = scmp.ne.s32.totalorder %s83, %s99
      %p101 = scmp.eq.s32.totalorder %s37, 0
      %p102 = por %p100, %p101
      %s103 = ssub.s32 %s38, %s50
      %p104 = scmp.eq.s32.totalorder %s103, 0
      %s106 = sadd.s32 %s105, 1
      %s107 = scalar_select %p104, %s105, %s106
      %p110 = pneg %p104
      %p111 = scmp.eq.s32.totalorder %s31, 3
      %p112 = por %p110, %p111
      %p113 = scmp.ne.s32.totalorder %s105, %s108
      %p114 = scmp.eq.s32.totalorder %s31, 0
      %p115 = por %p113, %p114
      %p116 = scmp.ne.s32.totalorder %s105, %s108
      %p117 = scmp.eq.s32.totalorder %s36, 3
      %p118 = por %p116, %p117
      %p119 = scmp.ne.s32.totalorder %s108, %s109
      %p120 = scmp.eq.s32.totalorder %s36, 0
      %p121 = por %p119, %p120
      %p122 = scmp.ne.s32.totalorder %s108, %s109
      %p123 = scmp.eq.s32.totalorder %s37, 3
      %p124 = por %p122, %p123
      %p126 = scmp.ne.s32.totalorder %s109, %s125
      %p127 = scmp.eq.s32.totalorder %s37, 0
      %p128 = por %p126, %p127
      %s129 = ssub.s32 %s38, %s50
      %p130 = scmp.eq.s32.totalorder %s129, 0
      %s132 = sadd.s32 %s131, 1
      %s133 = scalar_select %p130, %s131, %s132
      %p136 = pneg %p130
      %p137 = scmp.eq.s32.totalorder %s31, 3
      %p138 = por %p136, %p137
      %p139 = scmp.ne.s32.totalorder %s131, %s134
      %p140 = scmp.eq.s32.totalorder %s31, 0
      %p141 = por %p139, %p140
      %p142 = scmp.ne.s32.totalorder %s131, %s134
      %p143 = scmp.eq.s32.totalorder %s36, 3
      %p144 = por %p142, %p143
      %p145 = scmp.ne.s32.totalorder %s134, %s135
      %p146 = scmp.eq.s32.totalorder %s36, 0
      %p147 = por %p145, %p146
      %p148 = scmp.ne.s32.totalorder %s134, %s135
      %p149 = scmp.eq.s32.totalorder %s37, 3
      %p150 = por %p148, %p149
      %p152 = scmp.ne.s32.totalorder %s135, %s151
      %p153 = scmp.eq.s32.totalorder %s37, 0
      %p154 = por %p152, %p153
      %s155 = ssub.s32 %s39, %s46
      %p156 = scmp.eq.s32.totalorder %s155, 0
      %s158 = sadd.s32 %s157, 1
      %s159 = scalar_select %p156, %s157, %s158
      %p162 = pneg %p156
      %p163 = scmp.eq.s32.totalorder %s31, 3
      %p164 = por %p162, %p163
      %p165 = scmp.ne.s32.totalorder %s157, %s160
      %p166 = scmp.eq.s32.totalorder %s31, 0
      %p167 = por %p165, %p166
      %p168 = scmp.ne.s32.totalorder %s157, %s160
      %p169 = scmp.eq.s32.totalorder %s36, 3
      %p170 = por %p168, %p169
      %p171 = scmp.ne.s32.totalorder %s160, %s161
      %p172 = scmp.eq.s32.totalorder %s36, 0
      %p173 = por %p171, %p172
      %p174 = scmp.ne.s32.totalorder %s160, %s161
      %p175 = scmp.eq.s32.totalorder %s37, 3
      %p176 = por %p174, %p175
      %p178 = scmp.ne.s32.totalorder %s161, %s177
      %p179 = scmp.eq.s32.totalorder %s37, 0
      %p180 = por %p178, %p179
      %s181 = ssub.s32 %s39, %s46
      %p182 = scmp.eq.s32.totalorder %s181, 0
      %s184 = sadd.s32 %s183, 1
      %s185 = scalar_select %p182, %s183, %s184
      %p188 = pneg %p182
      %p189 = scmp.eq.s32.totalorder %s31, 3
      %p190 = por %p188, %p189
      %p191 = scmp.ne.s32.totalorder %s183, %s186
      %p192 = scmp.eq.s32.totalorder %s31, 0
      %p193 = por %p191, %p192
      %p194 = scmp.ne.s32.totalorder %s183, %s186
      %p195 = scmp.eq.s32.totalorder %s36, 3
      %p196 = por %p194, %p195
      %p197 = scmp.ne.s32.totalorder %s186, %s187
      %p198 = scmp.eq.s32.totalorder %s36, 0
      %p199 = por %p197, %p198
      %p200 = scmp.ne.s32.totalorder %s186, %s187
      %p201 = scmp.eq.s32.totalorder %s37, 3
      %p202 = por %p200, %p201
      %p204 = scmp.ne.s32.totalorder %s187, %s203
      %p205 = scmp.eq.s32.totalorder %s37, 0
      %p206 = por %p204, %p205
      %s207 = ssub.s32 %s39, %s46
      %p208 = scmp.eq.s32.totalorder %s207, 0
      %s210 = sadd.s32 %s209, 1
      %s211 = scalar_select %p208, %s209, %s210
      %p214 = pneg %p208
      %p215 = scmp.eq.s32.totalorder %s31, 3
      %p216 = por %p214, %p215
      %p217 = scmp.ne.s32.totalorder %s209, %s212
      %p218 = scmp.eq.s32.totalorder %s31, 0
      %p219 = por %p217, %p218
      %p220 = scmp.ne.s32.totalorder %s209, %s212
      %p221 = scmp.eq.s32.totalorder %s36, 3
      %p222 = por %p220, %p221
      %p223 = scmp.ne.s32.totalorder %s212, %s213
      %p224 = scmp.eq.s32.totalorder %s36, 0
      %p225 = por %p223, %p224
      %p226 = scmp.ne.s32.totalorder %s212, %s213
      %p227 = scmp.eq.s32.totalorder %s37, 3
      %p228 = por %p226, %p227
      %p230 = scmp.ne.s32.totalorder %s213, %s229
      %p231 = scmp.eq.s32.totalorder %s37, 0
      %p232 = por %p230, %p231
      %s233 = ssub.s32 %s39, %s46
      %p234 = scmp.eq.s32.totalorder %s233, 0
      %s236 = sadd.s32 %s235, 1
      %s237 = scalar_select %p234, %s235, %s236
      %p240 = pneg %p234
      %p241 = scmp.eq.s32.totalorder %s31, 3
      %p242 = por %p240, %p241
      %p243 = scmp.ne.s32.totalorder %s235, %s238
      %p244 = scmp.eq.s32.totalorder %s31, 0
      %p245 = por %p243, %p244
      %p246 = scmp.ne.s32.totalorder %s235, %s238
      %p247 = scmp.eq.s32.totalorder %s36, 3
      %p248 = por %p246, %p247
      %p249 = scmp.ne.s32.totalorder %s238, %s239
      %p250 = scmp.eq.s32.totalorder %s36, 0
      %p251 = por %p249, %p250
      %p252 = scmp.ne.s32.totalorder %s238, %s239
      %p253 = scmp.eq.s32.totalorder %s37, 3
      %p254 = por %p252, %p253
      %p256 = scmp.ne.s32.totalorder %s239, %s255
      %p257 = scmp.eq.s32.totalorder %s37, 0
      %p258 = por %p256, %p257
      %s259 = ssub.s32 %s39, %s46
      %p260 = scmp.eq.s32.totalorder %s259, 0
      %s262 = sadd.s32 %s261, 1
      %s263 = scalar_select %p260, %s261, %s262
      %p266 = pneg %p260
      %p267 = scmp.eq.s32.totalorder %s31, 3
      %p268 = por %p266, %p267
      %p269 = scmp.ne.s32.totalorder %s261, %s264
      %p270 = scmp.eq.s32.totalorder %s31, 0
      %p271 = por %p269, %p270
      %p272 = scmp.ne.s32.totalorder %s261, %s264
      %p273 = scmp.eq.s32.totalorder %s36, 3
      %p274 = por %p272, %p273
      %p275 = scmp.ne.s32.totalorder %s264, %s265
      %p276 = scmp.eq.s32.totalorder %s36, 0
      %p277 = por %p275, %p276
      %p278 = scmp.ne.s32.totalorder %s264, %s265
      %p279 = scmp.eq.s32.totalorder %s37, 3
      %p280 = por %p278, %p279
      %p282 = scmp.ne.s32.totalorder %s265, %s281
      %p283 = scmp.eq.s32.totalorder %s37, 0
      %p284 = por %p282, %p283
      %s285 = ssub.s32 %s39, %s46
      %p286 = scmp.eq.s32.totalorder %s285, 0
      %s288 = sadd.s32 %s287, 1
      %s289 = scalar_select %p286, %s287, %s288
      %p292 = pneg %p286
      %p293 = scmp.eq.s32.totalorder %s31, 3
      %p294 = por %p292, %p293
      %p295 = scmp.ne.s32.totalorder %s287, %s290
      %p296 = scmp.eq.s32.totalorder %s31, 0
      %p297 = por %p295, %p296
      %p298 = scmp.ne.s32.totalorder %s287, %s290
      %p299 = scmp.eq.s32.totalorder %s36, 3
      %p300 = por %p298, %p299
      %p301 = scmp.ne.s32.totalorder %s290, %s291
      %p302 = scmp.eq.s32.totalorder %s36, 0
      %p303 = por %p301, %p302
      %p304 = scmp.ne.s32.totalorder %s290, %s291
      %p305 = scmp.eq.s32.totalorder %s37, 3
      %p306 = por %p304, %p305
      %p308 = scmp.ne.s32.totalorder %s291, %s307
      %p309 = scmp.eq.s32.totalorder %s37, 0
      %p310 = por %p308, %p309
      %s311 = ssub.s32 %s39, %s46
      %p312 = scmp.eq.s32.totalorder %s311, 0
      %s314 = sadd.s32 %s313, 1
      %s315 = scalar_select %p312, %s313, %s314
      %p318 = pneg %p312
      %p319 = scmp.eq.s32.totalorder %s31, 3
      %p320 = por %p318, %p319
      %p321 = scmp.ne.s32.totalorder %s313, %s316
      %p322 = scmp.eq.s32.totalorder %s31, 0
      %p323 = por %p321, %p322
      %p324 = scmp.ne.s32.totalorder %s313, %s316
      %p325 = scmp.eq.s32.totalorder %s36, 3
      %p326 = por %p324, %p325
      %p327 = scmp.ne.s32.totalorder %s316, %s317
      %p328 = scmp.eq.s32.totalorder %s36, 0
      %p329 = por %p327, %p328
      %p330 = scmp.ne.s32.totalorder %s316, %s317
      %p331 = scmp.eq.s32.totalorder %s37, 3
      %p332 = por %p330, %p331
      %p334 = scmp.ne.s32.totalorder %s317, %s333
      %p335 = scmp.eq.s32.totalorder %s37, 0
      %p336 = por %p334, %p335
      %s337 = ssub.s32 %s39, %s46
      %p338 = scmp.eq.s32.totalorder %s337, 0
      %s340 = sadd.s32 %s339, 1
      %s341 = scalar_select %p338, %s339, %s340
      %p344 = pneg %p338
      %p345 = scmp.eq.s32.totalorder %s31, 3
      %p346 = por %p344, %p345
      %p347 = scmp.ne.s32.totalorder %s339, %s342
      %p348 = scmp.eq.s32.totalorder %s31, 0
      %p349 = por %p347, %p348
      %p350 = scmp.ne.s32.totalorder %s339, %s342
      %p351 = scmp.eq.s32.totalorder %s36, 3
      %p352 = por %p350, %p351
      %p353 = scmp.ne.s32.totalorder %s342, %s343
      %p354 = scmp.eq.s32.totalorder %s36, 0
      %p355 = por %p353, %p354
      %p356 = scmp.ne.s32.totalorder %s342, %s343
      %p357 = scmp.eq.s32.totalorder %s37, 3
      %p358 = por %p356, %p357
      %p360 = scmp.ne.s32.totalorder %s343, %s359
      %p361 = scmp.eq.s32.totalorder %s37, 0
      %p362 = por %p360, %p361
      %s363 = ssub.s32 %s39, %s46
      %p364 = scmp.eq.s32.totalorder %s363, 0
      %s366 = sadd.s32 %s365, 1
      %s367 = scalar_select %p364, %s365, %s366
      %p370 = pneg %p364
      %p371 = scmp.eq.s32.totalorder %s31, 3
      %p372 = por %p370, %p371
      %p373 = scmp.ne.s32.totalorder %s365, %s368
      %p374 = scmp.eq.s32.totalorder %s31, 0
      %p375 = por %p373, %p374
      %p376 = scmp.ne.s32.totalorder %s365, %s368
      %p377 = scmp.eq.s32.totalorder %s36, 3
      %p378 = por %p376, %p377
      %p379 = scmp.ne.s32.totalorder %s368, %s369
      %p380 = scmp.eq.s32.totalorder %s36, 0
      %p381 = por %p379, %p380
      %p382 = scmp.ne.s32.totalorder %s368, %s369
      %p383 = scmp.eq.s32.totalorder %s37, 3
      %p384 = por %p382, %p383
      %p386 = scmp.ne.s32.totalorder %s369, %s385
      %p387 = scmp.eq.s32.totalorder %s37, 0
      %p388 = por %p386, %p387
      %s389 = ssub.s32 %s39, %s46
      %p390 = scmp.eq.s32.totalorder %s389, 0
      %s392 = sadd.s32 %s391, 1
      %s393 = scalar_select %p390, %s391, %s392
      %p396 = pneg %p390
      %p397 = scmp.eq.s32.totalorder %s31, 3
      %p398 = por %p396, %p397
      %p399 = scmp.ne.s32.totalorder %s391, %s394
      %p400 = scmp.eq.s32.totalorder %s31, 0
      %p401 = por %p399, %p400
      %p402 = scmp.ne.s32.totalorder %s391, %s394
      %p403 = scmp.eq.s32.totalorder %s36, 3
      %p404 = por %p402, %p403
      %p405 = scmp.ne.s32.totalorder %s394, %s395
      %p406 = scmp.eq.s32.totalorder %s36, 0
      %p407 = por %p405, %p406
      %p408 = scmp.ne.s32.totalorder %s394, %s395
      %p409 = scmp.eq.s32.totalorder %s37, 3
      %p410 = por %p408, %p409
      %p412 = scmp.ne.s32.totalorder %s395, %s411
      %p413 = scmp.eq.s32.totalorder %s37, 0
      %p414 = por %p412, %p413
      %s415 = ssub.s32 %s39, %s46
      %p416 = scmp.eq.s32.totalorder %s415, 0
      %s418 = sadd.s32 %s417, 1
      %s419 = scalar_select %p416, %s417, %s418
      %p422 = pneg %p416
      %p423 = scmp.eq.s32.totalorder %s31, 3
      %p424 = por %p422, %p423
      %p425 = scmp.ne.s32.totalorder %s417, %s420
      %p426 = scmp.eq.s32.totalorder %s31, 0
      %p427 = por %p425, %p426
      %p428 = scmp.ne.s32.totalorder %s417, %s420
      %p429 = scmp.eq.s32.totalorder %s36, 3
      %p430 = por %p428, %p429
      %p431 = scmp.ne.s32.totalorder %s420, %s421
      %p432 = scmp.eq.s32.totalorder %s36, 0
      %p433 = por %p431, %p432
      %p434 = scmp.ne.s32.totalorder %s420, %s421
      %p435 = scmp.eq.s32.totalorder %s37, 3
      %p436 = por %p434, %p435
      %p438 = scmp.ne.s32.totalorder %s421, %s437
      %p439 = scmp.eq.s32.totalorder %s37, 0
      %p440 = por %p438, %p439
      %s441 = ssub.s32 %s39, %s46
      %p442 = scmp.eq.s32.totalorder %s441, 0
      %s444 = sadd.s32 %s443, 1
      %s445 = scalar_select %p442, %s443, %s444
      %p448 = pneg %p442
      %p449 = scmp.eq.s32.totalorder %s31, 3
      %p450 = por %p448, %p449
      %p451 = scmp.ne.s32.totalorder %s443, %s446
      %p452 = scmp.eq.s32.totalorder %s31, 0
      %p453 = por %p451, %p452
      %p454 = scmp.ne.s32.totalorder %s443, %s446
      %p455 = scmp.eq.s32.totalorder %s36, 3
      %p456 = por %p454, %p455
      %p457 = scmp.ne.s32.totalorder %s446, %s447
      %p458 = scmp.eq.s32.totalorder %s36, 0
      %p459 = por %p457, %p458
      %p460 = scmp.ne.s32.totalorder %s446, %s447
      %p461 = scmp.eq.s32.totalorder %s37, 3
      %p462 = por %p460, %p461
      %p464 = scmp.ne.s32.totalorder %s447, %s463
      %p465 = scmp.eq.s32.totalorder %s37, 0
      %p466 = por %p464, %p465
      %s467 = ssub.s32 %s39, %s46
      %p468 = scmp.eq.s32.totalorder %s467, 0
      %s470 = sadd.s32 %s469, 1
      %s471 = scalar_select %p468, %s469, %s470
      %p474 = pneg %p468
      %p475 = scmp.eq.s32.totalorder %s31, 3
      %p476 = por %p474, %p475
      %p477 = scmp.ne.s32.totalorder %s469, %s472
      %p478 = scmp.eq.s32.totalorder %s31, 0
      %p479 = por %p477, %p478
      %p480 = scmp.ne.s32.totalorder %s469, %s472
      %p481 = scmp.eq.s32.totalorder %s36, 3
      %p482 = por %p480, %p481
      %p483 = scmp.ne.s32.totalorder %s472, %s473
      %p484 = scmp.eq.s32.totalorder %s36, 0
      %p485 = por %p483, %p484
      %p486 = scmp.ne.s32.totalorder %s472, %s473
      %p487 = scmp.eq.s32.totalorder %s37, 3
      %p488 = por %p486, %p487
      %p490 = scmp.ne.s32.totalorder %s473, %s489
      %p491 = scmp.eq.s32.totalorder %s37, 0
      %p492 = por %p490, %p491
      %s493 = ssub.s32 %s39, %s46
      %p494 = scmp.eq.s32.totalorder %s493, 0
      %s496 = sadd.s32 %s495, 1
      %s497 = scalar_select %p494, %s495, %s496
      %p500 = pneg %p494
      %p501 = scmp.eq.s32.totalorder %s31, 3
      %p502 = por %p500, %p501
      %p503 = scmp.ne.s32.totalorder %s495, %s498
      %p504 = scmp.eq.s32.totalorder %s31, 0
      %p505 = por %p503, %p504
      %p506 = scmp.ne.s32.totalorder %s495, %s498
      %p507 = scmp.eq.s32.totalorder %s36, 3
      %p508 = por %p506, %p507
      %p509 = scmp.ne.s32.totalorder %s498, %s499
      %p510 = scmp.eq.s32.totalorder %s36, 0
      %p511 = por %p509, %p510
      %p512 = scmp.ne.s32.totalorder %s498, %s499
      %p513 = scmp.eq.s32.totalorder %s37, 3
      %p514 = por %p512, %p513
      %p516 = scmp.ne.s32.totalorder %s499, %s515
      %p517 = scmp.eq.s32.totalorder %s37, 0
      %p518 = por %p516, %p517
      %s519 = ssub.s32 %s39, %s46
      %p520 = scmp.eq.s32.totalorder %s519, 0
      %s522 = sadd.s32 %s521, 1
      %s523 = scalar_select %p520, %s521, %s522
      %p526 = pneg %p520
      %p527 = scmp.eq.s32.totalorder %s31, 3
      %p528 = por %p526, %p527
      %p529 = scmp.ne.s32.totalorder %s521, %s524
      %p530 = scmp.eq.s32.totalorder %s31, 0
      %p531 = por %p529, %p530
      %p532 = scmp.ne.s32.totalorder %s521, %s524
      %p533 = scmp.eq.s32.totalorder %s36, 3
      %p534 = por %p532, %p533
      %p535 = scmp.ne.s32.totalorder %s524, %s525
      %p536 = scmp.eq.s32.totalorder %s36, 0
      %p537 = por %p535, %p536
      %p538 = scmp.ne.s32.totalorder %s524, %s525
      %p539 = scmp.eq.s32.totalorder %s37, 3
      %p540 = por %p538, %p539
      %p542 = scmp.ne.s32.totalorder %s525, %s541
      %p543 = scmp.eq.s32.totalorder %s37, 0
      %p544 = por %p542, %p543
      %s545 = ssub.s32 %s39, %s46
      %p546 = scmp.eq.s32.totalorder %s545, 0
      %s548 = sadd.s32 %s547, 1
      %s549 = scalar_select %p546, %s547, %s548
      %p552 = pneg %p546
      %p553 = scmp.eq.s32.totalorder %s31, 3
      %p554 = por %p552, %p553
      %p555 = scmp.ne.s32.totalorder %s547, %s550
      %p556 = scmp.eq.s32.totalorder %s31, 0
      %p557 = por %p555, %p556
      %p558 = scmp.ne.s32.totalorder %s547, %s550
      %p559 = scmp.eq.s32.totalorder %s36, 3
      %p560 = por %p558, %p559
      %p561 = scmp.ne.s32.totalorder %s550, %s551
      %p562 = scmp.eq.s32.totalorder %s36, 0
      %p563 = por %p561, %p562
      %p564 = scmp.ne.s32.totalorder %s550, %s551
      %p565 = scmp.eq.s32.totalorder %s37, 3
      %p566 = por %p564, %p565
      %p568 = scmp.ne.s32.totalorder %s551, %s567
      %p569 = scmp.eq.s32.totalorder %s37, 0
      %p570 = por %p568, %p569
      %s571 = ssub.s32 %s39, %s46
      %p572 = scmp.eq.s32.totalorder %s571, 0
      %s574 = sadd.s32 %s573, 1
      %s575 = scalar_select %p572, %s573, %s574
      %p578 = pneg %p572
      %p579 = scmp.eq.s32.totalorder %s31, 3
      %p580 = por %p578, %p579
      %p581 = scmp.ne.s32.totalorder %s573, %s576
      %p582 = scmp.eq.s32.totalorder %s31, 0
      %p583 = por %p581, %p582
      %p584 = scmp.ne.s32.totalorder %s573, %s576
      %p585 = scmp.eq.s32.totalorder %s36, 3
      %p586 = por %p584, %p585
      %p587 = scmp.ne.s32.totalorder %s576, %s577
      %p588 = scmp.eq.s32.totalorder %s36, 0
      %p589 = por %p587, %p588
      %p590 = scmp.ne.s32.totalorder %s576, %s577
      %p591 = scmp.eq.s32.totalorder %s37, 3
      %p592 = por %p590, %p591
      %p594 = scmp.ne.s32.totalorder %s577, %s593
      %p595 = scmp.eq.s32.totalorder %s37, 0
      %p596 = por %p594, %p595
      %s597 = ssub.s32 %s39, %s46
      %p598 = scmp.eq.s32.totalorder %s597, 0
      %s600 = sadd.s32 %s599, 1
      %s601 = scalar_select %p598, %s599, %s600
      %p604 = pneg %p598
      %p605 = scmp.eq.s32.totalorder %s31, 3
      %p606 = por %p604, %p605
      %p607 = scmp.ne.s32.totalorder %s599, %s602
      %p608 = scmp.eq.s32.totalorder %s31, 0
      %p609 = por %p607, %p608
      %p610 = scmp.ne.s32.totalorder %s599, %s602
      %p611 = scmp.eq.s32.totalorder %s36, 3
      %p612 = por %p610, %p611
      %p613 = scmp.ne.s32.totalorder %s602, %s603
      %p614 = scmp.eq.s32.totalorder %s36, 0
      %p615 = por %p613, %p614
      %p616 = scmp.ne.s32.totalorder %s602, %s603
      %p617 = scmp.eq.s32.totalorder %s37, 3
      %p618 = por %p616, %p617
      %p620 = scmp.ne.s32.totalorder %s603, %s619
      %p621 = scmp.eq.s32.totalorder %s37, 0
      %p622 = por %p620, %p621
      %s623 = ssub.s32 %s38, %s50
      %p624 = scmp.eq.s32.totalorder %s623, 0
      %s626 = sadd.s32 %s625, 1
      %s627 = scalar_select %p624, %s625, %s626
      %p630 = pneg %p624
      %p631 = scmp.eq.s32.totalorder %s31, 3
      %p632 = por %p630, %p631
      %p633 = scmp.ne.s32.totalorder %s625, %s628
      %p634 = scmp.eq.s32.totalorder %s31, 0
      %p635 = por %p633, %p634
      %p636 = scmp.ne.s32.totalorder %s625, %s628
      %p637 = scmp.eq.s32.totalorder %s36, 3
      %p638 = por %p636, %p637
      %p639 = scmp.ne.s32.totalorder %s628, %s629
      %p640 = scmp.eq.s32.totalorder %s36, 0
      %p641 = por %p639, %p640
      %p642 = scmp.ne.s32.totalorder %s628, %s629
      %p643 = scmp.eq.s32.totalorder %s37, 3
      %p644 = por %p642, %p643
      %p646 = scmp.ne.s32.totalorder %s629, %s645
      %p647 = scmp.eq.s32.totalorder %s37, 0
      %p648 = por %p646, %p647
      %p649 = scmp.le.s32.totalorder 1, %s31
      %p650 = scmp.lt.s32.totalorder %s31, 5
      %p651 = pnand %p649, %p650
      %p652 = pneg %p651
      // Predicated region
      $region9: #{decoder_forward.1} parent=5 // pred_check
        _
      $region10: #{decoder_forward.1} parent=5 // pred_check_branch
        %654 = sbr.rel (%p651) target = $region12
      $region11: #{decoder_forward.1} parent=5 // pred_region
        %s655 = ssub.s32 %s31, 1
      $region12: #{decoder_forward.1} parent=5 // pred_fallthru
        _
      %p656 = scmp.lt.s32.totalorder %s31, 4
      // Predicated region
      $region13: #{decoder_forward.1} parent=5 // pred_check
        %p657 = pneg %p656
      $region14: #{decoder_forward.1} parent=5 // pred_check_branch
        %659 = sbr.rel (%p657) target = $region16
      $region15: #{decoder_forward.1} parent=5 // pred_region
        // Predicated region
        $region17: #{decoder_forward.1} parent=15 // pred_check
          %p660 = pneg %p63
        $region18: #{decoder_forward.1} parent=15 // pred_check_branch
          %662 = sbr.rel (%p660) target = $region20
        $region19: #{decoder_forward.1} parent=15 // pred_region
          %s663 = smul.u32 2, %s38
          %p664 = scmp.lt.s32.totalorder %s663, 3
          %s665 = scalar_select %p664, %s663, 3
          %s666 = smul.addr %s665, 8
          %s667 = scalar_lea.vmem %s0, %s666
          %s668 = smul.u32 2, %s38
        $region20: #{decoder_forward.1} parent=15 // pred_fallthru
          _
        // Predicated region
        $region21: #{decoder_forward.1} parent=15 // pred_check
          %p669 = pneg %p89
        $region22: #{decoder_forward.1} parent=15 // pred_check_branch
          %671 = sbr.rel (%p669) target = $region24
        $region23: #{decoder_forward.1} parent=15 // pred_region
          %s672 = smul.u32 2, %s38
          %p673 = scmp.lt.s32.totalorder %s672, 3
          %s674 = scalar_select %p673, %s672, 3
          %s675 = smul.addr %s674, 8
          %s676 = scalar_lea.vmem %s1, %s675
          %s677 = smul.u32 2, %s38
        $region24: #{decoder_forward.1} parent=15 // pred_fallthru
          _
        // Predicated region
        $region25: #{decoder_forward.1} parent=15 // pred_check
          %p678 = pneg %p115
        $region26: #{decoder_forward.1} parent=15 // pred_check_branch
          %680 = sbr.rel (%p678) target = $region28
        $region27: #{decoder_forward.1} parent=15 // pred_region
          %s681 = smul.u32 2, %s38
          %p682 = scmp.lt.s32.totalorder %s681, 3
          %s683 = scalar_select %p682, %s681, 3
          %s684 = smul.addr %s683, 3
          %s685 = smul.addr %s684, 4
          %s686 = scalar_lea.vmem %s2, %s685
          %s687 = smul.u32 2, %s38
        $region28: #{decoder_forward.1} parent=15 // pred_fallthru
          _
        // Predicated region
        $region29: #{decoder_forward.1} parent=15 // pred_check
          %p688 = pneg %p141
        $region30: #{decoder_forward.1} parent=15 // pred_check_branch
          %690 = sbr.rel (%p688) target = $region32
        $region31: #{decoder_forward.1} parent=15 // pred_region
          %s691 = smul.u32 2, %s38
          %p692 = scmp.lt.s32.totalorder %s691, 3
          %s693 = scalar_select %p692, %s691, 3
          %s694 = smul.addr %s693, 5
          %s695 = smul.addr %s694, 4
          %s696 = scalar_lea.vmem %s3, %s695
          %s697 = smul.u32 2, %s38
        $region32: #{decoder_forward.1} parent=15 // pred_fallthru
          _
        // Predicated region
        $region33: #{decoder_forward.1} parent=15 // pred_check
          %p698 = pneg %p167
        $region34: #{decoder_forward.1} parent=15 // pred_check_branch
          %700 = sbr.rel (%p698) target = $region36
        $region35: #{decoder_forward.1} parent=15 // pred_region
          %p701 = scmp.lt.s32.totalorder %s39, 1
          %s702 = scalar_select %p701, %s39, 1
          %s703 = smul.addr %s702, 16
          %s704 = smul.addr %s703, 4
          %s705 = scalar_lea.vmem %s4, %s704
        $region36: #{decoder_forward.1} parent=15 // pred_fallthru
          _
        // Predicated region
        $region37: #{decoder_forward.1} parent=15 // pred_check
          %p706 = pneg %p193
        $region38: #{decoder_forward.1} parent=15 // pred_check_branch
          %708 = sbr.rel (%p706) target = $region40
        $region39: #{decoder_forward.1} parent=15 // pred_region
          %p709 = scmp.lt.s32.totalorder %s39, 1
          %s710 = scalar_select %p709, %s39, 1
          %s711 = smul.addr %s710, 4
          %s712 = scalar_lea.vmem %s5, %s711
        $region40: #{decoder_forward.1} parent=15 // pred_fallthru
          _
        // Predicated region
        $region41: #{decoder_forward.1} parent=15 // pred_check
          %p713 = pneg %p219
        $region42: #{decoder_forward.1} parent=15 // pred_check_branch
          %715 = sbr.rel (%p713) target = $region44
        $region43: #{decoder_forward.1} parent=15 // pred_region
          %p716 = scmp.lt.s32.totalorder %s39, 1
          %s717 = scalar_select %p716, %s39, 1
          %s718 = smul.addr %s717, 16
          %s719 = smul.addr %s718, 4
          %s720 = scalar_lea.vmem %s6, %s719
        $region44: #{decoder_forward.1} parent=15 // pred_fallthru
          _
        // Predicated region
        $region45: #{decoder_forward.1} parent=15 // pred_check
          %p721 = pneg %p245
        $region46: #{decoder_forward.1} parent=15 // pred_check_branch
          %723 = sbr.rel (%p721) target = $region48
        $region47: #{decoder_forward.1} parent=15 // pred_region
          %p724 = scmp.lt.s32.totalorder %s39, 1
          %s725 = scalar_select %p724, %s39, 1
          %s726 = smul.addr %s725, 4
          %s727 = scalar_lea.vmem %s7, %s726
        $region48: #{decoder_forward.1} parent=15 // pred_fallthru
          _
        // Predicated region
        $region49: #{decoder_forward.1} parent=15 // pred_check
          %p728 = pneg %p271
        $region50: #{decoder_forward.1} parent=15 // pred_check_branch
          %730 = sbr.rel (%p728) target = $region52
        $region51: #{decoder_forward.1} parent=15 // pred_region
          %p731 = scmp.lt.s32.totalorder %s39, 1
          %s732 = scalar_select %p731, %s39, 1
          %s733 = smul.addr %s732, 4
          %s734 = scalar_lea.vmem %s8, %s733
        $region52: #{decoder_forward.1} parent=15 // pred_fallthru
          _
        // Predicated region
        $region53: #{decoder_forward.1} parent=15 // pred_check
          %p735 = pneg %p297
        $region54: #{decoder_forward.1} parent=15 // pred_check_branch
          %737 = sbr.rel (%p735) target = $region56
        $region55: #{decoder_forward.1} parent=15 // pred_region
          %p738 = scmp.lt.s32.totalorder %s39, 1
          %s739 = scalar_select %p738, %s39, 1
          %s740 = smul.addr %s739, 4
          %s741 = scalar_lea.vmem %s9, %s740
        $region56: #{decoder_forward.1} parent=15 // pred_fallthru
          _
        // Predicated region
        $region57: #{decoder_forward.1} parent=15 // pred_check
          %p742 = pneg %p323
        $region58: #{decoder_forward.1} parent=15 // pred_check_branch
          %744 = sbr.rel (%p742) target = $region60
        $region59: #{decoder_forward.1} parent=15 // pred_region
          %p745 = scmp.lt.s32.totalorder %s39, 1
          %s746 = scalar_select %p745, %s39, 1
          %s747 = smul.addr %s746, 8
          %s748 = smul.addr %s747, 4
          %s749 = scalar_lea.vmem %s10, %s748
        $region60: #{decoder_forward.1} parent=15 // pred_fallthru
          _
        // Predicated region
        $region61: #{decoder_forward.1} parent=15 // pred_check
          %p750 = pneg %p349
        $region62: #{decoder_forward.1} parent=15 // pred_check_branch
          %752 = sbr.rel (%p750) target = $region64
        $region63: #{decoder_forward.1} parent=15 // pred_region
          %p753 = scmp.lt.s32.totalorder %s39, 1
          %s754 = scalar_select %p753, %s39, 1
          %s755 = smul.addr %s754, 2
          %s756 = scalar_lea.vmem %s11, %s755
        $region64: #{decoder_forward.1} parent=15 // pred_fallthru
          _
        // Predicated region
        $region65: #{decoder_forward.1} parent=15 // pred_check
          %p757 = pneg %p375
        $region66: #{decoder_forward.1} parent=15 // pred_check_branch
          %759 = sbr.rel (%p757) target = $region68
        $region67: #{decoder_forward.1} parent=15 // pred_region
          %p760 = scmp.lt.s32.totalorder %s39, 1
          %s761 = scalar_select %p760, %s39, 1
          %s762 = smul.addr %s761, 16
          %s763 = smul.addr %s762, 4
          %s764 = scalar_lea.vmem %s12, %s763
        $region68: #{decoder_forward.1} parent=15 // pred_fallthru
          _
        // Predicated region
        $region69: #{decoder_forward.1} parent=15 // pred_check
          %p765 = pneg %p401
        $region70: #{decoder_forward.1} parent=15 // pred_check_branch
          %767 = sbr.rel (%p765) target = $region72
        $region71: #{decoder_forward.1} parent=15 // pred_region
          %p768 = scmp.lt.s32.totalorder %s39, 1
          %s769 = scalar_select %p768, %s39, 1
          %s770 = smul.addr %s769, 2
          %s771 = scalar_lea.vmem %s13, %s770
        $region72: #{decoder_forward.1} parent=15 // pred_fallthru
          _
        // Predicated region
        $region73: #{decoder_forward.1} parent=15 // pred_check
          %p772 = pneg %p427
        $region74: #{decoder_forward.1} parent=15 // pred_check_branch
          %774 = sbr.rel (%p772) target = $region76
        $region75: #{decoder_forward.1} parent=15 // pred_region
          %p775 = scmp.lt.s32.totalorder %s39, 1
          %s776 = scalar_select %p775, %s39, 1
          %s777 = smul.addr %s776, 2
          %s778 = scalar_lea.vmem %s14, %s777
        $region76: #{decoder_forward.1} parent=15 // pred_fallthru
          _
        // Predicated region
        $region77: #{decoder_forward.1} parent=15 // pred_check
          %p779 = pneg %p453
        $region78: #{decoder_forward.1} parent=15 // pred_check_branch
          %781 = sbr.rel (%p779) target = $region80
        $region79: #{decoder_forward.1} parent=15 // pred_region
          %p782 = scmp.lt.s32.totalorder %s39, 1
          %s783 = scalar_select %p782, %s39, 1
          %s784 = smul.addr %s783, 2
          %s785 = scalar_lea.vmem %s15, %s784
        $region80: #{decoder_forward.1} parent=15 // pred_fallthru
          _
        // Predicated region
        $region81: #{decoder_forward.1} parent=15 // pred_check
          %p786 = pneg %p479
        $region82: #{decoder_forward.1} parent=15 // pred_check_branch
          %788 = sbr.rel (%p786) target = $region84
        $region83: #{decoder_forward.1} parent=15 // pred_region
          %p789 = scmp.lt.s32.totalorder %s39, 1
          %s790 = scalar_select %p789, %s39, 1
          %s791 = smul.addr %s790, 4
          %s792 = smul.addr %s791, 4
          %s793 = scalar_lea.vmem %s16, %s792
        $region84: #{decoder_forward.1} parent=15 // pred_fallthru
          _
        // Predicated region
        $region85: #{decoder_forward.1} parent=15 // pred_check
          %p794 = pneg %p505
        $region86: #{decoder_forward.1} parent=15 // pred_check_branch
          %796 = sbr.rel (%p794) target = $region88
        $region87: #{decoder_forward.1} parent=15 // pred_region
          %p797 = scmp.lt.s32.totalorder %s39, 1
          %s798 = scalar_select %p797, %s39, 1
          %s799 = smul.addr %s798, 4
          %s800 = smul.addr %s799, 4
          %s801 = scalar_lea.vmem %s17, %s800
        $region88: #{decoder_forward.1} parent=15 // pred_fallthru
          _
        // Predicated region
        $region89: #{decoder_forward.1} parent=15 // pred_check
          %p802 = pneg %p531
        $region90: #{decoder_forward.1} parent=15 // pred_check_branch
          %804 = sbr.rel (%p802) target = $region92
        $region91: #{decoder_forward.1} parent=15 // pred_region
          %p805 = scmp.lt.s32.totalorder %s39, 1
          %s806 = scalar_select %p805, %s39, 1
          %s807 = scalar_lea.vmem %s18, %s806
        $region92: #{decoder_forward.1} parent=15 // pred_fallthru
          _
        // Predicated region
        $region93: #{decoder_forward.1} parent=15 // pred_check
          %p808 = pneg %p557
        $region94: #{decoder_forward.1} parent=15 // pred_check_branch
          %810 = sbr.rel (%p808) target = $region96
        $region95: #{decoder_forward.1} parent=15 // pred_region
          %p811 = scmp.lt.s32.totalorder %s39, 1
          %s812 = scalar_select %p811, %s39, 1
          %s813 = smul.addr %s812, 4
          %s814 = smul.addr %s813, 4
          %s815 = scalar_lea.vmem %s19, %s814
        $region96: #{decoder_forward.1} parent=15 // pred_fallthru
          _
        // Predicated region
        $region97: #{decoder_forward.1} parent=15 // pred_check
          %p816 = pneg %p583
        $region98: #{decoder_forward.1} parent=15 // pred_check_branch
          %818 = sbr.rel (%p816) target = $region100
        $region99: #{decoder_forward.1} parent=15 // pred_region
          %p819 = scmp.lt.s32.totalorder %s39, 1
          %s820 = scalar_select %p819, %s39, 1
          %s821 = smul.addr %s820, 4
          %s822 = smul.addr %s821, 4
          %s823 = scalar_lea.vmem %s20, %s822
        $region100: #{decoder_forward.1} parent=15 // pred_fallthru
          _
        // Predicated region
        $region101: #{decoder_forward.1} parent=15 // pred_check
          %p824 = pneg %p609
        $region102: #{decoder_forward.1} parent=15 // pred_check_branch
          %826 = sbr.rel (%p824) target = $region104
        $region103: #{decoder_forward.1} parent=15 // pred_region
          %p827 = scmp.lt.s32.totalorder %s39, 1
          %s828 = scalar_select %p827, %s39, 1
          %s829 = scalar_lea.vmem %s21, %s828
        $region104: #{decoder_forward.1} parent=15 // pred_fallthru
          _
      $region16: #{decoder_forward.1} parent=5 // pred_fallthru
        _
      %p830 = scmp.le.s32.totalorder 1, %s31
      %p831 = scmp.lt.s32.totalorder %s31, 5
      %p832 = pnand %p830, %p831
      %p833 = pneg %p832
      // Predicated region
      $region105: #{decoder_forward.1} parent=5 // pred_check
        _
      $region106: #{decoder_forward.1} parent=5 // pred_check_branch
        %835 = sbr.rel (%p832) target = $region108
      $region107: #{decoder_forward.1} parent=5 // pred_region
        %s836 = ssub.s32 %s31, 1
        %s837 = smul.u32 2, %s40
        %p838 = scmp.lt.s32.totalorder %s837, 3
        %s839 = scalar_select %p838, %s837, 3
        %s840 = smul.addr %s839, 8
        %s841 = scalar_lea.vmem %s0, %s840
        %p842 = pneg %p69
        %p843 = pneg %p66
        %s844 = smul.u32 2, %s40
        %p845 = scmp.lt.s32.totalorder %s844, 3
        %s846 = scalar_select %p845, %s844, 3
        %s847 = smul.addr %s846, 8
        %s848 = scalar_lea.vmem %s1, %s847
        %p849 = pneg %p95
        %p850 = pneg %p92
        %s851 = smul.u32 2, %s40
        %p852 = scmp.lt.s32.totalorder %s851, 3
        %s853 = scalar_select %p852, %s851, 3
        %s854 = smul.addr %s853, 3
        %s855 = smul.addr %s854, 4
        %s856 = scalar_lea.vmem %s2, %s855
        %p857 = pneg %p121
        %p858 = pneg %p118
        %s859 = smul.u32 2, %s40
        %p860 = scmp.lt.s32.totalorder %s859, 3
        %s861 = scalar_select %p860, %s859, 3
        %s862 = smul.addr %s861, 5
        %s863 = smul.addr %s862, 4
        %s864 = scalar_lea.vmem %s3, %s863
        %p865 = pneg %p147
        %p866 = pneg %p144
        %p867 = scmp.lt.s32.totalorder %s41, 1
        %s868 = scalar_select %p867, %s41, 1
        %s869 = smul.addr %s868, 16
        %s870 = smul.addr %s869, 4
        %s871 = scalar_lea.vmem %s4, %s870
        %p872 = pneg %p173
        %p873 = pneg %p170
        %p874 = scmp.lt.s32.totalorder %s41, 1
        %s875 = scalar_select %p874, %s41, 1
        %s876 = smul.addr %s875, 4
        %s877 = scalar_lea.vmem %s5, %s876
        %p878 = pneg %p199
        %p879 = pneg %p196
        %p880 = scmp.lt.s32.totalorder %s41, 1
        %s881 = scalar_select %p880, %s41, 1
        %s882 = smul.addr %s881, 16
        %s883 = smul.addr %s882, 4
        %s884 = scalar_lea.vmem %s6, %s883
        %p885 = pneg %p225
        %p886 = pneg %p222
        %p887 = scmp.lt.s32.totalorder %s41, 1
        %s888 = scalar_select %p887, %s41, 1
        %s889 = smul.addr %s888, 4
        %s890 = scalar_lea.vmem %s7, %s889
        %p891 = pneg %p251
        %p892 = pneg %p248
        %p893 = scmp.lt.s32.totalorder %s41, 1
        %s894 = scalar_select %p893, %s41, 1
        %s895 = smul.addr %s894, 4
        %s896 = scalar_lea.vmem %s8, %s895
        %p897 = pneg %p277
        %p898 = pneg %p274
        %p899 = scmp.lt.s32.totalorder %s41, 1
        %s900 = scalar_select %p899, %s41, 1
        %s901 = smul.addr %s900, 4
        %s902 = scalar_lea.vmem %s9, %s901
        %p903 = pneg %p303
        %p904 = pneg %p300
        %p905 = scmp.lt.s32.totalorder %s41, 1
        %s906 = scalar_select %p905, %s41, 1
        %s907 = smul.addr %s906, 8
        %s908 = smul.addr %s907, 4
        %s909 = scalar_lea.vmem %s10, %s908
        %p910 = pneg %p329
        %p911 = pneg %p326
        %p912 = scmp.lt.s32.totalorder %s41, 1
        %s913 = scalar_select %p912, %s41, 1
        %s914 = smul.addr %s913, 2
        %s915 = scalar_lea.vmem %s11, %s914
        %p916 = pneg %p355
        %p917 = pneg %p352
        %p918 = scmp.lt.s32.totalorder %s41, 1
        %s919 = scalar_select %p918, %s41, 1
        %s920 = smul.addr %s919, 16
        %s921 = smul.addr %s920, 4
        %s922 = scalar_lea.vmem %s12, %s921
        %p923 = pneg %p381
        %p924 = pneg %p378
        %p925 = scmp.lt.s32.totalorder %s41, 1
        %s926 = scalar_select %p925, %s41, 1
        %s927 = smul.addr %s926, 2
        %s928 = scalar_lea.vmem %s13, %s927
        %p929 = pneg %p407
        %p930 = pneg %p404
        %p931 = scmp.lt.s32.totalorder %s41, 1
        %s932 = scalar_select %p931, %s41, 1
        %s933 = smul.addr %s932, 2
        %s934 = scalar_lea.vmem %s14, %s933
        %p935 = pneg %p433
        %p936 = pneg %p430
        %p937 = scmp.lt.s32.totalorder %s41, 1
        %s938 = scalar_select %p937, %s41, 1
        %s939 = smul.addr %s938, 2
        %s940 = scalar_lea.vmem %s15, %s939
        %p941 = pneg %p459
        %p942 = pneg %p456
        %p943 = scmp.lt.s32.totalorder %s41, 1
        %s944 = scalar_select %p943, %s41, 1
        %s945 = smul.addr %s944, 4
        %s946 = smul.addr %s945, 4
        %s947 = scalar_lea.vmem %s16, %s946
        %p948 = pneg %p485
        %p949 = pneg %p482
        %p950 = scmp.lt.s32.totalorder %s41, 1
        %s951 = scalar_select %p950, %s41, 1
        %s952 = smul.addr %s951, 4
        %s953 = smul.addr %s952, 4
        %s954 = scalar_lea.vmem %s17, %s953
        %p955 = pneg %p511
        %p956 = pneg %p508
        %p957 = scmp.lt.s32.totalorder %s41, 1
        %s958 = scalar_select %p957, %s41, 1
        %s959 = scalar_lea.vmem %s18, %s958
        %p960 = pneg %p537
        %p961 = pneg %p534
        %p962 = scmp.lt.s32.totalorder %s41, 1
        %s963 = scalar_select %p962, %s41, 1
        %s964 = smul.addr %s963, 4
        %s965 = smul.addr %s964, 4
        %s966 = scalar_lea.vmem %s19, %s965
        %p967 = pneg %p563
        %p968 = pneg %p560
        %p969 = scmp.lt.s32.totalorder %s41, 1
        %s970 = scalar_select %p969, %s41, 1
        %s971 = smul.addr %s970, 4
        %s972 = smul.addr %s971, 4
        %s973 = scalar_lea.vmem %s20, %s972
        %p974 = pneg %p589
        %p975 = pneg %p586
        %p976 = scmp.lt.s32.totalorder %s41, 1
        %s977 = scalar_select %p976, %s41, 1
        %s978 = scalar_lea.vmem %s21, %s977
        %p979 = pneg %p615
        %p980 = pneg %p612
        %p981 = pneg %p641
        %p982 = pneg %p638
        %s983 = sand.u32 %s628, 1
        %s984 = scalar_lea.sflag [#allocation3], %s983
        %s985 = sand.u32 %s628, 1
        %s986 = smul.addr %s985, 16
        %s987 = scalar_lea.vmem [#allocation2], %s986
        %s988 = smul.u32 2, %s40
        %p989 = scmp.lt.s32.totalorder %s988, 3
        %s990 = scalar_select %p989, %s988, 3
        %s991 = smul.addr %s990, 8
        %s992 = scalar_lea.vmem %s0, %s991
        %s993 = smul.u32 2, %s40
        %s994 = smul.u32 2, %s40
        %p995 = scmp.lt.s32.totalorder %s994, 3
        %s996 = scalar_select %p995, %s994, 3
        %s997 = smul.addr %s996, 8
        %s998 = scalar_lea.vmem %s1, %s997
        %s999 = smul.u32 2, %s40
        %s1000 = smul.u32 2, %s40
        %p1001 = scmp.lt.s32.totalorder %s1000, 3
        %s1002 = scalar_select %p1001, %s1000, 3
        %s1003 = smul.addr %s1002, 3
        %s1004 = smul.addr %s1003, 4
        %s1005 = scalar_lea.vmem %s2, %s1004
        %s1006 = smul.u32 2, %s40
        %s1007 = smul.u32 2, %s40
        %p1008 = scmp.lt.s32.totalorder %s1007, 3
        %s1009 = scalar_select %p1008, %s1007, 3
        %s1010 = smul.addr %s1009, 5
        %s1011 = smul.addr %s1010, 4
        %s1012 = scalar_lea.vmem %s3, %s1011
        %s1013 = smul.u32 2, %s40
        %p1014 = scmp.lt.s32.totalorder %s41, 1
        %s1015 = scalar_select %p1014, %s41, 1
        %s1016 = smul.addr %s1015, 16
        %s1017 = smul.addr %s1016, 4
        %s1018 = scalar_lea.vmem %s4, %s1017
        %p1019 = scmp.lt.s32.totalorder %s41, 1
        %s1020 = scalar_select %p1019, %s41, 1
        %s1021 = smul.addr %s1020, 4
        %s1022 = scalar_lea.vmem %s5, %s1021
        %p1023 = scmp.lt.s32.totalorder %s41, 1
        %s1024 = scalar_select %p1023, %s41, 1
        %s1025 = smul.addr %s1024, 16
        %s1026 = smul.addr %s1025, 4
        %s1027 = scalar_lea.vmem %s6, %s1026
        %p1028 = scmp.lt.s32.totalorder %s41, 1
        %s1029 = scalar_select %p1028, %s41, 1
        %s1030 = smul.addr %s1029, 4
        %s1031 = scalar_lea.vmem %s7, %s1030
        %p1032 = scmp.lt.s32.totalorder %s41, 1
        %s1033 = scalar_select %p1032, %s41, 1
        %s1034 = smul.addr %s1033, 4
        %s1035 = scalar_lea.vmem %s8, %s1034
        %p1036 = scmp.lt.s32.totalorder %s41, 1
        %s1037 = scalar_select %p1036, %s41, 1
        %s1038 = smul.addr %s1037, 4
        %s1039 = scalar_lea.vmem %s9, %s1038
        %p1040 = scmp.lt.s32.totalorder %s41, 1
        %s1041 = scalar_select %p1040, %s41, 1
        %s1042 = smul.addr %s1041, 8
        %s1043 = smul.addr %s1042, 4
        %s1044 = scalar_lea.vmem %s10, %s1043
        %p1045 = scmp.lt.s32.totalorder %s41, 1
        %s1046 = scalar_select %p1045, %s41, 1
        %s1047 = smul.addr %s1046, 2
        %s1048 = scalar_lea.vmem %s11, %s1047
        %p1049 = scmp.lt.s32.totalorder %s41, 1
        %s1050 = scalar_select %p1049, %s41, 1
        %s1051 = smul.addr %s1050, 16
        %s1052 = smul.addr %s1051, 4
        %s1053 = scalar_lea.vmem %s12, %s1052
        %p1054 = scmp.lt.s32.totalorder %s41, 1
        %s1055 = scalar_select %p1054, %s41, 1
        %s1056 = smul.addr %s1055, 2
        %s1057 = scalar_lea.vmem %s13, %s1056
        %p1058 = scmp.lt.s32.totalorder %s41, 1
        %s1059 = scalar_select %p1058, %s41, 1
        %s1060 = smul.addr %s1059, 2
        %s1061 = scalar_lea.vmem %s14, %s1060
        %p1062 = scmp.lt.s32.totalorder %s41, 1
        %s1063 = scalar_select %p1062, %s41, 1
        %s1064 = smul.addr %s1063, 2
        %s1065 = scalar_lea.vmem %s15, %s1064
        %p1066 = scmp.lt.s32.totalorder %s41, 1
        %s1067 = scalar_select %p1066, %s41, 1
        %s1068 = smul.addr %s1067, 4
        %s1069 = smul.addr %s1068, 4
        %s1070 = scalar_lea.vmem %s16, %s1069
        %p1071 = scmp.lt.s32.totalorder %s41, 1
        %s1072 = scalar_select %p1071, %s41, 1
        %s1073 = smul.addr %s1072, 4
        %s1074 = smul.addr %s1073, 4
        %s1075 = scalar_lea.vmem %s17, %s1074
        %p1076 = scmp.lt.s32.totalorder %s41, 1
        %s1077 = scalar_select %p1076, %s41, 1
        %s1078 = scalar_lea.vmem %s18, %s1077
        %p1079 = scmp.lt.s32.totalorder %s41, 1
        %s1080 = scalar_select %p1079, %s41, 1
        %s1081 = smul.addr %s1080, 4
        %s1082 = smul.addr %s1081, 4
        %s1083 = scalar_lea.vmem %s19, %s1082
        %p1084 = scmp.lt.s32.totalorder %s41, 1
        %s1085 = scalar_select %p1084, %s41, 1
        %s1086 = smul.addr %s1085, 4
        %s1087 = smul.addr %s1086, 4
        %s1088 = scalar_lea.vmem %s20, %s1087
        %p1089 = scmp.lt.s32.totalorder %s41, 1
        %s1090 = scalar_select %p1089, %s41, 1
        %s1091 = scalar_lea.vmem %s21, %s1090
        %s1092 = smul.u32 2, %s40
        %p1094 = scmp.eq.s32.totalorder %s41, 0
        // Predicated region
        $region109: #{decoder_forward.1} parent=107 // pred_check
          %p1095 = pneg %p1094
        $region110: #{decoder_forward.1} parent=107 // pred_check_branch
          %1097 = sbr.rel (%p1095) target = $region112
        $region111: #{decoder_forward.1} parent=107 // pred_region
          %v1098 = vld [vmem:[%s992] sm:$0xff]
          %v1099 = vld [vmem:[%s992 + $0x8] sm:$0xff]
          %vm1100 = vcmask 261120
          %1101 = vst.msk [vmem:[%s987] sm:$0xff] %vm1100, %v1098
          %1102 = vst.msk [vmem:[%s987 + $0x8] sm:$0xff] %vm1100, %v1099
        $region112: #{decoder_forward.1} parent=107 // pred_fallthru
          _
        %v1103 = vld [vmem:[%s998] sm:$0xff]
        %v1104 = vld [vmem:[%s998 + $0x8] sm:$0xff]
        %v1105 = vld [vmem:[%s987] sm:$0xff]
        %v1106 = vld [vmem:[%s987 + $0x8] sm:$0xff]
        %v1107 = vld [vmem:[%s1018] sm:$0xf]
        %v1108 = vld [vmem:[%s1018 + $0x4] sm:$0xf]
        %v1109 = vld [vmem:[%s1018 + $0x8] sm:$0xf]
        %v1110 = vld [vmem:[%s1018 + $0xc] sm:$0xf]
        %v1111 = vld [vmem:[%s1022] sm:$0x1]
        %v1112 = vpack.c.bf16 %v1106, %v1105
        %v1114 = vlaneseq
        %v1115 = vshrl.u32 %v1114, 7
        %v1116 = vsub.s32 0, %v1115
        %v1117 = vrot.slane %v1111, %v1116
        %v1123 = vunpack.c.l.b16 %v1107
        %v1124 = vunpack.c.l.b16 %v1108
        %v1125 = vunpack.c.l.b16 %v1109
        %v1126 = vunpack.c.l.b16 %v1110
        %v1127 = vpack.c.b16 %v1124, %v1123
        %v1128 = vpack.c.b16 %v1126, %v1125
        %vm1131 = vcmask 261120
        %v1133 = vsel %vm1131, %v1112, 0
        %1135 = vmatprep.subr.bf16.mxu0 0
        %1136 = vmatpush1.bf16.msra.mxu0 %v1127
        %1137 = vmatprep.subr.bf16.mxu0 0
        %1138 = vmatpush1.bf16.msra.mxu0 %v1128
        %1139 = vmatprep.subr.bf16.mxu0 0
        %1140 = vmatpush1.bf16.msra.mxu0 0
        %1141 = vmatprep.subr.bf16.mxu0 0
        %1142 = vmatpush1.bf16.msra.mxu0 0
        %1143 = vmatprep.subr.bf16.mxu0 0
        %1144 = vmatpush1.bf16.msra.mxu0 0
        %1145 = vmatprep.subr.bf16.mxu0 0
        %1146 = vmatpush1.bf16.msra.mxu0 0
        %1147 = vmatprep.subr.bf16.mxu0 0
        %1148 = vmatpush1.bf16.msra.mxu0 0
        %1149 = vmatprep.subr.bf16.mxu0 0
        %1150 = vmatpush1.bf16.msra.mxu0 0
        %1151 = vmatprep.subr.bf16.mxu0 0
        %1152 = vmatpush1.bf16.msra.mxu0 0
        %1153 = vmatprep.subr.bf16.mxu0 0
        %1154 = vmatpush1.bf16.msra.mxu0 0
        %1155 = vmatprep.subr.bf16.mxu0 0
        %1156 = vmatpush1.bf16.msra.mxu0 0
        %1157 = vmatprep.subr.bf16.mxu0 0
        %1158 = vmatpush1.bf16.msra.mxu0 0
        %1159 = vmatprep.subr.bf16.mxu0 0
        %1160 = vmatpush1.bf16.msra.mxu0 0
        %1161 = vmatprep.subr.bf16.mxu0 0
        %1162 = vmatpush1.bf16.msra.mxu0 0
        %1163 = vmatprep.subr.bf16.mxu0 0
        %1164 = vmatpush1.bf16.msra.mxu0 0
        %1165 = vmatprep.subr.bf16.mxu0 0
        %1166 = vmatpush1.bf16.msra.mxu0 0
        %1167 = vmatprep.mubr.bf16.mxu0 0
        %1168 = vmatmul.mubr.bf16.gmra.mrb[0].mxu0 %v1133
        %v1169 = vpop.f32.mrb[0].mxu0
        %v1170 = vadd.f32 %v1117, %v1169
        %v1171 = vpop.f32.mrb[0].mxu0
        %v1172 = vpop.f32.mrb[0].mxu0
        %v1173 = vadd.f32 %v1117, %v1172
        %v1174 = vpop.f32.mrb[0].mxu0
        %1175 = vdwg.mxu0
        %v1176 = vld [vmem:[%s1027] sm:$0xf]
        %v1177 = vld [vmem:[%s1027 + $0x4] sm:$0xf]
        %v1178 = vld [vmem:[%s1027 + $0x8] sm:$0xf]
        %v1179 = vld [vmem:[%s1027 + $0xc] sm:$0xf]
        %v1180 = vpack.c.bf16 %v1170, %v1170
        %1182 = vrot.lane.b32.xlu0 %v1180, 96
        %v1183 = vpop.permute.xlu0 %1182
        %vm1184 = vcmask 64512
        %v1186 = vsel %vm1184, %v1180, 0
        %v1189 = vsel %vm1184, %v1183, 0
        %1191 = vmatprep.subr.bf16.mxu0 0
        %1192 = vmatpush1.bf16.xpose.msra.mxu0 %v1189
        %1193 = vmatprep.subr.bf16.mxu0 0
        %1194 = vmatpush1.bf16.xpose.msra.mxu0 0
        %1195 = vmatprep.subr.bf16.mxu0 0
        %1196 = vmatpush1.bf16.xpose.msra.mxu0 0
        %1197 = vmatprep.subr.bf16.mxu0 0
        %1198 = vmatpush1.bf16.xpose.msra.mxu0 0
        %1199 = vmatprep.subr.bf16.mxu0 0
        %1200 = vmatpush1.bf16.xpose.msra.mxu0 0
        %1201 = vmatprep.subr.bf16.mxu0 0
        %1202 = vmatpush1.bf16.xpose.msra.mxu0 0
        %1203 = vmatprep.subr.bf16.mxu0 0
        %1204 = vmatpush1.bf16.xpose.msra.mxu0 0
        %1205 = vmatprep.subr.bf16.mxu0 0
        %1206 = vmatpush1.bf16.xpose.msra.mxu0 0
        %1207 = vmatprep.subr.bf16.mxu0 0
        %1208 = vmatpush1.bf16.xpose.msra.mxu0 0
        %1209 = vmatprep.subr.bf16.mxu0 0
        %1210 = vmatpush1.bf16.xpose.msra.mxu0 0
        %1211 = vmatprep.subr.bf16.mxu0 0
        %1212 = vmatpush1.bf16.xpose.msra.mxu0 0
        %1213 = vmatprep.subr.bf16.mxu0 0
        %1214 = vmatpush1.bf16.xpose.msra.mxu0 0
        %1215 = vmatprep.subr.bf16.mxu0 0
        %1216 = vmatpush1.bf16.xpose.msra.mxu0 0
        %1217 = vmatprep.subr.bf16.mxu0 0
        %1218 = vmatpush1.bf16.xpose.msra.mxu0 0
        %1219 = vmatprep.subr.bf16.mxu0 0
        %1220 = vmatpush1.bf16.xpose.msra.mxu0 0
        %1221 = vmatprep.subr.bf16.mxu0 0
        %1222 = vmatpush1.bf16.xpose.msra.mxu0 0
        %1223 = vmatprep.mubr.bf16.mxu0 0
        %1224 = vmatmul.mubr.bf16.gmra.mrb[0].mxu0 %v1186
        %v1225 = vpop.f32.mrb[0].mxu0
        %v1226 = vadd.f32 0.0, %v1225
        %v1227 = vpop.f32.mrb[0].mxu0
        %v1228 = vpop.f32.mrb[0].mxu0
        %v1229 = vpop.f32.mrb[0].mxu0
        %1230 = vdwg.mxu0
        %v1231 = vmul.f32 %v1226, 0.35355338
        %v1232 = vsel %vm1184, %v1231, -inf
        %1233 = vmax.xlane.f32.xlu0 %v1232
        %v1234 = vpop.xlane.xlu0 %1233
        %v1235 = vsub.f32 %v1231, %v1234
        %v1236 = vmul.f32 %v1235, 1.442695
        %v1237 = vpow.pop %v1236
        %v1238 = vsel %vm1184, %v1237, 0.0
        %1239 = vadd.xlane.f32.xlu0 %v1238
        %v1240 = vpop.xlane.xlu0 %1239
        %v1241 = vrcp.pop %v1240
        %v1242 = vmul.f32 %v1237, %v1241
        %v1243 = vpack.c.bf16 %v1242, %v1242
        %1244 = vrot.lane.b32.xlu0 %v1180, 64
        %v1245 = vpop.permute.xlu0 %1244
        %v1247 = vsel %vm1184, %v1243, 0
        %vm1249 = vcmask 1043456
        %v1251 = vsel %vm1249, %v1245, 0
        %1253 = vmatprep.subr.bf16.mxu0 0
        %1254 = vmatpush1.bf16.msra.mxu0 %v1251
        %1255 = vmatprep.subr.bf16.mxu0 0
        %1256 = vmatpush1.bf16.msra.mxu0 0
        %1257 = vmatprep.subr.bf16.mxu0 0
        %1258 = vmatpush1.bf16.msra.mxu0 0
        %1259 = vmatprep.subr.bf16.mxu0 0
        %1260 = vmatpush1.bf16.msra.mxu0 0
        %1261 = vmatprep.subr.bf16.mxu0 0
        %1262 = vmatpush1.bf16.msra.mxu0 0
        %1263 = vmatprep.subr.bf16.mxu0 0
        %1264 = vmatpush1.bf16.msra.mxu0 0
        %1265 = vmatprep.subr.bf16.mxu0 0
        %1266 = vmatpush1.bf16.msra.mxu0 0
        %1267 = vmatprep.subr.bf16.mxu0 0
        %1268 = vmatpush1.bf16.msra.mxu0 0
        %1269 = vmatprep.subr.bf16.mxu0 0
        %1270 = vmatpush1.bf16.msra.mxu0 0
        %1271 = vmatprep.subr.bf16.mxu0 0
        %1272 = vmatpush1.bf16.msra.mxu0 0
        %1273 = vmatprep.subr.bf16.mxu0 0
        %1274 = vmatpush1.bf16.msra.mxu0 0
        %1275 = vmatprep.subr.bf16.mxu0 0
        %1276 = vmatpush1.bf16.msra.mxu0 0
        %1277 = vmatprep.subr.bf16.mxu0 0
        %1278 = vmatpush1.bf16.msra.mxu0 0
        %1279 = vmatprep.subr.bf16.mxu0 0
        %1280 = vmatpush1.bf16.msra.mxu0 0
        %1281 = vmatprep.subr.bf16.mxu0 0
        %1282 = vmatpush1.bf16.msra.mxu0 0
        %1283 = vmatprep.subr.bf16.mxu0 0
        %1284 = vmatpush1.bf16.msra.mxu0 0
        %1285 = vmatprep.mubr.bf16.mxu0 0
        %1286 = vmatmul.mubr.bf16.gmra.mrb[0].mxu0 %v1247
        %v1287 = vpop.f32.mrb[0].mxu0
        %v1288 = vadd.f32 0.0, %v1287
        %v1289 = vpop.f32.mrb[0].mxu0
        %v1290 = vpop.f32.mrb[0].mxu0
        %v1291 = vpop.f32.mrb[0].mxu0
        %1292 = vdwg.mxu0
        %v1293 = vpack.c.bf16 %v1288, %v1288
        %1294 = vrot.lane.b32.xlu0 %v1180, 120
        %v1295 = vpop.permute.xlu0 %1294
        %1296 = vrot.lane.b32.xlu0 %v1180, 88
        %v1297 = vpop.permute.xlu0 %1296
        %v1299 = vsel %vm1184, %v1295, 0
        %v1302 = vsel %vm1184, %v1297, 0
        %1304 = vmatprep.subr.bf16.mxu0 0
        %1305 = vmatpush1.bf16.xpose.msra.mxu0 %v1302
        %1306 = vmatprep.subr.bf16.mxu0 0
        %1307 = vmatpush1.bf16.xpose.msra.mxu0 0
        %1308 = vmatprep.subr.bf16.mxu0 0
        %1309 = vmatpush1.bf16.xpose.msra.mxu0 0
        %1310 = vmatprep.subr.bf16.mxu0 0
        %1311 = vmatpush1.bf16.xpose.msra.mxu0 0
        %1312 = vmatprep.subr.bf16.mxu0 0
        %1313 = vmatpush1.bf16.xpose.msra.mxu0 0
        %1314 = vmatprep.subr.bf16.mxu0 0
        %1315 = vmatpush1.bf16.xpose.msra.mxu0 0
        %1316 = vmatprep.subr.bf16.mxu0 0
        %1317 = vmatpush1.bf16.xpose.msra.mxu0 0
        %1318 = vmatprep.subr.bf16.mxu0 0
        %1319 = vmatpush1.bf16.xpose.msra.mxu0 0
        %1320 = vmatprep.subr.bf16.mxu0 0
        %1321 = vmatpush1.bf16.xpose.msra.mxu0 0
        %1322 = vmatprep.subr.bf16.mxu0 0
        %1323 = vmatpush1.bf16.xpose.msra.mxu0 0
        %1324 = vmatprep.subr.bf16.mxu0 0
        %1325 = vmatpush1.bf16.xpose.msra.mxu0 0
        %1326 = vmatprep.subr.bf16.mxu0 0
        %1327 = vmatpush1.bf16.xpose.msra.mxu0 0
        %1328 = vmatprep.subr.bf16.mxu0 0
        %1329 = vmatpush1.bf16.xpose.msra.mxu0 0
        %1330 = vmatprep.subr.bf16.mxu0 0
        %1331 = vmatpush1.bf16.xpose.msra.mxu0 0
        %1332 = vmatprep.subr.bf16.mxu0 0
        %1333 = vmatpush1.bf16.xpose.msra.mxu0 0
        %1334 = vmatprep.subr.bf16.mxu0 0
        %1335 = vmatpush1.bf16.xpose.msra.mxu0 0
        %1336 = vmatprep.mubr.bf16.mxu0 0
        %1337 = vmatmul.mubr.bf16.gmra.mrb[0].mxu0 %v1299
        %v1338 = vpop.f32.mrb[0].mxu0
        %v1339 = vadd.f32 0.0, %v1338
        %v1340 = vpop.f32.mrb[0].mxu0
        %v1341 = vpop.f32.mrb[0].mxu0
        %v1342 = vpop.f32.mrb[0].mxu0
        %1343 = vdwg.mxu0
        %v1344 = vmul.f32 %v1339, 0.35355338
        %v1345 = vsel %vm1184, %v1344, -inf
        %1346 = vmax.xlane.f32.xlu0 %v1345
        %v1347 = vpop.xlane.xlu0 %1346
        %v1348 = vsub.f32 %v1344, %v1347
        %v1349 = vmul.f32 %v1348, 1.442695
        %v1350 = vpow.pop %v1349
        %v1351 = vsel %vm1184, %v1350, 0.0
        %1352 = vadd.xlane.f32.xlu0 %v1351
        %v1353 = vpop.xlane.xlu0 %1352
        %v1354 = vrcp.pop %v1353
        %v1355 = vmul.f32 %v1350, %v1354
        %v1356 = vpack.c.bf16 %v1355, %v1355
        %1357 = vrot.lane.b32.xlu0 %v1180, 56
        %v1358 = vpop.permute.xlu0 %1357
        %v1360 = vsel %vm1184, %v1356, 0
        %v1363 = vsel %vm1249, %v1358, 0
        %1365 = vmatprep.subr.bf16.mxu0 0
        %1366 = vmatpush1.bf16.msra.mxu0 %v1363
        %1367 = vmatprep.subr.bf16.mxu0 0
        %1368 = vmatpush1.bf16.msra.mxu0 0
        %1369 = vmatprep.subr.bf16.mxu0 0
        %1370 = vmatpush1.bf16.msra.mxu0 0
        %1371 = vmatprep.subr.bf16.mxu0 0
        %1372 = vmatpush1.bf16.msra.mxu0 0
        %1373 = vmatprep.subr.bf16.mxu0 0
        %1374 = vmatpush1.bf16.msra.mxu0 0
        %1375 = vmatprep.subr.bf16.mxu0 0
        %1376 = vmatpush1.bf16.msra.mxu0 0
        %1377 = vmatprep.subr.bf16.mxu0 0
        %1378 = vmatpush1.bf16.msra.mxu0 0
        %1379 = vmatprep.subr.bf16.mxu0 0
        %1380 = vmatpush1.bf16.msra.mxu0 0
        %1381 = vmatprep.subr.bf16.mxu0 0
        %1382 = vmatpush1.bf16.msra.mxu0 0
        %1383 = vmatprep.subr.bf16.mxu0 0
        %1384 = vmatpush1.bf16.msra.mxu0 0
        %1385 = vmatprep.subr.bf16.mxu0 0
        %1386 = vmatpush1.bf16.msra.mxu0 0
        %1387 = vmatprep.subr.bf16.mxu0 0
        %1388 = vmatpush1.bf16.msra.mxu0 0
        %1389 = vmatprep.subr.bf16.mxu0 0
        %1390 = vmatpush1.bf16.msra.mxu0 0
        %1391 = vmatprep.subr.bf16.mxu0 0
        %1392 = vmatpush1.bf16.msra.mxu0 0
        %1393 = vmatprep.subr.bf16.mxu0 0
        %1394 = vmatpush1.bf16.msra.mxu0 0
        %1395 = vmatprep.subr.bf16.mxu0 0
        %1396 = vmatpush1.bf16.msra.mxu0 0
        %1397 = vmatprep.mubr.bf16.mxu0 0
        %1398 = vmatmul.mubr.bf16.gmra.mrb[0].mxu0 %v1360
        %v1399 = vpop.f32.mrb[0].mxu0
        %v1400 = vadd.f32 0.0, %v1399
        %v1401 = vpop.f32.mrb[0].mxu0
        %v1402 = vpop.f32.mrb[0].mxu0
        %v1403 = vpop.f32.mrb[0].mxu0
        %1404 = vdwg.mxu0
        %v1405 = vpack.c.bf16 %v1400, %v1400
        %v1407 = vsel %vm1184, %v1405, 0
        %v1410 = vsel %vm1249, %v1177, 0
        %1412 = vmatprep.subr.bf16.mxu0 0
        %1413 = vmatpush1.bf16.msra.mxu0 %v1410
        %1414 = vmatprep.subr.bf16.mxu0 0
        %1415 = vmatpush1.bf16.msra.mxu0 0
        %1416 = vmatprep.subr.bf16.mxu0 0
        %1417 = vmatpush1.bf16.msra.mxu0 0
        %1418 = vmatprep.subr.bf16.mxu0 0
        %1419 = vmatpush1.bf16.msra.mxu0 0
        %1420 = vmatprep.subr.bf16.mxu0 0
        %1421 = vmatpush1.bf16.msra.mxu0 0
        %1422 = vmatprep.subr.bf16.mxu0 0
        %1423 = vmatpush1.bf16.msra.mxu0 0
        %1424 = vmatprep.subr.bf16.mxu0 0
        %1425 = vmatpush1.bf16.msra.mxu0 0
        %1426 = vmatprep.subr.bf16.mxu0 0
        %1427 = vmatpush1.bf16.msra.mxu0 0
        %1428 = vmatprep.subr.bf16.mxu0 0
        %1429 = vmatpush1.bf16.msra.mxu0 0
        %1430 = vmatprep.subr.bf16.mxu0 0
        %1431 = vmatpush1.bf16.msra.mxu0 0
        %1432 = vmatprep.subr.bf16.mxu0 0
        %1433 = vmatpush1.bf16.msra.mxu0 0
        %1434 = vmatprep.subr.bf16.mxu0 0
        %1435 = vmatpush1.bf16.msra.mxu0 0
        %1436 = vmatprep.subr.bf16.mxu0 0
        %1437 = vmatpush1.bf16.msra.mxu0 0
        %1438 = vmatprep.subr.bf16.mxu0 0
        %1439 = vmatpush1.bf16.msra.mxu0 0
        %1440 = vmatprep.subr.bf16.mxu0 0
        %1441 = vmatpush1.bf16.msra.mxu0 0
        %1442 = vmatprep.subr.bf16.mxu0 0
        %1443 = vmatpush1.bf16.msra.mxu0 0
        %1444 = vmatprep.mubr.bf16.mxu0 0
        %1445 = vmatmul.mubr.bf16.gmra.mrb[0].mxu0 %v1407
        %v1446 = vpop.f32.mrb[0].mxu0
        %v1447 = vadd.f32 0.0, %v1446
        %v1448 = vpop.f32.mrb[0].mxu0
        %v1449 = vpop.f32.mrb[0].mxu0
        %v1450 = vpop.f32.mrb[0].mxu0
        %1451 = vdwg.mxu0
        %v1453 = vsel %vm1184, %v1293, 0
        %v1456 = vsel %vm1249, %v1176, 0
        %1458 = vmatprep.subr.bf16.mxu0 0
        %1459 = vmatpush1.bf16.msra.mxu0 %v1456
        %1460 = vmatprep.subr.bf16.mxu0 0
        %1461 = vmatpush1.bf16.msra.mxu0 0
        %1462 = vmatprep.subr.bf16.mxu0 0
        %1463 = vmatpush1.bf16.msra.mxu0 0
        %1464 = vmatprep.subr.bf16.mxu0 0
        %1465 = vmatpush1.bf16.msra.mxu0 0
        %1466 = vmatprep.subr.bf16.mxu0 0
        %1467 = vmatpush1.bf16.msra.mxu0 0
        %1468 = vmatprep.subr.bf16.mxu0 0
        %1469 = vmatpush1.bf16.msra.mxu0 0
        %1470 = vmatprep.subr.bf16.mxu0 0
        %1471 = vmatpush1.bf16.msra.mxu0 0
        %1472 = vmatprep.subr.bf16.mxu0 0
        %1473 = vmatpush1.bf16.msra.mxu0 0
        %1474 = vmatprep.subr.bf16.mxu0 0
        %1475 = vmatpush1.bf16.msra.mxu0 0
        %1476 = vmatprep.subr.bf16.mxu0 0
        %1477 = vmatpush1.bf16.msra.mxu0 0
        %1478 = vmatprep.subr.bf16.mxu0 0
        %1479 = vmatpush1.bf16.msra.mxu0 0
        %1480 = vmatprep.subr.bf16.mxu0 0
        %1481 = vmatpush1.bf16.msra.mxu0 0
        %1482 = vmatprep.subr.bf16.mxu0 0
        %1483 = vmatpush1.bf16.msra.mxu0 0
        %1484 = vmatprep.subr.bf16.mxu0 0
        %1485 = vmatpush1.bf16.msra.mxu0 0
        %1486 = vmatprep.subr.bf16.mxu0 0
        %1487 = vmatpush1.bf16.msra.mxu0 0
        %1488 = vmatprep.subr.bf16.mxu0 0
        %1489 = vmatpush1.bf16.msra.mxu0 0
        %1490 = vmatprep.mubr.bf16.mxu0 0
        %1491 = vmatmul.mubr.bf16.gmra.mrb[0].mxu0 %v1453
        %v1492 = vpop.f32.mrb[0].mxu0
        %v1493 = vadd.f32 %v1447, %v1492
        %v1494 = vpop.f32.mrb[0].mxu0
        %v1495 = vpop.f32.mrb[0].mxu0
        %v1496 = vpop.f32.mrb[0].mxu0
        %1497 = vdwg.mxu0
        %1498 = vrot.lane.b32.xlu0 %v1180, 112
        %v1499 = vpop.permute.xlu0 %1498
        %1500 = vrot.lane.b32.xlu0 %v1180, 80
        %v1501 = vpop.permute.xlu0 %1500
        %v1503 = vsel %vm1184, %v1499, 0
        %v1506 = vsel %vm1184, %v1501, 0
        %1508 = vmatprep.subr.bf16.mxu0 0
        %1509 = vmatpush1.bf16.xpose.msra.mxu0 %v1506
        %1510 = vmatprep.subr.bf16.mxu0 0
        %1511 = vmatpush1.bf16.xpose.msra.mxu0 0
        %1512 = vmatprep.subr.bf16.mxu0 0
        %1513 = vmatpush1.bf16.xpose.msra.mxu0 0
        %1514 = vmatprep.subr.bf16.mxu0 0
        %1515 = vmatpush1.bf16.xpose.msra.mxu0 0
        %1516 = vmatprep.subr.bf16.mxu0 0
        %1517 = vmatpush1.bf16.xpose.msra.mxu0 0
        %1518 = vmatprep.subr.bf16.mxu0 0
        %1519 = vmatpush1.bf16.xpose.msra.mxu0 0
        %1520 = vmatprep.subr.bf16.mxu0 0
        %1521 = vmatpush1.bf16.xpose.msra.mxu0 0
        %1522 = vmatprep.subr.bf16.mxu0 0
        %1523 = vmatpush1.bf16.xpose.msra.mxu0 0
        %1524 = vmatprep.subr.bf16.mxu0 0
        %1525 = vmatpush1.bf16.xpose.msra.mxu0 0
        %1526 = vmatprep.subr.bf16.mxu0 0
        %1527 = vmatpush1.bf16.xpose.msra.mxu0 0
        %1528 = vmatprep.subr.bf16.mxu0 0
        %1529 = vmatpush1.bf16.xpose.msra.mxu0 0
        %1530 = vmatprep.subr.bf16.mxu0 0
        %1531 = vmatpush1.bf16.xpose.msra.mxu0 0
        %1532 = vmatprep.subr.bf16.mxu0 0
        %1533 = vmatpush1.bf16.xpose.msra.mxu0 0
        %1534 = vmatprep.subr.bf16.mxu0 0
        %1535 = vmatpush1.bf16.xpose.msra.mxu0 0
        %1536 = vmatprep.subr.bf16.mxu0 0
        %1537 = vmatpush1.bf16.xpose.msra.mxu0 0
        %1538 = vmatprep.subr.bf16.mxu0 0
        %1539 = vmatpush1.bf16.xpose.msra.mxu0 0
        %1540 = vmatprep.mubr.bf16.mxu0 0
        %1541 = vmatmul.mubr.bf16.gmra.mrb[0].mxu0 %v1503
        %v1542 = vpop.f32.mrb[0].mxu0
        %v1543 = vadd.f32 0.0, %v1542
        %v1544 = vpop.f32.mrb[0].mxu0
        %v1545 = vpop.f32.mrb[0].mxu0
        %v1546 = vpop.f32.mrb[0].mxu0
        %1547 = vdwg.mxu0
        %v1548 = vmul.f32 %v1543, 0.35355338
        %v1549 = vsel %vm1184, %v1548, -inf
        %1550 = vmax.xlane.f32.xlu0 %v1549
        %v1551 = vpop.xlane.xlu0 %1550
        %v1552 = vsub.f32 %v1548, %v1551
        %v1553 = vmul.f32 %v1552, 1.442695
        %v1554 = vpow.pop %v1553
        %v1555 = vsel %vm1184, %v1554, 0.0
        %1556 = vadd.xlane.f32.xlu0 %v1555
        %v1557 = vpop.xlane.xlu0 %1556
        %v1558 = vrcp.pop %v1557
        %v1559 = vmul.f32 %v1554, %v1558
        %v1560 = vpack.c.bf16 %v1559, %v1559
        %1561 = vrot.lane.b32.xlu0 %v1180, 48
        %v1562 = vpop.permute.xlu0 %1561
        %v1564 = vsel %vm1184, %v1560, 0
        %v1567 = vsel %vm1249, %v1562, 0
        %1569 = vmatprep.subr.bf16.mxu0 0
        %1570 = vmatpush1.bf16.msra.mxu0 %v1567
        %1571 = vmatprep.subr.bf16.mxu0 0
        %1572 = vmatpush1.bf16.msra.mxu0 0
        %1573 = vmatprep.subr.bf16.mxu0 0
        %1574 = vmatpush1.bf16.msra.mxu0 0
        %1575 = vmatprep.subr.bf16.mxu0 0
        %1576 = vmatpush1.bf16.msra.mxu0 0
        %1577 = vmatprep.subr.bf16.mxu0 0
        %1578 = vmatpush1.bf16.msra.mxu0 0
        %1579 = vmatprep.subr.bf16.mxu0 0
        %1580 = vmatpush1.bf16.msra.mxu0 0
        %1581 = vmatprep.subr.bf16.mxu0 0
        %1582 = vmatpush1.bf16.msra.mxu0 0
        %1583 = vmatprep.subr.bf16.mxu0 0
        %1584 = vmatpush1.bf16.msra.mxu0 0
        %1585 = vmatprep.subr.bf16.mxu0 0
        %1586 = vmatpush1.bf16.msra.mxu0 0
        %1587 = vmatprep.subr.bf16.mxu0 0
        %1588 = vmatpush1.bf16.msra.mxu0 0
        %1589 = vmatprep.subr.bf16.mxu0 0
        %1590 = vmatpush1.bf16.msra.mxu0 0
        %1591 = vmatprep.subr.bf16.mxu0 0
        %1592 = vmatpush1.bf16.msra.mxu0 0
        %1593 = vmatprep.subr.bf16.mxu0 0
        %1594 = vmatpush1.bf16.msra.mxu0 0
        %1595 = vmatprep.subr.bf16.mxu0 0
        %1596 = vmatpush1.bf16.msra.mxu0 0
        %1597 = vmatprep.subr.bf16.mxu0 0
        %1598 = vmatpush1.bf16.msra.mxu0 0
        %1599 = vmatprep.subr.bf16.mxu0 0
        %1600 = vmatpush1.bf16.msra.mxu0 0
        %1601 = vmatprep.mubr.bf16.mxu0 0
        %1602 = vmatmul.mubr.bf16.gmra.mrb[0].mxu0 %v1564
        %v1603 = vpop.f32.mrb[0].mxu0
        %v1604 = vadd.f32 0.0, %v1603
        %v1605 = vpop.f32.mrb[0].mxu0
        %v1606 = vpop.f32.mrb[0].mxu0
        %v1607 = vpop.f32.mrb[0].mxu0
        %1608 = vdwg.mxu0
        %v1609 = vpack.c.bf16 %v1604, %v1604
        %v1611 = vsel %vm1184, %v1609, 0
        %v1614 = vsel %vm1249, %v1178, 0
        %1616 = vmatprep.subr.bf16.mxu0 0
        %1617 = vmatpush1.bf16.msra.mxu0 %v1614
        %1618 = vmatprep.subr.bf16.mxu0 0
        %1619 = vmatpush1.bf16.msra.mxu0 0
        %1620 = vmatprep.subr.bf16.mxu0 0
        %1621 = vmatpush1.bf16.msra.mxu0 0
        %1622 = vmatprep.subr.bf16.mxu0 0
        %1623 = vmatpush1.bf16.msra.mxu0 0
        %1624 = vmatprep.subr.bf16.mxu0 0
        %1625 = vmatpush1.bf16.msra.mxu0 0
        %1626 = vmatprep.subr.bf16.mxu0 0
        %1627 = vmatpush1.bf16.msra.mxu0 0
        %1628 = vmatprep.subr.bf16.mxu0 0
        %1629 = vmatpush1.bf16.msra.mxu0 0
        %1630 = vmatprep.subr.bf16.mxu0 0
        %1631 = vmatpush1.bf16.msra.mxu0 0
        %1632 = vmatprep.subr.bf16.mxu0 0
        %1633 = vmatpush1.bf16.msra.mxu0 0
        %1634 = vmatprep.subr.bf16.mxu0 0
        %1635 = vmatpush1.bf16.msra.mxu0 0
        %1636 = vmatprep.subr.bf16.mxu0 0
        %1637 = vmatpush1.bf16.msra.mxu0 0
        %1638 = vmatprep.subr.bf16.mxu0 0
        %1639 = vmatpush1.bf16.msra.mxu0 0
        %1640 = vmatprep.subr.bf16.mxu0 0
        %1641 = vmatpush1.bf16.msra.mxu0 0
        %1642 = vmatprep.subr.bf16.mxu0 0
        %1643 = vmatpush1.bf16.msra.mxu0 0
        %1644 = vmatprep.subr.bf16.mxu0 0
        %1645 = vmatpush1.bf16.msra.mxu0 0
        %1646 = vmatprep.subr.bf16.mxu0 0
        %1647 = vmatpush1.bf16.msra.mxu0 0
        %1648 = vmatprep.mubr.bf16.mxu0 0
        %1649 = vmatmul.mubr.bf16.gmra.mrb[0].mxu0 %v1611
        %v1650 = vpop.f32.mrb[0].mxu0
        %v1651 = vadd.f32 0.0, %v1650
        %v1652 = vpop.f32.mrb[0].mxu0
        %v1653 = vpop.f32.mrb[0].mxu0
        %v1654 = vpop.f32.mrb[0].mxu0
        %1655 = vdwg.mxu0
        %v1656 = vadd.f32 %v1493, %v1651
        %1657 = vrot.lane.b32.xlu0 %v1180, 104
        %v1658 = vpop.permute.xlu0 %1657
        %1659 = vrot.lane.b32.xlu0 %v1180, 72
        %v1660 = vpop.permute.xlu0 %1659
        %v1662 = vsel %vm1184, %v1658, 0
        %v1665 = vsel %vm1184, %v1660, 0
        %1667 = vmatprep.subr.bf16.mxu0 0
        %1668 = vmatpush1.bf16.xpose.msra.mxu0 %v1665
        %1669 = vmatprep.subr.bf16.mxu0 0
        %1670 = vmatpush1.bf16.xpose.msra.mxu0 0
        %1671 = vmatprep.subr.bf16.mxu0 0
        %1672 = vmatpush1.bf16.xpose.msra.mxu0 0
        %1673 = vmatprep.subr.bf16.mxu0 0
        %1674 = vmatpush1.bf16.xpose.msra.mxu0 0
        %1675 = vmatprep.subr.bf16.mxu0 0
        %1676 = vmatpush1.bf16.xpose.msra.mxu0 0
        %1677 = vmatprep.subr.bf16.mxu0 0
        %1678 = vmatpush1.bf16.xpose.msra.mxu0 0
        %1679 = vmatprep.subr.bf16.mxu0 0
        %1680 = vmatpush1.bf16.xpose.msra.mxu0 0
        %1681 = vmatprep.subr.bf16.mxu0 0
        %1682 = vmatpush1.bf16.xpose.msra.mxu0 0
        %1683 = vmatprep.subr.bf16.mxu0 0
        %1684 = vmatpush1.bf16.xpose.msra.mxu0 0
        %1685 = vmatprep.subr.bf16.mxu0 0
        %1686 = vmatpush1.bf16.xpose.msra.mxu0 0
        %1687 = vmatprep.subr.bf16.mxu0 0
        %1688 = vmatpush1.bf16.xpose.msra.mxu0 0
        %1689 = vmatprep.subr.bf16.mxu0 0
        %1690 = vmatpush1.bf16.xpose.msra.mxu0 0
        %1691 = vmatprep.subr.bf16.mxu0 0
        %1692 = vmatpush1.bf16.xpose.msra.mxu0 0
        %1693 = vmatprep.subr.bf16.mxu0 0
        %1694 = vmatpush1.bf16.xpose.msra.mxu0 0
        %1695 = vmatprep.subr.bf16.mxu0 0
        %1696 = vmatpush1.bf16.xpose.msra.mxu0 0
        %1697 = vmatprep.subr.bf16.mxu0 0
        %1698 = vmatpush1.bf16.xpose.msra.mxu0 0
        %1699 = vmatprep.mubr.bf16.mxu0 0
        %1700 = vmatmul.mubr.bf16.gmra.mrb[0].mxu0 %v1662
        %v1701 = vpop.f32.mrb[0].mxu0
        %v1702 = vadd.f32 0.0, %v1701
        %v1703 = vpop.f32.mrb[0].mxu0
        %v1704 = vpop.f32.mrb[0].mxu0
        %v1705 = vpop.f32.mrb[0].mxu0
        %1706 = vdwg.mxu0
        %v1707 = vmul.f32 %v1702, 0.35355338
        %v1708 = vsel %vm1184, %v1707, -inf
        %1709 = vmax.xlane.f32.xlu0 %v1708
        %v1710 = vpop.xlane.xlu0 %1709
        %v1711 = vsub.f32 %v1707, %v1710
        %v1712 = vmul.f32 %v1711, 1.442695
        %v1713 = vpow.pop %v1712
        %v1714 = vsel %vm1184, %v1713, 0.0
        %1715 = vadd.xlane.f32.xlu0 %v1714
        %v1716 = vpop.xlane.xlu0 %1715
        %v1717 = vrcp.pop %v1716
        %v1718 = vmul.f32 %v1713, %v1717
        %v1719 = vpack.c.bf16 %v1718, %v1718
        %1720 = vrot.lane.b32.xlu0 %v1180, 40
        %v1721 = vpop.permute.xlu0 %1720
        %v1723 = vsel %vm1184, %v1719, 0
        %v1726 = vsel %vm1249, %v1721, 0
        %1728 = vmatprep.subr.bf16.mxu0 0
        %1729 = vmatpush1.bf16.msra.mxu0 %v1726
        %1730 = vmatprep.subr.bf16.mxu0 0
        %1731 = vmatpush1.bf16.msra.mxu0 0
        %1732 = vmatprep.subr.bf16.mxu0 0
        %1733 = vmatpush1.bf16.msra.mxu0 0
        %1734 = vmatprep.subr.bf16.mxu0 0
        %1735 = vmatpush1.bf16.msra.mxu0 0
        %1736 = vmatprep.subr.bf16.mxu0 0
        %1737 = vmatpush1.bf16.msra.mxu0 0
        %1738 = vmatprep.subr.bf16.mxu0 0
        %1739 = vmatpush1.bf16.msra.mxu0 0
        %1740 = vmatprep.subr.bf16.mxu0 0
        %1741 = vmatpush1.bf16.msra.mxu0 0
        %1742 = vmatprep.subr.bf16.mxu0 0
        %1743 = vmatpush1.bf16.msra.mxu0 0
        %1744 = vmatprep.subr.bf16.mxu0 0
        %1745 = vmatpush1.bf16.msra.mxu0 0
        %1746 = vmatprep.subr.bf16.mxu0 0
        %1747 = vmatpush1.bf16.msra.mxu0 0
        %1748 = vmatprep.subr.bf16.mxu0 0
        %1749 = vmatpush1.bf16.msra.mxu0 0
        %1750 = vmatprep.subr.bf16.mxu0 0
        %1751 = vmatpush1.bf16.msra.mxu0 0
        %1752 = vmatprep.subr.bf16.mxu0 0
        %1753 = vmatpush1.bf16.msra.mxu0 0
        %1754 = vmatprep.subr.bf16.mxu0 0
        %1755 = vmatpush1.bf16.msra.mxu0 0
        %1756 = vmatprep.subr.bf16.mxu0 0
        %1757 = vmatpush1.bf16.msra.mxu0 0
        %1758 = vmatprep.subr.bf16.mxu0 0
        %1759 = vmatpush1.bf16.msra.mxu0 0
        %1760 = vmatprep.mubr.bf16.mxu0 0
        %1761 = vmatmul.mubr.bf16.gmra.mrb[0].mxu0 %v1723
        %v1762 = vpop.f32.mrb[0].mxu0
        %v1763 = vadd.f32 0.0, %v1762
        %v1764 = vpop.f32.mrb[0].mxu0
        %v1765 = vpop.f32.mrb[0].mxu0
        %v1766 = vpop.f32.mrb[0].mxu0
        %1767 = vdwg.mxu0
        %v1768 = vpack.c.bf16 %v1763, %v1763
        %v1770 = vsel %vm1184, %v1768, 0
        %v1773 = vsel %vm1249, %v1179, 0
        %1775 = vmatprep.subr.bf16.mxu0 0
        %1776 = vmatpush1.bf16.msra.mxu0 %v1773
        %1777 = vmatprep.subr.bf16.mxu0 0
        %1778 = vmatpush1.bf16.msra.mxu0 0
        %1779 = vmatprep.subr.bf16.mxu0 0
        %1780 = vmatpush1.bf16.msra.mxu0 0
        %1781 = vmatprep.subr.bf16.mxu0 0
        %1782 = vmatpush1.bf16.msra.mxu0 0
        %1783 = vmatprep.subr.bf16.mxu0 0
        %1784 = vmatpush1.bf16.msra.mxu0 0
        %1785 = vmatprep.subr.bf16.mxu0 0
        %1786 = vmatpush1.bf16.msra.mxu0 0
        %1787 = vmatprep.subr.bf16.mxu0 0
        %1788 = vmatpush1.bf16.msra.mxu0 0
        %1789 = vmatprep.subr.bf16.mxu0 0
        %1790 = vmatpush1.bf16.msra.mxu0 0
        %1791 = vmatprep.subr.bf16.mxu0 0
        %1792 = vmatpush1.bf16.msra.mxu0 0
        %1793 = vmatprep.subr.bf16.mxu0 0
        %1794 = vmatpush1.bf16.msra.mxu0 0
        %1795 = vmatprep.subr.bf16.mxu0 0
        %1796 = vmatpush1.bf16.msra.mxu0 0
        %1797 = vmatprep.subr.bf16.mxu0 0
        %1798 = vmatpush1.bf16.msra.mxu0 0
        %1799 = vmatprep.subr.bf16.mxu0 0
        %1800 = vmatpush1.bf16.msra.mxu0 0
        %1801 = vmatprep.subr.bf16.mxu0 0
        %1802 = vmatpush1.bf16.msra.mxu0 0
        %1803 = vmatprep.subr.bf16.mxu0 0
        %1804 = vmatpush1.bf16.msra.mxu0 0
        %1805 = vmatprep.subr.bf16.mxu0 0
        %1806 = vmatpush1.bf16.msra.mxu0 0
        %1807 = vmatprep.mubr.bf16.mxu0 0
        %1808 = vmatmul.mubr.bf16.gmra.mrb[0].mxu0 %v1770
        %v1809 = vpop.f32.mrb[0].mxu0
        %v1810 = vadd.f32 0.0, %v1809
        %v1811 = vpop.f32.mrb[0].mxu0
        %v1812 = vpop.f32.mrb[0].mxu0
        %v1813 = vpop.f32.mrb[0].mxu0
        %1814 = vdwg.mxu0
        %v1815 = vadd.f32 %v1656, %v1810
        %v1816 = vpack.c.bf16 %v1173, %v1173
        %1818 = vrot.lane.b32.xlu0 %v1816, 96
        %v1819 = vpop.permute.xlu0 %1818
        %v1821 = vsel %vm1184, %v1816, 0
        %v1824 = vsel %vm1184, %v1819, 0
        %1826 = vmatprep.subr.bf16.mxu0 0
        %1827 = vmatpush1.bf16.xpose.msra.mxu0 %v1824
        %1828 = vmatprep.subr.bf16.mxu0 0
        %1829 = vmatpush1.bf16.xpose.msra.mxu0 0
        %1830 = vmatprep.subr.bf16.mxu0 0
        %1831 = vmatpush1.bf16.xpose.msra.mxu0 0
        %1832 = vmatprep.subr.bf16.mxu0 0
        %1833 = vmatpush1.bf16.xpose.msra.mxu0 0
        %1834 = vmatprep.subr.bf16.mxu0 0
        %1835 = vmatpush1.bf16.xpose.msra.mxu0 0
        %1836 = vmatprep.subr.bf16.mxu0 0
        %1837 = vmatpush1.bf16.xpose.msra.mxu0 0
        %1838 = vmatprep.subr.bf16.mxu0 0
        %1839 = vmatpush1.bf16.xpose.msra.mxu0 0
        %1840 = vmatprep.subr.bf16.mxu0 0
        %1841 = vmatpush1.bf16.xpose.msra.mxu0 0
        %1842 = vmatprep.subr.bf16.mxu0 0
        %1843 = vmatpush1.bf16.xpose.msra.mxu0 0
        %1844 = vmatprep.subr.bf16.mxu0 0
        %1845 = vmatpush1.bf16.xpose.msra.mxu0 0
        %1846 = vmatprep.subr.bf16.mxu0 0
        %1847 = vmatpush1.bf16.xpose.msra.mxu0 0
        %1848 = vmatprep.subr.bf16.mxu0 0
        %1849 = vmatpush1.bf16.xpose.msra.mxu0 0
        %1850 = vmatprep.subr.bf16.mxu0 0
        %1851 = vmatpush1.bf16.xpose.msra.mxu0 0
        %1852 = vmatprep.subr.bf16.mxu0 0
        %1853 = vmatpush1.bf16.xpose.msra.mxu0 0
        %1854 = vmatprep.subr.bf16.mxu0 0
        %1855 = vmatpush1.bf16.xpose.msra.mxu0 0
        %1856 = vmatprep.subr.bf16.mxu0 0
        %1857 = vmatpush1.bf16.xpose.msra.mxu0 0
        %1858 = vmatprep.mubr.bf16.mxu0 0
        %1859 = vmatmul.mubr.bf16.gmra.mrb[0].mxu0 %v1821
        %v1860 = vpop.f32.mrb[0].mxu0
        %v1861 = vadd.f32 0.0, %v1860
        %v1862 = vpop.f32.mrb[0].mxu0
        %v1863 = vpop.f32.mrb[0].mxu0
        %v1864 = vpop.f32.mrb[0].mxu0
        %1865 = vdwg.mxu0
        %v1866 = vmul.f32 %v1861, 0.35355338
        %v1867 = vsel %vm1184, %v1866, -inf
        %1868 = vmax.xlane.f32.xlu0 %v1867
        %v1869 = vpop.xlane.xlu0 %1868
        %v1870 = vsub.f32 %v1866, %v1869
        %v1871 = vmul.f32 %v1870, 1.442695
        %v1872 = vpow.pop %v1871
        %v1873 = vsel %vm1184, %v1872, 0.0
        %1874 = vadd.xlane.f32.xlu0 %v1873
        %v1875 = vpop.xlane.xlu0 %1874
        %v1876 = vrcp.pop %v1875
        %v1877 = vmul.f32 %v1872, %v1876
        %v1878 = vpack.c.bf16 %v1877, %v1877
        %1879 = vrot.lane.b32.xlu0 %v1816, 64
        %v1880 = vpop.permute.xlu0 %1879
        %v1882 = vsel %vm1184, %v1878, 0
        %v1885 = vsel %vm1249, %v1880, 0
        %1887 = vmatprep.subr.bf16.mxu0 0
        %1888 = vmatpush1.bf16.msra.mxu0 %v1885
        %1889 = vmatprep.subr.bf16.mxu0 0
        %1890 = vmatpush1.bf16.msra.mxu0 0
        %1891 = vmatprep.subr.bf16.mxu0 0
        %1892 = vmatpush1.bf16.msra.mxu0 0
        %1893 = vmatprep.subr.bf16.mxu0 0
        %1894 = vmatpush1.bf16.msra.mxu0 0
        %1895 = vmatprep.subr.bf16.mxu0 0
        %1896 = vmatpush1.bf16.msra.mxu0 0
        %1897 = vmatprep.subr.bf16.mxu0 0
        %1898 = vmatpush1.bf16.msra.mxu0 0
        %1899 = vmatprep.subr.bf16.mxu0 0
        %1900 = vmatpush1.bf16.msra.mxu0 0
        %1901 = vmatprep.subr.bf16.mxu0 0
        %1902 = vmatpush1.bf16.msra.mxu0 0
        %1903 = vmatprep.subr.bf16.mxu0 0
        %1904 = vmatpush1.bf16.msra.mxu0 0
        %1905 = vmatprep.subr.bf16.mxu0 0
        %1906 = vmatpush1.bf16.msra.mxu0 0
        %1907 = vmatprep.subr.bf16.mxu0 0
        %1908 = vmatpush1.bf16.msra.mxu0 0
        %1909 = vmatprep.subr.bf16.mxu0 0
        %1910 = vmatpush1.bf16.msra.mxu0 0
        %1911 = vmatprep.subr.bf16.mxu0 0
        %1912 = vmatpush1.bf16.msra.mxu0 0
        %1913 = vmatprep.subr.bf16.mxu0 0
        %1914 = vmatpush1.bf16.msra.mxu0 0
        %1915 = vmatprep.subr.bf16.mxu0 0
        %1916 = vmatpush1.bf16.msra.mxu0 0
        %1917 = vmatprep.subr.bf16.mxu0 0
        %1918 = vmatpush1.bf16.msra.mxu0 0
        %1919 = vmatprep.mubr.bf16.mxu0 0
        %1920 = vmatmul.mubr.bf16.gmra.mrb[0].mxu0 %v1882
        %v1921 = vpop.f32.mrb[0].mxu0
        %v1922 = vadd.f32 0.0, %v1921
        %v1923 = vpop.f32.mrb[0].mxu0
        %v1924 = vpop.f32.mrb[0].mxu0
        %v1925 = vpop.f32.mrb[0].mxu0
        %1926 = vdwg.mxu0
        %v1927 = vpack.c.bf16 %v1922, %v1922
        %1928 = vrot.lane.b32.xlu0 %v1816, 120
        %v1929 = vpop.permute.xlu0 %1928
        %1930 = vrot.lane.b32.xlu0 %v1816, 88
        %v1931 = vpop.permute.xlu0 %1930
        %v1933 = vsel %vm1184, %v1929, 0
        %v1936 = vsel %vm1184, %v1931, 0
        %1938 = vmatprep.subr.bf16.mxu0 0
        %1939 = vmatpush1.bf16.xpose.msra.mxu0 %v1936
        %1940 = vmatprep.subr.bf16.mxu0 0
        %1941 = vmatpush1.bf16.xpose.msra.mxu0 0
        %1942 = vmatprep.subr.bf16.mxu0 0
        %1943 = vmatpush1.bf16.xpose.msra.mxu0 0
        %1944 = vmatprep.subr.bf16.mxu0 0
        %1945 = vmatpush1.bf16.xpose.msra.mxu0 0
        %1946 = vmatprep.subr.bf16.mxu0 0
        %1947 = vmatpush1.bf16.xpose.msra.mxu0 0
        %1948 = vmatprep.subr.bf16.mxu0 0
        %1949 = vmatpush1.bf16.xpose.msra.mxu0 0
        %1950 = vmatprep.subr.bf16.mxu0 0
        %1951 = vmatpush1.bf16.xpose.msra.mxu0 0
        %1952 = vmatprep.subr.bf16.mxu0 0
        %1953 = vmatpush1.bf16.xpose.msra.mxu0 0
        %1954 = vmatprep.subr.bf16.mxu0 0
        %1955 = vmatpush1.bf16.xpose.msra.mxu0 0
        %1956 = vmatprep.subr.bf16.mxu0 0
        %1957 = vmatpush1.bf16.xpose.msra.mxu0 0
        %1958 = vmatprep.subr.bf16.mxu0 0
        %1959 = vmatpush1.bf16.xpose.msra.mxu0 0
        %1960 = vmatprep.subr.bf16.mxu0 0
        %1961 = vmatpush1.bf16.xpose.msra.mxu0 0
        %1962 = vmatprep.subr.bf16.mxu0 0
        %1963 = vmatpush1.bf16.xpose.msra.mxu0 0
        %1964 = vmatprep.subr.bf16.mxu0 0
        %1965 = vmatpush1.bf16.xpose.msra.mxu0 0
        %1966 = vmatprep.subr.bf16.mxu0 0
        %1967 = vmatpush1.bf16.xpose.msra.mxu0 0
        %1968 = vmatprep.subr.bf16.mxu0 0
        %1969 = vmatpush1.bf16.xpose.msra.mxu0 0
        %1970 = vmatprep.mubr.bf16.mxu0 0
        %1971 = vmatmul.mubr.bf16.gmra.mrb[0].mxu0 %v1933
        %v1972 = vpop.f32.mrb[0].mxu0
        %v1973 = vadd.f32 0.0, %v1972
        %v1974 = vpop.f32.mrb[0].mxu0
        %v1975 = vpop.f32.mrb[0].mxu0
        %v1976 = vpop.f32.mrb[0].mxu0
        %1977 = vdwg.mxu0
        %v1978 = vmul.f32 %v1973, 0.35355338
        %v1979 = vsel %vm1184, %v1978, -inf
        %1980 = vmax.xlane.f32.xlu0 %v1979
        %v1981 = vpop.xlane.xlu0 %1980
        %v1982 = vsub.f32 %v1978, %v1981
        %v1983 = vmul.f32 %v1982, 1.442695
        %v1984 = vpow.pop %v1983
        %v1985 = vsel %vm1184, %v1984, 0.0
        %1986 = vadd.xlane.f32.xlu0 %v1985
        %v1987 = vpop.xlane.xlu0 %1986
        %v1988 = vrcp.pop %v1987
        %v1989 = vmul.f32 %v1984, %v1988
        %v1990 = vpack.c.bf16 %v1989, %v1989
        %1991 = vrot.lane.b32.xlu0 %v1816, 56
        %v1992 = vpop.permute.xlu0 %1991
        %v1994 = vsel %vm1184, %v1990, 0
        %v1997 = vsel %vm1249, %v1992, 0
        %1999 = vmatprep.subr.bf16.mxu0 0
        %2000 = vmatpush1.bf16.msra.mxu0 %v1997
        %2001 = vmatprep.subr.bf16.mxu0 0
        %2002 = vmatpush1.bf16.msra.mxu0 0
        %2003 = vmatprep.subr.bf16.mxu0 0
        %2004 = vmatpush1.bf16.msra.mxu0 0
        %2005 = vmatprep.subr.bf16.mxu0 0
        %2006 = vmatpush1.bf16.msra.mxu0 0
        %2007 = vmatprep.subr.bf16.mxu0 0
        %2008 = vmatpush1.bf16.msra.mxu0 0
        %2009 = vmatprep.subr.bf16.mxu0 0
        %2010 = vmatpush1.bf16.msra.mxu0 0
        %2011 = vmatprep.subr.bf16.mxu0 0
        %2012 = vmatpush1.bf16.msra.mxu0 0
        %2013 = vmatprep.subr.bf16.mxu0 0
        %2014 = vmatpush1.bf16.msra.mxu0 0
        %2015 = vmatprep.subr.bf16.mxu0 0
        %2016 = vmatpush1.bf16.msra.mxu0 0
        %2017 = vmatprep.subr.bf16.mxu0 0
        %2018 = vmatpush1.bf16.msra.mxu0 0
        %2019 = vmatprep.subr.bf16.mxu0 0
        %2020 = vmatpush1.bf16.msra.mxu0 0
        %2021 = vmatprep.subr.bf16.mxu0 0
        %2022 = vmatpush1.bf16.msra.mxu0 0
        %2023 = vmatprep.subr.bf16.mxu0 0
        %2024 = vmatpush1.bf16.msra.mxu0 0
        %2025 = vmatprep.subr.bf16.mxu0 0
        %2026 = vmatpush1.bf16.msra.mxu0 0
        %2027 = vmatprep.subr.bf16.mxu0 0
        %2028 = vmatpush1.bf16.msra.mxu0 0
        %2029 = vmatprep.subr.bf16.mxu0 0
        %2030 = vmatpush1.bf16.msra.mxu0 0
        %2031 = vmatprep.mubr.bf16.mxu0 0
        %2032 = vmatmul.mubr.bf16.gmra.mrb[0].mxu0 %v1994
        %v2033 = vpop.f32.mrb[0].mxu0
        %v2034 = vadd.f32 0.0, %v2033
        %v2035 = vpop.f32.mrb[0].mxu0
        %v2036 = vpop.f32.mrb[0].mxu0
        %v2037 = vpop.f32.mrb[0].mxu0
        %2038 = vdwg.mxu0
        %v2039 = vpack.c.bf16 %v2034, %v2034
        %v2041 = vsel %vm1184, %v2039, 0
        %2043 = vmatprep.subr.bf16.mxu0 0
        %2044 = vmatpush1.bf16.msra.mxu0 %v1410
        %2045 = vmatprep.subr.bf16.mxu0 0
        %2046 = vmatpush1.bf16.msra.mxu0 0
        %2047 = vmatprep.subr.bf16.mxu0 0
        %2048 = vmatpush1.bf16.msra.mxu0 0
        %2049 = vmatprep.subr.bf16.mxu0 0
        %2050 = vmatpush1.bf16.msra.mxu0 0
        %2051 = vmatprep.subr.bf16.mxu0 0
        %2052 = vmatpush1.bf16.msra.mxu0 0
        %2053 = vmatprep.subr.bf16.mxu0 0
        %2054 = vmatpush1.bf16.msra.mxu0 0
        %2055 = vmatprep.subr.bf16.mxu0 0
        %2056 = vmatpush1.bf16.msra.mxu0 0
        %2057 = vmatprep.subr.bf16.mxu0 0
        %2058 = vmatpush1.bf16.msra.mxu0 0
        %2059 = vmatprep.subr.bf16.mxu0 0
        %2060 = vmatpush1.bf16.msra.mxu0 0
        %2061 = vmatprep.subr.bf16.mxu0 0
        %2062 = vmatpush1.bf16.msra.mxu0 0
        %2063 = vmatprep.subr.bf16.mxu0 0
        %2064 = vmatpush1.bf16.msra.mxu0 0
        %2065 = vmatprep.subr.bf16.mxu0 0
        %2066 = vmatpush1.bf16.msra.mxu0 0
        %2067 = vmatprep.subr.bf16.mxu0 0
        %2068 = vmatpush1.bf16.msra.mxu0 0
        %2069 = vmatprep.subr.bf16.mxu0 0
        %2070 = vmatpush1.bf16.msra.mxu0 0
        %2071 = vmatprep.subr.bf16.mxu0 0
        %2072 = vmatpush1.bf16.msra.mxu0 0
        %2073 = vmatprep.subr.bf16.mxu0 0
        %2074 = vmatpush1.bf16.msra.mxu0 0
        %2075 = vmatprep.mubr.bf16.mxu0 0
        %2076 = vmatmul.mubr.bf16.gmra.mrb[0].mxu0 %v2041
        %v2077 = vpop.f32.mrb[0].mxu0
        %v2078 = vadd.f32 0.0, %v2077
        %v2079 = vpop.f32.mrb[0].mxu0
        %v2080 = vpop.f32.mrb[0].mxu0
        %v2081 = vpop.f32.mrb[0].mxu0
        %2082 = vdwg.mxu0
        %v2084 = vsel %vm1184, %v1927, 0
        %2086 = vmatprep.subr.bf16.mxu0 0
        %2087 = vmatpush1.bf16.msra.mxu0 %v1456
        %2088 = vmatprep.subr.bf16.mxu0 0
        %2089 = vmatpush1.bf16.msra.mxu0 0
        %2090 = vmatprep.subr.bf16.mxu0 0
        %2091 = vmatpush1.bf16.msra.mxu0 0
        %2092 = vmatprep.subr.bf16.mxu0 0
        %2093 = vmatpush1.bf16.msra.mxu0 0
        %2094 = vmatprep.subr.bf16.mxu0 0
        %2095 = vmatpush1.bf16.msra.mxu0 0
        %2096 = vmatprep.subr.bf16.mxu0 0
        %2097 = vmatpush1.bf16.msra.mxu0 0
        %2098 = vmatprep.subr.bf16.mxu0 0
        %2099 = vmatpush1.bf16.msra.mxu0 0
        %2100 = vmatprep.subr.bf16.mxu0 0
        %2101 = vmatpush1.bf16.msra.mxu0 0
        %2102 = vmatprep.subr.bf16.mxu0 0
        %2103 = vmatpush1.bf16.msra.mxu0 0
        %2104 = vmatprep.subr.bf16.mxu0 0
        %2105 = vmatpush1.bf16.msra.mxu0 0
        %2106 = vmatprep.subr.bf16.mxu0 0
        %2107 = vmatpush1.bf16.msra.mxu0 0
        %2108 = vmatprep.subr.bf16.mxu0 0
        %2109 = vmatpush1.bf16.msra.mxu0 0
        %2110 = vmatprep.subr.bf16.mxu0 0
        %2111 = vmatpush1.bf16.msra.mxu0 0
        %2112 = vmatprep.subr.bf16.mxu0 0
        %2113 = vmatpush1.bf16.msra.mxu0 0
        %2114 = vmatprep.subr.bf16.mxu0 0
        %2115 = vmatpush1.bf16.msra.mxu0 0
        %2116 = vmatprep.subr.bf16.mxu0 0
        %2117 = vmatpush1.bf16.msra.mxu0 0
        %2118 = vmatprep.mubr.bf16.mxu0 0
        %2119 = vmatmul.mubr.bf16.gmra.mrb[0].mxu0 %v2084
        %v2120 = vpop.f32.mrb[0].mxu0
        %v2121 = vadd.f32 %v2078, %v2120
        %v2122 = vpop.f32.mrb[0].mxu0
        %v2123 = vpop.f32.mrb[0].mxu0
        %v2124 = vpop.f32.mrb[0].mxu0
        %2125 = vdwg.mxu0
        %2126 = vrot.lane.b32.xlu0 %v1816, 112
        %v2127 = vpop.permute.xlu0 %2126
        %2128 = vrot.lane.b32.xlu0 %v1816, 80
        %v2129 = vpop.permute.xlu0 %2128
        %v2131 = vsel %vm1184, %v2127, 0
        %v2134 = vsel %vm1184, %v2129, 0
        %2136 = vmatprep.subr.bf16.mxu0 0
        %2137 = vmatpush1.bf16.xpose.msra.mxu0 %v2134
        %2138 = vmatprep.subr.bf16.mxu0 0
        %2139 = vmatpush1.bf16.xpose.msra.mxu0 0
        %2140 = vmatprep.subr.bf16.mxu0 0
        %2141 = vmatpush1.bf16.xpose.msra.mxu0 0
        %2142 = vmatprep.subr.bf16.mxu0 0
        %2143 = vmatpush1.bf16.xpose.msra.mxu0 0
        %2144 = vmatprep.subr.bf16.mxu0 0
        %2145 = vmatpush1.bf16.xpose.msra.mxu0 0
        %2146 = vmatprep.subr.bf16.mxu0 0
        %2147 = vmatpush1.bf16.xpose.msra.mxu0 0
        %2148 = vmatprep.subr.bf16.mxu0 0
        %2149 = vmatpush1.bf16.xpose.msra.mxu0 0
        %2150 = vmatprep.subr.bf16.mxu0 0
        %2151 = vmatpush1.bf16.xpose.msra.mxu0 0
        %2152 = vmatprep.subr.bf16.mxu0 0
        %2153 = vmatpush1.bf16.xpose.msra.mxu0 0
        %2154 = vmatprep.subr.bf16.mxu0 0
        %2155 = vmatpush1.bf16.xpose.msra.mxu0 0
        %2156 = vmatprep.subr.bf16.mxu0 0
        %2157 = vmatpush1.bf16.xpose.msra.mxu0 0
        %2158 = vmatprep.subr.bf16.mxu0 0
        %2159 = vmatpush1.bf16.xpose.msra.mxu0 0
        %2160 = vmatprep.subr.bf16.mxu0 0
        %2161 = vmatpush1.bf16.xpose.msra.mxu0 0
        %2162 = vmatprep.subr.bf16.mxu0 0
        %2163 = vmatpush1.bf16.xpose.msra.mxu0 0
        %2164 = vmatprep.subr.bf16.mxu0 0
        %2165 = vmatpush1.bf16.xpose.msra.mxu0 0
        %2166 = vmatprep.subr.bf16.mxu0 0
        %2167 = vmatpush1.bf16.xpose.msra.mxu0 0
        %2168 = vmatprep.mubr.bf16.mxu0 0
        %2169 = vmatmul.mubr.bf16.gmra.mrb[0].mxu0 %v2131
        %v2170 = vpop.f32.mrb[0].mxu0
        %v2171 = vadd.f32 0.0, %v2170
        %v2172 = vpop.f32.mrb[0].mxu0
        %v2173 = vpop.f32.mrb[0].mxu0
        %v2174 = vpop.f32.mrb[0].mxu0
        %2175 = vdwg.mxu0
        %v2176 = vmul.f32 %v2171, 0.35355338
        %v2177 = vsel %vm1184, %v2176, -inf
        %2178 = vmax.xlane.f32.xlu0 %v2177
        %v2179 = vpop.xlane.xlu0 %2178
        %v2180 = vsub.f32 %v2176, %v2179
        %v2181 = vmul.f32 %v2180, 1.442695
        %v2182 = vpow.pop %v2181
        %v2183 = vsel %vm1184, %v2182, 0.0
        %2184 = vadd.xlane.f32.xlu0 %v2183
        %v2185 = vpop.xlane.xlu0 %2184
        %v2186 = vrcp.pop %v2185
        %v2187 = vmul.f32 %v2182, %v2186
        %v2188 = vpack.c.bf16 %v2187, %v2187
        %2189 = vrot.lane.b32.xlu0 %v1816, 48
        %v2190 = vpop.permute.xlu0 %2189
        %v2192 = vsel %vm1184, %v2188, 0
        %v2195 = vsel %vm1249, %v2190, 0
        %2197 = vmatprep.subr.bf16.mxu0 0
        %2198 = vmatpush1.bf16.msra.mxu0 %v2195
        %2199 = vmatprep.subr.bf16.mxu0 0
        %2200 = vmatpush1.bf16.msra.mxu0 0
        %2201 = vmatprep.subr.bf16.mxu0 0
        %2202 = vmatpush1.bf16.msra.mxu0 0
        %2203 = vmatprep.subr.bf16.mxu0 0
        %2204 = vmatpush1.bf16.msra.mxu0 0
        %2205 = vmatprep.subr.bf16.mxu0 0
        %2206 = vmatpush1.bf16.msra.mxu0 0
        %2207 = vmatprep.subr.bf16.mxu0 0
        %2208 = vmatpush1.bf16.msra.mxu0 0
        %2209 = vmatprep.subr.bf16.mxu0 0
        %2210 = vmatpush1.bf16.msra.mxu0 0
        %2211 = vmatprep.subr.bf16.mxu0 0
        %2212 = vmatpush1.bf16.msra.mxu0 0
        %2213 = vmatprep.subr.bf16.mxu0 0
        %2214 = vmatpush1.bf16.msra.mxu0 0
        %2215 = vmatprep.subr.bf16.mxu0 0
        %2216 = vmatpush1.bf16.msra.mxu0 0
        %2217 = vmatprep.subr.bf16.mxu0 0
        %2218 = vmatpush1.bf16.msra.mxu0 0
        %2219 = vmatprep.subr.bf16.mxu0 0
        %2220 = vmatpush1.bf16.msra.mxu0 0
        %2221 = vmatprep.subr.bf16.mxu0 0
        %2222 = vmatpush1.bf16.msra.mxu0 0
        %2223 = vmatprep.subr.bf16.mxu0 0
        %2224 = vmatpush1.bf16.msra.mxu0 0
        %2225 = vmatprep.subr.bf16.mxu0 0
        %2226 = vmatpush1.bf16.msra.mxu0 0
        %2227 = vmatprep.subr.bf16.mxu0 0
        %2228 = vmatpush1.bf16.msra.mxu0 0
        %2229 = vmatprep.mubr.bf16.mxu0 0
        %2230 = vmatmul.mubr.bf16.gmra.mrb[0].mxu0 %v2192
        %v2231 = vpop.f32.mrb[0].mxu0
        %v2232 = vadd.f32 0.0, %v2231
        %v2233 = vpop.f32.mrb[0].mxu0
        %v2234 = vpop.f32.mrb[0].mxu0
        %v2235 = vpop.f32.mrb[0].mxu0
        %2236 = vdwg.mxu0
        %v2237 = vpack.c.bf16 %v2232, %v2232
        %v2239 = vsel %vm1184, %v2237, 0
        %2241 = vmatprep.subr.bf16.mxu0 0
        %2242 = vmatpush1.bf16.msra.mxu0 %v1614
        %2243 = vmatprep.subr.bf16.mxu0 0
        %2244 = vmatpush1.bf16.msra.mxu0 0
        %2245 = vmatprep.subr.bf16.mxu0 0
        %2246 = vmatpush1.bf16.msra.mxu0 0
        %2247 = vmatprep.subr.bf16.mxu0 0
        %2248 = vmatpush1.bf16.msra.mxu0 0
        %2249 = vmatprep.subr.bf16.mxu0 0
        %2250 = vmatpush1.bf16.msra.mxu0 0
        %2251 = vmatprep.subr.bf16.mxu0 0
        %2252 = vmatpush1.bf16.msra.mxu0 0
        %2253 = vmatprep.subr.bf16.mxu0 0
        %2254 = vmatpush1.bf16.msra.mxu0 0
        %2255 = vmatprep.subr.bf16.mxu0 0
        %2256 = vmatpush1.bf16.msra.mxu0 0
        %2257 = vmatprep.subr.bf16.mxu0 0
        %2258 = vmatpush1.bf16.msra.mxu0 0
        %2259 = vmatprep.subr.bf16.mxu0 0
        %2260 = vmatpush1.bf16.msra.mxu0 0
        %2261 = vmatprep.subr.bf16.mxu0 0
        %2262 = vmatpush1.bf16.msra.mxu0 0
        %2263 = vmatprep.subr.bf16.mxu0 0
        %2264 = vmatpush1.bf16.msra.mxu0 0
        %2265 = vmatprep.subr.bf16.mxu0 0
        %2266 = vmatpush1.bf16.msra.mxu0 0
        %2267 = vmatprep.subr.bf16.mxu0 0
        %2268 = vmatpush1.bf16.msra.mxu0 0
        %2269 = vmatprep.subr.bf16.mxu0 0
        %2270 = vmatpush1.bf16.msra.mxu0 0
        %2271 = vmatprep.subr.bf16.mxu0 0
        %2272 = vmatpush1.bf16.msra.mxu0 0
        %2273 = vmatprep.mubr.bf16.mxu0 0
        %2274 = vmatmul.mubr.bf16.gmra.mrb[0].mxu0 %v2239
        %v2275 = vpop.f32.mrb[0].mxu0
        %v2276 = vadd.f32 0.0, %v2275
        %v2277 = vpop.f32.mrb[0].mxu0
        %v2278 = vpop.f32.mrb[0].mxu0
        %v2279 = vpop.f32.mrb[0].mxu0
        %2280 = vdwg.mxu0
        %v2281 = vadd.f32 %v2121, %v2276
        %2282 = vrot.lane.b32.xlu0 %v1816, 104
        %v2283 = vpop.permute.xlu0 %2282
        %2284 = vrot.lane.b32.xlu0 %v1816, 72
        %v2285 = vpop.permute.xlu0 %2284
        %v2287 = vsel %vm1184, %v2283, 0
        %v2290 = vsel %vm1184, %v2285, 0
        %2292 = vmatprep.subr.bf16.mxu0 0
        %2293 = vmatpush1.bf16.xpose.msra.mxu0 %v2290
        %2294 = vmatprep.subr.bf16.mxu0 0
        %2295 = vmatpush1.bf16.xpose.msra.mxu0 0
        %2296 = vmatprep.subr.bf16.mxu0 0
        %2297 = vmatpush1.bf16.xpose.msra.mxu0 0
        %2298 = vmatprep.subr.bf16.mxu0 0
        %2299 = vmatpush1.bf16.xpose.msra.mxu0 0
        %2300 = vmatprep.subr.bf16.mxu0 0
        %2301 = vmatpush1.bf16.xpose.msra.mxu0 0
        %2302 = vmatprep.subr.bf16.mxu0 0
        %2303 = vmatpush1.bf16.xpose.msra.mxu0 0
        %2304 = vmatprep.subr.bf16.mxu0 0
        %2305 = vmatpush1.bf16.xpose.msra.mxu0 0
        %2306 = vmatprep.subr.bf16.mxu0 0
        %2307 = vmatpush1.bf16.xpose.msra.mxu0 0
        %2308 = vmatprep.subr.bf16.mxu0 0
        %2309 = vmatpush1.bf16.xpose.msra.mxu0 0
        %2310 = vmatprep.subr.bf16.mxu0 0
        %2311 = vmatpush1.bf16.xpose.msra.mxu0 0
        %2312 = vmatprep.subr.bf16.mxu0 0
        %2313 = vmatpush1.bf16.xpose.msra.mxu0 0
        %2314 = vmatprep.subr.bf16.mxu0 0
        %2315 = vmatpush1.bf16.xpose.msra.mxu0 0
        %2316 = vmatprep.subr.bf16.mxu0 0
        %2317 = vmatpush1.bf16.xpose.msra.mxu0 0
        %2318 = vmatprep.subr.bf16.mxu0 0
        %2319 = vmatpush1.bf16.xpose.msra.mxu0 0
        %2320 = vmatprep.subr.bf16.mxu0 0
        %2321 = vmatpush1.bf16.xpose.msra.mxu0 0
        %2322 = vmatprep.subr.bf16.mxu0 0
        %2323 = vmatpush1.bf16.xpose.msra.mxu0 0
        %2324 = vmatprep.mubr.bf16.mxu0 0
        %2325 = vmatmul.mubr.bf16.gmra.mrb[0].mxu0 %v2287
        %v2326 = vpop.f32.mrb[0].mxu0
        %v2327 = vadd.f32 0.0, %v2326
        %v2328 = vpop.f32.mrb[0].mxu0
        %v2329 = vpop.f32.mrb[0].mxu0
        %v2330 = vpop.f32.mrb[0].mxu0
        %2331 = vdwg.mxu0
        %v2332 = vmul.f32 %v2327, 0.35355338
        %v2333 = vsel %vm1184, %v2332, -inf
        %2334 = vmax.xlane.f32.xlu0 %v2333
        %v2335 = vpop.xlane.xlu0 %2334
        %v2336 = vsub.f32 %v2332, %v2335
        %v2337 = vmul.f32 %v2336, 1.442695
        %v2338 = vpow.pop %v2337
        %v2339 = vsel %vm1184, %v2338, 0.0
        %2340 = vadd.xlane.f32.xlu0 %v2339
        %v2341 = vpop.xlane.xlu0 %2340
        %v2342 = vrcp.pop %v2341
        %v2343 = vmul.f32 %v2338, %v2342
        %v2344 = vpack.c.bf16 %v2343, %v2343
        %2345 = vrot.lane.b32.xlu0 %v1816, 40
        %v2346 = vpop.permute.xlu0 %2345
        %v2348 = vsel %vm1184, %v2344, 0
        %v2351 = vsel %vm1249, %v2346, 0
        %2353 = vmatprep.subr.bf16.mxu0 0
        %2354 = vmatpush1.bf16.msra.mxu0 %v2351
        %2355 = vmatprep.subr.bf16.mxu0 0
        %2356 = vmatpush1.bf16.msra.mxu0 0
        %2357 = vmatprep.subr.bf16.mxu0 0
        %2358 = vmatpush1.bf16.msra.mxu0 0
        %2359 = vmatprep.subr.bf16.mxu0 0
        %2360 = vmatpush1.bf16.msra.mxu0 0
        %2361 = vmatprep.subr.bf16.mxu0 0
        %2362 = vmatpush1.bf16.msra.mxu0 0
        %2363 = vmatprep.subr.bf16.mxu0 0
        %2364 = vmatpush1.bf16.msra.mxu0 0
        %2365 = vmatprep.subr.bf16.mxu0 0
        %2366 = vmatpush1.bf16.msra.mxu0 0
        %2367 = vmatprep.subr.bf16.mxu0 0
        %2368 = vmatpush1.bf16.msra.mxu0 0
        %2369 = vmatprep.subr.bf16.mxu0 0
        %2370 = vmatpush1.bf16.msra.mxu0 0
        %2371 = vmatprep.subr.bf16.mxu0 0
        %2372 = vmatpush1.bf16.msra.mxu0 0
        %2373 = vmatprep.subr.bf16.mxu0 0
        %2374 = vmatpush1.bf16.msra.mxu0 0
        %2375 = vmatprep.subr.bf16.mxu0 0
        %2376 = vmatpush1.bf16.msra.mxu0 0
        %2377 = vmatprep.subr.bf16.mxu0 0
        %2378 = vmatpush1.bf16.msra.mxu0 0
        %2379 = vmatprep.subr.bf16.mxu0 0
        %2380 = vmatpush1.bf16.msra.mxu0 0
        %2381 = vmatprep.subr.bf16.mxu0 0
        %2382 = vmatpush1.bf16.msra.mxu0 0
        %2383 = vmatprep.subr.bf16.mxu0 0
        %2384 = vmatpush1.bf16.msra.mxu0 0
        %2385 = vmatprep.mubr.bf16.mxu0 0
        %2386 = vmatmul.mubr.bf16.gmra.mrb[0].mxu0 %v2348
        %v2387 = vpop.f32.mrb[0].mxu0
        %v2388 = vadd.f32 0.0, %v2387
        %v2389 = vpop.f32.mrb[0].mxu0
        %v2390 = vpop.f32.mrb[0].mxu0
        %v2391 = vpop.f32.mrb[0].mxu0
        %2392 = vdwg.mxu0
        %v2393 = vpack.c.bf16 %v2388, %v2388
        %v2395 = vsel %vm1184, %v2393, 0
        %2397 = vmatprep.subr.bf16.mxu0 0
        %2398 = vmatpush1.bf16.msra.mxu0 %v1773
        %2399 = vmatprep.subr.bf16.mxu0 0
        %2400 = vmatpush1.bf16.msra.mxu0 0
        %2401 = vmatprep.subr.bf16.mxu0 0
        %2402 = vmatpush1.bf16.msra.mxu0 0
        %2403 = vmatprep.subr.bf16.mxu0 0
        %2404 = vmatpush1.bf16.msra.mxu0 0
        %2405 = vmatprep.subr.bf16.mxu0 0
        %2406 = vmatpush1.bf16.msra.mxu0 0
        %2407 = vmatprep.subr.bf16.mxu0 0
        %2408 = vmatpush1.bf16.msra.mxu0 0
        %2409 = vmatprep.subr.bf16.mxu0 0
        %2410 = vmatpush1.bf16.msra.mxu0 0
        %2411 = vmatprep.subr.bf16.mxu0 0
        %2412 = vmatpush1.bf16.msra.mxu0 0
        %2413 = vmatprep.subr.bf16.mxu0 0
        %2414 = vmatpush1.bf16.msra.mxu0 0
        %2415 = vmatprep.subr.bf16.mxu0 0
        %2416 = vmatpush1.bf16.msra.mxu0 0
        %2417 = vmatprep.subr.bf16.mxu0 0
        %2418 = vmatpush1.bf16.msra.mxu0 0
        %2419 = vmatprep.subr.bf16.mxu0 0
        %2420 = vmatpush1.bf16.msra.mxu0 0
        %2421 = vmatprep.subr.bf16.mxu0 0
        %2422 = vmatpush1.bf16.msra.mxu0 0
        %2423 = vmatprep.subr.bf16.mxu0 0
        %2424 = vmatpush1.bf16.msra.mxu0 0
        %2425 = vmatprep.subr.bf16.mxu0 0
        %2426 = vmatpush1.bf16.msra.mxu0 0
        %2427 = vmatprep.subr.bf16.mxu0 0
        %2428 = vmatpush1.bf16.msra.mxu0 0
        %2429 = vmatprep.mubr.bf16.mxu0 0
        %2430 = vmatmul.mubr.bf16.gmra.mrb[0].mxu0 %v2395
        %v2431 = vpop.f32.mrb[0].mxu0
        %v2432 = vadd.f32 0.0, %v2431
        %v2433 = vpop.f32.mrb[0].mxu0
        %v2434 = vpop.f32.mrb[0].mxu0
        %v2435 = vpop.f32.mrb[0].mxu0
        %2436 = vdwg.mxu0
        %v2437 = vadd.f32 %v2281, %v2432
        %v2438 = vld [vmem:[%s1031] sm:$0x1]
        %v2440 = vlaneseq
        %v2441 = vshrl.u32 %v2440, 7
        %v2442 = vsub.s32 0, %v2441
        %v2443 = vrot.slane %v2438, %v2442
        %v2445 = vadd.f32 %v1815, %v2443
        %v2446 = vadd.f32 %v2437, %v2443
        %v2447 = vld [vmem:[%s1035] sm:$0x1]
        %v2448 = vld [vmem:[%s1039] sm:$0x1]
        %v2449 = vadd.f32 %v1105, %v2445
        %v2450 = vadd.f32 %v1106, %v2446
        %v2451 = vsel %vm1131, %v2449, 0.0
        %2452 = vadd.xlane.f32.xlu0 %v2451
        %v2453 = vpop.xlane.xlu0 %2452
        %v2454 = vsel %vm1131, %v2450, 0.0
        %2455 = vadd.xlane.f32.xlu0 %v2454
        %v2456 = vpop.xlane.xlu0 %2455
        %v2457 = vrcp.pop 32.0
        %v2458 = vmul.f32 %v2453, %v2457
        %v2459 = vmul.f32 %v2456, %v2457
        %v2460 = vsub.f32 %v2449, %v2458
        %v2461 = vsub.f32 %v2450, %v2459
        %v2462 = vmul.f32 %v2460, %v2460
        %v2463 = vmul.f32 %v2461, %v2461
        %v2464 = vsel %vm1131, %v2462, 0.0
        %2465 = vadd.xlane.f32.xlu0 %v2464
        %v2466 = vpop.xlane.xlu0 %2465
        %v2467 = vsel %vm1131, %v2463, 0.0
        %2468 = vadd.xlane.f32.xlu0 %v2467
        %v2469 = vpop.xlane.xlu0 %2468
        %v2470 = vmul.f32 %v2466, %v2457
        %v2471 = vmul.f32 %v2469, %v2457
        %v2472 = vadd.f32 %v2470, 1e-05
        %v2473 = vadd.f32 %v2471, 1e-05
        %v2474 = vrsqrt.pop %v2472
        %v2475 = vrsqrt.pop %v2473
        %v2476 = vmul.f32 %v2460, %v2474
        %v2477 = vmul.f32 %v2461, %v2475
        %v2479 = vlaneseq
        %v2480 = vshrl.u32 %v2479, 7
        %v2481 = vsub.s32 0, %v2480
        %v2482 = vrot.slane %v2447, %v2481
        %v2484 = vmul.f32 %v2476, %v2482
        %v2485 = vmul.f32 %v2477, %v2482
        %v2487 = vlaneseq
        %v2488 = vshrl.u32 %v2487, 7
        %v2489 = vsub.s32 0, %v2488
        %v2490 = vrot.slane %v2448, %v2489
        %v2492 = vadd.f32 %v2484, %v2490
        %v2493 = vadd.f32 %v2485, %v2490
        %v2494 = vld [vmem:[%s1070] sm:$0xf]
        %v2495 = vld [vmem:[%s1070 + $0x4] sm:$0xf]
        %v2496 = vld [vmem:[%s1070 + $0x8] sm:$0xf]
        %v2497 = vld [vmem:[%s1070 + $0xc] sm:$0xf]
        %v2498 = vpack.c.bf16 %v1104, %v1103
        %v2499 = vld [vmem:[%s1075] sm:$0xf]
        %v2500 = vld [vmem:[%s1075 + $0x4] sm:$0xf]
        %v2501 = vld [vmem:[%s1075 + $0x8] sm:$0xf]
        %v2502 = vld [vmem:[%s1075 + $0xc] sm:$0xf]
        %v2503 = vpack.c.bf16 %v2493, %v2492
        %v2508 = vunpack.c.l.b16 %v2499
        %v2509 = vunpack.c.l.b16 %v2500
        %v2510 = vunpack.c.l.b16 %v2501
        %v2511 = vunpack.c.l.b16 %v2502
        %v2512 = vpack.c.b16 %v2509, %v2508
        %v2513 = vpack.c.b16 %v2511, %v2510
        %v2517 = vsel %vm1131, %v2503, 0
        %2519 = vmatprep.subr.bf16.mxu0 0
        %2520 = vmatpush1.bf16.msra.mxu0 %v2512
        %2521 = vmatprep.subr.bf16.mxu0 0
        %2522 = vmatpush1.bf16.msra.mxu0 %v2513
        %2523 = vmatprep.subr.bf16.mxu0 0
        %2524 = vmatpush1.bf16.msra.mxu0 0
        %2525 = vmatprep.subr.bf16.mxu0 0
        %2526 = vmatpush1.bf16.msra.mxu0 0
        %2527 = vmatprep.subr.bf16.mxu0 0
        %2528 = vmatpush1.bf16.msra.mxu0 0
        %2529 = vmatprep.subr.bf16.mxu0 0
        %2530 = vmatpush1.bf16.msra.mxu0 0
        %2531 = vmatprep.subr.bf16.mxu0 0
        %2532 = vmatpush1.bf16.msra.mxu0 0
        %2533 = vmatprep.subr.bf16.mxu0 0
        %2534 = vmatpush1.bf16.msra.mxu0 0
        %2535 = vmatprep.subr.bf16.mxu0 0
        %2536 = vmatpush1.bf16.msra.mxu0 0
        %2537 = vmatprep.subr.bf16.mxu0 0
        %2538 = vmatpush1.bf16.msra.mxu0 0
        %2539 = vmatprep.subr.bf16.mxu0 0
        %2540 = vmatpush1.bf16.msra.mxu0 0
        %2541 = vmatprep.subr.bf16.mxu0 0
        %2542 = vmatpush1.bf16.msra.mxu0 0
        %2543 = vmatprep.subr.bf16.mxu0 0
        %2544 = vmatpush1.bf16.msra.mxu0 0
        %2545 = vmatprep.subr.bf16.mxu0 0
        %2546 = vmatpush1.bf16.msra.mxu0 0
        %2547 = vmatprep.subr.bf16.mxu0 0
        %2548 = vmatpush1.bf16.msra.mxu0 0
        %2549 = vmatprep.subr.bf16.mxu0 0
        %2550 = vmatpush1.bf16.msra.mxu0 0
        %2551 = vmatprep.mubr.bf16.mxu0 0
        %2552 = vmatmul.mubr.bf16.gmra.mrb[0].mxu0 %v2517
        %v2553 = vpop.f32.mrb[0].mxu0
        %v2554 = vadd.f32 0.0, %v2553
        %v2555 = vpop.f32.mrb[0].mxu0
        %v2556 = vpop.f32.mrb[0].mxu0
        %v2557 = vadd.f32 0.0, %v2556
        %v2558 = vpop.f32.mrb[0].mxu0
        %2559 = vdwg.mxu0
        %v2564 = vunpack.c.l.b16 %v2494
        %v2565 = vunpack.c.l.b16 %v2495
        %v2566 = vunpack.c.l.b16 %v2496
        %v2567 = vunpack.c.l.b16 %v2497
        %v2568 = vpack.c.b16 %v2565, %v2564
        %v2569 = vpack.c.b16 %v2567, %v2566
        %v2573 = vsel %vm1131, %v2498, 0
        %2575 = vmatprep.subr.bf16.mxu0 0
        %2576 = vmatpush1.bf16.msra.mxu0 %v2568
        %2577 = vmatprep.subr.bf16.mxu0 0
        %2578 = vmatpush1.bf16.msra.mxu0 %v2569
        %2579 = vmatprep.subr.bf16.mxu0 0
        %2580 = vmatpush1.bf16.msra.mxu0 0
        %2581 = vmatprep.subr.bf16.mxu0 0
        %2582 = vmatpush1.bf16.msra.mxu0 0
        %2583 = vmatprep.subr.bf16.mxu0 0
        %2584 = vmatpush1.bf16.msra.mxu0 0
        %2585 = vmatprep.subr.bf16.mxu0 0
        %2586 = vmatpush1.bf16.msra.mxu0 0
        %2587 = vmatprep.subr.bf16.mxu0 0
        %2588 = vmatpush1.bf16.msra.mxu0 0
        %2589 = vmatprep.subr.bf16.mxu0 0
        %2590 = vmatpush1.bf16.msra.mxu0 0
        %2591 = vmatprep.subr.bf16.mxu0 0
        %2592 = vmatpush1.bf16.msra.mxu0 0
        %2593 = vmatprep.subr.bf16.mxu0 0
        %2594 = vmatpush1.bf16.msra.mxu0 0
        %2595 = vmatprep.subr.bf16.mxu0 0
        %2596 = vmatpush1.bf16.msra.mxu0 0
        %2597 = vmatprep.subr.bf16.mxu0 0
        %2598 = vmatpush1.bf16.msra.mxu0 0
        %2599 = vmatprep.subr.bf16.mxu0 0
        %2600 = vmatpush1.bf16.msra.mxu0 0
        %2601 = vmatprep.subr.bf16.mxu0 0
        %2602 = vmatpush1.bf16.msra.mxu0 0
        %2603 = vmatprep.subr.bf16.mxu0 0
        %2604 = vmatpush1.bf16.msra.mxu0 0
        %2605 = vmatprep.subr.bf16.mxu0 0
        %2606 = vmatpush1.bf16.msra.mxu0 0
        %2607 = vmatprep.mubr.bf16.mxu0 0
        %2608 = vmatmul.mubr.bf16.gmra.mrb[0].mxu0 %v2573
        %v2609 = vpop.f32.mrb[0].mxu0
        %v2610 = vadd.f32 %v2554, %v2609
        %v2611 = vpop.f32.mrb[0].mxu0
        %v2612 = vpop.f32.mrb[0].mxu0
        %v2613 = vadd.f32 %v2557, %v2612
        %v2614 = vpop.f32.mrb[0].mxu0
        %2615 = vdwg.mxu0
        %v2616 = vld [vmem:[%s1078] sm:$0x1]
        %v2618 = vlaneseq
        %v2619 = vshrl.u32 %v2618, 7
        %v2620 = vsub.s32 0, %v2619
        %v2621 = vrot.slane %v2616, %v2620
        %v2623 = vadd.f32 %v2610, %v2621
        %v2624 = vadd.f32 %v2613, %v2621
        %vm2625 = vcmask 39936
        %v2626 = vsel %vm2625, %v2623, 0.0
        %v2627 = vrot.slane %v2626, 4
        %v2628 = vadd.f32 %v2626, %v2627
        %v2629 = vrot.slane %v2628, 2
        %v2630 = vadd.f32 %v2628, %v2629
        %v2631 = vrot.slane %v2630, 1
        %v2632 = vadd.f32 %v2630, %v2631
        %v2633 = vrcp.pop 8.0
        %v2634 = vmul.f32 %v2632, %v2633
        %v2635 = vsel %vm2625, %v2634, -inf
        %2636 = vmax.xlane.f32.xlu0 %v2635
        %v2637 = vpop.xlane.xlu0 %2636
        %v2638 = vsub.f32 %v2634, %v2637
        %v2639 = vmul.f32 %v2638, 1.442695
        %v2640 = vpow.pop %v2639
        %v2641 = vsel %vm2625, %v2640, 0.0
        %2642 = vadd.xlane.f32.xlu0 %v2641
        %v2643 = vpop.xlane.xlu0 %2642
        %v2644 = vrcp.pop %v2643
        %v2645 = vmul.f32 %v2640, %v2644
        %v2646 = vld [vmem:[%s1012] sm:$0xf]
        %v2647 = vunpack.c.l.bf16 %v2646
        %2649 = vset.pattern.permute.xlu0 0
        %2650 = vperm.xlu0 %2649, %v2645
        %v2651 = vpop.permute.xlu0 %2650
        %v2653 = vmul.f32 %v2651, %v2647
        %s2654 = scalar_lea.vmem %s1012, 4
        %v2655 = vld [vmem:[%s2654] sm:$0xf]
        %v2656 = vunpack.c.l.bf16 %v2655
        %2657 = vset.pattern.permute.xlu0 1
        %2658 = vperm.xlu0 %2657, %v2645
        %v2659 = vpop.permute.xlu0 %2658
        %v2661 = vmul.f32 %v2659, %v2656
        %v2662 = vadd.f32 %v2653, %v2661
        %s2663 = scalar_lea.vmem %s1012, 8
        %v2664 = vld [vmem:[%s2663] sm:$0xf]
        %v2665 = vunpack.c.l.bf16 %v2664
        %2666 = vset.pattern.permute.xlu0 2
        %2667 = vperm.xlu0 %2666, %v2645
        %v2668 = vpop.permute.xlu0 %2667
        %v2670 = vmul.f32 %v2668, %v2665
        %v2671 = vadd.f32 %v2662, %v2670
        %s2672 = scalar_lea.vmem %s1012, 12
        %v2673 = vld [vmem:[%s2672] sm:$0xf]
        %v2674 = vunpack.c.l.bf16 %v2673
        %2675 = vset.pattern.permute.xlu0 3
        %2676 = vperm.xlu0 %2675, %v2645
        %v2677 = vpop.permute.xlu0 %2676
        %v2679 = vmul.f32 %v2677, %v2674
        %v2680 = vadd.f32 %v2671, %v2679
        %s2681 = scalar_lea.vmem %s1012, 16
        %v2682 = vld [vmem:[%s2681] sm:$0xf]
        %v2683 = vunpack.c.l.bf16 %v2682
        %2684 = vset.pattern.permute.xlu0 4
        %2685 = vperm.xlu0 %2684, %v2645
        %v2686 = vpop.permute.xlu0 %2685
        %v2688 = vmul.f32 %v2686, %v2683
        %v2689 = vadd.f32 %v2680, %v2688
        %v2690 = vsel %vm2625, %v2624, 0.0
        %v2691 = vrot.slane %v2690, 4
        %v2692 = vadd.f32 %v2690, %v2691
        %v2693 = vrot.slane %v2692, 2
        %v2694 = vadd.f32 %v2692, %v2693
        %v2695 = vrot.slane %v2694, 1
        %v2696 = vadd.f32 %v2694, %v2695
        %v2697 = vmul.f32 %v2696, %v2633
        %v2698 = vsel %vm2625, %v2697, -inf
        %2699 = vmax.xlane.f32.xlu0 %v2698
        %v2700 = vpop.xlane.xlu0 %2699
        %v2701 = vsub.f32 %v2697, %v2700
        %v2702 = vmul.f32 %v2701, 1.442695
        %v2703 = vpow.pop %v2702
        %v2704 = vsel %vm2625, %v2703, 0.0
        %2705 = vadd.xlane.f32.xlu0 %v2704
        %v2706 = vpop.xlane.xlu0 %2705
        %v2707 = vrcp.pop %v2706
        %v2708 = vmul.f32 %v2703, %v2707
        %s2709 = scalar_lea.vmem %s1012, 20
        %v2710 = vld [vmem:[%s2709] sm:$0xf]
        %v2711 = vunpack.c.l.bf16 %v2710
        %2713 = vset.pattern.permute.xlu0 0
        %2714 = vperm.xlu0 %2713, %v2708
        %v2715 = vpop.permute.xlu0 %2714
        %v2717 = vmul.f32 %v2715, %v2711
        %s2718 = scalar_lea.vmem %s1012, 24
        %v2719 = vld [vmem:[%s2718] sm:$0xf]
        %v2720 = vunpack.c.l.bf16 %v2719
        %2721 = vset.pattern.permute.xlu0 1
        %2722 = vperm.xlu0 %2721, %v2708
        %v2723 = vpop.permute.xlu0 %2722
        %v2725 = vmul.f32 %v2723, %v2720
        %v2726 = vadd.f32 %v2717, %v2725
        %s2727 = scalar_lea.vmem %s1012, 28
        %v2728 = vld [vmem:[%s2727] sm:$0xf]
        %v2729 = vunpack.c.l.bf16 %v2728
        %2730 = vset.pattern.permute.xlu0 2
        %2731 = vperm.xlu0 %2730, %v2708
        %v2732 = vpop.permute.xlu0 %2731
        %v2734 = vmul.f32 %v2732, %v2729
        %v2735 = vadd.f32 %v2726, %v2734
        %s2736 = scalar_lea.vmem %s1012, 32
        %v2737 = vld [vmem:[%s2736] sm:$0xf]
        %v2738 = vunpack.c.l.bf16 %v2737
        %2739 = vset.pattern.permute.xlu0 3
        %2740 = vperm.xlu0 %2739, %v2708
        %v2741 = vpop.permute.xlu0 %2740
        %v2743 = vmul.f32 %v2741, %v2738
        %v2744 = vadd.f32 %v2735, %v2743
        %s2745 = scalar_lea.vmem %s1012, 36
        %v2746 = vld [vmem:[%s2745] sm:$0xf]
        %v2747 = vunpack.c.l.bf16 %v2746
        %2748 = vset.pattern.permute.xlu0 4
        %2749 = vperm.xlu0 %2748, %v2708
        %v2750 = vpop.permute.xlu0 %2749
        %v2752 = vmul.f32 %v2750, %v2747
        %v2753 = vadd.f32 %v2744, %v2752
        %s2754 = scalar_lea.vmem %s1018, 16
        %v2755 = vld [vmem:[%s2754] sm:$0xf]
        %v2756 = vld [vmem:[%s2754 + $0x4] sm:$0xf]
        %v2757 = vld [vmem:[%s2754 + $0x8] sm:$0xf]
        %v2758 = vld [vmem:[%s2754 + $0xc] sm:$0xf]
        %s2759 = scalar_lea.vmem %s1022, 1
        %v2760 = vld [vmem:[%s2759] sm:$0x1]
        %v2761 = vpack.c.bf16 %v2753, %v2689
        %v2763 = vlaneseq
        %v2764 = vshrl.u32 %v2763, 7
        %v2765 = vsub.s32 0, %v2764
        %v2766 = vrot.slane %v2760, %v2765
        %v2772 = vunpack.c.l.b16 %v2755
        %v2773 = vunpack.c.l.b16 %v2756
        %v2774 = vunpack.c.l.b16 %v2757
        %v2775 = vunpack.c.l.b16 %v2758
        %v2776 = vpack.c.b16 %v2773, %v2772
        %v2777 = vpack.c.b16 %v2775, %v2774
        %v2781 = vsel %vm1131, %v2761, 0
        %2783 = vmatprep.subr.bf16.mxu0 0
        %2784 = vmatpush1.bf16.msra.mxu0 %v2776
        %2785 = vmatprep.subr.bf16.mxu0 0
        %2786 = vmatpush1.bf16.msra.mxu0 %v2777
        %2787 = vmatprep.subr.bf16.mxu0 0
        %2788 = vmatpush1.bf16.msra.mxu0 0
        %2789 = vmatprep.subr.bf16.mxu0 0
        %2790 = vmatpush1.bf16.msra.mxu0 0
        %2791 = vmatprep.subr.bf16.mxu0 0
        %2792 = vmatpush1.bf16.msra.mxu0 0
        %2793 = vmatprep.subr.bf16.mxu0 0
        %2794 = vmatpush1.bf16.msra.mxu0 0
        %2795 = vmatprep.subr.bf16.mxu0 0
        %2796 = vmatpush1.bf16.msra.mxu0 0
        %2797 = vmatprep.subr.bf16.mxu0 0
        %2798 = vmatpush1.bf16.msra.mxu0 0
        %2799 = vmatprep.subr.bf16.mxu0 0
        %2800 = vmatpush1.bf16.msra.mxu0 0
        %2801 = vmatprep.subr.bf16.mxu0 0
        %2802 = vmatpush1.bf16.msra.mxu0 0
        %2803 = vmatprep.subr.bf16.mxu0 0
        %2804 = vmatpush1.bf16.msra.mxu0 0
        %2805 = vmatprep.subr.bf16.mxu0 0
        %2806 = vmatpush1.bf16.msra.mxu0 0
        %2807 = vmatprep.subr.bf16.mxu0 0
        %2808 = vmatpush1.bf16.msra.mxu0 0
        %2809 = vmatprep.subr.bf16.mxu0 0
        %2810 = vmatpush1.bf16.msra.mxu0 0
        %2811 = vmatprep.subr.bf16.mxu0 0
        %2812 = vmatpush1.bf16.msra.mxu0 0
        %2813 = vmatprep.subr.bf16.mxu0 0
        %2814 = vmatpush1.bf16.msra.mxu0 0
        %2815 = vmatprep.mubr.bf16.mxu0 0
        %2816 = vmatmul.mubr.bf16.gmra.mrb[0].mxu0 %v2781
        %v2817 = vpop.f32.mrb[0].mxu0
        %v2818 = vadd.f32 %v2766, %v2817
        %v2819 = vpop.f32.mrb[0].mxu0
        %v2820 = vpop.f32.mrb[0].mxu0
        %v2821 = vadd.f32 %v2766, %v2820
        %v2822 = vpop.f32.mrb[0].mxu0
        %2823 = vdwg.mxu0
        %2824 = vrot.lane.b32.xlu0 %v2776, 64
        %v2825 = vpop.permute.xlu0 %2824
        %2826 = vrot.lane.b32.xlu0 %v2777, 64
        %v2827 = vpop.permute.xlu0 %2826
        %2830 = vrot.lane.b32.xlu0 %v2766, 64
        %v2831 = vpop.permute.xlu0 %2830
        %2833 = vmatprep.subr.bf16.mxu0 0
        %2834 = vmatpush1.bf16.msra.mxu0 %v2825
        %2835 = vmatprep.subr.bf16.mxu0 0
        %2836 = vmatpush1.bf16.msra.mxu0 %v2827
        %2837 = vmatprep.subr.bf16.mxu0 0
        %2838 = vmatpush1.bf16.msra.mxu0 0
        %2839 = vmatprep.subr.bf16.mxu0 0
        %2840 = vmatpush1.bf16.msra.mxu0 0
        %2841 = vmatprep.subr.bf16.mxu0 0
        %2842 = vmatpush1.bf16.msra.mxu0 0
        %2843 = vmatprep.subr.bf16.mxu0 0
        %2844 = vmatpush1.bf16.msra.mxu0 0
        %2845 = vmatprep.subr.bf16.mxu0 0
        %2846 = vmatpush1.bf16.msra.mxu0 0
        %2847 = vmatprep.subr.bf16.mxu0 0
        %2848 = vmatpush1.bf16.msra.mxu0 0
        %2849 = vmatprep.subr.bf16.mxu0 0
        %2850 = vmatpush1.bf16.msra.mxu0 0
        %2851 = vmatprep.subr.bf16.mxu0 0
        %2852 = vmatpush1.bf16.msra.mxu0 0
        %2853 = vmatprep.subr.bf16.mxu0 0
        %2854 = vmatpush1.bf16.msra.mxu0 0
        %2855 = vmatprep.subr.bf16.mxu0 0
        %2856 = vmatpush1.bf16.msra.mxu0 0
        %2857 = vmatprep.subr.bf16.mxu0 0
        %2858 = vmatpush1.bf16.msra.mxu0 0
        %2859 = vmatprep.subr.bf16.mxu0 0
        %2860 = vmatpush1.bf16.msra.mxu0 0
        %2861 = vmatprep.subr.bf16.mxu0 0
        %2862 = vmatpush1.bf16.msra.mxu0 0
        %2863 = vmatprep.subr.bf16.mxu0 0
        %2864 = vmatpush1.bf16.msra.mxu0 0
        %2865 = vmatprep.mubr.bf16.mxu0 0
        %2866 = vmatmul.mubr.bf16.gmra.mrb[0].mxu0 %v2517
        %v2867 = vpop.f32.mrb[0].mxu0
        %v2868 = vadd.f32 %v2831, %v2867
        %v2869 = vpop.f32.mrb[0].mxu0
        %v2870 = vpop.f32.mrb[0].mxu0
        %v2871 = vadd.f32 %v2831, %v2870
        %v2872 = vpop.f32.mrb[0].mxu0
        %2873 = vdwg.mxu0
        %s2874 = scalar_lea.vmem %s1027, 16
        %v2875 = vld [vmem:[%s2874] sm:$0xf]
        %v2876 = vld [vmem:[%s2874 + $0x4] sm:$0xf]
        %v2877 = vld [vmem:[%s2874 + $0x8] sm:$0xf]
        %v2878 = vld [vmem:[%s2874 + $0xc] sm:$0xf]
        %v2879 = vpack.c.bf16 %v2818, %v2818
        %2881 = vrot.lane.b32.xlu0 %v2879, 96
        %v2882 = vpop.permute.xlu0 %2881
        %v2884 = vsel %vm1184, %v2879, 0
        %v2887 = vsel %vm1184, %v2882, 0
        %2889 = vmatprep.subr.bf16.mxu0 0
        %2890 = vmatpush1.bf16.xpose.msra.mxu0 %v2887
        %2891 = vmatprep.subr.bf16.mxu0 0
        %2892 = vmatpush1.bf16.xpose.msra.mxu0 0
        %2893 = vmatprep.subr.bf16.mxu0 0
        %2894 = vmatpush1.bf16.xpose.msra.mxu0 0
        %2895 = vmatprep.subr.bf16.mxu0 0
        %2896 = vmatpush1.bf16.xpose.msra.mxu0 0
        %2897 = vmatprep.subr.bf16.mxu0 0
        %2898 = vmatpush1.bf16.xpose.msra.mxu0 0
        %2899 = vmatprep.subr.bf16.mxu0 0
        %2900 = vmatpush1.bf16.xpose.msra.mxu0 0
        %2901 = vmatprep.subr.bf16.mxu0 0
        %2902 = vmatpush1.bf16.xpose.msra.mxu0 0
        %2903 = vmatprep.subr.bf16.mxu0 0
        %2904 = vmatpush1.bf16.xpose.msra.mxu0 0
        %2905 = vmatprep.subr.bf16.mxu0 0
        %2906 = vmatpush1.bf16.xpose.msra.mxu0 0
        %2907 = vmatprep.subr.bf16.mxu0 0
        %2908 = vmatpush1.bf16.xpose.msra.mxu0 0
        %2909 = vmatprep.subr.bf16.mxu0 0
        %2910 = vmatpush1.bf16.xpose.msra.mxu0 0
        %2911 = vmatprep.subr.bf16.mxu0 0
        %2912 = vmatpush1.bf16.xpose.msra.mxu0 0
        %2913 = vmatprep.subr.bf16.mxu0 0
        %2914 = vmatpush1.bf16.xpose.msra.mxu0 0
        %2915 = vmatprep.subr.bf16.mxu0 0
        %2916 = vmatpush1.bf16.xpose.msra.mxu0 0
        %2917 = vmatprep.subr.bf16.mxu0 0
        %2918 = vmatpush1.bf16.xpose.msra.mxu0 0
        %2919 = vmatprep.subr.bf16.mxu0 0
        %2920 = vmatpush1.bf16.xpose.msra.mxu0 0
        %2921 = vmatprep.mubr.bf16.mxu0 0
        %2922 = vmatmul.mubr.bf16.gmra.mrb[0].mxu0 %v2884
        %v2923 = vpop.f32.mrb[0].mxu0
        %v2924 = vadd.f32 0.0, %v2923
        %v2925 = vpop.f32.mrb[0].mxu0
        %v2926 = vpop.f32.mrb[0].mxu0
        %v2927 = vpop.f32.mrb[0].mxu0
        %2928 = vdwg.mxu0
        %v2929 = vmul.f32 %v2924, 0.35355338
        %v2930 = vsel %vm1184, %v2929, -inf
        %2931 = vmax.xlane.f32.xlu0 %v2930
        %v2932 = vpop.xlane.xlu0 %2931
        %v2933 = vsub.f32 %v2929, %v2932
        %v2934 = vmul.f32 %v2933, 1.442695
        %v2935 = vpow.pop %v2934
        %v2936 = vsel %vm1184, %v2935, 0.0
        %2937 = vadd.xlane.f32.xlu0 %v2936
        %v2938 = vpop.xlane.xlu0 %2937
        %v2939 = vrcp.pop %v2938
        %v2940 = vmul.f32 %v2935, %v2939
        %v2941 = vpack.c.bf16 %v2940, %v2940
        %v2942 = vpack.c.bf16 %v2868, %v2868
        %v2944 = vsel %vm1184, %v2941, 0
        %v2947 = vsel %vm1249, %v2942, 0
        %2949 = vmatprep.subr.bf16.mxu0 0
        %2950 = vmatpush1.bf16.msra.mxu0 %v2947
        %2951 = vmatprep.subr.bf16.mxu0 0
        %2952 = vmatpush1.bf16.msra.mxu0 0
        %2953 = vmatprep.subr.bf16.mxu0 0
        %2954 = vmatpush1.bf16.msra.mxu0 0
        %2955 = vmatprep.subr.bf16.mxu0 0
        %2956 = vmatpush1.bf16.msra.mxu0 0
        %2957 = vmatprep.subr.bf16.mxu0 0
        %2958 = vmatpush1.bf16.msra.mxu0 0
        %2959 = vmatprep.subr.bf16.mxu0 0
        %2960 = vmatpush1.bf16.msra.mxu0 0
        %2961 = vmatprep.subr.bf16.mxu0 0
        %2962 = vmatpush1.bf16.msra.mxu0 0
        %2963 = vmatprep.subr.bf16.mxu0 0
        %2964 = vmatpush1.bf16.msra.mxu0 0
        %2965 = vmatprep.subr.bf16.mxu0 0
        %2966 = vmatpush1.bf16.msra.mxu0 0
        %2967 = vmatprep.subr.bf16.mxu0 0
        %2968 = vmatpush1.bf16.msra.mxu0 0
        %2969 = vmatprep.subr.bf16.mxu0 0
        %2970 = vmatpush1.bf16.msra.mxu0 0
        %2971 = vmatprep.subr.bf16.mxu0 0
        %2972 = vmatpush1.bf16.msra.mxu0 0
        %2973 = vmatprep.subr.bf16.mxu0 0
        %2974 = vmatpush1.bf16.msra.mxu0 0
        %2975 = vmatprep.subr.bf16.mxu0 0
        %2976 = vmatpush1.bf16.msra.mxu0 0
        %2977 = vmatprep.subr.bf16.mxu0 0
        %2978 = vmatpush1.bf16.msra.mxu0 0
        %2979 = vmatprep.subr.bf16.mxu0 0
        %2980 = vmatpush1.bf16.msra.mxu0 0
        %2981 = vmatprep.mubr.bf16.mxu0 0
        %2982 = vmatmul.mubr.bf16.gmra.mrb[0].mxu0 %v2944
        %v2983 = vpop.f32.mrb[0].mxu0
        %v2984 = vadd.f32 0.0, %v2983
        %v2985 = vpop.f32.mrb[0].mxu0
        %v2986 = vpop.f32.mrb[0].mxu0
        %v2987 = vpop.f32.mrb[0].mxu0
        %2988 = vdwg.mxu0
        %v2989 = vpack.c.bf16 %v2984, %v2984
        %2990 = vrot.lane.b32.xlu0 %v2879, 120
        %v2991 = vpop.permute.xlu0 %2990
        %2992 = vrot.lane.b32.xlu0 %v2879, 88
        %v2993 = vpop.permute.xlu0 %2992
        %v2995 = vsel %vm1184, %v2991, 0
        %v2998 = vsel %vm1184, %v2993, 0
        %3000 = vmatprep.subr.bf16.mxu0 0
        %3001 = vmatpush1.bf16.xpose.msra.mxu0 %v2998
        %3002 = vmatprep.subr.bf16.mxu0 0
        %3003 = vmatpush1.bf16.xpose.msra.mxu0 0
        %3004 = vmatprep.subr.bf16.mxu0 0
        %3005 = vmatpush1.bf16.xpose.msra.mxu0 0
        %3006 = vmatprep.subr.bf16.mxu0 0
        %3007 = vmatpush1.bf16.xpose.msra.mxu0 0
        %3008 = vmatprep.subr.bf16.mxu0 0
        %3009 = vmatpush1.bf16.xpose.msra.mxu0 0
        %3010 = vmatprep.subr.bf16.mxu0 0
        %3011 = vmatpush1.bf16.xpose.msra.mxu0 0
        %3012 = vmatprep.subr.bf16.mxu0 0
        %3013 = vmatpush1.bf16.xpose.msra.mxu0 0
        %3014 = vmatprep.subr.bf16.mxu0 0
        %3015 = vmatpush1.bf16.xpose.msra.mxu0 0
        %3016 = vmatprep.subr.bf16.mxu0 0
        %3017 = vmatpush1.bf16.xpose.msra.mxu0 0
        %3018 = vmatprep.subr.bf16.mxu0 0
        %3019 = vmatpush1.bf16.xpose.msra.mxu0 0
        %3020 = vmatprep.subr.bf16.mxu0 0
        %3021 = vmatpush1.bf16.xpose.msra.mxu0 0
        %3022 = vmatprep.subr.bf16.mxu0 0
        %3023 = vmatpush1.bf16.xpose.msra.mxu0 0
        %3024 = vmatprep.subr.bf16.mxu0 0
        %3025 = vmatpush1.bf16.xpose.msra.mxu0 0
        %3026 = vmatprep.subr.bf16.mxu0 0
        %3027 = vmatpush1.bf16.xpose.msra.mxu0 0
        %3028 = vmatprep.subr.bf16.mxu0 0
        %3029 = vmatpush1.bf16.xpose.msra.mxu0 0
        %3030 = vmatprep.subr.bf16.mxu0 0
        %3031 = vmatpush1.bf16.xpose.msra.mxu0 0
        %3032 = vmatprep.mubr.bf16.mxu0 0
        %3033 = vmatmul.mubr.bf16.gmra.mrb[0].mxu0 %v2995
        %v3034 = vpop.f32.mrb[0].mxu0
        %v3035 = vadd.f32 0.0, %v3034
        %v3036 = vpop.f32.mrb[0].mxu0
        %v3037 = vpop.f32.mrb[0].mxu0
        %v3038 = vpop.f32.mrb[0].mxu0
        %3039 = vdwg.mxu0
        %v3040 = vmul.f32 %v3035, 0.35355338
        %v3041 = vsel %vm1184, %v3040, -inf
        %3042 = vmax.xlane.f32.xlu0 %v3041
        %v3043 = vpop.xlane.xlu0 %3042
        %v3044 = vsub.f32 %v3040, %v3043
        %v3045 = vmul.f32 %v3044, 1.442695
        %v3046 = vpow.pop %v3045
        %v3047 = vsel %vm1184, %v3046, 0.0
        %3048 = vadd.xlane.f32.xlu0 %v3047
        %v3049 = vpop.xlane.xlu0 %3048
        %v3050 = vrcp.pop %v3049
        %v3051 = vmul.f32 %v3046, %v3050
        %v3052 = vpack.c.bf16 %v3051, %v3051
        %3054 = vrot.lane.b32.xlu0 %v2942, 120
        %v3055 = vpop.permute.xlu0 %3054
        %v3057 = vsel %vm1184, %v3052, 0
        %v3060 = vsel %vm1249, %v3055, 0
        %3062 = vmatprep.subr.bf16.mxu0 0
        %3063 = vmatpush1.bf16.msra.mxu0 %v3060
        %3064 = vmatprep.subr.bf16.mxu0 0
        %3065 = vmatpush1.bf16.msra.mxu0 0
        %3066 = vmatprep.subr.bf16.mxu0 0
        %3067 = vmatpush1.bf16.msra.mxu0 0
        %3068 = vmatprep.subr.bf16.mxu0 0
        %3069 = vmatpush1.bf16.msra.mxu0 0
        %3070 = vmatprep.subr.bf16.mxu0 0
        %3071 = vmatpush1.bf16.msra.mxu0 0
        %3072 = vmatprep.subr.bf16.mxu0 0
        %3073 = vmatpush1.bf16.msra.mxu0 0
        %3074 = vmatprep.subr.bf16.mxu0 0
        %3075 = vmatpush1.bf16.msra.mxu0 0
        %3076 = vmatprep.subr.bf16.mxu0 0
        %3077 = vmatpush1.bf16.msra.mxu0 0
        %3078 = vmatprep.subr.bf16.mxu0 0
        %3079 = vmatpush1.bf16.msra.mxu0 0
        %3080 = vmatprep.subr.bf16.mxu0 0
        %3081 = vmatpush1.bf16.msra.mxu0 0
        %3082 = vmatprep.subr.bf16.mxu0 0
        %3083 = vmatpush1.bf16.msra.mxu0 0
        %3084 = vmatprep.subr.bf16.mxu0 0
        %3085 = vmatpush1.bf16.msra.mxu0 0
        %3086 = vmatprep.subr.bf16.mxu0 0
        %3087 = vmatpush1.bf16.msra.mxu0 0
        %3088 = vmatprep.subr.bf16.mxu0 0
        %3089 = vmatpush1.bf16.msra.mxu0 0
        %3090 = vmatprep.subr.bf16.mxu0 0
        %3091 = vmatpush1.bf16.msra.mxu0 0
        %3092 = vmatprep.subr.bf16.mxu0 0
        %3093 = vmatpush1.bf16.msra.mxu0 0
        %3094 = vmatprep.mubr.bf16.mxu0 0
        %3095 = vmatmul.mubr.bf16.gmra.mrb[0].mxu0 %v3057
        %v3096 = vpop.f32.mrb[0].mxu0
        %v3097 = vadd.f32 0.0, %v3096
        %v3098 = vpop.f32.mrb[0].mxu0
        %v3099 = vpop.f32.mrb[0].mxu0
        %v3100 = vpop.f32.mrb[0].mxu0
        %3101 = vdwg.mxu0
        %v3102 = vpack.c.bf16 %v3097, %v3097
        %v3104 = vsel %vm1184, %v3102, 0
        %v3107 = vsel %vm1249, %v2876, 0
        %3109 = vmatprep.subr.bf16.mxu0 0
        %3110 = vmatpush1.bf16.msra.mxu0 %v3107
        %3111 = vmatprep.subr.bf16.mxu0 0
        %3112 = vmatpush1.bf16.msra.mxu0 0
        %3113 = vmatprep.subr.bf16.mxu0 0
        %3114 = vmatpush1.bf16.msra.mxu0 0
        %3115 = vmatprep.subr.bf16.mxu0 0
        %3116 = vmatpush1.bf16.msra.mxu0 0
        %3117 = vmatprep.subr.bf16.mxu0 0
        %3118 = vmatpush1.bf16.msra.mxu0 0
        %3119 = vmatprep.subr.bf16.mxu0 0
        %3120 = vmatpush1.bf16.msra.mxu0 0
        %3121 = vmatprep.subr.bf16.mxu0 0
        %3122 = vmatpush1.bf16.msra.mxu0 0
        %3123 = vmatprep.subr.bf16.mxu0 0
        %3124 = vmatpush1.bf16.msra.mxu0 0
        %3125 = vmatprep.subr.bf16.mxu0 0
        %3126 = vmatpush1.bf16.msra.mxu0 0
        %3127 = vmatprep.subr.bf16.mxu0 0
        %3128 = vmatpush1.bf16.msra.mxu0 0
        %3129 = vmatprep.subr.bf16.mxu0 0
        %3130 = vmatpush1.bf16.msra.mxu0 0
        %3131 = vmatprep.subr.bf16.mxu0 0
        %3132 = vmatpush1.bf16.msra.mxu0 0
        %3133 = vmatprep.subr.bf16.mxu0 0
        %3134 = vmatpush1.bf16.msra.mxu0 0
        %3135 = vmatprep.subr.bf16.mxu0 0
        %3136 = vmatpush1.bf16.msra.mxu0 0
        %3137 = vmatprep.subr.bf16.mxu0 0
        %3138 = vmatpush1.bf16.msra.mxu0 0
        %3139 = vmatprep.subr.bf16.mxu0 0
        %3140 = vmatpush1.bf16.msra.mxu0 0
        %3141 = vmatprep.mubr.bf16.mxu0 0
        %3142 = vmatmul.mubr.bf16.gmra.mrb[0].mxu0 %v3104
        %v3143 = vpop.f32.mrb[0].mxu0
        %v3144 = vadd.f32 0.0, %v3143
        %v3145 = vpop.f32.mrb[0].mxu0
        %v3146 = vpop.f32.mrb[0].mxu0
        %v3147 = vpop.f32.mrb[0].mxu0
        %3148 = vdwg.mxu0
        %v3150 = vsel %vm1184, %v2989, 0
        %v3153 = vsel %vm1249, %v2875, 0
        %3155 = vmatprep.subr.bf16.mxu0 0
        %3156 = vmatpush1.bf16.msra.mxu0 %v3153
        %3157 = vmatprep.subr.bf16.mxu0 0
        %3158 = vmatpush1.bf16.msra.mxu0 0
        %3159 = vmatprep.subr.bf16.mxu0 0
        %3160 = vmatpush1.bf16.msra.mxu0 0
        %3161 = vmatprep.subr.bf16.mxu0 0
        %3162 = vmatpush1.bf16.msra.mxu0 0
        %3163 = vmatprep.subr.bf16.mxu0 0
        %3164 = vmatpush1.bf16.msra.mxu0 0
        %3165 = vmatprep.subr.bf16.mxu0 0
        %3166 = vmatpush1.bf16.msra.mxu0 0
        %3167 = vmatprep.subr.bf16.mxu0 0
        %3168 = vmatpush1.bf16.msra.mxu0 0
        %3169 = vmatprep.subr.bf16.mxu0 0
        %3170 = vmatpush1.bf16.msra.mxu0 0
        %3171 = vmatprep.subr.bf16.mxu0 0
        %3172 = vmatpush1.bf16.msra.mxu0 0
        %3173 = vmatprep.subr.bf16.mxu0 0
        %3174 = vmatpush1.bf16.msra.mxu0 0
        %3175 = vmatprep.subr.bf16.mxu0 0
        %3176 = vmatpush1.bf16.msra.mxu0 0
        %3177 = vmatprep.subr.bf16.mxu0 0
        %3178 = vmatpush1.bf16.msra.mxu0 0
        %3179 = vmatprep.subr.bf16.mxu0 0
        %3180 = vmatpush1.bf16.msra.mxu0 0
        %3181 = vmatprep.subr.bf16.mxu0 0
        %3182 = vmatpush1.bf16.msra.mxu0 0
        %3183 = vmatprep.subr.bf16.mxu0 0
        %3184 = vmatpush1.bf16.msra.mxu0 0
        %3185 = vmatprep.subr.bf16.mxu0 0
        %3186 = vmatpush1.bf16.msra.mxu0 0
        %3187 = vmatprep.mubr.bf16.mxu0 0
        %3188 = vmatmul.mubr.bf16.gmra.mrb[0].mxu0 %v3150
        %v3189 = vpop.f32.mrb[0].mxu0
        %v3190 = vadd.f32 %v3144, %v3189
        %v3191 = vpop.f32.mrb[0].mxu0
        %v3192 = vpop.f32.mrb[0].mxu0
        %v3193 = vpop.f32.mrb[0].mxu0
        %3194 = vdwg.mxu0
        %3195 = vrot.lane.b32.xlu0 %v2879, 112
        %v3196 = vpop.permute.xlu0 %3195
        %3197 = vrot.lane.b32.xlu0 %v2879, 80
        %v3198 = vpop.permute.xlu0 %3197
        %v3200 = vsel %vm1184, %v3196, 0
        %v3203 = vsel %vm1184, %v3198, 0
        %3205 = vmatprep.subr.bf16.mxu0 0
        %3206 = vmatpush1.bf16.xpose.msra.mxu0 %v3203
        %3207 = vmatprep.subr.bf16.mxu0 0
        %3208 = vmatpush1.bf16.xpose.msra.mxu0 0
        %3209 = vmatprep.subr.bf16.mxu0 0
        %3210 = vmatpush1.bf16.xpose.msra.mxu0 0
        %3211 = vmatprep.subr.bf16.mxu0 0
        %3212 = vmatpush1.bf16.xpose.msra.mxu0 0
        %3213 = vmatprep.subr.bf16.mxu0 0
        %3214 = vmatpush1.bf16.xpose.msra.mxu0 0
        %3215 = vmatprep.subr.bf16.mxu0 0
        %3216 = vmatpush1.bf16.xpose.msra.mxu0 0
        %3217 = vmatprep.subr.bf16.mxu0 0
        %3218 = vmatpush1.bf16.xpose.msra.mxu0 0
        %3219 = vmatprep.subr.bf16.mxu0 0
        %3220 = vmatpush1.bf16.xpose.msra.mxu0 0
        %3221 = vmatprep.subr.bf16.mxu0 0
        %3222 = vmatpush1.bf16.xpose.msra.mxu0 0
        %3223 = vmatprep.subr.bf16.mxu0 0
        %3224 = vmatpush1.bf16.xpose.msra.mxu0 0
        %3225 = vmatprep.subr.bf16.mxu0 0
        %3226 = vmatpush1.bf16.xpose.msra.mxu0 0
        %3227 = vmatprep.subr.bf16.mxu0 0
        %3228 = vmatpush1.bf16.xpose.msra.mxu0 0
        %3229 = vmatprep.subr.bf16.mxu0 0
        %3230 = vmatpush1.bf16.xpose.msra.mxu0 0
        %3231 = vmatprep.subr.bf16.mxu0 0
        %3232 = vmatpush1.bf16.xpose.msra.mxu0 0
        %3233 = vmatprep.subr.bf16.mxu0 0
        %3234 = vmatpush1.bf16.xpose.msra.mxu0 0
        %3235 = vmatprep.subr.bf16.mxu0 0
        %3236 = vmatpush1.bf16.xpose.msra.mxu0 0
        %3237 = vmatprep.mubr.bf16.mxu0 0
        %3238 = vmatmul.mubr.bf16.gmra.mrb[0].mxu0 %v3200
        %v3239 = vpop.f32.mrb[0].mxu0
        %v3240 = vadd.f32 0.0, %v3239
        %v3241 = vpop.f32.mrb[0].mxu0
        %v3242 = vpop.f32.mrb[0].mxu0
        %v3243 = vpop.f32.mrb[0].mxu0
        %3244 = vdwg.mxu0
        %v3245 = vmul.f32 %v3240, 0.35355338
        %v3246 = vsel %vm1184, %v3245, -inf
        %3247 = vmax.xlane.f32.xlu0 %v3246
        %v3248 = vpop.xlane.xlu0 %3247
        %v3249 = vsub.f32 %v3245, %v3248
        %v3250 = vmul.f32 %v3249, 1.442695
        %v3251 = vpow.pop %v3250
        %v3252 = vsel %vm1184, %v3251, 0.0
        %3253 = vadd.xlane.f32.xlu0 %v3252
        %v3254 = vpop.xlane.xlu0 %3253
        %v3255 = vrcp.pop %v3254
        %v3256 = vmul.f32 %v3251, %v3255
        %v3257 = vpack.c.bf16 %v3256, %v3256
        %3258 = vrot.lane.b32.xlu0 %v2942, 112
        %v3259 = vpop.permute.xlu0 %3258
        %v3261 = vsel %vm1184, %v3257, 0
        %v3264 = vsel %vm1249, %v3259, 0
        %3266 = vmatprep.subr.bf16.mxu0 0
        %3267 = vmatpush1.bf16.msra.mxu0 %v3264
        %3268 = vmatprep.subr.bf16.mxu0 0
        %3269 = vmatpush1.bf16.msra.mxu0 0
        %3270 = vmatprep.subr.bf16.mxu0 0
        %3271 = vmatpush1.bf16.msra.mxu0 0
        %3272 = vmatprep.subr.bf16.mxu0 0
        %3273 = vmatpush1.bf16.msra.mxu0 0
        %3274 = vmatprep.subr.bf16.mxu0 0
        %3275 = vmatpush1.bf16.msra.mxu0 0
        %3276 = vmatprep.subr.bf16.mxu0 0
        %3277 = vmatpush1.bf16.msra.mxu0 0
        %3278 = vmatprep.subr.bf16.mxu0 0
        %3279 = vmatpush1.bf16.msra.mxu0 0
        %3280 = vmatprep.subr.bf16.mxu0 0
        %3281 = vmatpush1.bf16.msra.mxu0 0
        %3282 = vmatprep.subr.bf16.mxu0 0
        %3283 = vmatpush1.bf16.msra.mxu0 0
        %3284 = vmatprep.subr.bf16.mxu0 0
        %3285 = vmatpush1.bf16.msra.mxu0 0
        %3286 = vmatprep.subr.bf16.mxu0 0
        %3287 = vmatpush1.bf16.msra.mxu0 0
        %3288 = vmatprep.subr.bf16.mxu0 0
        %3289 = vmatpush1.bf16.msra.mxu0 0
        %3290 = vmatprep.subr.bf16.mxu0 0
        %3291 = vmatpush1.bf16.msra.mxu0 0
        %3292 = vmatprep.subr.bf16.mxu0 0
        %3293 = vmatpush1.bf16.msra.mxu0 0
        %3294 = vmatprep.subr.bf16.mxu0 0
        %3295 = vmatpush1.bf16.msra.mxu0 0
        %3296 = vmatprep.subr.bf16.mxu0 0
        %3297 = vmatpush1.bf16.msra.mxu0 0
        %3298 = vmatprep.mubr.bf16.mxu0 0
        %3299 = vmatmul.mubr.bf16.gmra.mrb[0].mxu0 %v3261
        %v3300 = vpop.f32.mrb[0].mxu0
        %v3301 = vadd.f32 0.0, %v3300
        %v3302 = vpop.f32.mrb[0].mxu0
        %v3303 = vpop.f32.mrb[0].mxu0
        %v3304 = vpop.f32.mrb[0].mxu0
        %3305 = vdwg.mxu0
        %v3306 = vpack.c.bf16 %v3301, %v3301
        %v3308 = vsel %vm1184, %v3306, 0
        %v3311 = vsel %vm1249, %v2877, 0
        %3313 = vmatprep.subr.bf16.mxu0 0
        %3314 = vmatpush1.bf16.msra.mxu0 %v3311
        %3315 = vmatprep.subr.bf16.mxu0 0
        %3316 = vmatpush1.bf16.msra.mxu0 0
        %3317 = vmatprep.subr.bf16.mxu0 0
        %3318 = vmatpush1.bf16.msra.mxu0 0
        %3319 = vmatprep.subr.bf16.mxu0 0
        %3320 = vmatpush1.bf16.msra.mxu0 0
        %3321 = vmatprep.subr.bf16.mxu0 0
        %3322 = vmatpush1.bf16.msra.mxu0 0
        %3323 = vmatprep.subr.bf16.mxu0 0
        %3324 = vmatpush1.bf16.msra.mxu0 0
        %3325 = vmatprep.subr.bf16.mxu0 0
        %3326 = vmatpush1.bf16.msra.mxu0 0
        %3327 = vmatprep.subr.bf16.mxu0 0
        %3328 = vmatpush1.bf16.msra.mxu0 0
        %3329 = vmatprep.subr.bf16.mxu0 0
        %3330 = vmatpush1.bf16.msra.mxu0 0
        %3331 = vmatprep.subr.bf16.mxu0 0
        %3332 = vmatpush1.bf16.msra.mxu0 0
        %3333 = vmatprep.subr.bf16.mxu0 0
        %3334 = vmatpush1.bf16.msra.mxu0 0
        %3335 = vmatprep.subr.bf16.mxu0 0
        %3336 = vmatpush1.bf16.msra.mxu0 0
        %3337 = vmatprep.subr.bf16.mxu0 0
        %3338 = vmatpush1.bf16.msra.mxu0 0
        %3339 = vmatprep.subr.bf16.mxu0 0
        %3340 = vmatpush1.bf16.msra.mxu0 0
        %3341 = vmatprep.subr.bf16.mxu0 0
        %3342 = vmatpush1.bf16.msra.mxu0 0
        %3343 = vmatprep.subr.bf16.mxu0 0
        %3344 = vmatpush1.bf16.msra.mxu0 0
        %3345 = vmatprep.mubr.bf16.mxu0 0
        %3346 = vmatmul.mubr.bf16.gmra.mrb[0].mxu0 %v3308
        %v3347 = vpop.f32.mrb[0].mxu0
        %v3348 = vadd.f32 0.0, %v3347
        %v3349 = vpop.f32.mrb[0].mxu0
        %v3350 = vpop.f32.mrb[0].mxu0
        %v3351 = vpop.f32.mrb[0].mxu0
        %3352 = vdwg.mxu0
        %v3353 = vadd.f32 %v3190, %v3348
        %3354 = vrot.lane.b32.xlu0 %v2879, 104
        %v3355 = vpop.permute.xlu0 %3354
        %3356 = vrot.lane.b32.xlu0 %v2879, 72
        %v3357 = vpop.permute.xlu0 %3356
        %v3359 = vsel %vm1184, %v3355, 0
        %v3362 = vsel %vm1184, %v3357, 0
        %3364 = vmatprep.subr.bf16.mxu0 0
        %3365 = vmatpush1.bf16.xpose.msra.mxu0 %v3362
        %3366 = vmatprep.subr.bf16.mxu0 0
        %3367 = vmatpush1.bf16.xpose.msra.mxu0 0
        %3368 = vmatprep.subr.bf16.mxu0 0
        %3369 = vmatpush1.bf16.xpose.msra.mxu0 0
        %3370 = vmatprep.subr.bf16.mxu0 0
        %3371 = vmatpush1.bf16.xpose.msra.mxu0 0
        %3372 = vmatprep.subr.bf16.mxu0 0
        %3373 = vmatpush1.bf16.xpose.msra.mxu0 0
        %3374 = vmatprep.subr.bf16.mxu0 0
        %3375 = vmatpush1.bf16.xpose.msra.mxu0 0
        %3376 = vmatprep.subr.bf16.mxu0 0
        %3377 = vmatpush1.bf16.xpose.msra.mxu0 0
        %3378 = vmatprep.subr.bf16.mxu0 0
        %3379 = vmatpush1.bf16.xpose.msra.mxu0 0
        %3380 = vmatprep.subr.bf16.mxu0 0
        %3381 = vmatpush1.bf16.xpose.msra.mxu0 0
        %3382 = vmatprep.subr.bf16.mxu0 0
        %3383 = vmatpush1.bf16.xpose.msra.mxu0 0
        %3384 = vmatprep.subr.bf16.mxu0 0
        %3385 = vmatpush1.bf16.xpose.msra.mxu0 0
        %3386 = vmatprep.subr.bf16.mxu0 0
        %3387 = vmatpush1.bf16.xpose.msra.mxu0 0
        %3388 = vmatprep.subr.bf16.mxu0 0
        %3389 = vmatpush1.bf16.xpose.msra.mxu0 0
        %3390 = vmatprep.subr.bf16.mxu0 0
        %3391 = vmatpush1.bf16.xpose.msra.mxu0 0
        %3392 = vmatprep.subr.bf16.mxu0 0
        %3393 = vmatpush1.bf16.xpose.msra.mxu0 0
        %3394 = vmatprep.subr.bf16.mxu0 0
        %3395 = vmatpush1.bf16.xpose.msra.mxu0 0
        %3396 = vmatprep.mubr.bf16.mxu0 0
        %3397 = vmatmul.mubr.bf16.gmra.mrb[0].mxu0 %v3359
        %v3398 = vpop.f32.mrb[0].mxu0
        %v3399 = vadd.f32 0.0, %v3398
        %v3400 = vpop.f32.mrb[0].mxu0
        %v3401 = vpop.f32.mrb[0].mxu0
        %v3402 = vpop.f32.mrb[0].mxu0
        %3403 = vdwg.mxu0
        %v3404 = vmul.f32 %v3399, 0.35355338
        %v3405 = vsel %vm1184, %v3404, -inf
        %3406 = vmax.xlane.f32.xlu0 %v3405
        %v3407 = vpop.xlane.xlu0 %3406
        %v3408 = vsub.f32 %v3404, %v3407
        %v3409 = vmul.f32 %v3408, 1.442695
        %v3410 = vpow.pop %v3409
        %v3411 = vsel %vm1184, %v3410, 0.0
        %3412 = vadd.xlane.f32.xlu0 %v3411
        %v3413 = vpop.xlane.xlu0 %3412
        %v3414 = vrcp.pop %v3413
        %v3415 = vmul.f32 %v3410, %v3414
        %v3416 = vpack.c.bf16 %v3415, %v3415
        %3417 = vrot.lane.b32.xlu0 %v2942, 104
        %v3418 = vpop.permute.xlu0 %3417
        %v3420 = vsel %vm1184, %v3416, 0
        %v3423 = vsel %vm1249, %v3418, 0
        %3425 = vmatprep.subr.bf16.mxu0 0
        %3426 = vmatpush1.bf16.msra.mxu0 %v3423
        %3427 = vmatprep.subr.bf16.mxu0 0
        %3428 = vmatpush1.bf16.msra.mxu0 0
        %3429 = vmatprep.subr.bf16.mxu0 0
        %3430 = vmatpush1.bf16.msra.mxu0 0
        %3431 = vmatprep.subr.bf16.mxu0 0
        %3432 = vmatpush1.bf16.msra.mxu0 0
        %3433 = vmatprep.subr.bf16.mxu0 0
        %3434 = vmatpush1.bf16.msra.mxu0 0
        %3435 = vmatprep.subr.bf16.mxu0 0
        %3436 = vmatpush1.bf16.msra.mxu0 0
        %3437 = vmatprep.subr.bf16.mxu0 0
        %3438 = vmatpush1.bf16.msra.mxu0 0
        %3439 = vmatprep.subr.bf16.mxu0 0
        %3440 = vmatpush1.bf16.msra.mxu0 0
        %3441 = vmatprep.subr.bf16.mxu0 0
        %3442 = vmatpush1.bf16.msra.mxu0 0
        %3443 = vmatprep.subr.bf16.mxu0 0
        %3444 = vmatpush1.bf16.msra.mxu0 0
        %3445 = vmatprep.subr.bf16.mxu0 0
        %3446 = vmatpush1.bf16.msra.mxu0 0
        %3447 = vmatprep.subr.bf16.mxu0 0
        %3448 = vmatpush1.bf16.msra.mxu0 0
        %3449 = vmatprep.subr.bf16.mxu0 0
        %3450 = vmatpush1.bf16.msra.mxu0 0
        %3451 = vmatprep.subr.bf16.mxu0 0
        %3452 = vmatpush1.bf16.msra.mxu0 0
        %3453 = vmatprep.subr.bf16.mxu0 0
        %3454 = vmatpush1.bf16.msra.mxu0 0
        %3455 = vmatprep.subr.bf16.mxu0 0
        %3456 = vmatpush1.bf16.msra.mxu0 0
        %3457 = vmatprep.mubr.bf16.mxu0 0
        %3458 = vmatmul.mubr.bf16.gmra.mrb[0].mxu0 %v3420
        %v3459 = vpop.f32.mrb[0].mxu0
        %v3460 = vadd.f32 0.0, %v3459
        %v3461 = vpop.f32.mrb[0].mxu0
        %v3462 = vpop.f32.mrb[0].mxu0
        %v3463 = vpop.f32.mrb[0].mxu0
        %3464 = vdwg.mxu0
        %v3465 = vpack.c.bf16 %v3460, %v3460
        %v3467 = vsel %vm1184, %v3465, 0
        %v3470 = vsel %vm1249, %v2878, 0
        %3472 = vmatprep.subr.bf16.mxu0 0
        %3473 = vmatpush1.bf16.msra.mxu0 %v3470
        %3474 = vmatprep.subr.bf16.mxu0 0
        %3475 = vmatpush1.bf16.msra.mxu0 0
        %3476 = vmatprep.subr.bf16.mxu0 0
        %3477 = vmatpush1.bf16.msra.mxu0 0
        %3478 = vmatprep.subr.bf16.mxu0 0
        %3479 = vmatpush1.bf16.msra.mxu0 0
        %3480 = vmatprep.subr.bf16.mxu0 0
        %3481 = vmatpush1.bf16.msra.mxu0 0
        %3482 = vmatprep.subr.bf16.mxu0 0
        %3483 = vmatpush1.bf16.msra.mxu0 0
        %3484 = vmatprep.subr.bf16.mxu0 0
        %3485 = vmatpush1.bf16.msra.mxu0 0
        %3486 = vmatprep.subr.bf16.mxu0 0
        %3487 = vmatpush1.bf16.msra.mxu0 0
        %3488 = vmatprep.subr.bf16.mxu0 0
        %3489 = vmatpush1.bf16.msra.mxu0 0
        %3490 = vmatprep.subr.bf16.mxu0 0
        %3491 = vmatpush1.bf16.msra.mxu0 0
        %3492 = vmatprep.subr.bf16.mxu0 0
        %3493 = vmatpush1.bf16.msra.mxu0 0
        %3494 = vmatprep.subr.bf16.mxu0 0
        %3495 = vmatpush1.bf16.msra.mxu0 0
        %3496 = vmatprep.subr.bf16.mxu0 0
        %3497 = vmatpush1.bf16.msra.mxu0 0
        %3498 = vmatprep.subr.bf16.mxu0 0
        %3499 = vmatpush1.bf16.msra.mxu0 0
        %3500 = vmatprep.subr.bf16.mxu0 0
        %3501 = vmatpush1.bf16.msra.mxu0 0
        %3502 = vmatprep.subr.bf16.mxu0 0
        %3503 = vmatpush1.bf16.msra.mxu0 0
        %3504 = vmatprep.mubr.bf16.mxu0 0
        %3505 = vmatmul.mubr.bf16.gmra.mrb[0].mxu0 %v3467
        %v3506 = vpop.f32.mrb[0].mxu0
        %v3507 = vadd.f32 0.0, %v3506
        %v3508 = vpop.f32.mrb[0].mxu0
        %v3509 = vpop.f32.mrb[0].mxu0
        %v3510 = vpop.f32.mrb[0].mxu0
        %3511 = vdwg.mxu0
        %v3512 = vadd.f32 %v3353, %v3507
        %v3513 = vpack.c.bf16 %v2821, %v2821
        %3515 = vrot.lane.b32.xlu0 %v3513, 96
        %v3516 = vpop.permute.xlu0 %3515
        %v3518 = vsel %vm1184, %v3513, 0
        %v3521 = vsel %vm1184, %v3516, 0
        %3523 = vmatprep.subr.bf16.mxu0 0
        %3524 = vmatpush1.bf16.xpose.msra.mxu0 %v3521
        %3525 = vmatprep.subr.bf16.mxu0 0
        %3526 = vmatpush1.bf16.xpose.msra.mxu0 0
        %3527 = vmatprep.subr.bf16.mxu0 0
        %3528 = vmatpush1.bf16.xpose.msra.mxu0 0
        %3529 = vmatprep.subr.bf16.mxu0 0
        %3530 = vmatpush1.bf16.xpose.msra.mxu0 0
        %3531 = vmatprep.subr.bf16.mxu0 0
        %3532 = vmatpush1.bf16.xpose.msra.mxu0 0
        %3533 = vmatprep.subr.bf16.mxu0 0
        %3534 = vmatpush1.bf16.xpose.msra.mxu0 0
        %3535 = vmatprep.subr.bf16.mxu0 0
        %3536 = vmatpush1.bf16.xpose.msra.mxu0 0
        %3537 = vmatprep.subr.bf16.mxu0 0
        %3538 = vmatpush1.bf16.xpose.msra.mxu0 0
        %3539 = vmatprep.subr.bf16.mxu0 0
        %3540 = vmatpush1.bf16.xpose.msra.mxu0 0
        %3541 = vmatprep.subr.bf16.mxu0 0
        %3542 = vmatpush1.bf16.xpose.msra.mxu0 0
        %3543 = vmatprep.subr.bf16.mxu0 0
        %3544 = vmatpush1.bf16.xpose.msra.mxu0 0
        %3545 = vmatprep.subr.bf16.mxu0 0
        %3546 = vmatpush1.bf16.xpose.msra.mxu0 0
        %3547 = vmatprep.subr.bf16.mxu0 0
        %3548 = vmatpush1.bf16.xpose.msra.mxu0 0
        %3549 = vmatprep.subr.bf16.mxu0 0
        %3550 = vmatpush1.bf16.xpose.msra.mxu0 0
        %3551 = vmatprep.subr.bf16.mxu0 0
        %3552 = vmatpush1.bf16.xpose.msra.mxu0 0
        %3553 = vmatprep.subr.bf16.mxu0 0
        %3554 = vmatpush1.bf16.xpose.msra.mxu0 0
        %3555 = vmatprep.mubr.bf16.mxu0 0
        %3556 = vmatmul.mubr.bf16.gmra.mrb[0].mxu0 %v3518
        %v3557 = vpop.f32.mrb[0].mxu0
        %v3558 = vadd.f32 0.0, %v3557
        %v3559 = vpop.f32.mrb[0].mxu0
        %v3560 = vpop.f32.mrb[0].mxu0
        %v3561 = vpop.f32.mrb[0].mxu0
        %3562 = vdwg.mxu0
        %v3563 = vmul.f32 %v3558, 0.35355338
        %v3564 = vsel %vm1184, %v3563, -inf
        %3565 = vmax.xlane.f32.xlu0 %v3564
        %v3566 = vpop.xlane.xlu0 %3565
        %v3567 = vsub.f32 %v3563, %v3566
        %v3568 = vmul.f32 %v3567, 1.442695
        %v3569 = vpow.pop %v3568
        %v3570 = vsel %vm1184, %v3569, 0.0
        %3571 = vadd.xlane.f32.xlu0 %v3570
        %v3572 = vpop.xlane.xlu0 %3571
        %v3573 = vrcp.pop %v3572
        %v3574 = vmul.f32 %v3569, %v3573
        %v3575 = vpack.c.bf16 %v3574, %v3574
        %v3576 = vpack.c.bf16 %v2871, %v2871
        %v3578 = vsel %vm1184, %v3575, 0
        %v3581 = vsel %vm1249, %v3576, 0
        %3583 = vmatprep.subr.bf16.mxu0 0
        %3584 = vmatpush1.bf16.msra.mxu0 %v3581
        %3585 = vmatprep.subr.bf16.mxu0 0
        %3586 = vmatpush1.bf16.msra.mxu0 0
        %3587 = vmatprep.subr.bf16.mxu0 0
        %3588 = vmatpush1.bf16.msra.mxu0 0
        %3589 = vmatprep.subr.bf16.mxu0 0
        %3590 = vmatpush1.bf16.msra.mxu0 0
        %3591 = vmatprep.subr.bf16.mxu0 0
        %3592 = vmatpush1.bf16.msra.mxu0 0
        %3593 = vmatprep.subr.bf16.mxu0 0
        %3594 = vmatpush1.bf16.msra.mxu0 0
        %3595 = vmatprep.subr.bf16.mxu0 0
        %3596 = vmatpush1.bf16.msra.mxu0 0
        %3597 = vmatprep.subr.bf16.mxu0 0
        %3598 = vmatpush1.bf16.msra.mxu0 0
        %3599 = vmatprep.subr.bf16.mxu0 0
        %3600 = vmatpush1.bf16.msra.mxu0 0
        %3601 = vmatprep.subr.bf16.mxu0 0
        %3602 = vmatpush1.bf16.msra.mxu0 0
        %3603 = vmatprep.subr.bf16.mxu0 0
        %3604 = vmatpush1.bf16.msra.mxu0 0
        %3605 = vmatprep.subr.bf16.mxu0 0
        %3606 = vmatpush1.bf16.msra.mxu0 0
        %3607 = vmatprep.subr.bf16.mxu0 0
        %3608 = vmatpush1.bf16.msra.mxu0 0
        %3609 = vmatprep.subr.bf16.mxu0 0
        %3610 = vmatpush1.bf16.msra.mxu0 0
        %3611 = vmatprep.subr.bf16.mxu0 0
        %3612 = vmatpush1.bf16.msra.mxu0 0
        %3613 = vmatprep.subr.bf16.mxu0 0
        %3614 = vmatpush1.bf16.msra.mxu0 0
        %3615 = vmatprep.mubr.bf16.mxu0 0
        %3616 = vmatmul.mubr.bf16.gmra.mrb[0].mxu0 %v3578
        %v3617 = vpop.f32.mrb[0].mxu0
        %v3618 = vadd.f32 0.0, %v3617
        %v3619 = vpop.f32.mrb[0].mxu0
        %v3620 = vpop.f32.mrb[0].mxu0
        %v3621 = vpop.f32.mrb[0].mxu0
        %3622 = vdwg.mxu0
        %v3623 = vpack.c.bf16 %v3618, %v3618
        %3624 = vrot.lane.b32.xlu0 %v3513, 120
        %v3625 = vpop.permute.xlu0 %3624
        %3626 = vrot.lane.b32.xlu0 %v3513, 88
        %v3627 = vpop.permute.xlu0 %3626
        %v3629 = vsel %vm1184, %v3625, 0
        %v3632 = vsel %vm1184, %v3627, 0
        %3634 = vmatprep.subr.bf16.mxu0 0
        %3635 = vmatpush1.bf16.xpose.msra.mxu0 %v3632
        %3636 = vmatprep.subr.bf16.mxu0 0
        %3637 = vmatpush1.bf16.xpose.msra.mxu0 0
        %3638 = vmatprep.subr.bf16.mxu0 0
        %3639 = vmatpush1.bf16.xpose.msra.mxu0 0
        %3640 = vmatprep.subr.bf16.mxu0 0
        %3641 = vmatpush1.bf16.xpose.msra.mxu0 0
        %3642 = vmatprep.subr.bf16.mxu0 0
        %3643 = vmatpush1.bf16.xpose.msra.mxu0 0
        %3644 = vmatprep.subr.bf16.mxu0 0
        %3645 = vmatpush1.bf16.xpose.msra.mxu0 0
        %3646 = vmatprep.subr.bf16.mxu0 0
        %3647 = vmatpush1.bf16.xpose.msra.mxu0 0
        %3648 = vmatprep.subr.bf16.mxu0 0
        %3649 = vmatpush1.bf16.xpose.msra.mxu0 0
        %3650 = vmatprep.subr.bf16.mxu0 0
        %3651 = vmatpush1.bf16.xpose.msra.mxu0 0
        %3652 = vmatprep.subr.bf16.mxu0 0
        %3653 = vmatpush1.bf16.xpose.msra.mxu0 0
        %3654 = vmatprep.subr.bf16.mxu0 0
        %3655 = vmatpush1.bf16.xpose.msra.mxu0 0
        %3656 = vmatprep.subr.bf16.mxu0 0
        %3657 = vmatpush1.bf16.xpose.msra.mxu0 0
        %3658 = vmatprep.subr.bf16.mxu0 0
        %3659 = vmatpush1.bf16.xpose.msra.mxu0 0
        %3660 = vmatprep.subr.bf16.mxu0 0
        %3661 = vmatpush1.bf16.xpose.msra.mxu0 0
        %3662 = vmatprep.subr.bf16.mxu0 0
        %3663 = vmatpush1.bf16.xpose.msra.mxu0 0
        %3664 = vmatprep.subr.bf16.mxu0 0
        %3665 = vmatpush1.bf16.xpose.msra.mxu0 0
        %3666 = vmatprep.mubr.bf16.mxu0 0
        %3667 = vmatmul.mubr.bf16.gmra.mrb[0].mxu0 %v3629
        %v3668 = vpop.f32.mrb[0].mxu0
        %v3669 = vadd.f32 0.0, %v3668
        %v3670 = vpop.f32.mrb[0].mxu0
        %v3671 = vpop.f32.mrb[0].mxu0
        %v3672 = vpop.f32.mrb[0].mxu0
        %3673 = vdwg.mxu0
        %v3674 = vmul.f32 %v3669, 0.35355338
        %v3675 = vsel %vm1184, %v3674, -inf
        %3676 = vmax.xlane.f32.xlu0 %v3675
        %v3677 = vpop.xlane.xlu0 %3676
        %v3678 = vsub.f32 %v3674, %v3677
        %v3679 = vmul.f32 %v3678, 1.442695
        %v3680 = vpow.pop %v3679
        %v3681 = vsel %vm1184, %v3680, 0.0
        %3682 = vadd.xlane.f32.xlu0 %v3681
        %v3683 = vpop.xlane.xlu0 %3682
        %v3684 = vrcp.pop %v3683
        %v3685 = vmul.f32 %v3680, %v3684
        %v3686 = vpack.c.bf16 %v3685, %v3685
        %3688 = vrot.lane.b32.xlu0 %v3576, 120
        %v3689 = vpop.permute.xlu0 %3688
        %v3691 = vsel %vm1184, %v3686, 0
        %v3694 = vsel %vm1249, %v3689, 0
        %3696 = vmatprep.subr.bf16.mxu0 0
        %3697 = vmatpush1.bf16.msra.mxu0 %v3694
        %3698 = vmatprep.subr.bf16.mxu0 0
        %3699 = vmatpush1.bf16.msra.mxu0 0
        %3700 = vmatprep.subr.bf16.mxu0 0
        %3701 = vmatpush1.bf16.msra.mxu0 0
        %3702 = vmatprep.subr.bf16.mxu0 0
        %3703 = vmatpush1.bf16.msra.mxu0 0
        %3704 = vmatprep.subr.bf16.mxu0 0
        %3705 = vmatpush1.bf16.msra.mxu0 0
        %3706 = vmatprep.subr.bf16.mxu0 0
        %3707 = vmatpush1.bf16.msra.mxu0 0
        %3708 = vmatprep.subr.bf16.mxu0 0
        %3709 = vmatpush1.bf16.msra.mxu0 0
        %3710 = vmatprep.subr.bf16.mxu0 0
        %3711 = vmatpush1.bf16.msra.mxu0 0
        %3712 = vmatprep.subr.bf16.mxu0 0
        %3713 = vmatpush1.bf16.msra.mxu0 0
        %3714 = vmatprep.subr.bf16.mxu0 0
        %3715 = vmatpush1.bf16.msra.mxu0 0
        %3716 = vmatprep.subr.bf16.mxu0 0
        %3717 = vmatpush1.bf16.msra.mxu0 0
        %3718 = vmatprep.subr.bf16.mxu0 0
        %3719 = vmatpush1.bf16.msra.mxu0 0
        %3720 = vmatprep.subr.bf16.mxu0 0
        %3721 = vmatpush1.bf16.msra.mxu0 0
        %3722 = vmatprep.subr.bf16.mxu0 0
        %3723 = vmatpush1.bf16.msra.mxu0 0
        %3724 = vmatprep.subr.bf16.mxu0 0
        %3725 = vmatpush1.bf16.msra.mxu0 0
        %3726 = vmatprep.subr.bf16.mxu0 0
        %3727 = vmatpush1.bf16.msra.mxu0 0
        %3728 = vmatprep.mubr.bf16.mxu0 0
        %3729 = vmatmul.mubr.bf16.gmra.mrb[0].mxu0 %v3691
        %v3730 = vpop.f32.mrb[0].mxu0
        %v3731 = vadd.f32 0.0, %v3730
        %v3732 = vpop.f32.mrb[0].mxu0
        %v3733 = vpop.f32.mrb[0].mxu0
        %v3734 = vpop.f32.mrb[0].mxu0
        %3735 = vdwg.mxu0
        %v3736 = vpack.c.bf16 %v3731, %v3731
        %v3738 = vsel %vm1184, %v3736, 0
        %3740 = vmatprep.subr.bf16.mxu0 0
        %3741 = vmatpush1.bf16.msra.mxu0 %v3107
        %3742 = vmatprep.subr.bf16.mxu0 0
        %3743 = vmatpush1.bf16.msra.mxu0 0
        %3744 = vmatprep.subr.bf16.mxu0 0
        %3745 = vmatpush1.bf16.msra.mxu0 0
        %3746 = vmatprep.subr.bf16.mxu0 0
        %3747 = vmatpush1.bf16.msra.mxu0 0
        %3748 = vmatprep.subr.bf16.mxu0 0
        %3749 = vmatpush1.bf16.msra.mxu0 0
        %3750 = vmatprep.subr.bf16.mxu0 0
        %3751 = vmatpush1.bf16.msra.mxu0 0
        %3752 = vmatprep.subr.bf16.mxu0 0
        %3753 = vmatpush1.bf16.msra.mxu0 0
        %3754 = vmatprep.subr.bf16.mxu0 0
        %3755 = vmatpush1.bf16.msra.mxu0 0
        %3756 = vmatprep.subr.bf16.mxu0 0
        %3757 = vmatpush1.bf16.msra.mxu0 0
        %3758 = vmatprep.subr.bf16.mxu0 0
        %3759 = vmatpush1.bf16.msra.mxu0 0
        %3760 = vmatprep.subr.bf16.mxu0 0
        %3761 = vmatpush1.bf16.msra.mxu0 0
        %3762 = vmatprep.subr.bf16.mxu0 0
        %3763 = vmatpush1.bf16.msra.mxu0 0
        %3764 = vmatprep.subr.bf16.mxu0 0
        %3765 = vmatpush1.bf16.msra.mxu0 0
        %3766 = vmatprep.subr.bf16.mxu0 0
        %3767 = vmatpush1.bf16.msra.mxu0 0
        %3768 = vmatprep.subr.bf16.mxu0 0
        %3769 = vmatpush1.bf16.msra.mxu0 0
        %3770 = vmatprep.subr.bf16.mxu0 0
        %3771 = vmatpush1.bf16.msra.mxu0 0
        %3772 = vmatprep.mubr.bf16.mxu0 0
        %3773 = vmatmul.mubr.bf16.gmra.mrb[0].mxu0 %v3738
        %v3774 = vpop.f32.mrb[0].mxu0
        %v3775 = vadd.f32 0.0, %v3774
        %v3776 = vpop.f32.mrb[0].mxu0
        %v3777 = vpop.f32.mrb[0].mxu0
        %v3778 = vpop.f32.mrb[0].mxu0
        %3779 = vdwg.mxu0
        %v3781 = vsel %vm1184, %v3623, 0
        %3783 = vmatprep.subr.bf16.mxu0 0
        %3784 = vmatpush1.bf16.msra.mxu0 %v3153
        %3785 = vmatprep.subr.bf16.mxu0 0
        %3786 = vmatpush1.bf16.msra.mxu0 0
        %3787 = vmatprep.subr.bf16.mxu0 0
        %3788 = vmatpush1.bf16.msra.mxu0 0
        %3789 = vmatprep.subr.bf16.mxu0 0
        %3790 = vmatpush1.bf16.msra.mxu0 0
        %3791 = vmatprep.subr.bf16.mxu0 0
        %3792 = vmatpush1.bf16.msra.mxu0 0
        %3793 = vmatprep.subr.bf16.mxu0 0
        %3794 = vmatpush1.bf16.msra.mxu0 0
        %3795 = vmatprep.subr.bf16.mxu0 0
        %3796 = vmatpush1.bf16.msra.mxu0 0
        %3797 = vmatprep.subr.bf16.mxu0 0
        %3798 = vmatpush1.bf16.msra.mxu0 0
        %3799 = vmatprep.subr.bf16.mxu0 0
        %3800 = vmatpush1.bf16.msra.mxu0 0
        %3801 = vmatprep.subr.bf16.mxu0 0
        %3802 = vmatpush1.bf16.msra.mxu0 0
        %3803 = vmatprep.subr.bf16.mxu0 0
        %3804 = vmatpush1.bf16.msra.mxu0 0
        %3805 = vmatprep.subr.bf16.mxu0 0
        %3806 = vmatpush1.bf16.msra.mxu0 0
        %3807 = vmatprep.subr.bf16.mxu0 0
        %3808 = vmatpush1.bf16.msra.mxu0 0
        %3809 = vmatprep.subr.bf16.mxu0 0
        %3810 = vmatpush1.bf16.msra.mxu0 0
        %3811 = vmatprep.subr.bf16.mxu0 0
        %3812 = vmatpush1.bf16.msra.mxu0 0
        %3813 = vmatprep.subr.bf16.mxu0 0
        %3814 = vmatpush1.bf16.msra.mxu0 0
        %3815 = vmatprep.mubr.bf16.mxu0 0
        %3816 = vmatmul.mubr.bf16.gmra.mrb[0].mxu0 %v3781
        %v3817 = vpop.f32.mrb[0].mxu0
        %v3818 = vadd.f32 %v3775, %v3817
        %v3819 = vpop.f32.mrb[0].mxu0
        %v3820 = vpop.f32.mrb[0].mxu0
        %v3821 = vpop.f32.mrb[0].mxu0
        %3822 = vdwg.mxu0
        %3823 = vrot.lane.b32.xlu0 %v3513, 112
        %v3824 = vpop.permute.xlu0 %3823
        %3825 = vrot.lane.b32.xlu0 %v3513, 80
        %v3826 = vpop.permute.xlu0 %3825
        %v3828 = vsel %vm1184, %v3824, 0
        %v3831 = vsel %vm1184, %v3826, 0
        %3833 = vmatprep.subr.bf16.mxu0 0
        %3834 = vmatpush1.bf16.xpose.msra.mxu0 %v3831
        %3835 = vmatprep.subr.bf16.mxu0 0
        %3836 = vmatpush1.bf16.xpose.msra.mxu0 0
        %3837 = vmatprep.subr.bf16.mxu0 0
        %3838 = vmatpush1.bf16.xpose.msra.mxu0 0
        %3839 = vmatprep.subr.bf16.mxu0 0
        %3840 = vmatpush1.bf16.xpose.msra.mxu0 0
        %3841 = vmatprep.subr.bf16.mxu0 0
        %3842 = vmatpush1.bf16.xpose.msra.mxu0 0
        %3843 = vmatprep.subr.bf16.mxu0 0
        %3844 = vmatpush1.bf16.xpose.msra.mxu0 0
        %3845 = vmatprep.subr.bf16.mxu0 0
        %3846 = vmatpush1.bf16.xpose.msra.mxu0 0
        %3847 = vmatprep.subr.bf16.mxu0 0
        %3848 = vmatpush1.bf16.xpose.msra.mxu0 0
        %3849 = vmatprep.subr.bf16.mxu0 0
        %3850 = vmatpush1.bf16.xpose.msra.mxu0 0
        %3851 = vmatprep.subr.bf16.mxu0 0
        %3852 = vmatpush1.bf16.xpose.msra.mxu0 0
        %3853 = vmatprep.subr.bf16.mxu0 0
        %3854 = vmatpush1.bf16.xpose.msra.mxu0 0
        %3855 = vmatprep.subr.bf16.mxu0 0
        %3856 = vmatpush1.bf16.xpose.msra.mxu0 0
        %3857 = vmatprep.subr.bf16.mxu0 0
        %3858 = vmatpush1.bf16.xpose.msra.mxu0 0
        %3859 = vmatprep.subr.bf16.mxu0 0
        %3860 = vmatpush1.bf16.xpose.msra.mxu0 0
        %3861 = vmatprep.subr.bf16.mxu0 0
        %3862 = vmatpush1.bf16.xpose.msra.mxu0 0
        %3863 = vmatprep.subr.bf16.mxu0 0
        %3864 = vmatpush1.bf16.xpose.msra.mxu0 0
        %3865 = vmatprep.mubr.bf16.mxu0 0
        %3866 = vmatmul.mubr.bf16.gmra.mrb[0].mxu0 %v3828
        %v3867 = vpop.f32.mrb[0].mxu0
        %v3868 = vadd.f32 0.0, %v3867
        %v3869 = vpop.f32.mrb[0].mxu0
        %v3870 = vpop.f32.mrb[0].mxu0
        %v3871 = vpop.f32.mrb[0].mxu0
        %3872 = vdwg.mxu0
        %v3873 = vmul.f32 %v3868, 0.35355338
        %v3874 = vsel %vm1184, %v3873, -inf
        %3875 = vmax.xlane.f32.xlu0 %v3874
        %v3876 = vpop.xlane.xlu0 %3875
        %v3877 = vsub.f32 %v3873, %v3876
        %v3878 = vmul.f32 %v3877, 1.442695
        %v3879 = vpow.pop %v3878
        %v3880 = vsel %vm1184, %v3879, 0.0
        %3881 = vadd.xlane.f32.xlu0 %v3880
        %v3882 = vpop.xlane.xlu0 %3881
        %v3883 = vrcp.pop %v3882
        %v3884 = vmul.f32 %v3879, %v3883
        %v3885 = vpack.c.bf16 %v3884, %v3884
        %3886 = vrot.lane.b32.xlu0 %v3576, 112
        %v3887 = vpop.permute.xlu0 %3886
        %v3889 = vsel %vm1184, %v3885, 0
        %v3892 = vsel %vm1249, %v3887, 0
        %3894 = vmatprep.subr.bf16.mxu0 0
        %3895 = vmatpush1.bf16.msra.mxu0 %v3892
        %3896 = vmatprep.subr.bf16.mxu0 0
        %3897 = vmatpush1.bf16.msra.mxu0 0
        %3898 = vmatprep.subr.bf16.mxu0 0
        %3899 = vmatpush1.bf16.msra.mxu0 0
        %3900 = vmatprep.subr.bf16.mxu0 0
        %3901 = vmatpush1.bf16.msra.mxu0 0
        %3902 = vmatprep.subr.bf16.mxu0 0
        %3903 = vmatpush1.bf16.msra.mxu0 0
        %3904 = vmatprep.subr.bf16.mxu0 0
        %3905 = vmatpush1.bf16.msra.mxu0 0
        %3906 = vmatprep.subr.bf16.mxu0 0
        %3907 = vmatpush1.bf16.msra.mxu0 0
        %3908 = vmatprep.subr.bf16.mxu0 0
        %3909 = vmatpush1.bf16.msra.mxu0 0
        %3910 = vmatprep.subr.bf16.mxu0 0
        %3911 = vmatpush1.bf16.msra.mxu0 0
        %3912 = vmatprep.subr.bf16.mxu0 0
        %3913 = vmatpush1.bf16.msra.mxu0 0
        %3914 = vmatprep.subr.bf16.mxu0 0
        %3915 = vmatpush1.bf16.msra.mxu0 0
        %3916 = vmatprep.subr.bf16.mxu0 0
        %3917 = vmatpush1.bf16.msra.mxu0 0
        %3918 = vmatprep.subr.bf16.mxu0 0
        %3919 = vmatpush1.bf16.msra.mxu0 0
        %3920 = vmatprep.subr.bf16.mxu0 0
        %3921 = vmatpush1.bf16.msra.mxu0 0
        %3922 = vmatprep.subr.bf16.mxu0 0
        %3923 = vmatpush1.bf16.msra.mxu0 0
        %3924 = vmatprep.subr.bf16.mxu0 0
        %3925 = vmatpush1.bf16.msra.mxu0 0
        %3926 = vmatprep.mubr.bf16.mxu0 0
        %3927 = vmatmul.mubr.bf16.gmra.mrb[0].mxu0 %v3889
        %v3928 = vpop.f32.mrb[0].mxu0
        %v3929 = vadd.f32 0.0, %v3928
        %v3930 = vpop.f32.mrb[0].mxu0
        %v3931 = vpop.f32.mrb[0].mxu0
        %v3932 = vpop.f32.mrb[0].mxu0
        %3933 = vdwg.mxu0
        %v3934 = vpack.c.bf16 %v3929, %v3929
        %v3936 = vsel %vm1184, %v3934, 0
        %3938 = vmatprep.subr.bf16.mxu0 0
        %3939 = vmatpush1.bf16.msra.mxu0 %v3311
        %3940 = vmatprep.subr.bf16.mxu0 0
        %3941 = vmatpush1.bf16.msra.mxu0 0
        %3942 = vmatprep.subr.bf16.mxu0 0
        %3943 = vmatpush1.bf16.msra.mxu0 0
        %3944 = vmatprep.subr.bf16.mxu0 0
        %3945 = vmatpush1.bf16.msra.mxu0 0
        %3946 = vmatprep.subr.bf16.mxu0 0
        %3947 = vmatpush1.bf16.msra.mxu0 0
        %3948 = vmatprep.subr.bf16.mxu0 0
        %3949 = vmatpush1.bf16.msra.mxu0 0
        %3950 = vmatprep.subr.bf16.mxu0 0
        %3951 = vmatpush1.bf16.msra.mxu0 0
        %3952 = vmatprep.subr.bf16.mxu0 0
        %3953 = vmatpush1.bf16.msra.mxu0 0
        %3954 = vmatprep.subr.bf16.mxu0 0
        %3955 = vmatpush1.bf16.msra.mxu0 0
        %3956 = vmatprep.subr.bf16.mxu0 0
        %3957 = vmatpush1.bf16.msra.mxu0 0
        %3958 = vmatprep.subr.bf16.mxu0 0
        %3959 = vmatpush1.bf16.msra.mxu0 0
        %3960 = vmatprep.subr.bf16.mxu0 0
        %3961 = vmatpush1.bf16.msra.mxu0 0
        %3962 = vmatprep.subr.bf16.mxu0 0
        %3963 = vmatpush1.bf16.msra.mxu0 0
        %3964 = vmatprep.subr.bf16.mxu0 0
        %3965 = vmatpush1.bf16.msra.mxu0 0
        %3966 = vmatprep.subr.bf16.mxu0 0
        %3967 = vmatpush1.bf16.msra.mxu0 0
        %3968 = vmatprep.subr.bf16.mxu0 0
        %3969 = vmatpush1.bf16.msra.mxu0 0
        %3970 = vmatprep.mubr.bf16.mxu0 0
        %3971 = vmatmul.mubr.bf16.gmra.mrb[0].mxu0 %v3936
        %v3972 = vpop.f32.mrb[0].mxu0
        %v3973 = vadd.f32 0.0, %v3972
        %v3974 = vpop.f32.mrb[0].mxu0
        %v3975 = vpop.f32.mrb[0].mxu0
        %v3976 = vpop.f32.mrb[0].mxu0
        %3977 = vdwg.mxu0
        %v3978 = vadd.f32 %v3818, %v3973
        %3979 = vrot.lane.b32.xlu0 %v3513, 104
        %v3980 = vpop.permute.xlu0 %3979
        %3981 = vrot.lane.b32.xlu0 %v3513, 72
        %v3982 = vpop.permute.xlu0 %3981
        %v3984 = vsel %vm1184, %v3980, 0
        %v3987 = vsel %vm1184, %v3982, 0
        %3989 = vmatprep.subr.bf16.mxu0 0
        %3990 = vmatpush1.bf16.xpose.msra.mxu0 %v3987
        %3991 = vmatprep.subr.bf16.mxu0 0
        %3992 = vmatpush1.bf16.xpose.msra.mxu0 0
        %3993 = vmatprep.subr.bf16.mxu0 0
        %3994 = vmatpush1.bf16.xpose.msra.mxu0 0
        %3995 = vmatprep.subr.bf16.mxu0 0
        %3996 = vmatpush1.bf16.xpose.msra.mxu0 0
        %3997 = vmatprep.subr.bf16.mxu0 0
        %3998 = vmatpush1.bf16.xpose.msra.mxu0 0
        %3999 = vmatprep.subr.bf16.mxu0 0
        %4000 = vmatpush1.bf16.xpose.msra.mxu0 0
        %4001 = vmatprep.subr.bf16.mxu0 0
        %4002 = vmatpush1.bf16.xpose.msra.mxu0 0
        %4003 = vmatprep.subr.bf16.mxu0 0
        %4004 = vmatpush1.bf16.xpose.msra.mxu0 0
        %4005 = vmatprep.subr.bf16.mxu0 0
        %4006 = vmatpush1.bf16.xpose.msra.mxu0 0
        %4007 = vmatprep.subr.bf16.mxu0 0
        %4008 = vmatpush1.bf16.xpose.msra.mxu0 0
        %4009 = vmatprep.subr.bf16.mxu0 0
        %4010 = vmatpush1.bf16.xpose.msra.mxu0 0
        %4011 = vmatprep.subr.bf16.mxu0 0
        %4012 = vmatpush1.bf16.xpose.msra.mxu0 0
        %4013 = vmatprep.subr.bf16.mxu0 0
        %4014 = vmatpush1.bf16.xpose.msra.mxu0 0
        %4015 = vmatprep.subr.bf16.mxu0 0
        %4016 = vmatpush1.bf16.xpose.msra.mxu0 0
        %4017 = vmatprep.subr.bf16.mxu0 0
        %4018 = vmatpush1.bf16.xpose.msra.mxu0 0
        %4019 = vmatprep.subr.bf16.mxu0 0
        %4020 = vmatpush1.bf16.xpose.msra.mxu0 0
        %4021 = vmatprep.mubr.bf16.mxu0 0
        %4022 = vmatmul.mubr.bf16.gmra.mrb[0].mxu0 %v3984
        %v4023 = vpop.f32.mrb[0].mxu0
        %v4024 = vadd.f32 0.0, %v4023
        %v4025 = vpop.f32.mrb[0].mxu0
        %v4026 = vpop.f32.mrb[0].mxu0
        %v4027 = vpop.f32.mrb[0].mxu0
        %4028 = vdwg.mxu0
        %v4029 = vmul.f32 %v4024, 0.35355338
        %v4030 = vsel %vm1184, %v4029, -inf
        %4031 = vmax.xlane.f32.xlu0 %v4030
        %v4032 = vpop.xlane.xlu0 %4031
        %v4033 = vsub.f32 %v4029, %v4032
        %v4034 = vmul.f32 %v4033, 1.442695
        %v4035 = vpow.pop %v4034
        %v4036 = vsel %vm1184, %v4035, 0.0
        %4037 = vadd.xlane.f32.xlu0 %v4036
        %v4038 = vpop.xlane.xlu0 %4037
        %v4039 = vrcp.pop %v4038
        %v4040 = vmul.f32 %v4035, %v4039
        %v4041 = vpack.c.bf16 %v4040, %v4040
        %4042 = vrot.lane.b32.xlu0 %v3576, 104
        %v4043 = vpop.permute.xlu0 %4042
        %v4045 = vsel %vm1184, %v4041, 0
        %v4048 = vsel %vm1249, %v4043, 0
        %4050 = vmatprep.subr.bf16.mxu0 0
        %4051 = vmatpush1.bf16.msra.mxu0 %v4048
        %4052 = vmatprep.subr.bf16.mxu0 0
        %4053 = vmatpush1.bf16.msra.mxu0 0
        %4054 = vmatprep.subr.bf16.mxu0 0
        %4055 = vmatpush1.bf16.msra.mxu0 0
        %4056 = vmatprep.subr.bf16.mxu0 0
        %4057 = vmatpush1.bf16.msra.mxu0 0
        %4058 = vmatprep.subr.bf16.mxu0 0
        %4059 = vmatpush1.bf16.msra.mxu0 0
        %4060 = vmatprep.subr.bf16.mxu0 0
        %4061 = vmatpush1.bf16.msra.mxu0 0
        %4062 = vmatprep.subr.bf16.mxu0 0
        %4063 = vmatpush1.bf16.msra.mxu0 0
        %4064 = vmatprep.subr.bf16.mxu0 0
        %4065 = vmatpush1.bf16.msra.mxu0 0
        %4066 = vmatprep.subr.bf16.mxu0 0
        %4067 = vmatpush1.bf16.msra.mxu0 0
        %4068 = vmatprep.subr.bf16.mxu0 0
        %4069 = vmatpush1.bf16.msra.mxu0 0
        %4070 = vmatprep.subr.bf16.mxu0 0
        %4071 = vmatpush1.bf16.msra.mxu0 0
        %4072 = vmatprep.subr.bf16.mxu0 0
        %4073 = vmatpush1.bf16.msra.mxu0 0
        %4074 = vmatprep.subr.bf16.mxu0 0
        %4075 = vmatpush1.bf16.msra.mxu0 0
        %4076 = vmatprep.subr.bf16.mxu0 0
        %4077 = vmatpush1.bf16.msra.mxu0 0
        %4078 = vmatprep.subr.bf16.mxu0 0
        %4079 = vmatpush1.bf16.msra.mxu0 0
        %4080 = vmatprep.subr.bf16.mxu0 0
        %4081 = vmatpush1.bf16.msra.mxu0 0
        %4082 = vmatprep.mubr.bf16.mxu0 0
        %4083 = vmatmul.mubr.bf16.gmra.mrb[0].mxu0 %v4045
        %v4084 = vpop.f32.mrb[0].mxu0
        %v4085 = vadd.f32 0.0, %v4084
        %v4086 = vpop.f32.mrb[0].mxu0
        %v4087 = vpop.f32.mrb[0].mxu0
        %v4088 = vpop.f32.mrb[0].mxu0
        %4089 = vdwg.mxu0
        %v4090 = vpack.c.bf16 %v4085, %v4085
        %v4092 = vsel %vm1184, %v4090, 0
        %4094 = vmatprep.subr.bf16.mxu0 0
        %4095 = vmatpush1.bf16.msra.mxu0 %v3470
        %4096 = vmatprep.subr.bf16.mxu0 0
        %4097 = vmatpush1.bf16.msra.mxu0 0
        %4098 = vmatprep.subr.bf16.mxu0 0
        %4099 = vmatpush1.bf16.msra.mxu0 0
        %4100 = vmatprep.subr.bf16.mxu0 0
        %4101 = vmatpush1.bf16.msra.mxu0 0
        %4102 = vmatprep.subr.bf16.mxu0 0
        %4103 = vmatpush1.bf16.msra.mxu0 0
        %4104 = vmatprep.subr.bf16.mxu0 0
        %4105 = vmatpush1.bf16.msra.mxu0 0
        %4106 = vmatprep.subr.bf16.mxu0 0
        %4107 = vmatpush1.bf16.msra.mxu0 0
        %4108 = vmatprep.subr.bf16.mxu0 0
        %4109 = vmatpush1.bf16.msra.mxu0 0
        %4110 = vmatprep.subr.bf16.mxu0 0
        %4111 = vmatpush1.bf16.msra.mxu0 0
        %4112 = vmatprep.subr.bf16.mxu0 0
        %4113 = vmatpush1.bf16.msra.mxu0 0
        %4114 = vmatprep.subr.bf16.mxu0 0
        %4115 = vmatpush1.bf16.msra.mxu0 0
        %4116 = vmatprep.subr.bf16.mxu0 0
        %4117 = vmatpush1.bf16.msra.mxu0 0
        %4118 = vmatprep.subr.bf16.mxu0 0
        %4119 = vmatpush1.bf16.msra.mxu0 0
        %4120 = vmatprep.subr.bf16.mxu0 0
        %4121 = vmatpush1.bf16.msra.mxu0 0
        %4122 = vmatprep.subr.bf16.mxu0 0
        %4123 = vmatpush1.bf16.msra.mxu0 0
        %4124 = vmatprep.subr.bf16.mxu0 0
        %4125 = vmatpush1.bf16.msra.mxu0 0
        %4126 = vmatprep.mubr.bf16.mxu0 0
        %4127 = vmatmul.mubr.bf16.gmra.mrb[0].mxu0 %v4092
        %v4128 = vpop.f32.mrb[0].mxu0
        %v4129 = vadd.f32 0.0, %v4128
        %v4130 = vpop.f32.mrb[0].mxu0
        %v4131 = vpop.f32.mrb[0].mxu0
        %v4132 = vpop.f32.mrb[0].mxu0
        %4133 = vdwg.mxu0
        %v4134 = vadd.f32 %v3978, %v4129
        %s4135 = scalar_lea.vmem %s1031, 1
        %v4136 = vld [vmem:[%s4135] sm:$0x1]
        %v4138 = vlaneseq
        %v4139 = vshrl.u32 %v4138, 7
        %v4140 = vsub.s32 0, %v4139
        %v4141 = vrot.slane %v4136, %v4140
        %v4143 = vadd.f32 %v3512, %v4141
        %v4144 = vadd.f32 %v4134, %v4141
        %s4145 = scalar_lea.vmem %s1035, 1
        %v4146 = vld [vmem:[%s4145] sm:$0x1]
        %s4147 = scalar_lea.vmem %s1039, 1
        %v4148 = vld [vmem:[%s4147] sm:$0x1]
        %v4149 = vadd.f32 %v2689, %v4143
        %v4150 = vadd.f32 %v2753, %v4144
        %v4151 = vsel %vm1131, %v4149, 0.0
        %4152 = vadd.xlane.f32.xlu0 %v4151
        %v4153 = vpop.xlane.xlu0 %4152
        %v4154 = vsel %vm1131, %v4150, 0.0
        %4155 = vadd.xlane.f32.xlu0 %v4154
        %v4156 = vpop.xlane.xlu0 %4155
        %v4157 = vmul.f32 %v4153, %v2457
        %v4158 = vmul.f32 %v4156, %v2457
        %v4159 = vsub.f32 %v4149, %v4157
        %v4160 = vsub.f32 %v4150, %v4158
        %v4161 = vmul.f32 %v4159, %v4159
        %v4162 = vmul.f32 %v4160, %v4160
        %v4163 = vsel %vm1131, %v4161, 0.0
        %4164 = vadd.xlane.f32.xlu0 %v4163
        %v4165 = vpop.xlane.xlu0 %4164
        %v4166 = vsel %vm1131, %v4162, 0.0
        %4167 = vadd.xlane.f32.xlu0 %v4166
        %v4168 = vpop.xlane.xlu0 %4167
        %v4169 = vmul.f32 %v4165, %v2457
        %v4170 = vmul.f32 %v4168, %v2457
        %v4171 = vadd.f32 %v4169, 1e-05
        %v4172 = vadd.f32 %v4170, 1e-05
        %v4173 = vrsqrt.pop %v4171
        %v4174 = vrsqrt.pop %v4172
        %v4175 = vmul.f32 %v4159, %v4173
        %v4176 = vmul.f32 %v4160, %v4174
        %v4178 = vlaneseq
        %v4179 = vshrl.u32 %v4178, 7
        %v4180 = vsub.s32 0, %v4179
        %v4181 = vrot.slane %v4146, %v4180
        %v4183 = vmul.f32 %v4175, %v4181
        %v4184 = vmul.f32 %v4176, %v4181
        %v4186 = vlaneseq
        %v4187 = vshrl.u32 %v4186, 7
        %v4188 = vsub.s32 0, %v4187
        %v4189 = vrot.slane %v4148, %v4188
        %v4191 = vadd.f32 %v4183, %v4189
        %v4192 = vadd.f32 %v4184, %v4189
        %v4193 = vld [vmem:[%s1044] sm:$0xf]
        %v4194 = vld [vmem:[%s1044 + $0x4] sm:$0xf]
        %v4195 = vld [vmem:[%s1044 + $0x8] sm:$0xf]
        %v4196 = vld [vmem:[%s1044 + $0xc] sm:$0xf]
        %v4197 = vpack.c.bf16 %v4192, %v4191
        %v4198 = vld [vmem:[%s1048] sm:$0x1]
        %v4200 = vlaneseq
        %v4201 = vshrl.u32 %v4200, 7
        %v4202 = vsub.s32 0, %v4201
        %v4203 = vrot.slane %v4198, %v4202
        %v4209 = vunpack.c.l.b16 %v4193
        %v4210 = vunpack.c.l.b16 %v4194
        %v4211 = vunpack.c.l.b16 %v4195
        %v4212 = vunpack.c.l.b16 %v4196
        %v4213 = vpack.c.b16 %v4210, %v4209
        %v4214 = vpack.c.b16 %v4212, %v4211
        %v4218 = vsel %vm1131, %v4197, 0
        %4220 = vmatprep.subr.bf16.mxu0 0
        %4221 = vmatpush1.bf16.msra.mxu0 %v4213
        %4222 = vmatprep.subr.bf16.mxu0 0
        %4223 = vmatpush1.bf16.msra.mxu0 %v4214
        %4224 = vmatprep.subr.bf16.mxu0 0
        %4225 = vmatpush1.bf16.msra.mxu0 0
        %4226 = vmatprep.subr.bf16.mxu0 0
        %4227 = vmatpush1.bf16.msra.mxu0 0
        %4228 = vmatprep.subr.bf16.mxu0 0
        %4229 = vmatpush1.bf16.msra.mxu0 0
        %4230 = vmatprep.subr.bf16.mxu0 0
        %4231 = vmatpush1.bf16.msra.mxu0 0
        %4232 = vmatprep.subr.bf16.mxu0 0
        %4233 = vmatpush1.bf16.msra.mxu0 0
        %4234 = vmatprep.subr.bf16.mxu0 0
        %4235 = vmatpush1.bf16.msra.mxu0 0
        %4236 = vmatprep.subr.bf16.mxu0 0
        %4237 = vmatpush1.bf16.msra.mxu0 0
        %4238 = vmatprep.subr.bf16.mxu0 0
        %4239 = vmatpush1.bf16.msra.mxu0 0
        %4240 = vmatprep.subr.bf16.mxu0 0
        %4241 = vmatpush1.bf16.msra.mxu0 0
        %4242 = vmatprep.subr.bf16.mxu0 0
        %4243 = vmatpush1.bf16.msra.mxu0 0
        %4244 = vmatprep.subr.bf16.mxu0 0
        %4245 = vmatpush1.bf16.msra.mxu0 0
        %4246 = vmatprep.subr.bf16.mxu0 0
        %4247 = vmatpush1.bf16.msra.mxu0 0
        %4248 = vmatprep.subr.bf16.mxu0 0
        %4249 = vmatpush1.bf16.msra.mxu0 0
        %4250 = vmatprep.subr.bf16.mxu0 0
        %4251 = vmatpush1.bf16.msra.mxu0 0
        %4252 = vmatprep.mubr.bf16.mxu0 0
        %4253 = vmatmul.mubr.bf16.gmra.mrb[0].mxu0 %v4218
        %v4254 = vpop.f32.mrb[0].mxu0
        %v4255 = vadd.f32 %v4203, %v4254
        %v4256 = vpop.f32.mrb[0].mxu0
        %v4257 = vpop.f32.mrb[0].mxu0
        %v4258 = vadd.f32 %v4203, %v4257
        %v4259 = vpop.f32.mrb[0].mxu0
        %4260 = vdwg.mxu0
        %v4261 = vmax.f32 %v4255, 0.0
        %v4262 = vmax.f32 %v4258, 0.0
        %v4263 = vld [vmem:[%s1053] sm:$0xf]
        %v4264 = vld [vmem:[%s1053 + $0x4] sm:$0xf]
        %v4265 = vld [vmem:[%s1053 + $0x8] sm:$0xf]
        %v4266 = vld [vmem:[%s1053 + $0xc] sm:$0xf]
        %v4267 = vld [vmem:[%s1053 + $0x10] sm:$0xf]
        %v4268 = vld [vmem:[%s1053 + $0x14] sm:$0xf]
        %v4269 = vld [vmem:[%s1053 + $0x18] sm:$0xf]
        %v4270 = vld [vmem:[%s1053 + $0x1c] sm:$0xf]
        %v4271 = vpack.c.bf16 %v4262, %v4261
        %v4272 = vld [vmem:[%s1057] sm:$0x1]
        %v4274 = vlaneseq
        %v4275 = vshrl.u32 %v4274, 7
        %v4276 = vsub.s32 0, %v4275
        %v4277 = vrot.slane %v4272, %v4276
        %v4287 = vunpack.c.l.b16 %v4263
        %v4288 = vunpack.c.l.b16 %v4264
        %v4289 = vunpack.c.l.b16 %v4265
        %v4290 = vunpack.c.l.b16 %v4266
        %v4291 = vunpack.c.l.b16 %v4267
        %v4292 = vunpack.c.l.b16 %v4268
        %v4293 = vunpack.c.l.b16 %v4269
        %v4294 = vunpack.c.l.b16 %v4270
        %v4295 = vpack.c.b16 %v4288, %v4287
        %v4296 = vpack.c.b16 %v4290, %v4289
        %v4297 = vpack.c.b16 %v4292, %v4291
        %v4298 = vpack.c.b16 %v4294, %v4293
        %vm4303 = vcmask 523264
        %v4305 = vsel %vm4303, %v4271, 0
        %4307 = vmatprep.subr.bf16.mxu0 0
        %4308 = vmatpush1.bf16.msra.mxu0 %v4295
        %4309 = vmatprep.subr.bf16.mxu0 0
        %4310 = vmatpush1.bf16.msra.mxu0 %v4296
        %4311 = vmatprep.subr.bf16.mxu0 0
        %4312 = vmatpush1.bf16.msra.mxu0 %v4297
        %4313 = vmatprep.subr.bf16.mxu0 0
        %4314 = vmatpush1.bf16.msra.mxu0 %v4298
        %4315 = vmatprep.subr.bf16.mxu0 0
        %4316 = vmatpush1.bf16.msra.mxu0 0
        %4317 = vmatprep.subr.bf16.mxu0 0
        %4318 = vmatpush1.bf16.msra.mxu0 0
        %4319 = vmatprep.subr.bf16.mxu0 0
        %4320 = vmatpush1.bf16.msra.mxu0 0
        %4321 = vmatprep.subr.bf16.mxu0 0
        %4322 = vmatpush1.bf16.msra.mxu0 0
        %4323 = vmatprep.subr.bf16.mxu0 0
        %4324 = vmatpush1.bf16.msra.mxu0 0
        %4325 = vmatprep.subr.bf16.mxu0 0
        %4326 = vmatpush1.bf16.msra.mxu0 0
        %4327 = vmatprep.subr.bf16.mxu0 0
        %4328 = vmatpush1.bf16.msra.mxu0 0
        %4329 = vmatprep.subr.bf16.mxu0 0
        %4330 = vmatpush1.bf16.msra.mxu0 0
        %4331 = vmatprep.subr.bf16.mxu0 0
        %4332 = vmatpush1.bf16.msra.mxu0 0
        %4333 = vmatprep.subr.bf16.mxu0 0
        %4334 = vmatpush1.bf16.msra.mxu0 0
        %4335 = vmatprep.subr.bf16.mxu0 0
        %4336 = vmatpush1.bf16.msra.mxu0 0
        %4337 = vmatprep.subr.bf16.mxu0 0
        %4338 = vmatpush1.bf16.msra.mxu0 0
        %4339 = vmatprep.mubr.bf16.mxu0 0
        %4340 = vmatmul.mubr.bf16.gmra.mrb[0].mxu0 %v4305
        %v4341 = vpop.f32.mrb[0].mxu0
        %v4342 = vadd.f32 %v4277, %v4341
        %v4343 = vpop.f32.mrb[0].mxu0
        %v4344 = vpop.f32.mrb[0].mxu0
        %v4345 = vadd.f32 %v4277, %v4344
        %v4346 = vpop.f32.mrb[0].mxu0
        %4347 = vdwg.mxu0
        %v4348 = vld [vmem:[%s1061] sm:$0x1]
        %v4349 = vld [vmem:[%s1065] sm:$0x1]
        %v4350 = vadd.f32 %v4191, %v4342
        %v4351 = vadd.f32 %v4192, %v4345
        %v4352 = vsel %vm1131, %v4350, 0.0
        %4353 = vadd.xlane.f32.xlu0 %v4352
        %v4354 = vpop.xlane.xlu0 %4353
        %v4355 = vsel %vm1131, %v4351, 0.0
        %4356 = vadd.xlane.f32.xlu0 %v4355
        %v4357 = vpop.xlane.xlu0 %4356
        %v4358 = vmul.f32 %v4354, %v2457
        %v4359 = vmul.f32 %v4357, %v2457
        %v4360 = vsub.f32 %v4350, %v4358
        %v4361 = vsub.f32 %v4351, %v4359
        %v4362 = vmul.f32 %v4360, %v4360
        %v4363 = vmul.f32 %v4361, %v4361
        %v4364 = vsel %vm1131, %v4362, 0.0
        %4365 = vadd.xlane.f32.xlu0 %v4364
        %v4366 = vpop.xlane.xlu0 %4365
        %v4367 = vsel %vm1131, %v4363, 0.0
        %4368 = vadd.xlane.f32.xlu0 %v4367
        %v4369 = vpop.xlane.xlu0 %4368
        %v4370 = vmul.f32 %v4366, %v2457
        %v4371 = vmul.f32 %v4369, %v2457
        %v4372 = vadd.f32 %v4370, 1e-05
        %v4373 = vadd.f32 %v4371, 1e-05
        %v4374 = vrsqrt.pop %v4372
        %v4375 = vrsqrt.pop %v4373
        %v4376 = vmul.f32 %v4360, %v4374
        %v4377 = vmul.f32 %v4361, %v4375
        %v4379 = vlaneseq
        %v4380 = vshrl.u32 %v4379, 7
        %v4381 = vsub.s32 0, %v4380
        %v4382 = vrot.slane %v4348, %v4381
        %v4384 = vmul.f32 %v4376, %v4382
        %v4385 = vmul.f32 %v4377, %v4382
        %v4387 = vlaneseq
        %v4388 = vshrl.u32 %v4387, 7
        %v4389 = vsub.s32 0, %v4388
        %v4390 = vrot.slane %v4349, %v4389
        %v4392 = vadd.f32 %v4384, %v4390
        %v4393 = vadd.f32 %v4385, %v4390
        %v4394 = vld [vmem:[%s1083] sm:$0xf]
        %v4395 = vld [vmem:[%s1083 + $0x4] sm:$0xf]
        %v4396 = vld [vmem:[%s1083 + $0x8] sm:$0xf]
        %v4397 = vld [vmem:[%s1083 + $0xc] sm:$0xf]
        %v4398 = vld [vmem:[%s1088] sm:$0xf]
        %v4399 = vld [vmem:[%s1088 + $0x4] sm:$0xf]
        %v4400 = vld [vmem:[%s1088 + $0x8] sm:$0xf]
        %v4401 = vld [vmem:[%s1088 + $0xc] sm:$0xf]
        %v4402 = vpack.c.bf16 %v4393, %v4392
        %v4407 = vunpack.c.l.b16 %v4398
        %v4408 = vunpack.c.l.b16 %v4399
        %v4409 = vunpack.c.l.b16 %v4400
        %v4410 = vunpack.c.l.b16 %v4401
        %v4411 = vpack.c.b16 %v4408, %v4407
        %v4412 = vpack.c.b16 %v4410, %v4409
        %v4416 = vsel %vm1131, %v4402, 0
        %4418 = vmatprep.subr.bf16.mxu0 0
        %4419 = vmatpush1.bf16.msra.mxu0 %v4411
        %4420 = vmatprep.subr.bf16.mxu0 0
        %4421 = vmatpush1.bf16.msra.mxu0 %v4412
        %4422 = vmatprep.subr.bf16.mxu0 0
        %4423 = vmatpush1.bf16.msra.mxu0 0
        %4424 = vmatprep.subr.bf16.mxu0 0
        %4425 = vmatpush1.bf16.msra.mxu0 0
        %4426 = vmatprep.subr.bf16.mxu0 0
        %4427 = vmatpush1.bf16.msra.mxu0 0
        %4428 = vmatprep.subr.bf16.mxu0 0
        %4429 = vmatpush1.bf16.msra.mxu0 0
        %4430 = vmatprep.subr.bf16.mxu0 0
        %4431 = vmatpush1.bf16.msra.mxu0 0
        %4432 = vmatprep.subr.bf16.mxu0 0
        %4433 = vmatpush1.bf16.msra.mxu0 0
        %4434 = vmatprep.subr.bf16.mxu0 0
        %4435 = vmatpush1.bf16.msra.mxu0 0
        %4436 = vmatprep.subr.bf16.mxu0 0
        %4437 = vmatpush1.bf16.msra.mxu0 0
        %4438 = vmatprep.subr.bf16.mxu0 0
        %4439 = vmatpush1.bf16.msra.mxu0 0
        %4440 = vmatprep.subr.bf16.mxu0 0
        %4441 = vmatpush1.bf16.msra.mxu0 0
        %4442 = vmatprep.subr.bf16.mxu0 0
        %4443 = vmatpush1.bf16.msra.mxu0 0
        %4444 = vmatprep.subr.bf16.mxu0 0
        %4445 = vmatpush1.bf16.msra.mxu0 0
        %4446 = vmatprep.subr.bf16.mxu0 0
        %4447 = vmatpush1.bf16.msra.mxu0 0
        %4448 = vmatprep.subr.bf16.mxu0 0
        %4449 = vmatpush1.bf16.msra.mxu0 0
        %4450 = vmatprep.mubr.bf16.mxu0 0
        %4451 = vmatmul.mubr.bf16.gmra.mrb[0].mxu0 %v4416
        %v4452 = vpop.f32.mrb[0].mxu0
        %v4453 = vadd.f32 0.0, %v4452
        %v4454 = vpop.f32.mrb[0].mxu0
        %v4455 = vpop.f32.mrb[0].mxu0
        %v4456 = vadd.f32 0.0, %v4455
        %v4457 = vpop.f32.mrb[0].mxu0
        %4458 = vdwg.mxu0
        %v4463 = vunpack.c.l.b16 %v4394
        %v4464 = vunpack.c.l.b16 %v4395
        %v4465 = vunpack.c.l.b16 %v4396
        %v4466 = vunpack.c.l.b16 %v4397
        %v4467 = vpack.c.b16 %v4464, %v4463
        %v4468 = vpack.c.b16 %v4466, %v4465
        %4471 = vmatprep.subr.bf16.mxu0 0
        %4472 = vmatpush1.bf16.msra.mxu0 %v4467
        %4473 = vmatprep.subr.bf16.mxu0 0
        %4474 = vmatpush1.bf16.msra.mxu0 %v4468
        %4475 = vmatprep.subr.bf16.mxu0 0
        %4476 = vmatpush1.bf16.msra.mxu0 0
        %4477 = vmatprep.subr.bf16.mxu0 0
        %4478 = vmatpush1.bf16.msra.mxu0 0
        %4479 = vmatprep.subr.bf16.mxu0 0
        %4480 = vmatpush1.bf16.msra.mxu0 0
        %4481 = vmatprep.subr.bf16.mxu0 0
        %4482 = vmatpush1.bf16.msra.mxu0 0
        %4483 = vmatprep.subr.bf16.mxu0 0
        %4484 = vmatpush1.bf16.msra.mxu0 0
        %4485 = vmatprep.subr.bf16.mxu0 0
        %4486 = vmatpush1.bf16.msra.mxu0 0
        %4487 = vmatprep.subr.bf16.mxu0 0
        %4488 = vmatpush1.bf16.msra.mxu0 0
        %4489 = vmatprep.subr.bf16.mxu0 0
        %4490 = vmatpush1.bf16.msra.mxu0 0
        %4491 = vmatprep.subr.bf16.mxu0 0
        %4492 = vmatpush1.bf16.msra.mxu0 0
        %4493 = vmatprep.subr.bf16.mxu0 0
        %4494 = vmatpush1.bf16.msra.mxu0 0
        %4495 = vmatprep.subr.bf16.mxu0 0
        %4496 = vmatpush1.bf16.msra.mxu0 0
        %4497 = vmatprep.subr.bf16.mxu0 0
        %4498 = vmatpush1.bf16.msra.mxu0 0
        %4499 = vmatprep.subr.bf16.mxu0 0
        %4500 = vmatpush1.bf16.msra.mxu0 0
        %4501 = vmatprep.subr.bf16.mxu0 0
        %4502 = vmatpush1.bf16.msra.mxu0 0
        %4503 = vmatprep.mubr.bf16.mxu0 0
        %4504 = vmatmul.mubr.bf16.gmra.mrb[0].mxu0 %v2573
        %v4505 = vpop.f32.mrb[0].mxu0
        %v4506 = vadd.f32 %v4453, %v4505
        %v4507 = vpop.f32.mrb[0].mxu0
        %v4508 = vpop.f32.mrb[0].mxu0
        %v4509 = vadd.f32 %v4456, %v4508
        %v4510 = vpop.f32.mrb[0].mxu0
        %4511 = vdwg.mxu0
        %v4512 = vld [vmem:[%s1091] sm:$0x1]
        %v4514 = vlaneseq
        %v4515 = vshrl.u32 %v4514, 7
        %v4516 = vsub.s32 0, %v4515
        %v4517 = vrot.slane %v4512, %v4516
        %v4519 = vadd.f32 %v4506, %v4517
        %v4520 = vadd.f32 %v4509, %v4517
        %vm4521 = vcmask 23552
        %v4522 = vsel %vm4521, %v4519, 0.0
        %v4523 = vrot.slane %v4522, 4
        %v4524 = vadd.f32 %v4522, %v4523
        %v4525 = vrot.slane %v4524, 2
        %v4526 = vadd.f32 %v4524, %v4525
        %v4527 = vrot.slane %v4526, 1
        %v4528 = vadd.f32 %v4526, %v4527
        %v4529 = vmul.f32 %v4528, %v2633
        %v4530 = vsel %vm4521, %v4529, -inf
        %4531 = vmax.xlane.f32.xlu0 %v4530
        %v4532 = vpop.xlane.xlu0 %4531
        %v4533 = vsub.f32 %v4529, %v4532
        %v4534 = vmul.f32 %v4533, 1.442695
        %v4535 = vpow.pop %v4534
        %v4536 = vsel %vm4521, %v4535, 0.0
        %4537 = vadd.xlane.f32.xlu0 %v4536
        %v4538 = vpop.xlane.xlu0 %4537
        %v4539 = vrcp.pop %v4538
        %v4540 = vmul.f32 %v4535, %v4539
        %v4541 = vld [vmem:[%s1005] sm:$0xf]
        %v4542 = vunpack.c.l.bf16 %v4541
        %4544 = vset.pattern.permute.xlu0 0
        %4545 = vperm.xlu0 %4544, %v4540
        %v4546 = vpop.permute.xlu0 %4545
        %v4548 = vmul.f32 %v4546, %v4542
        %s4549 = scalar_lea.vmem %s1005, 4
        %v4550 = vld [vmem:[%s4549] sm:$0xf]
        %v4551 = vunpack.c.l.bf16 %v4550
        %4552 = vset.pattern.permute.xlu0 1
        %4553 = vperm.xlu0 %4552, %v4540
        %v4554 = vpop.permute.xlu0 %4553
        %v4556 = vmul.f32 %v4554, %v4551
        %v4557 = vadd.f32 %v4548, %v4556
        %s4558 = scalar_lea.vmem %s1005, 8
        %v4559 = vld [vmem:[%s4558] sm:$0xf]
        %v4560 = vunpack.c.l.bf16 %v4559
        %4561 = vset.pattern.permute.xlu0 2
        %4562 = vperm.xlu0 %4561, %v4540
        %v4563 = vpop.permute.xlu0 %4562
        %v4565 = vmul.f32 %v4563, %v4560
        %v4566 = vadd.f32 %v4557, %v4565
        %v4567 = vsel %vm4521, %v4520, 0.0
        %v4568 = vrot.slane %v4567, 4
        %v4569 = vadd.f32 %v4567, %v4568
        %v4570 = vrot.slane %v4569, 2
        %v4571 = vadd.f32 %v4569, %v4570
        %v4572 = vrot.slane %v4571, 1
        %v4573 = vadd.f32 %v4571, %v4572
        %v4574 = vmul.f32 %v4573, %v2633
        %v4575 = vsel %vm4521, %v4574, -inf
        %4576 = vmax.xlane.f32.xlu0 %v4575
        %v4577 = vpop.xlane.xlu0 %4576
        %v4578 = vsub.f32 %v4574, %v4577
        %v4579 = vmul.f32 %v4578, 1.442695
        %v4580 = vpow.pop %v4579
        %v4581 = vsel %vm4521, %v4580, 0.0
        %4582 = vadd.xlane.f32.xlu0 %v4581
        %v4583 = vpop.xlane.xlu0 %4582
        %v4584 = vrcp.pop %v4583
        %v4585 = vmul.f32 %v4580, %v4584
        %s4586 = scalar_lea.vmem %s1005, 12
        %v4587 = vld [vmem:[%s4586] sm:$0xf]
        %v4588 = vunpack.c.l.bf16 %v4587
        %4590 = vset.pattern.permute.xlu0 0
        %4591 = vperm.xlu0 %4590, %v4585
        %v4592 = vpop.permute.xlu0 %4591
        %v4594 = vmul.f32 %v4592, %v4588
        %s4595 = scalar_lea.vmem %s1005, 16
        %v4596 = vld [vmem:[%s4595] sm:$0xf]
        %v4597 = vunpack.c.l.bf16 %v4596
        %4598 = vset.pattern.permute.xlu0 1
        %4599 = vperm.xlu0 %4598, %v4585
        %v4600 = vpop.permute.xlu0 %4599
        %v4602 = vmul.f32 %v4600, %v4597
        %v4603 = vadd.f32 %v4594, %v4602
        %s4604 = scalar_lea.vmem %s1005, 20
        %v4605 = vld [vmem:[%s4604] sm:$0xf]
        %v4606 = vunpack.c.l.bf16 %v4605
        %4607 = vset.pattern.permute.xlu0 2
        %4608 = vperm.xlu0 %4607, %v4585
        %v4609 = vpop.permute.xlu0 %4608
        %v4611 = vmul.f32 %v4609, %v4606
        %v4612 = vadd.f32 %v4603, %v4611
        %s4613 = scalar_lea.vmem %s1018, 32
        %v4614 = vld [vmem:[%s4613] sm:$0xf]
        %v4615 = vld [vmem:[%s4613 + $0x4] sm:$0xf]
        %v4616 = vld [vmem:[%s4613 + $0x8] sm:$0xf]
        %v4617 = vld [vmem:[%s4613 + $0xc] sm:$0xf]
        %s4618 = scalar_lea.vmem %s1022, 2
        %v4619 = vld [vmem:[%s4618] sm:$0x1]
        %v4621 = vlaneseq
        %v4622 = vshrl.u32 %v4621, 7
        %v4623 = vsub.s32 0, %v4622
        %v4624 = vrot.slane %v4619, %v4623
        %v4630 = vunpack.c.l.b16 %v4614
        %v4631 = vunpack.c.l.b16 %v4615
        %v4632 = vunpack.c.l.b16 %v4616
        %v4633 = vunpack.c.l.b16 %v4617
        %v4634 = vpack.c.b16 %v4631, %v4630
        %v4635 = vpack.c.b16 %v4633, %v4632
        %4638 = vmatprep.subr.bf16.mxu0 0
        %4639 = vmatpush1.bf16.msra.mxu0 %v4634
        %4640 = vmatprep.subr.bf16.mxu0 0
        %4641 = vmatpush1.bf16.msra.mxu0 %v4635
        %4642 = vmatprep.subr.bf16.mxu0 0
        %4643 = vmatpush1.bf16.msra.mxu0 0
        %4644 = vmatprep.subr.bf16.mxu0 0
        %4645 = vmatpush1.bf16.msra.mxu0 0
        %4646 = vmatprep.subr.bf16.mxu0 0
        %4647 = vmatpush1.bf16.msra.mxu0 0
        %4648 = vmatprep.subr.bf16.mxu0 0
        %4649 = vmatpush1.bf16.msra.mxu0 0
        %4650 = vmatprep.subr.bf16.mxu0 0
        %4651 = vmatpush1.bf16.msra.mxu0 0
        %4652 = vmatprep.subr.bf16.mxu0 0
        %4653 = vmatpush1.bf16.msra.mxu0 0
        %4654 = vmatprep.subr.bf16.mxu0 0
        %4655 = vmatpush1.bf16.msra.mxu0 0
        %4656 = vmatprep.subr.bf16.mxu0 0
        %4657 = vmatpush1.bf16.msra.mxu0 0
        %4658 = vmatprep.subr.bf16.mxu0 0
        %4659 = vmatpush1.bf16.msra.mxu0 0
        %4660 = vmatprep.subr.bf16.mxu0 0
        %4661 = vmatpush1.bf16.msra.mxu0 0
        %4662 = vmatprep.subr.bf16.mxu0 0
        %4663 = vmatpush1.bf16.msra.mxu0 0
        %4664 = vmatprep.subr.bf16.mxu0 0
        %4665 = vmatpush1.bf16.msra.mxu0 0
        %4666 = vmatprep.subr.bf16.mxu0 0
        %4667 = vmatpush1.bf16.msra.mxu0 0
        %4668 = vmatprep.subr.bf16.mxu0 0
        %4669 = vmatpush1.bf16.msra.mxu0 0
        %4670 = vmatprep.mubr.bf16.mxu0 0
        %4671 = vmatmul.mubr.bf16.gmra.mrb[0].mxu0 %v2573
        %v4672 = vpop.f32.mrb[0].mxu0
        %v4673 = vadd.f32 %v4624, %v4672
        %v4674 = vpop.f32.mrb[0].mxu0
        %v4675 = vpop.f32.mrb[0].mxu0
        %v4676 = vadd.f32 %v4624, %v4675
        %v4677 = vpop.f32.mrb[0].mxu0
        %4678 = vdwg.mxu0
        %v4679 = vpack.c.bf16 %v4612, %v4566
        %4680 = vrot.lane.b32.xlu0 %v4634, 96
        %v4681 = vpop.permute.xlu0 %4680
        %4682 = vrot.lane.b32.xlu0 %v4635, 96
        %v4683 = vpop.permute.xlu0 %4682
        %4686 = vrot.lane.b32.xlu0 %v4624, 96
        %v4687 = vpop.permute.xlu0 %4686
        %v4690 = vsel %vm1131, %v4679, 0
        %4692 = vmatprep.subr.bf16.mxu0 0
        %4693 = vmatpush1.bf16.msra.mxu0 %v4681
        %4694 = vmatprep.subr.bf16.mxu0 0
        %4695 = vmatpush1.bf16.msra.mxu0 %v4683
        %4696 = vmatprep.subr.bf16.mxu0 0
        %4697 = vmatpush1.bf16.msra.mxu0 0
        %4698 = vmatprep.subr.bf16.mxu0 0
        %4699 = vmatpush1.bf16.msra.mxu0 0
        %4700 = vmatprep.subr.bf16.mxu0 0
        %4701 = vmatpush1.bf16.msra.mxu0 0
        %4702 = vmatprep.subr.bf16.mxu0 0
        %4703 = vmatpush1.bf16.msra.mxu0 0
        %4704 = vmatprep.subr.bf16.mxu0 0
        %4705 = vmatpush1.bf16.msra.mxu0 0
        %4706 = vmatprep.subr.bf16.mxu0 0
        %4707 = vmatpush1.bf16.msra.mxu0 0
        %4708 = vmatprep.subr.bf16.mxu0 0
        %4709 = vmatpush1.bf16.msra.mxu0 0
        %4710 = vmatprep.subr.bf16.mxu0 0
        %4711 = vmatpush1.bf16.msra.mxu0 0
        %4712 = vmatprep.subr.bf16.mxu0 0
        %4713 = vmatpush1.bf16.msra.mxu0 0
        %4714 = vmatprep.subr.bf16.mxu0 0
        %4715 = vmatpush1.bf16.msra.mxu0 0
        %4716 = vmatprep.subr.bf16.mxu0 0
        %4717 = vmatpush1.bf16.msra.mxu0 0
        %4718 = vmatprep.subr.bf16.mxu0 0
        %4719 = vmatpush1.bf16.msra.mxu0 0
        %4720 = vmatprep.subr.bf16.mxu0 0
        %4721 = vmatpush1.bf16.msra.mxu0 0
        %4722 = vmatprep.subr.bf16.mxu0 0
        %4723 = vmatpush1.bf16.msra.mxu0 0
        %4724 = vmatprep.mubr.bf16.mxu0 0
        %4725 = vmatmul.mubr.bf16.gmra.mrb[0].mxu0 %v4690
        %v4726 = vpop.f32.mrb[0].mxu0
        %v4727 = vadd.f32 %v4687, %v4726
        %v4728 = vpop.f32.mrb[0].mxu0
        %v4729 = vpop.f32.mrb[0].mxu0
        %v4730 = vadd.f32 %v4687, %v4729
        %v4731 = vpop.f32.mrb[0].mxu0
        %4732 = vdwg.mxu0
        %4733 = vrot.lane.b32.xlu0 %v4634, 64
        %v4734 = vpop.permute.xlu0 %4733
        %4735 = vrot.lane.b32.xlu0 %v4635, 64
        %v4736 = vpop.permute.xlu0 %4735
        %4739 = vrot.lane.b32.xlu0 %v4624, 64
        %v4740 = vpop.permute.xlu0 %4739
        %4742 = vmatprep.subr.bf16.mxu0 0
        %4743 = vmatpush1.bf16.msra.mxu0 %v4734
        %4744 = vmatprep.subr.bf16.mxu0 0
        %4745 = vmatpush1.bf16.msra.mxu0 %v4736
        %4746 = vmatprep.subr.bf16.mxu0 0
        %4747 = vmatpush1.bf16.msra.mxu0 0
        %4748 = vmatprep.subr.bf16.mxu0 0
        %4749 = vmatpush1.bf16.msra.mxu0 0
        %4750 = vmatprep.subr.bf16.mxu0 0
        %4751 = vmatpush1.bf16.msra.mxu0 0
        %4752 = vmatprep.subr.bf16.mxu0 0
        %4753 = vmatpush1.bf16.msra.mxu0 0
        %4754 = vmatprep.subr.bf16.mxu0 0
        %4755 = vmatpush1.bf16.msra.mxu0 0
        %4756 = vmatprep.subr.bf16.mxu0 0
        %4757 = vmatpush1.bf16.msra.mxu0 0
        %4758 = vmatprep.subr.bf16.mxu0 0
        %4759 = vmatpush1.bf16.msra.mxu0 0
        %4760 = vmatprep.subr.bf16.mxu0 0
        %4761 = vmatpush1.bf16.msra.mxu0 0
        %4762 = vmatprep.subr.bf16.mxu0 0
        %4763 = vmatpush1.bf16.msra.mxu0 0
        %4764 = vmatprep.subr.bf16.mxu0 0
        %4765 = vmatpush1.bf16.msra.mxu0 0
        %4766 = vmatprep.subr.bf16.mxu0 0
        %4767 = vmatpush1.bf16.msra.mxu0 0
        %4768 = vmatprep.subr.bf16.mxu0 0
        %4769 = vmatpush1.bf16.msra.mxu0 0
        %4770 = vmatprep.subr.bf16.mxu0 0
        %4771 = vmatpush1.bf16.msra.mxu0 0
        %4772 = vmatprep.subr.bf16.mxu0 0
        %4773 = vmatpush1.bf16.msra.mxu0 0
        %4774 = vmatprep.mubr.bf16.mxu0 0
        %4775 = vmatmul.mubr.bf16.gmra.mrb[0].mxu0 %v4416
        %v4776 = vpop.f32.mrb[0].mxu0
        %v4777 = vadd.f32 %v4740, %v4776
        %v4778 = vpop.f32.mrb[0].mxu0
        %v4779 = vpop.f32.mrb[0].mxu0
        %v4780 = vadd.f32 %v4740, %v4779
        %v4781 = vpop.f32.mrb[0].mxu0
        %4782 = vdwg.mxu0
        %s4783 = scalar_lea.vmem %s1027, 32
        %v4784 = vld [vmem:[%s4783] sm:$0xf]
        %v4785 = vld [vmem:[%s4783 + $0x4] sm:$0xf]
        %v4786 = vld [vmem:[%s4783 + $0x8] sm:$0xf]
        %v4787 = vld [vmem:[%s4783 + $0xc] sm:$0xf]
        %v4788 = vpack.c.bf16 %v4673, %v4673
        %v4789 = vpack.c.bf16 %v4727, %v4727
        %v4791 = vsel %vm1184, %v4788, 0
        %v4794 = vsel %vm1184, %v4789, 0
        %4796 = vmatprep.subr.bf16.mxu0 0
        %4797 = vmatpush1.bf16.xpose.msra.mxu0 %v4794
        %4798 = vmatprep.subr.bf16.mxu0 0
        %4799 = vmatpush1.bf16.xpose.msra.mxu0 0
        %4800 = vmatprep.subr.bf16.mxu0 0
        %4801 = vmatpush1.bf16.xpose.msra.mxu0 0
        %4802 = vmatprep.subr.bf16.mxu0 0
        %4803 = vmatpush1.bf16.xpose.msra.mxu0 0
        %4804 = vmatprep.subr.bf16.mxu0 0
        %4805 = vmatpush1.bf16.xpose.msra.mxu0 0
        %4806 = vmatprep.subr.bf16.mxu0 0
        %4807 = vmatpush1.bf16.xpose.msra.mxu0 0
        %4808 = vmatprep.subr.bf16.mxu0 0
        %4809 = vmatpush1.bf16.xpose.msra.mxu0 0
        %4810 = vmatprep.subr.bf16.mxu0 0
        %4811 = vmatpush1.bf16.xpose.msra.mxu0 0
        %4812 = vmatprep.subr.bf16.mxu0 0
        %4813 = vmatpush1.bf16.xpose.msra.mxu0 0
        %4814 = vmatprep.subr.bf16.mxu0 0
        %4815 = vmatpush1.bf16.xpose.msra.mxu0 0
        %4816 = vmatprep.subr.bf16.mxu0 0
        %4817 = vmatpush1.bf16.xpose.msra.mxu0 0
        %4818 = vmatprep.subr.bf16.mxu0 0
        %4819 = vmatpush1.bf16.xpose.msra.mxu0 0
        %4820 = vmatprep.subr.bf16.mxu0 0
        %4821 = vmatpush1.bf16.xpose.msra.mxu0 0
        %4822 = vmatprep.subr.bf16.mxu0 0
        %4823 = vmatpush1.bf16.xpose.msra.mxu0 0
        %4824 = vmatprep.subr.bf16.mxu0 0
        %4825 = vmatpush1.bf16.xpose.msra.mxu0 0
        %4826 = vmatprep.subr.bf16.mxu0 0
        %4827 = vmatpush1.bf16.xpose.msra.mxu0 0
        %4828 = vmatprep.mubr.bf16.mxu0 0
        %4829 = vmatmul.mubr.bf16.gmra.mrb[0].mxu0 %v4791
        %v4830 = vpop.f32.mrb[0].mxu0
        %v4831 = vadd.f32 0.0, %v4830
        %v4832 = vpop.f32.mrb[0].mxu0
        %v4833 = vpop.f32.mrb[0].mxu0
        %v4834 = vpop.f32.mrb[0].mxu0
        %4835 = vdwg.mxu0
        %v4836 = vmul.f32 %v4831, 0.35355338
        %v4837 = vsel %vm1184, %v4836, -inf
        %4838 = vmax.xlane.f32.xlu0 %v4837
        %v4839 = vpop.xlane.xlu0 %4838
        %v4840 = vsub.f32 %v4836, %v4839
        %v4841 = vmul.f32 %v4840, 1.442695
        %v4842 = vpow.pop %v4841
        %v4843 = vsel %vm1184, %v4842, 0.0
        %4844 = vadd.xlane.f32.xlu0 %v4843
        %v4845 = vpop.xlane.xlu0 %4844
        %v4846 = vrcp.pop %v4845
        %v4847 = vmul.f32 %v4842, %v4846
        %v4848 = vpack.c.bf16 %v4847, %v4847
        %v4849 = vpack.c.bf16 %v4777, %v4777
        %v4851 = vsel %vm1184, %v4848, 0
        %v4854 = vsel %vm1249, %v4849, 0
        %4856 = vmatprep.subr.bf16.mxu0 0
        %4857 = vmatpush1.bf16.msra.mxu0 %v4854
        %4858 = vmatprep.subr.bf16.mxu0 0
        %4859 = vmatpush1.bf16.msra.mxu0 0
        %4860 = vmatprep.subr.bf16.mxu0 0
        %4861 = vmatpush1.bf16.msra.mxu0 0
        %4862 = vmatprep.subr.bf16.mxu0 0
        %4863 = vmatpush1.bf16.msra.mxu0 0
        %4864 = vmatprep.subr.bf16.mxu0 0
        %4865 = vmatpush1.bf16.msra.mxu0 0
        %4866 = vmatprep.subr.bf16.mxu0 0
        %4867 = vmatpush1.bf16.msra.mxu0 0
        %4868 = vmatprep.subr.bf16.mxu0 0
        %4869 = vmatpush1.bf16.msra.mxu0 0
        %4870 = vmatprep.subr.bf16.mxu0 0
        %4871 = vmatpush1.bf16.msra.mxu0 0
        %4872 = vmatprep.subr.bf16.mxu0 0
        %4873 = vmatpush1.bf16.msra.mxu0 0
        %4874 = vmatprep.subr.bf16.mxu0 0
        %4875 = vmatpush1.bf16.msra.mxu0 0
        %4876 = vmatprep.subr.bf16.mxu0 0
        %4877 = vmatpush1.bf16.msra.mxu0 0
        %4878 = vmatprep.subr.bf16.mxu0 0
        %4879 = vmatpush1.bf16.msra.mxu0 0
        %4880 = vmatprep.subr.bf16.mxu0 0
        %4881 = vmatpush1.bf16.msra.mxu0 0
        %4882 = vmatprep.subr.bf16.mxu0 0
        %4883 = vmatpush1.bf16.msra.mxu0 0
        %4884 = vmatprep.subr.bf16.mxu0 0
        %4885 = vmatpush1.bf16.msra.mxu0 0
        %4886 = vmatprep.subr.bf16.mxu0 0
        %4887 = vmatpush1.bf16.msra.mxu0 0
        %4888 = vmatprep.mubr.bf16.mxu0 0
        %4889 = vmatmul.mubr.bf16.gmra.mrb[0].mxu0 %v4851
        %v4890 = vpop.f32.mrb[0].mxu0
        %v4891 = vadd.f32 0.0, %v4890
        %v4892 = vpop.f32.mrb[0].mxu0
        %v4893 = vpop.f32.mrb[0].mxu0
        %v4894 = vpop.f32.mrb[0].mxu0
        %4895 = vdwg.mxu0
        %v4896 = vpack.c.bf16 %v4891, %v4891
        %4898 = vrot.lane.b32.xlu0 %v4788, 120
        %v4899 = vpop.permute.xlu0 %4898
        %4901 = vrot.lane.b32.xlu0 %v4789, 120
        %v4902 = vpop.permute.xlu0 %4901
        %v4904 = vsel %vm1184, %v4899, 0
        %v4907 = vsel %vm1184, %v4902, 0
        %4909 = vmatprep.subr.bf16.mxu0 0
        %4910 = vmatpush1.bf16.xpose.msra.mxu0 %v4907
        %4911 = vmatprep.subr.bf16.mxu0 0
        %4912 = vmatpush1.bf16.xpose.msra.mxu0 0
        %4913 = vmatprep.subr.bf16.mxu0 0
        %4914 = vmatpush1.bf16.xpose.msra.mxu0 0
        %4915 = vmatprep.subr.bf16.mxu0 0
        %4916 = vmatpush1.bf16.xpose.msra.mxu0 0
        %4917 = vmatprep.subr.bf16.mxu0 0
        %4918 = vmatpush1.bf16.xpose.msra.mxu0 0
        %4919 = vmatprep.subr.bf16.mxu0 0
        %4920 = vmatpush1.bf16.xpose.msra.mxu0 0
        %4921 = vmatprep.subr.bf16.mxu0 0
        %4922 = vmatpush1.bf16.xpose.msra.mxu0 0
        %4923 = vmatprep.subr.bf16.mxu0 0
        %4924 = vmatpush1.bf16.xpose.msra.mxu0 0
        %4925 = vmatprep.subr.bf16.mxu0 0
        %4926 = vmatpush1.bf16.xpose.msra.mxu0 0
        %4927 = vmatprep.subr.bf16.mxu0 0
        %4928 = vmatpush1.bf16.xpose.msra.mxu0 0
        %4929 = vmatprep.subr.bf16.mxu0 0
        %4930 = vmatpush1.bf16.xpose.msra.mxu0 0
        %4931 = vmatprep.subr.bf16.mxu0 0
        %4932 = vmatpush1.bf16.xpose.msra.mxu0 0
        %4933 = vmatprep.subr.bf16.mxu0 0
        %4934 = vmatpush1.bf16.xpose.msra.mxu0 0
        %4935 = vmatprep.subr.bf16.mxu0 0
        %4936 = vmatpush1.bf16.xpose.msra.mxu0 0
        %4937 = vmatprep.subr.bf16.mxu0 0
        %4938 = vmatpush1.bf16.xpose.msra.mxu0 0
        %4939 = vmatprep.subr.bf16.mxu0 0
        %4940 = vmatpush1.bf16.xpose.msra.mxu0 0
        %4941 = vmatprep.mubr.bf16.mxu0 0
        %4942 = vmatmul.mubr.bf16.gmra.mrb[0].mxu0 %v4904
        %v4943 = vpop.f32.mrb[0].mxu0
        %v4944 = vadd.f32 0.0, %v4943
        %v4945 = vpop.f32.mrb[0].mxu0
        %v4946 = vpop.f32.mrb[0].mxu0
        %v4947 = vpop.f32.mrb[0].mxu0
        %4948 = vdwg.mxu0
        %v4949 = vmul.f32 %v4944, 0.35355338
        %v4950 = vsel %vm1184, %v4949, -inf
        %4951 = vmax.xlane.f32.xlu0 %v4950
        %v4952 = vpop.xlane.xlu0 %4951
        %v4953 = vsub.f32 %v4949, %v4952
        %v4954 = vmul.f32 %v4953, 1.442695
        %v4955 = vpow.pop %v4954
        %v4956 = vsel %vm1184, %v4955, 0.0
        %4957 = vadd.xlane.f32.xlu0 %v4956
        %v4958 = vpop.xlane.xlu0 %4957
        %v4959 = vrcp.pop %v4958
        %v4960 = vmul.f32 %v4955, %v4959
        %v4961 = vpack.c.bf16 %v4960, %v4960
        %4963 = vrot.lane.b32.xlu0 %v4849, 120
        %v4964 = vpop.permute.xlu0 %4963
        %v4966 = vsel %vm1184, %v4961, 0
        %v4969 = vsel %vm1249, %v4964, 0
        %4971 = vmatprep.subr.bf16.mxu0 0
        %4972 = vmatpush1.bf16.msra.mxu0 %v4969
        %4973 = vmatprep.subr.bf16.mxu0 0
        %4974 = vmatpush1.bf16.msra.mxu0 0
        %4975 = vmatprep.subr.bf16.mxu0 0
        %4976 = vmatpush1.bf16.msra.mxu0 0
        %4977 = vmatprep.subr.bf16.mxu0 0
        %4978 = vmatpush1.bf16.msra.mxu0 0
        %4979 = vmatprep.subr.bf16.mxu0 0
        %4980 = vmatpush1.bf16.msra.mxu0 0
        %4981 = vmatprep.subr.bf16.mxu0 0
        %4982 = vmatpush1.bf16.msra.mxu0 0
        %4983 = vmatprep.subr.bf16.mxu0 0
        %4984 = vmatpush1.bf16.msra.mxu0 0
        %4985 = vmatprep.subr.bf16.mxu0 0
        %4986 = vmatpush1.bf16.msra.mxu0 0
        %4987 = vmatprep.subr.bf16.mxu0 0
        %4988 = vmatpush1.bf16.msra.mxu0 0
        %4989 = vmatprep.subr.bf16.mxu0 0
        %4990 = vmatpush1.bf16.msra.mxu0 0
        %4991 = vmatprep.subr.bf16.mxu0 0
        %4992 = vmatpush1.bf16.msra.mxu0 0
        %4993 = vmatprep.subr.bf16.mxu0 0
        %4994 = vmatpush1.bf16.msra.mxu0 0
        %4995 = vmatprep.subr.bf16.mxu0 0
        %4996 = vmatpush1.bf16.msra.mxu0 0
        %4997 = vmatprep.subr.bf16.mxu0 0
        %4998 = vmatpush1.bf16.msra.mxu0 0
        %4999 = vmatprep.subr.bf16.mxu0 0
        %5000 = vmatpush1.bf16.msra.mxu0 0
        %5001 = vmatprep.subr.bf16.mxu0 0
        %5002 = vmatpush1.bf16.msra.mxu0 0
        %5003 = vmatprep.mubr.bf16.mxu0 0
        %5004 = vmatmul.mubr.bf16.gmra.mrb[0].mxu0 %v4966
        %v5005 = vpop.f32.mrb[0].mxu0
        %v5006 = vadd.f32 0.0, %v5005
        %v5007 = vpop.f32.mrb[0].mxu0
        %v5008 = vpop.f32.mrb[0].mxu0
        %v5009 = vpop.f32.mrb[0].mxu0
        %5010 = vdwg.mxu0
        %v5011 = vpack.c.bf16 %v5006, %v5006
        %v5013 = vsel %vm1184, %v5011, 0
        %v5016 = vsel %vm1249, %v4785, 0
        %5018 = vmatprep.subr.bf16.mxu0 0
        %5019 = vmatpush1.bf16.msra.mxu0 %v5016
        %5020 = vmatprep.subr.bf16.mxu0 0
        %5021 = vmatpush1.bf16.msra.mxu0 0
        %5022 = vmatprep.subr.bf16.mxu0 0
        %5023 = vmatpush1.bf16.msra.mxu0 0
        %5024 = vmatprep.subr.bf16.mxu0 0
        %5025 = vmatpush1.bf16.msra.mxu0 0
        %5026 = vmatprep.subr.bf16.mxu0 0
        %5027 = vmatpush1.bf16.msra.mxu0 0
        %5028 = vmatprep.subr.bf16.mxu0 0
        %5029 = vmatpush1.bf16.msra.mxu0 0
        %5030 = vmatprep.subr.bf16.mxu0 0
        %5031 = vmatpush1.bf16.msra.mxu0 0
        %5032 = vmatprep.subr.bf16.mxu0 0
        %5033 = vmatpush1.bf16.msra.mxu0 0
        %5034 = vmatprep.subr.bf16.mxu0 0
        %5035 = vmatpush1.bf16.msra.mxu0 0
        %5036 = vmatprep.subr.bf16.mxu0 0
        %5037 = vmatpush1.bf16.msra.mxu0 0
        %5038 = vmatprep.subr.bf16.mxu0 0
        %5039 = vmatpush1.bf16.msra.mxu0 0
        %5040 = vmatprep.subr.bf16.mxu0 0
        %5041 = vmatpush1.bf16.msra.mxu0 0
        %5042 = vmatprep.subr.bf16.mxu0 0
        %5043 = vmatpush1.bf16.msra.mxu0 0
        %5044 = vmatprep.subr.bf16.mxu0 0
        %5045 = vmatpush1.bf16.msra.mxu0 0
        %5046 = vmatprep.subr.bf16.mxu0 0
        %5047 = vmatpush1.bf16.msra.mxu0 0
        %5048 = vmatprep.subr.bf16.mxu0 0
        %5049 = vmatpush1.bf16.msra.mxu0 0
        %5050 = vmatprep.mubr.bf16.mxu0 0
        %5051 = vmatmul.mubr.bf16.gmra.mrb[0].mxu0 %v5013
        %v5052 = vpop.f32.mrb[0].mxu0
        %v5053 = vadd.f32 0.0, %v5052
        %v5054 = vpop.f32.mrb[0].mxu0
        %v5055 = vpop.f32.mrb[0].mxu0
        %v5056 = vpop.f32.mrb[0].mxu0
        %5057 = vdwg.mxu0
        %v5059 = vsel %vm1184, %v4896, 0
        %v5062 = vsel %vm1249, %v4784, 0
        %5064 = vmatprep.subr.bf16.mxu0 0
        %5065 = vmatpush1.bf16.msra.mxu0 %v5062
        %5066 = vmatprep.subr.bf16.mxu0 0
        %5067 = vmatpush1.bf16.msra.mxu0 0
        %5068 = vmatprep.subr.bf16.mxu0 0
        %5069 = vmatpush1.bf16.msra.mxu0 0
        %5070 = vmatprep.subr.bf16.mxu0 0
        %5071 = vmatpush1.bf16.msra.mxu0 0
        %5072 = vmatprep.subr.bf16.mxu0 0
        %5073 = vmatpush1.bf16.msra.mxu0 0
        %5074 = vmatprep.subr.bf16.mxu0 0
        %5075 = vmatpush1.bf16.msra.mxu0 0
        %5076 = vmatprep.subr.bf16.mxu0 0
        %5077 = vmatpush1.bf16.msra.mxu0 0
        %5078 = vmatprep.subr.bf16.mxu0 0
        %5079 = vmatpush1.bf16.msra.mxu0 0
        %5080 = vmatprep.subr.bf16.mxu0 0
        %5081 = vmatpush1.bf16.msra.mxu0 0
        %5082 = vmatprep.subr.bf16.mxu0 0
        %5083 = vmatpush1.bf16.msra.mxu0 0
        %5084 = vmatprep.subr.bf16.mxu0 0
        %5085 = vmatpush1.bf16.msra.mxu0 0
        %5086 = vmatprep.subr.bf16.mxu0 0
        %5087 = vmatpush1.bf16.msra.mxu0 0
        %5088 = vmatprep.subr.bf16.mxu0 0
        %5089 = vmatpush1.bf16.msra.mxu0 0
        %5090 = vmatprep.subr.bf16.mxu0 0
        %5091 = vmatpush1.bf16.msra.mxu0 0
        %5092 = vmatprep.subr.bf16.mxu0 0
        %5093 = vmatpush1.bf16.msra.mxu0 0
        %5094 = vmatprep.subr.bf16.mxu0 0
        %5095 = vmatpush1.bf16.msra.mxu0 0
        %5096 = vmatprep.mubr.bf16.mxu0 0
        %5097 = vmatmul.mubr.bf16.gmra.mrb[0].mxu0 %v5059
        %v5098 = vpop.f32.mrb[0].mxu0
        %v5099 = vadd.f32 %v5053, %v5098
        %v5100 = vpop.f32.mrb[0].mxu0
        %v5101 = vpop.f32.mrb[0].mxu0
        %v5102 = vpop.f32.mrb[0].mxu0
        %5103 = vdwg.mxu0
        %5104 = vrot.lane.b32.xlu0 %v4788, 112
        %v5105 = vpop.permute.xlu0 %5104
        %5106 = vrot.lane.b32.xlu0 %v4789, 112
        %v5107 = vpop.permute.xlu0 %5106
        %v5109 = vsel %vm1184, %v5105, 0
        %v5112 = vsel %vm1184, %v5107, 0
        %5114 = vmatprep.subr.bf16.mxu0 0
        %5115 = vmatpush1.bf16.xpose.msra.mxu0 %v5112
        %5116 = vmatprep.subr.bf16.mxu0 0
        %5117 = vmatpush1.bf16.xpose.msra.mxu0 0
        %5118 = vmatprep.subr.bf16.mxu0 0
        %5119 = vmatpush1.bf16.xpose.msra.mxu0 0
        %5120 = vmatprep.subr.bf16.mxu0 0
        %5121 = vmatpush1.bf16.xpose.msra.mxu0 0
        %5122 = vmatprep.subr.bf16.mxu0 0
        %5123 = vmatpush1.bf16.xpose.msra.mxu0 0
        %5124 = vmatprep.subr.bf16.mxu0 0
        %5125 = vmatpush1.bf16.xpose.msra.mxu0 0
        %5126 = vmatprep.subr.bf16.mxu0 0
        %5127 = vmatpush1.bf16.xpose.msra.mxu0 0
        %5128 = vmatprep.subr.bf16.mxu0 0
        %5129 = vmatpush1.bf16.xpose.msra.mxu0 0
        %5130 = vmatprep.subr.bf16.mxu0 0
        %5131 = vmatpush1.bf16.xpose.msra.mxu0 0
        %5132 = vmatprep.subr.bf16.mxu0 0
        %5133 = vmatpush1.bf16.xpose.msra.mxu0 0
        %5134 = vmatprep.subr.bf16.mxu0 0
        %5135 = vmatpush1.bf16.xpose.msra.mxu0 0
        %5136 = vmatprep.subr.bf16.mxu0 0
        %5137 = vmatpush1.bf16.xpose.msra.mxu0 0
        %5138 = vmatprep.subr.bf16.mxu0 0
        %5139 = vmatpush1.bf16.xpose.msra.mxu0 0
        %5140 = vmatprep.subr.bf16.mxu0 0
        %5141 = vmatpush1.bf16.xpose.msra.mxu0 0
        %5142 = vmatprep.subr.bf16.mxu0 0
        %5143 = vmatpush1.bf16.xpose.msra.mxu0 0
        %5144 = vmatprep.subr.bf16.mxu0 0
        %5145 = vmatpush1.bf16.xpose.msra.mxu0 0
        %5146 = vmatprep.mubr.bf16.mxu0 0
        %5147 = vmatmul.mubr.bf16.gmra.mrb[0].mxu0 %v5109
        %v5148 = vpop.f32.mrb[0].mxu0
        %v5149 = vadd.f32 0.0, %v5148
        %v5150 = vpop.f32.mrb[0].mxu0
        %v5151 = vpop.f32.mrb[0].mxu0
        %v5152 = vpop.f32.mrb[0].mxu0
        %5153 = vdwg.mxu0
        %v5154 = vmul.f32 %v5149, 0.35355338
        %v5155 = vsel %vm1184, %v5154, -inf
        %5156 = vmax.xlane.f32.xlu0 %v5155
        %v5157 = vpop.xlane.xlu0 %5156
        %v5158 = vsub.f32 %v5154, %v5157
        %v5159 = vmul.f32 %v5158, 1.442695
        %v5160 = vpow.pop %v5159
        %v5161 = vsel %vm1184, %v5160, 0.0
        %5162 = vadd.xlane.f32.xlu0 %v5161
        %v5163 = vpop.xlane.xlu0 %5162
        %v5164 = vrcp.pop %v5163
        %v5165 = vmul.f32 %v5160, %v5164
        %v5166 = vpack.c.bf16 %v5165, %v5165
        %5167 = vrot.lane.b32.xlu0 %v4849, 112
        %v5168 = vpop.permute.xlu0 %5167
        %v5170 = vsel %vm1184, %v5166, 0
        %v5173 = vsel %vm1249, %v5168, 0
        %5175 = vmatprep.subr.bf16.mxu0 0
        %5176 = vmatpush1.bf16.msra.mxu0 %v5173
        %5177 = vmatprep.subr.bf16.mxu0 0
        %5178 = vmatpush1.bf16.msra.mxu0 0
        %5179 = vmatprep.subr.bf16.mxu0 0
        %5180 = vmatpush1.bf16.msra.mxu0 0
        %5181 = vmatprep.subr.bf16.mxu0 0
        %5182 = vmatpush1.bf16.msra.mxu0 0
        %5183 = vmatprep.subr.bf16.mxu0 0
        %5184 = vmatpush1.bf16.msra.mxu0 0
        %5185 = vmatprep.subr.bf16.mxu0 0
        %5186 = vmatpush1.bf16.msra.mxu0 0
        %5187 = vmatprep.subr.bf16.mxu0 0
        %5188 = vmatpush1.bf16.msra.mxu0 0
        %5189 = vmatprep.subr.bf16.mxu0 0
        %5190 = vmatpush1.bf16.msra.mxu0 0
        %5191 = vmatprep.subr.bf16.mxu0 0
        %5192 = vmatpush1.bf16.msra.mxu0 0
        %5193 = vmatprep.subr.bf16.mxu0 0
        %5194 = vmatpush1.bf16.msra.mxu0 0
        %5195 = vmatprep.subr.bf16.mxu0 0
        %5196 = vmatpush1.bf16.msra.mxu0 0
        %5197 = vmatprep.subr.bf16.mxu0 0
        %5198 = vmatpush1.bf16.msra.mxu0 0
        %5199 = vmatprep.subr.bf16.mxu0 0
        %5200 = vmatpush1.bf16.msra.mxu0 0
        %5201 = vmatprep.subr.bf16.mxu0 0
        %5202 = vmatpush1.bf16.msra.mxu0 0
        %5203 = vmatprep.subr.bf16.mxu0 0
        %5204 = vmatpush1.bf16.msra.mxu0 0
        %5205 = vmatprep.subr.bf16.mxu0 0
        %5206 = vmatpush1.bf16.msra.mxu0 0
        %5207 = vmatprep.mubr.bf16.mxu0 0
        %5208 = vmatmul.mubr.bf16.gmra.mrb[0].mxu0 %v5170
        %v5209 = vpop.f32.mrb[0].mxu0
        %v5210 = vadd.f32 0.0, %v5209
        %v5211 = vpop.f32.mrb[0].mxu0
        %v5212 = vpop.f32.mrb[0].mxu0
        %v5213 = vpop.f32.mrb[0].mxu0
        %5214 = vdwg.mxu0
        %v5215 = vpack.c.bf16 %v5210, %v5210
        %v5217 = vsel %vm1184, %v5215, 0
        %v5220 = vsel %vm1249, %v4786, 0
        %5222 = vmatprep.subr.bf16.mxu0 0
        %5223 = vmatpush1.bf16.msra.mxu0 %v5220
        %5224 = vmatprep.subr.bf16.mxu0 0
        %5225 = vmatpush1.bf16.msra.mxu0 0
        %5226 = vmatprep.subr.bf16.mxu0 0
        %5227 = vmatpush1.bf16.msra.mxu0 0
        %5228 = vmatprep.subr.bf16.mxu0 0
        %5229 = vmatpush1.bf16.msra.mxu0 0
        %5230 = vmatprep.subr.bf16.mxu0 0
        %5231 = vmatpush1.bf16.msra.mxu0 0
        %5232 = vmatprep.subr.bf16.mxu0 0
        %5233 = vmatpush1.bf16.msra.mxu0 0
        %5234 = vmatprep.subr.bf16.mxu0 0
        %5235 = vmatpush1.bf16.msra.mxu0 0
        %5236 = vmatprep.subr.bf16.mxu0 0
        %5237 = vmatpush1.bf16.msra.mxu0 0
        %5238 = vmatprep.subr.bf16.mxu0 0
        %5239 = vmatpush1.bf16.msra.mxu0 0
        %5240 = vmatprep.subr.bf16.mxu0 0
        %5241 = vmatpush1.bf16.msra.mxu0 0
        %5242 = vmatprep.subr.bf16.mxu0 0
        %5243 = vmatpush1.bf16.msra.mxu0 0
        %5244 = vmatprep.subr.bf16.mxu0 0
        %5245 = vmatpush1.bf16.msra.mxu0 0
        %5246 = vmatprep.subr.bf16.mxu0 0
        %5247 = vmatpush1.bf16.msra.mxu0 0
        %5248 = vmatprep.subr.bf16.mxu0 0
        %5249 = vmatpush1.bf16.msra.mxu0 0
        %5250 = vmatprep.subr.bf16.mxu0 0
        %5251 = vmatpush1.bf16.msra.mxu0 0
        %5252 = vmatprep.subr.bf16.mxu0 0
        %5253 = vmatpush1.bf16.msra.mxu0 0
        %5254 = vmatprep.mubr.bf16.mxu0 0
        %5255 = vmatmul.mubr.bf16.gmra.mrb[0].mxu0 %v5217
        %v5256 = vpop.f32.mrb[0].mxu0
        %v5257 = vadd.f32 0.0, %v5256
        %v5258 = vpop.f32.mrb[0].mxu0
        %v5259 = vpop.f32.mrb[0].mxu0
        %v5260 = vpop.f32.mrb[0].mxu0
        %5261 = vdwg.mxu0
        %v5262 = vadd.f32 %v5099, %v5257
        %5263 = vrot.lane.b32.xlu0 %v4788, 104
        %v5264 = vpop.permute.xlu0 %5263
        %5265 = vrot.lane.b32.xlu0 %v4789, 104
        %v5266 = vpop.permute.xlu0 %5265
        %v5268 = vsel %vm1184, %v5264, 0
        %v5271 = vsel %vm1184, %v5266, 0
        %5273 = vmatprep.subr.bf16.mxu0 0
        %5274 = vmatpush1.bf16.xpose.msra.mxu0 %v5271
        %5275 = vmatprep.subr.bf16.mxu0 0
        %5276 = vmatpush1.bf16.xpose.msra.mxu0 0
        %5277 = vmatprep.subr.bf16.mxu0 0
        %5278 = vmatpush1.bf16.xpose.msra.mxu0 0
        %5279 = vmatprep.subr.bf16.mxu0 0
        %5280 = vmatpush1.bf16.xpose.msra.mxu0 0
        %5281 = vmatprep.subr.bf16.mxu0 0
        %5282 = vmatpush1.bf16.xpose.msra.mxu0 0
        %5283 = vmatprep.subr.bf16.mxu0 0
        %5284 = vmatpush1.bf16.xpose.msra.mxu0 0
        %5285 = vmatprep.subr.bf16.mxu0 0
        %5286 = vmatpush1.bf16.xpose.msra.mxu0 0
        %5287 = vmatprep.subr.bf16.mxu0 0
        %5288 = vmatpush1.bf16.xpose.msra.mxu0 0
        %5289 = vmatprep.subr.bf16.mxu0 0
        %5290 = vmatpush1.bf16.xpose.msra.mxu0 0
        %5291 = vmatprep.subr.bf16.mxu0 0
        %5292 = vmatpush1.bf16.xpose.msra.mxu0 0
        %5293 = vmatprep.subr.bf16.mxu0 0
        %5294 = vmatpush1.bf16.xpose.msra.mxu0 0
        %5295 = vmatprep.subr.bf16.mxu0 0
        %5296 = vmatpush1.bf16.xpose.msra.mxu0 0
        %5297 = vmatprep.subr.bf16.mxu0 0
        %5298 = vmatpush1.bf16.xpose.msra.mxu0 0
        %5299 = vmatprep.subr.bf16.mxu0 0
        %5300 = vmatpush1.bf16.xpose.msra.mxu0 0
        %5301 = vmatprep.subr.bf16.mxu0 0
        %5302 = vmatpush1.bf16.xpose.msra.mxu0 0
        %5303 = vmatprep.subr.bf16.mxu0 0
        %5304 = vmatpush1.bf16.xpose.msra.mxu0 0
        %5305 = vmatprep.mubr.bf16.mxu0 0
        %5306 = vmatmul.mubr.bf16.gmra.mrb[0].mxu0 %v5268
        %v5307 = vpop.f32.mrb[0].mxu0
        %v5308 = vadd.f32 0.0, %v5307
        %v5309 = vpop.f32.mrb[0].mxu0
        %v5310 = vpop.f32.mrb[0].mxu0
        %v5311 = vpop.f32.mrb[0].mxu0
        %5312 = vdwg.mxu0
        %v5313 = vmul.f32 %v5308, 0.35355338
        %v5314 = vsel %vm1184, %v5313, -inf
        %5315 = vmax.xlane.f32.xlu0 %v5314
        %v5316 = vpop.xlane.xlu0 %5315
        %v5317 = vsub.f32 %v5313, %v5316
        %v5318 = vmul.f32 %v5317, 1.442695
        %v5319 = vpow.pop %v5318
        %v5320 = vsel %vm1184, %v5319, 0.0
        %5321 = vadd.xlane.f32.xlu0 %v5320
        %v5322 = vpop.xlane.xlu0 %5321
        %v5323 = vrcp.pop %v5322
        %v5324 = vmul.f32 %v5319, %v5323
        %v5325 = vpack.c.bf16 %v5324, %v5324
        %5326 = vrot.lane.b32.xlu0 %v4849, 104
        %v5327 = vpop.permute.xlu0 %5326
        %v5329 = vsel %vm1184, %v5325, 0
        %v5332 = vsel %vm1249, %v5327, 0
        %5334 = vmatprep.subr.bf16.mxu0 0
        %5335 = vmatpush1.bf16.msra.mxu0 %v5332
        %5336 = vmatprep.subr.bf16.mxu0 0
        %5337 = vmatpush1.bf16.msra.mxu0 0
        %5338 = vmatprep.subr.bf16.mxu0 0
        %5339 = vmatpush1.bf16.msra.mxu0 0
        %5340 = vmatprep.subr.bf16.mxu0 0
        %5341 = vmatpush1.bf16.msra.mxu0 0
        %5342 = vmatprep.subr.bf16.mxu0 0
        %5343 = vmatpush1.bf16.msra.mxu0 0
        %5344 = vmatprep.subr.bf16.mxu0 0
        %5345 = vmatpush1.bf16.msra.mxu0 0
        %5346 = vmatprep.subr.bf16.mxu0 0
        %5347 = vmatpush1.bf16.msra.mxu0 0
        %5348 = vmatprep.subr.bf16.mxu0 0
        %5349 = vmatpush1.bf16.msra.mxu0 0
        %5350 = vmatprep.subr.bf16.mxu0 0
        %5351 = vmatpush1.bf16.msra.mxu0 0
        %5352 = vmatprep.subr.bf16.mxu0 0
        %5353 = vmatpush1.bf16.msra.mxu0 0
        %5354 = vmatprep.subr.bf16.mxu0 0
        %5355 = vmatpush1.bf16.msra.mxu0 0
        %5356 = vmatprep.subr.bf16.mxu0 0
        %5357 = vmatpush1.bf16.msra.mxu0 0
        %5358 = vmatprep.subr.bf16.mxu0 0
        %5359 = vmatpush1.bf16.msra.mxu0 0
        %5360 = vmatprep.subr.bf16.mxu0 0
        %5361 = vmatpush1.bf16.msra.mxu0 0
        %5362 = vmatprep.subr.bf16.mxu0 0
        %5363 = vmatpush1.bf16.msra.mxu0 0
        %5364 = vmatprep.subr.bf16.mxu0 0
        %5365 = vmatpush1.bf16.msra.mxu0 0
        %5366 = vmatprep.mubr.bf16.mxu0 0
        %5367 = vmatmul.mubr.bf16.gmra.mrb[0].mxu0 %v5329
        %v5368 = vpop.f32.mrb[0].mxu0
        %v5369 = vadd.f32 0.0, %v5368
        %v5370 = vpop.f32.mrb[0].mxu0
        %v5371 = vpop.f32.mrb[0].mxu0
        %v5372 = vpop.f32.mrb[0].mxu0
        %5373 = vdwg.mxu0
        %v5374 = vpack.c.bf16 %v5369, %v5369
        %v5376 = vsel %vm1184, %v5374, 0
        %v5379 = vsel %vm1249, %v4787, 0
        %5381 = vmatprep.subr.bf16.mxu0 0
        %5382 = vmatpush1.bf16.msra.mxu0 %v5379
        %5383 = vmatprep.subr.bf16.mxu0 0
        %5384 = vmatpush1.bf16.msra.mxu0 0
        %5385 = vmatprep.subr.bf16.mxu0 0
        %5386 = vmatpush1.bf16.msra.mxu0 0
        %5387 = vmatprep.subr.bf16.mxu0 0
        %5388 = vmatpush1.bf16.msra.mxu0 0
        %5389 = vmatprep.subr.bf16.mxu0 0
        %5390 = vmatpush1.bf16.msra.mxu0 0
        %5391 = vmatprep.subr.bf16.mxu0 0
        %5392 = vmatpush1.bf16.msra.mxu0 0
        %5393 = vmatprep.subr.bf16.mxu0 0
        %5394 = vmatpush1.bf16.msra.mxu0 0
        %5395 = vmatprep.subr.bf16.mxu0 0
        %5396 = vmatpush1.bf16.msra.mxu0 0
        %5397 = vmatprep.subr.bf16.mxu0 0
        %5398 = vmatpush1.bf16.msra.mxu0 0
        %5399 = vmatprep.subr.bf16.mxu0 0
        %5400 = vmatpush1.bf16.msra.mxu0 0
        %5401 = vmatprep.subr.bf16.mxu0 0
        %5402 = vmatpush1.bf16.msra.mxu0 0
        %5403 = vmatprep.subr.bf16.mxu0 0
        %5404 = vmatpush1.bf16.msra.mxu0 0
        %5405 = vmatprep.subr.bf16.mxu0 0
        %5406 = vmatpush1.bf16.msra.mxu0 0
        %5407 = vmatprep.subr.bf16.mxu0 0
        %5408 = vmatpush1.bf16.msra.mxu0 0
        %5409 = vmatprep.subr.bf16.mxu0 0
        %5410 = vmatpush1.bf16.msra.mxu0 0
        %5411 = vmatprep.subr.bf16.mxu0 0
        %5412 = vmatpush1.bf16.msra.mxu0 0
        %5413 = vmatprep.mubr.bf16.mxu0 0
        %5414 = vmatmul.mubr.bf16.gmra.mrb[0].mxu0 %v5376
        %v5415 = vpop.f32.mrb[0].mxu0
        %v5416 = vadd.f32 0.0, %v5415
        %v5417 = vpop.f32.mrb[0].mxu0
        %v5418 = vpop.f32.mrb[0].mxu0
        %v5419 = vpop.f32.mrb[0].mxu0
        %5420 = vdwg.mxu0
        %v5421 = vadd.f32 %v5262, %v5416
        %v5422 = vpack.c.bf16 %v4676, %v4676
        %v5423 = vpack.c.bf16 %v4730, %v4730
        %v5425 = vsel %vm1184, %v5422, 0
        %v5428 = vsel %vm1184, %v5423, 0
        %5430 = vmatprep.subr.bf16.mxu0 0
        %5431 = vmatpush1.bf16.xpose.msra.mxu0 %v5428
        %5432 = vmatprep.subr.bf16.mxu0 0
        %5433 = vmatpush1.bf16.xpose.msra.mxu0 0
        %5434 = vmatprep.subr.bf16.mxu0 0
        %5435 = vmatpush1.bf16.xpose.msra.mxu0 0
        %5436 = vmatprep.subr.bf16.mxu0 0
        %5437 = vmatpush1.bf16.xpose.msra.mxu0 0
        %5438 = vmatprep.subr.bf16.mxu0 0
        %5439 = vmatpush1.bf16.xpose.msra.mxu0 0
        %5440 = vmatprep.subr.bf16.mxu0 0
        %5441 = vmatpush1.bf16.xpose.msra.mxu0 0
        %5442 = vmatprep.subr.bf16.mxu0 0
        %5443 = vmatpush1.bf16.xpose.msra.mxu0 0
        %5444 = vmatprep.subr.bf16.mxu0 0
        %5445 = vmatpush1.bf16.xpose.msra.mxu0 0
        %5446 = vmatprep.subr.bf16.mxu0 0
        %5447 = vmatpush1.bf16.xpose.msra.mxu0 0
        %5448 = vmatprep.subr.bf16.mxu0 0
        %5449 = vmatpush1.bf16.xpose.msra.mxu0 0
        %5450 = vmatprep.subr.bf16.mxu0 0
        %5451 = vmatpush1.bf16.xpose.msra.mxu0 0
        %5452 = vmatprep.subr.bf16.mxu0 0
        %5453 = vmatpush1.bf16.xpose.msra.mxu0 0
        %5454 = vmatprep.subr.bf16.mxu0 0
        %5455 = vmatpush1.bf16.xpose.msra.mxu0 0
        %5456 = vmatprep.subr.bf16.mxu0 0
        %5457 = vmatpush1.bf16.xpose.msra.mxu0 0
        %5458 = vmatprep.subr.bf16.mxu0 0
        %5459 = vmatpush1.bf16.xpose.msra.mxu0 0
        %5460 = vmatprep.subr.bf16.mxu0 0
        %5461 = vmatpush1.bf16.xpose.msra.mxu0 0
        %5462 = vmatprep.mubr.bf16.mxu0 0
        %5463 = vmatmul.mubr.bf16.gmra.mrb[0].mxu0 %v5425
        %v5464 = vpop.f32.mrb[0].mxu0
        %v5465 = vadd.f32 0.0, %v5464
        %v5466 = vpop.f32.mrb[0].mxu0
        %v5467 = vpop.f32.mrb[0].mxu0
        %v5468 = vpop.f32.mrb[0].mxu0
        %5469 = vdwg.mxu0
        %v5470 = vmul.f32 %v5465, 0.35355338
        %v5471 = vsel %vm1184, %v5470, -inf
        %5472 = vmax.xlane.f32.xlu0 %v5471
        %v5473 = vpop.xlane.xlu0 %5472
        %v5474 = vsub.f32 %v5470, %v5473
        %v5475 = vmul.f32 %v5474, 1.442695
        %v5476 = vpow.pop %v5475
        %v5477 = vsel %vm1184, %v5476, 0.0
        %5478 = vadd.xlane.f32.xlu0 %v5477
        %v5479 = vpop.xlane.xlu0 %5478
        %v5480 = vrcp.pop %v5479
        %v5481 = vmul.f32 %v5476, %v5480
        %v5482 = vpack.c.bf16 %v5481, %v5481
        %v5483 = vpack.c.bf16 %v4780, %v4780
        %v5485 = vsel %vm1184, %v5482, 0
        %v5488 = vsel %vm1249, %v5483, 0
        %5490 = vmatprep.subr.bf16.mxu0 0
        %5491 = vmatpush1.bf16.msra.mxu0 %v5488
        %5492 = vmatprep.subr.bf16.mxu0 0
        %5493 = vmatpush1.bf16.msra.mxu0 0
        %5494 = vmatprep.subr.bf16.mxu0 0
        %5495 = vmatpush1.bf16.msra.mxu0 0
        %5496 = vmatprep.subr.bf16.mxu0 0
        %5497 = vmatpush1.bf16.msra.mxu0 0
        %5498 = vmatprep.subr.bf16.mxu0 0
        %5499 = vmatpush1.bf16.msra.mxu0 0
        %5500 = vmatprep.subr.bf16.mxu0 0
        %5501 = vmatpush1.bf16.msra.mxu0 0
        %5502 = vmatprep.subr.bf16.mxu0 0
        %5503 = vmatpush1.bf16.msra.mxu0 0
        %5504 = vmatprep.subr.bf16.mxu0 0
        %5505 = vmatpush1.bf16.msra.mxu0 0
        %5506 = vmatprep.subr.bf16.mxu0 0
        %5507 = vmatpush1.bf16.msra.mxu0 0
        %5508 = vmatprep.subr.bf16.mxu0 0
        %5509 = vmatpush1.bf16.msra.mxu0 0
        %5510 = vmatprep.subr.bf16.mxu0 0
        %5511 = vmatpush1.bf16.msra.mxu0 0
        %5512 = vmatprep.subr.bf16.mxu0 0
        %5513 = vmatpush1.bf16.msra.mxu0 0
        %5514 = vmatprep.subr.bf16.mxu0 0
        %5515 = vmatpush1.bf16.msra.mxu0 0
        %5516 = vmatprep.subr.bf16.mxu0 0
        %5517 = vmatpush1.bf16.msra.mxu0 0
        %5518 = vmatprep.subr.bf16.mxu0 0
        %5519 = vmatpush1.bf16.msra.mxu0 0
        %5520 = vmatprep.subr.bf16.mxu0 0
        %5521 = vmatpush1.bf16.msra.mxu0 0
        %5522 = vmatprep.mubr.bf16.mxu0 0
        %5523 = vmatmul.mubr.bf16.gmra.mrb[0].mxu0 %v5485
        %v5524 = vpop.f32.mrb[0].mxu0
        %v5525 = vadd.f32 0.0, %v5524
        %v5526 = vpop.f32.mrb[0].mxu0
        %v5527 = vpop.f32.mrb[0].mxu0
        %v5528 = vpop.f32.mrb[0].mxu0
        %5529 = vdwg.mxu0
        %v5530 = vpack.c.bf16 %v5525, %v5525
        %5532 = vrot.lane.b32.xlu0 %v5422, 120
        %v5533 = vpop.permute.xlu0 %5532
        %5535 = vrot.lane.b32.xlu0 %v5423, 120
        %v5536 = vpop.permute.xlu0 %5535
        %v5538 = vsel %vm1184, %v5533, 0
        %v5541 = vsel %vm1184, %v5536, 0
        %5543 = vmatprep.subr.bf16.mxu0 0
        %5544 = vmatpush1.bf16.xpose.msra.mxu0 %v5541
        %5545 = vmatprep.subr.bf16.mxu0 0
        %5546 = vmatpush1.bf16.xpose.msra.mxu0 0
        %5547 = vmatprep.subr.bf16.mxu0 0
        %5548 = vmatpush1.bf16.xpose.msra.mxu0 0
        %5549 = vmatprep.subr.bf16.mxu0 0
        %5550 = vmatpush1.bf16.xpose.msra.mxu0 0
        %5551 = vmatprep.subr.bf16.mxu0 0
        %5552 = vmatpush1.bf16.xpose.msra.mxu0 0
        %5553 = vmatprep.subr.bf16.mxu0 0
        %5554 = vmatpush1.bf16.xpose.msra.mxu0 0
        %5555 = vmatprep.subr.bf16.mxu0 0
        %5556 = vmatpush1.bf16.xpose.msra.mxu0 0
        %5557 = vmatprep.subr.bf16.mxu0 0
        %5558 = vmatpush1.bf16.xpose.msra.mxu0 0
        %5559 = vmatprep.subr.bf16.mxu0 0
        %5560 = vmatpush1.bf16.xpose.msra.mxu0 0
        %5561 = vmatprep.subr.bf16.mxu0 0
        %5562 = vmatpush1.bf16.xpose.msra.mxu0 0
        %5563 = vmatprep.subr.bf16.mxu0 0
        %5564 = vmatpush1.bf16.xpose.msra.mxu0 0
        %5565 = vmatprep.subr.bf16.mxu0 0
        %5566 = vmatpush1.bf16.xpose.msra.mxu0 0
        %5567 = vmatprep.subr.bf16.mxu0 0
        %5568 = vmatpush1.bf16.xpose.msra.mxu0 0
        %5569 = vmatprep.subr.bf16.mxu0 0
        %5570 = vmatpush1.bf16.xpose.msra.mxu0 0
        %5571 = vmatprep.subr.bf16.mxu0 0
        %5572 = vmatpush1.bf16.xpose.msra.mxu0 0
        %5573 = vmatprep.subr.bf16.mxu0 0
        %5574 = vmatpush1.bf16.xpose.msra.mxu0 0
        %5575 = vmatprep.mubr.bf16.mxu0 0
        %5576 = vmatmul.mubr.bf16.gmra.mrb[0].mxu0 %v5538
        %v5577 = vpop.f32.mrb[0].mxu0
        %v5578 = vadd.f32 0.0, %v5577
        %v5579 = vpop.f32.mrb[0].mxu0
        %v5580 = vpop.f32.mrb[0].mxu0
        %v5581 = vpop.f32.mrb[0].mxu0
        %5582 = vdwg.mxu0
        %v5583 = vmul.f32 %v5578, 0.35355338
        %v5584 = vsel %vm1184, %v5583, -inf
        %5585 = vmax.xlane.f32.xlu0 %v5584
        %v5586 = vpop.xlane.xlu0 %5585
        %v5587 = vsub.f32 %v5583, %v5586
        %v5588 = vmul.f32 %v5587, 1.442695
        %v5589 = vpow.pop %v5588
        %v5590 = vsel %vm1184, %v5589, 0.0
        %5591 = vadd.xlane.f32.xlu0 %v5590
        %v5592 = vpop.xlane.xlu0 %5591
        %v5593 = vrcp.pop %v5592
        %v5594 = vmul.f32 %v5589, %v5593
        %v5595 = vpack.c.bf16 %v5594, %v5594
        %5597 = vrot.lane.b32.xlu0 %v5483, 120
        %v5598 = vpop.permute.xlu0 %5597
        %v5600 = vsel %vm1184, %v5595, 0
        %v5603 = vsel %vm1249, %v5598, 0
        %5605 = vmatprep.subr.bf16.mxu0 0
        %5606 = vmatpush1.bf16.msra.mxu0 %v5603
        %5607 = vmatprep.subr.bf16.mxu0 0
        %5608 = vmatpush1.bf16.msra.mxu0 0
        %5609 = vmatprep.subr.bf16.mxu0 0
        %5610 = vmatpush1.bf16.msra.mxu0 0
        %5611 = vmatprep.subr.bf16.mxu0 0
        %5612 = vmatpush1.bf16.msra.mxu0 0
        %5613 = vmatprep.subr.bf16.mxu0 0
        %5614 = vmatpush1.bf16.msra.mxu0 0
        %5615 = vmatprep.subr.bf16.mxu0 0
        %5616 = vmatpush1.bf16.msra.mxu0 0
        %5617 = vmatprep.subr.bf16.mxu0 0
        %5618 = vmatpush1.bf16.msra.mxu0 0
        %5619 = vmatprep.subr.bf16.mxu0 0
        %5620 = vmatpush1.bf16.msra.mxu0 0
        %5621 = vmatprep.subr.bf16.mxu0 0
        %5622 = vmatpush1.bf16.msra.mxu0 0
        %5623 = vmatprep.subr.bf16.mxu0 0
        %5624 = vmatpush1.bf16.msra.mxu0 0
        %5625 = vmatprep.subr.bf16.mxu0 0
        %5626 = vmatpush1.bf16.msra.mxu0 0
        %5627 = vmatprep.subr.bf16.mxu0 0
        %5628 = vmatpush1.bf16.msra.mxu0 0
        %5629 = vmatprep.subr.bf16.mxu0 0
        %5630 = vmatpush1.bf16.msra.mxu0 0
        %5631 = vmatprep.subr.bf16.mxu0 0
        %5632 = vmatpush1.bf16.msra.mxu0 0
        %5633 = vmatprep.subr.bf16.mxu0 0
        %5634 = vmatpush1.bf16.msra.mxu0 0
        %5635 = vmatprep.subr.bf16.mxu0 0
        %5636 = vmatpush1.bf16.msra.mxu0 0
        %5637 = vmatprep.mubr.bf16.mxu0 0
        %5638 = vmatmul.mubr.bf16.gmra.mrb[0].mxu0 %v5600
        %v5639 = vpop.f32.mrb[0].mxu0
        %v5640 = vadd.f32 0.0, %v5639
        %v5641 = vpop.f32.mrb[0].mxu0
        %v5642 = vpop.f32.mrb[0].mxu0
        %v5643 = vpop.f32.mrb[0].mxu0
        %5644 = vdwg.mxu0
        %v5645 = vpack.c.bf16 %v5640, %v5640
        %v5647 = vsel %vm1184, %v5645, 0
        %5649 = vmatprep.subr.bf16.mxu0 0
        %5650 = vmatpush1.bf16.msra.mxu0 %v5016
        %5651 = vmatprep.subr.bf16.mxu0 0
        %5652 = vmatpush1.bf16.msra.mxu0 0
        %5653 = vmatprep.subr.bf16.mxu0 0
        %5654 = vmatpush1.bf16.msra.mxu0 0
        %5655 = vmatprep.subr.bf16.mxu0 0
        %5656 = vmatpush1.bf16.msra.mxu0 0
        %5657 = vmatprep.subr.bf16.mxu0 0
        %5658 = vmatpush1.bf16.msra.mxu0 0
        %5659 = vmatprep.subr.bf16.mxu0 0
        %5660 = vmatpush1.bf16.msra.mxu0 0
        %5661 = vmatprep.subr.bf16.mxu0 0
        %5662 = vmatpush1.bf16.msra.mxu0 0
        %5663 = vmatprep.subr.bf16.mxu0 0
        %5664 = vmatpush1.bf16.msra.mxu0 0
        %5665 = vmatprep.subr.bf16.mxu0 0
        %5666 = vmatpush1.bf16.msra.mxu0 0
        %5667 = vmatprep.subr.bf16.mxu0 0
        %5668 = vmatpush1.bf16.msra.mxu0 0
        %5669 = vmatprep.subr.bf16.mxu0 0
        %5670 = vmatpush1.bf16.msra.mxu0 0
        %5671 = vmatprep.subr.bf16.mxu0 0
        %5672 = vmatpush1.bf16.msra.mxu0 0
        %5673 = vmatprep.subr.bf16.mxu0 0
        %5674 = vmatpush1.bf16.msra.mxu0 0
        %5675 = vmatprep.subr.bf16.mxu0 0
        %5676 = vmatpush1.bf16.msra.mxu0 0
        %5677 = vmatprep.subr.bf16.mxu0 0
        %5678 = vmatpush1.bf16.msra.mxu0 0
        %5679 = vmatprep.subr.bf16.mxu0 0
        %5680 = vmatpush1.bf16.msra.mxu0 0
        %5681 = vmatprep.mubr.bf16.mxu0 0
        %5682 = vmatmul.mubr.bf16.gmra.mrb[0].mxu0 %v5647
        %v5683 = vpop.f32.mrb[0].mxu0
        %v5684 = vadd.f32 0.0, %v5683
        %v5685 = vpop.f32.mrb[0].mxu0
        %v5686 = vpop.f32.mrb[0].mxu0
        %v5687 = vpop.f32.mrb[0].mxu0
        %5688 = vdwg.mxu0
        %v5690 = vsel %vm1184, %v5530, 0
        %5692 = vmatprep.subr.bf16.mxu0 0
        %5693 = vmatpush1.bf16.msra.mxu0 %v5062
        %5694 = vmatprep.subr.bf16.mxu0 0
        %5695 = vmatpush1.bf16.msra.mxu0 0
        %5696 = vmatprep.subr.bf16.mxu0 0
        %5697 = vmatpush1.bf16.msra.mxu0 0
        %5698 = vmatprep.subr.bf16.mxu0 0
        %5699 = vmatpush1.bf16.msra.mxu0 0
        %5700 = vmatprep.subr.bf16.mxu0 0
        %5701 = vmatpush1.bf16.msra.mxu0 0
        %5702 = vmatprep.subr.bf16.mxu0 0
        %5703 = vmatpush1.bf16.msra.mxu0 0
        %5704 = vmatprep.subr.bf16.mxu0 0
        %5705 = vmatpush1.bf16.msra.mxu0 0
        %5706 = vmatprep.subr.bf16.mxu0 0
        %5707 = vmatpush1.bf16.msra.mxu0 0
        %5708 = vmatprep.subr.bf16.mxu0 0
        %5709 = vmatpush1.bf16.msra.mxu0 0
        %5710 = vmatprep.subr.bf16.mxu0 0
        %5711 = vmatpush1.bf16.msra.mxu0 0
        %5712 = vmatprep.subr.bf16.mxu0 0
        %5713 = vmatpush1.bf16.msra.mxu0 0
        %5714 = vmatprep.subr.bf16.mxu0 0
        %5715 = vmatpush1.bf16.msra.mxu0 0
        %5716 = vmatprep.subr.bf16.mxu0 0
        %5717 = vmatpush1.bf16.msra.mxu0 0
        %5718 = vmatprep.subr.bf16.mxu0 0
        %5719 = vmatpush1.bf16.msra.mxu0 0
        %5720 = vmatprep.subr.bf16.mxu0 0
        %5721 = vmatpush1.bf16.msra.mxu0 0
        %5722 = vmatprep.subr.bf16.mxu0 0
        %5723 = vmatpush1.bf16.msra.mxu0 0
        %5724 = vmatprep.mubr.bf16.mxu0 0
        %5725 = vmatmul.mubr.bf16.gmra.mrb[0].mxu0 %v5690
        %v5726 = vpop.f32.mrb[0].mxu0
        %v5727 = vadd.f32 %v5684, %v5726
        %v5728 = vpop.f32.mrb[0].mxu0
        %v5729 = vpop.f32.mrb[0].mxu0
        %v5730 = vpop.f32.mrb[0].mxu0
        %5731 = vdwg.mxu0
        %5732 = vrot.lane.b32.xlu0 %v5422, 112
        %v5733 = vpop.permute.xlu0 %5732
        %5734 = vrot.lane.b32.xlu0 %v5423, 112
        %v5735 = vpop.permute.xlu0 %5734
        %v5737 = vsel %vm1184, %v5733, 0
        %v5740 = vsel %vm1184, %v5735, 0
        %5742 = vmatprep.subr.bf16.mxu0 0
        %5743 = vmatpush1.bf16.xpose.msra.mxu0 %v5740
        %5744 = vmatprep.subr.bf16.mxu0 0
        %5745 = vmatpush1.bf16.xpose.msra.mxu0 0
        %5746 = vmatprep.subr.bf16.mxu0 0
        %5747 = vmatpush1.bf16.xpose.msra.mxu0 0
        %5748 = vmatprep.subr.bf16.mxu0 0
        %5749 = vmatpush1.bf16.xpose.msra.mxu0 0
        %5750 = vmatprep.subr.bf16.mxu0 0
        %5751 = vmatpush1.bf16.xpose.msra.mxu0 0
        %5752 = vmatprep.subr.bf16.mxu0 0
        %5753 = vmatpush1.bf16.xpose.msra.mxu0 0
        %5754 = vmatprep.subr.bf16.mxu0 0
        %5755 = vmatpush1.bf16.xpose.msra.mxu0 0
        %5756 = vmatprep.subr.bf16.mxu0 0
        %5757 = vmatpush1.bf16.xpose.msra.mxu0 0
        %5758 = vmatprep.subr.bf16.mxu0 0
        %5759 = vmatpush1.bf16.xpose.msra.mxu0 0
        %5760 = vmatprep.subr.bf16.mxu0 0
        %5761 = vmatpush1.bf16.xpose.msra.mxu0 0
        %5762 = vmatprep.subr.bf16.mxu0 0
        %5763 = vmatpush1.bf16.xpose.msra.mxu0 0
        %5764 = vmatprep.subr.bf16.mxu0 0
        %5765 = vmatpush1.bf16.xpose.msra.mxu0 0
        %5766 = vmatprep.subr.bf16.mxu0 0
        %5767 = vmatpush1.bf16.xpose.msra.mxu0 0
        %5768 = vmatprep.subr.bf16.mxu0 0
        %5769 = vmatpush1.bf16.xpose.msra.mxu0 0
        %5770 = vmatprep.subr.bf16.mxu0 0
        %5771 = vmatpush1.bf16.xpose.msra.mxu0 0
        %5772 = vmatprep.subr.bf16.mxu0 0
        %5773 = vmatpush1.bf16.xpose.msra.mxu0 0
        %5774 = vmatprep.mubr.bf16.mxu0 0
        %5775 = vmatmul.mubr.bf16.gmra.mrb[0].mxu0 %v5737
        %v5776 = vpop.f32.mrb[0].mxu0
        %v5777 = vadd.f32 0.0, %v5776
        %v5778 = vpop.f32.mrb[0].mxu0
        %v5779 = vpop.f32.mrb[0].mxu0
        %v5780 = vpop.f32.mrb[0].mxu0
        %5781 = vdwg.mxu0
        %v5782 = vmul.f32 %v5777, 0.35355338
        %v5783 = vsel %vm1184, %v5782, -inf
        %5784 = vmax.xlane.f32.xlu0 %v5783
        %v5785 = vpop.xlane.xlu0 %5784
        %v5786 = vsub.f32 %v5782, %v5785
        %v5787 = vmul.f32 %v5786, 1.442695
        %v5788 = vpow.pop %v5787
        %v5789 = vsel %vm1184, %v5788, 0.0
        %5790 = vadd.xlane.f32.xlu0 %v5789
        %v5791 = vpop.xlane.xlu0 %5790
        %v5792 = vrcp.pop %v5791
        %v5793 = vmul.f32 %v5788, %v5792
        %v5794 = vpack.c.bf16 %v5793, %v5793
        %5795 = vrot.lane.b32.xlu0 %v5483, 112
        %v5796 = vpop.permute.xlu0 %5795
        %v5798 = vsel %vm1184, %v5794, 0
        %v5801 = vsel %vm1249, %v5796, 0
        %5803 = vmatprep.subr.bf16.mxu0 0
        %5804 = vmatpush1.bf16.msra.mxu0 %v5801
        %5805 = vmatprep.subr.bf16.mxu0 0
        %5806 = vmatpush1.bf16.msra.mxu0 0
        %5807 = vmatprep.subr.bf16.mxu0 0
        %5808 = vmatpush1.bf16.msra.mxu0 0
        %5809 = vmatprep.subr.bf16.mxu0 0
        %5810 = vmatpush1.bf16.msra.mxu0 0
        %5811 = vmatprep.subr.bf16.mxu0 0
        %5812 = vmatpush1.bf16.msra.mxu0 0
        %5813 = vmatprep.subr.bf16.mxu0 0
        %5814 = vmatpush1.bf16.msra.mxu0 0
        %5815 = vmatprep.subr.bf16.mxu0 0
        %5816 = vmatpush1.bf16.msra.mxu0 0
        %5817 = vmatprep.subr.bf16.mxu0 0
        %5818 = vmatpush1.bf16.msra.mxu0 0
        %5819 = vmatprep.subr.bf16.mxu0 0
        %5820 = vmatpush1.bf16.msra.mxu0 0
        %5821 = vmatprep.subr.bf16.mxu0 0
        %5822 = vmatpush1.bf16.msra.mxu0 0
        %5823 = vmatprep.subr.bf16.mxu0 0
        %5824 = vmatpush1.bf16.msra.mxu0 0
        %5825 = vmatprep.subr.bf16.mxu0 0
        %5826 = vmatpush1.bf16.msra.mxu0 0
        %5827 = vmatprep.subr.bf16.mxu0 0
        %5828 = vmatpush1.bf16.msra.mxu0 0
        %5829 = vmatprep.subr.bf16.mxu0 0
        %5830 = vmatpush1.bf16.msra.mxu0 0
        %5831 = vmatprep.subr.bf16.mxu0 0
        %5832 = vmatpush1.bf16.msra.mxu0 0
        %5833 = vmatprep.subr.bf16.mxu0 0
        %5834 = vmatpush1.bf16.msra.mxu0 0
        %5835 = vmatprep.mubr.bf16.mxu0 0
        %5836 = vmatmul.mubr.bf16.gmra.mrb[0].mxu0 %v5798
        %v5837 = vpop.f32.mrb[0].mxu0
        %v5838 = vadd.f32 0.0, %v5837
        %v5839 = vpop.f32.mrb[0].mxu0
        %v5840 = vpop.f32.mrb[0].mxu0
        %v5841 = vpop.f32.mrb[0].mxu0
        %5842 = vdwg.mxu0
        %v5843 = vpack.c.bf16 %v5838, %v5838
        %v5845 = vsel %vm1184, %v5843, 0
        %5847 = vmatprep.subr.bf16.mxu0 0
        %5848 = vmatpush1.bf16.msra.mxu0 %v5220
        %5849 = vmatprep.subr.bf16.mxu0 0
        %5850 = vmatpush1.bf16.msra.mxu0 0
        %5851 = vmatprep.subr.bf16.mxu0 0
        %5852 = vmatpush1.bf16.msra.mxu0 0
        %5853 = vmatprep.subr.bf16.mxu0 0
        %5854 = vmatpush1.bf16.msra.mxu0 0
        %5855 = vmatprep.subr.bf16.mxu0 0
        %5856 = vmatpush1.bf16.msra.mxu0 0
        %5857 = vmatprep.subr.bf16.mxu0 0
        %5858 = vmatpush1.bf16.msra.mxu0 0
        %5859 = vmatprep.subr.bf16.mxu0 0
        %5860 = vmatpush1.bf16.msra.mxu0 0
        %5861 = vmatprep.subr.bf16.mxu0 0
        %5862 = vmatpush1.bf16.msra.mxu0 0
        %5863 = vmatprep.subr.bf16.mxu0 0
        %5864 = vmatpush1.bf16.msra.mxu0 0
        %5865 = vmatprep.subr.bf16.mxu0 0
        %5866 = vmatpush1.bf16.msra.mxu0 0
        %5867 = vmatprep.subr.bf16.mxu0 0
        %5868 = vmatpush1.bf16.msra.mxu0 0
        %5869 = vmatprep.subr.bf16.mxu0 0
        %5870 = vmatpush1.bf16.msra.mxu0 0
        %5871 = vmatprep.subr.bf16.mxu0 0
        %5872 = vmatpush1.bf16.msra.mxu0 0
        %5873 = vmatprep.subr.bf16.mxu0 0
        %5874 = vmatpush1.bf16.msra.mxu0 0
        %5875 = vmatprep.subr.bf16.mxu0 0
        %5876 = vmatpush1.bf16.msra.mxu0 0
        %5877 = vmatprep.subr.bf16.mxu0 0
        %5878 = vmatpush1.bf16.msra.mxu0 0
        %5879 = vmatprep.mubr.bf16.mxu0 0
        %5880 = vmatmul.mubr.bf16.gmra.mrb[0].mxu0 %v5845
        %v5881 = vpop.f32.mrb[0].mxu0
        %v5882 = vadd.f32 0.0, %v5881
        %v5883 = vpop.f32.mrb[0].mxu0
        %v5884 = vpop.f32.mrb[0].mxu0
        %v5885 = vpop.f32.mrb[0].mxu0
        %5886 = vdwg.mxu0
        %v5887 = vadd.f32 %v5727, %v5882
        %5888 = vrot.lane.b32.xlu0 %v5422, 104
        %v5889 = vpop.permute.xlu0 %5888
        %5890 = vrot.lane.b32.xlu0 %v5423, 104
        %v5891 = vpop.permute.xlu0 %5890
        %v5893 = vsel %vm1184, %v5889, 0
        %v5896 = vsel %vm1184, %v5891, 0
        %5898 = vmatprep.subr.bf16.mxu0 0
        %5899 = vmatpush1.bf16.xpose.msra.mxu0 %v5896
        %5900 = vmatprep.subr.bf16.mxu0 0
        %5901 = vmatpush1.bf16.xpose.msra.mxu0 0
        %5902 = vmatprep.subr.bf16.mxu0 0
        %5903 = vmatpush1.bf16.xpose.msra.mxu0 0
        %5904 = vmatprep.subr.bf16.mxu0 0
        %5905 = vmatpush1.bf16.xpose.msra.mxu0 0
        %5906 = vmatprep.subr.bf16.mxu0 0
        %5907 = vmatpush1.bf16.xpose.msra.mxu0 0
        %5908 = vmatprep.subr.bf16.mxu0 0
        %5909 = vmatpush1.bf16.xpose.msra.mxu0 0
        %5910 = vmatprep.subr.bf16.mxu0 0
        %5911 = vmatpush1.bf16.xpose.msra.mxu0 0
        %5912 = vmatprep.subr.bf16.mxu0 0
        %5913 = vmatpush1.bf16.xpose.msra.mxu0 0
        %5914 = vmatprep.subr.bf16.mxu0 0
        %5915 = vmatpush1.bf16.xpose.msra.mxu0 0
        %5916 = vmatprep.subr.bf16.mxu0 0
        %5917 = vmatpush1.bf16.xpose.msra.mxu0 0
        %5918 = vmatprep.subr.bf16.mxu0 0
        %5919 = vmatpush1.bf16.xpose.msra.mxu0 0
        %5920 = vmatprep.subr.bf16.mxu0 0
        %5921 = vmatpush1.bf16.xpose.msra.mxu0 0
        %5922 = vmatprep.subr.bf16.mxu0 0
        %5923 = vmatpush1.bf16.xpose.msra.mxu0 0
        %5924 = vmatprep.subr.bf16.mxu0 0
        %5925 = vmatpush1.bf16.xpose.msra.mxu0 0
        %5926 = vmatprep.subr.bf16.mxu0 0
        %5927 = vmatpush1.bf16.xpose.msra.mxu0 0
        %5928 = vmatprep.subr.bf16.mxu0 0
        %5929 = vmatpush1.bf16.xpose.msra.mxu0 0
        %5930 = vmatprep.mubr.bf16.mxu0 0
        %5931 = vmatmul.mubr.bf16.gmra.mrb[0].mxu0 %v5893
        %v5932 = vpop.f32.mrb[0].mxu0
        %v5933 = vadd.f32 0.0, %v5932
        %v5934 = vpop.f32.mrb[0].mxu0
        %v5935 = vpop.f32.mrb[0].mxu0
        %v5936 = vpop.f32.mrb[0].mxu0
        %5937 = vdwg.mxu0
        %v5938 = vmul.f32 %v5933, 0.35355338
        %v5939 = vsel %vm1184, %v5938, -inf
        %5940 = vmax.xlane.f32.xlu0 %v5939
        %v5941 = vpop.xlane.xlu0 %5940
        %v5942 = vsub.f32 %v5938, %v5941
        %v5943 = vmul.f32 %v5942, 1.442695
        %v5944 = vpow.pop %v5943
        %v5945 = vsel %vm1184, %v5944, 0.0
        %5946 = vadd.xlane.f32.xlu0 %v5945
        %v5947 = vpop.xlane.xlu0 %5946
        %v5948 = vrcp.pop %v5947
        %v5949 = vmul.f32 %v5944, %v5948
        %v5950 = vpack.c.bf16 %v5949, %v5949
        %5951 = vrot.lane.b32.xlu0 %v5483, 104
        %v5952 = vpop.permute.xlu0 %5951
        %v5954 = vsel %vm1184, %v5950, 0
        %v5957 = vsel %vm1249, %v5952, 0
        %5959 = vmatprep.subr.bf16.mxu0 0
        %5960 = vmatpush1.bf16.msra.mxu0 %v5957
        %5961 = vmatprep.subr.bf16.mxu0 0
        %5962 = vmatpush1.bf16.msra.mxu0 0
        %5963 = vmatprep.subr.bf16.mxu0 0
        %5964 = vmatpush1.bf16.msra.mxu0 0
        %5965 = vmatprep.subr.bf16.mxu0 0
        %5966 = vmatpush1.bf16.msra.mxu0 0
        %5967 = vmatprep.subr.bf16.mxu0 0
        %5968 = vmatpush1.bf16.msra.mxu0 0
        %5969 = vmatprep.subr.bf16.mxu0 0
        %5970 = vmatpush1.bf16.msra.mxu0 0
        %5971 = vmatprep.subr.bf16.mxu0 0
        %5972 = vmatpush1.bf16.msra.mxu0 0
        %5973 = vmatprep.subr.bf16.mxu0 0
        %5974 = vmatpush1.bf16.msra.mxu0 0
        %5975 = vmatprep.subr.bf16.mxu0 0
        %5976 = vmatpush1.bf16.msra.mxu0 0
        %5977 = vmatprep.subr.bf16.mxu0 0
        %5978 = vmatpush1.bf16.msra.mxu0 0
        %5979 = vmatprep.subr.bf16.mxu0 0
        %5980 = vmatpush1.bf16.msra.mxu0 0
        %5981 = vmatprep.subr.bf16.mxu0 0
        %5982 = vmatpush1.bf16.msra.mxu0 0
        %5983 = vmatprep.subr.bf16.mxu0 0
        %5984 = vmatpush1.bf16.msra.mxu0 0
        %5985 = vmatprep.subr.bf16.mxu0 0
        %5986 = vmatpush1.bf16.msra.mxu0 0
        %5987 = vmatprep.subr.bf16.mxu0 0
        %5988 = vmatpush1.bf16.msra.mxu0 0
        %5989 = vmatprep.subr.bf16.mxu0 0
        %5990 = vmatpush1.bf16.msra.mxu0 0
        %5991 = vmatprep.mubr.bf16.mxu0 0
        %5992 = vmatmul.mubr.bf16.gmra.mrb[0].mxu0 %v5954
        %v5993 = vpop.f32.mrb[0].mxu0
        %v5994 = vadd.f32 0.0, %v5993
        %v5995 = vpop.f32.mrb[0].mxu0
        %v5996 = vpop.f32.mrb[0].mxu0
        %v5997 = vpop.f32.mrb[0].mxu0
        %5998 = vdwg.mxu0
        %v5999 = vpack.c.bf16 %v5994, %v5994
        %v6001 = vsel %vm1184, %v5999, 0
        %6003 = vmatprep.subr.bf16.mxu0 0
        %6004 = vmatpush1.bf16.msra.mxu0 %v5379
        %6005 = vmatprep.subr.bf16.mxu0 0
        %6006 = vmatpush1.bf16.msra.mxu0 0
        %6007 = vmatprep.subr.bf16.mxu0 0
        %6008 = vmatpush1.bf16.msra.mxu0 0
        %6009 = vmatprep.subr.bf16.mxu0 0
        %6010 = vmatpush1.bf16.msra.mxu0 0
        %6011 = vmatprep.subr.bf16.mxu0 0
        %6012 = vmatpush1.bf16.msra.mxu0 0
        %6013 = vmatprep.subr.bf16.mxu0 0
        %6014 = vmatpush1.bf16.msra.mxu0 0
        %6015 = vmatprep.subr.bf16.mxu0 0
        %6016 = vmatpush1.bf16.msra.mxu0 0
        %6017 = vmatprep.subr.bf16.mxu0 0
        %6018 = vmatpush1.bf16.msra.mxu0 0
        %6019 = vmatprep.subr.bf16.mxu0 0
        %6020 = vmatpush1.bf16.msra.mxu0 0
        %6021 = vmatprep.subr.bf16.mxu0 0
        %6022 = vmatpush1.bf16.msra.mxu0 0
        %6023 = vmatprep.subr.bf16.mxu0 0
        %6024 = vmatpush1.bf16.msra.mxu0 0
        %6025 = vmatprep.subr.bf16.mxu0 0
        %6026 = vmatpush1.bf16.msra.mxu0 0
        %6027 = vmatprep.subr.bf16.mxu0 0
        %6028 = vmatpush1.bf16.msra.mxu0 0
        %6029 = vmatprep.subr.bf16.mxu0 0
        %6030 = vmatpush1.bf16.msra.mxu0 0
        %6031 = vmatprep.subr.bf16.mxu0 0
        %6032 = vmatpush1.bf16.msra.mxu0 0
        %6033 = vmatprep.subr.bf16.mxu0 0
        %6034 = vmatpush1.bf16.msra.mxu0 0
        %6035 = vmatprep.mubr.bf16.mxu0 0
        %6036 = vmatmul.mubr.bf16.gmra.mrb[0].mxu0 %v6001
        %v6037 = vpop.f32.mrb[0].mxu0
        %v6038 = vadd.f32 0.0, %v6037
        %v6039 = vpop.f32.mrb[0].mxu0
        %v6040 = vpop.f32.mrb[0].mxu0
        %v6041 = vpop.f32.mrb[0].mxu0
        %6042 = vdwg.mxu0
        %v6043 = vadd.f32 %v5887, %v6038
        %s6044 = scalar_lea.vmem %s1031, 2
        %v6045 = vld [vmem:[%s6044] sm:$0x1]
        %v6047 = vlaneseq
        %v6048 = vshrl.u32 %v6047, 7
        %v6049 = vsub.s32 0, %v6048
        %v6050 = vrot.slane %v6045, %v6049
        %v6052 = vadd.f32 %v5421, %v6050
        %v6053 = vadd.f32 %v6043, %v6050
        %s6054 = scalar_lea.vmem %s1035, 2
        %v6055 = vld [vmem:[%s6054] sm:$0x1]
        %s6056 = scalar_lea.vmem %s1039, 2
        %v6057 = vld [vmem:[%s6056] sm:$0x1]
        %v6058 = vadd.f32 %v1103, %v6052
        %v6059 = vadd.f32 %v1104, %v6053
        %v6060 = vsel %vm1131, %v6058, 0.0
        %6061 = vadd.xlane.f32.xlu0 %v6060
        %v6062 = vpop.xlane.xlu0 %6061
        %v6063 = vsel %vm1131, %v6059, 0.0
        %6064 = vadd.xlane.f32.xlu0 %v6063
        %v6065 = vpop.xlane.xlu0 %6064
        %v6066 = vmul.f32 %v6062, %v2457
        %v6067 = vmul.f32 %v6065, %v2457
        %v6068 = vsub.f32 %v6058, %v6066
        %v6069 = vsub.f32 %v6059, %v6067
        %v6070 = vmul.f32 %v6068, %v6068
        %v6071 = vmul.f32 %v6069, %v6069
        %v6072 = vsel %vm1131, %v6070, 0.0
        %6073 = vadd.xlane.f32.xlu0 %v6072
        %v6074 = vpop.xlane.xlu0 %6073
        %v6075 = vsel %vm1131, %v6071, 0.0
        %6076 = vadd.xlane.f32.xlu0 %v6075
        %v6077 = vpop.xlane.xlu0 %6076
        %v6078 = vmul.f32 %v6074, %v2457
        %v6079 = vmul.f32 %v6077, %v2457
        %v6080 = vadd.f32 %v6078, 1e-05
        %v6081 = vadd.f32 %v6079, 1e-05
        %v6082 = vrsqrt.pop %v6080
        %v6083 = vrsqrt.pop %v6081
        %v6084 = vmul.f32 %v6068, %v6082
        %v6085 = vmul.f32 %v6069, %v6083
        %v6087 = vlaneseq
        %v6088 = vshrl.u32 %v6087, 7
        %v6089 = vsub.s32 0, %v6088
        %v6090 = vrot.slane %v6055, %v6089
        %v6092 = vmul.f32 %v6084, %v6090
        %v6093 = vmul.f32 %v6085, %v6090
        %v6095 = vlaneseq
        %v6096 = vshrl.u32 %v6095, 7
        %v6097 = vsub.s32 0, %v6096
        %v6098 = vrot.slane %v6057, %v6097
        %v6100 = vadd.f32 %v6092, %v6098
        %v6101 = vadd.f32 %v6093, %v6098
        %s6102 = scalar_lea.vmem %s1018, 48
        %v6103 = vld [vmem:[%s6102] sm:$0xf]
        %v6104 = vld [vmem:[%s6102 + $0x4] sm:$0xf]
        %v6105 = vld [vmem:[%s6102 + $0x8] sm:$0xf]
        %v6106 = vld [vmem:[%s6102 + $0xc] sm:$0xf]
        %s6107 = scalar_lea.vmem %s1022, 3
        %v6108 = vld [vmem:[%s6107] sm:$0x1]
        %v6110 = vlaneseq
        %v6111 = vshrl.u32 %v6110, 7
        %v6112 = vsub.s32 0, %v6111
        %v6113 = vrot.slane %v6108, %v6112
        %v6119 = vunpack.c.l.b16 %v6103
        %v6120 = vunpack.c.l.b16 %v6104
        %v6121 = vunpack.c.l.b16 %v6105
        %v6122 = vunpack.c.l.b16 %v6106
        %v6123 = vpack.c.b16 %v6120, %v6119
        %v6124 = vpack.c.b16 %v6122, %v6121
        %6127 = vmatprep.subr.bf16.mxu0 0
        %6128 = vmatpush1.bf16.msra.mxu0 %v6123
        %6129 = vmatprep.subr.bf16.mxu0 0
        %6130 = vmatpush1.bf16.msra.mxu0 %v6124
        %6131 = vmatprep.subr.bf16.mxu0 0
        %6132 = vmatpush1.bf16.msra.mxu0 0
        %6133 = vmatprep.subr.bf16.mxu0 0
        %6134 = vmatpush1.bf16.msra.mxu0 0
        %6135 = vmatprep.subr.bf16.mxu0 0
        %6136 = vmatpush1.bf16.msra.mxu0 0
        %6137 = vmatprep.subr.bf16.mxu0 0
        %6138 = vmatpush1.bf16.msra.mxu0 0
        %6139 = vmatprep.subr.bf16.mxu0 0
        %6140 = vmatpush1.bf16.msra.mxu0 0
        %6141 = vmatprep.subr.bf16.mxu0 0
        %6142 = vmatpush1.bf16.msra.mxu0 0
        %6143 = vmatprep.subr.bf16.mxu0 0
        %6144 = vmatpush1.bf16.msra.mxu0 0
        %6145 = vmatprep.subr.bf16.mxu0 0
        %6146 = vmatpush1.bf16.msra.mxu0 0
        %6147 = vmatprep.subr.bf16.mxu0 0
        %6148 = vmatpush1.bf16.msra.mxu0 0
        %6149 = vmatprep.subr.bf16.mxu0 0
        %6150 = vmatpush1.bf16.msra.mxu0 0
        %6151 = vmatprep.subr.bf16.mxu0 0
        %6152 = vmatpush1.bf16.msra.mxu0 0
        %6153 = vmatprep.subr.bf16.mxu0 0
        %6154 = vmatpush1.bf16.msra.mxu0 0
        %6155 = vmatprep.subr.bf16.mxu0 0
        %6156 = vmatpush1.bf16.msra.mxu0 0
        %6157 = vmatprep.subr.bf16.mxu0 0
        %6158 = vmatpush1.bf16.msra.mxu0 0
        %6159 = vmatprep.mubr.bf16.mxu0 0
        %6160 = vmatmul.mubr.bf16.gmra.mrb[0].mxu0 %v2573
        %v6161 = vpop.f32.mrb[0].mxu0
        %v6162 = vadd.f32 %v6113, %v6161
        %v6163 = vpop.f32.mrb[0].mxu0
        %v6164 = vpop.f32.mrb[0].mxu0
        %v6165 = vadd.f32 %v6113, %v6164
        %v6166 = vpop.f32.mrb[0].mxu0
        %6167 = vdwg.mxu0
        %v6168 = vpack.c.bf16 %v6101, %v6100
        %6169 = vrot.lane.b32.xlu0 %v6123, 64
        %v6170 = vpop.permute.xlu0 %6169
        %6171 = vrot.lane.b32.xlu0 %v6124, 64
        %v6172 = vpop.permute.xlu0 %6171
        %6175 = vrot.lane.b32.xlu0 %v6113, 64
        %v6176 = vpop.permute.xlu0 %6175
        %v6179 = vsel %vm1131, %v6168, 0
        %6181 = vmatprep.subr.bf16.mxu0 0
        %6182 = vmatpush1.bf16.msra.mxu0 %v6170
        %6183 = vmatprep.subr.bf16.mxu0 0
        %6184 = vmatpush1.bf16.msra.mxu0 %v6172
        %6185 = vmatprep.subr.bf16.mxu0 0
        %6186 = vmatpush1.bf16.msra.mxu0 0
        %6187 = vmatprep.subr.bf16.mxu0 0
        %6188 = vmatpush1.bf16.msra.mxu0 0
        %6189 = vmatprep.subr.bf16.mxu0 0
        %6190 = vmatpush1.bf16.msra.mxu0 0
        %6191 = vmatprep.subr.bf16.mxu0 0
        %6192 = vmatpush1.bf16.msra.mxu0 0
        %6193 = vmatprep.subr.bf16.mxu0 0
        %6194 = vmatpush1.bf16.msra.mxu0 0
        %6195 = vmatprep.subr.bf16.mxu0 0
        %6196 = vmatpush1.bf16.msra.mxu0 0
        %6197 = vmatprep.subr.bf16.mxu0 0
        %6198 = vmatpush1.bf16.msra.mxu0 0
        %6199 = vmatprep.subr.bf16.mxu0 0
        %6200 = vmatpush1.bf16.msra.mxu0 0
        %6201 = vmatprep.subr.bf16.mxu0 0
        %6202 = vmatpush1.bf16.msra.mxu0 0
        %6203 = vmatprep.subr.bf16.mxu0 0
        %6204 = vmatpush1.bf16.msra.mxu0 0
        %6205 = vmatprep.subr.bf16.mxu0 0
        %6206 = vmatpush1.bf16.msra.mxu0 0
        %6207 = vmatprep.subr.bf16.mxu0 0
        %6208 = vmatpush1.bf16.msra.mxu0 0
        %6209 = vmatprep.subr.bf16.mxu0 0
        %6210 = vmatpush1.bf16.msra.mxu0 0
        %6211 = vmatprep.subr.bf16.mxu0 0
        %6212 = vmatpush1.bf16.msra.mxu0 0
        %6213 = vmatprep.mubr.bf16.mxu0 0
        %6214 = vmatmul.mubr.bf16.gmra.mrb[0].mxu0 %v6179
        %v6215 = vpop.f32.mrb[0].mxu0
        %v6216 = vadd.f32 %v6176, %v6215
        %v6217 = vpop.f32.mrb[0].mxu0
        %v6218 = vpop.f32.mrb[0].mxu0
        %v6219 = vadd.f32 %v6176, %v6218
        %v6220 = vpop.f32.mrb[0].mxu0
        %6221 = vdwg.mxu0
        %s6222 = scalar_lea.vmem %s1027, 48
        %v6223 = vld [vmem:[%s6222] sm:$0xf]
        %v6224 = vld [vmem:[%s6222 + $0x4] sm:$0xf]
        %v6225 = vld [vmem:[%s6222 + $0x8] sm:$0xf]
        %v6226 = vld [vmem:[%s6222 + $0xc] sm:$0xf]
        %v6227 = vpack.c.bf16 %v6162, %v6162
        %6229 = vrot.lane.b32.xlu0 %v6227, 96
        %v6230 = vpop.permute.xlu0 %6229
        %v6232 = vsel %vm1184, %v6227, 0
        %v6235 = vsel %vm1184, %v6230, 0
        %6237 = vmatprep.subr.bf16.mxu0 0
        %6238 = vmatpush1.bf16.xpose.msra.mxu0 %v6235
        %6239 = vmatprep.subr.bf16.mxu0 0
        %6240 = vmatpush1.bf16.xpose.msra.mxu0 0
        %6241 = vmatprep.subr.bf16.mxu0 0
        %6242 = vmatpush1.bf16.xpose.msra.mxu0 0
        %6243 = vmatprep.subr.bf16.mxu0 0
        %6244 = vmatpush1.bf16.xpose.msra.mxu0 0
        %6245 = vmatprep.subr.bf16.mxu0 0
        %6246 = vmatpush1.bf16.xpose.msra.mxu0 0
        %6247 = vmatprep.subr.bf16.mxu0 0
        %6248 = vmatpush1.bf16.xpose.msra.mxu0 0
        %6249 = vmatprep.subr.bf16.mxu0 0
        %6250 = vmatpush1.bf16.xpose.msra.mxu0 0
        %6251 = vmatprep.subr.bf16.mxu0 0
        %6252 = vmatpush1.bf16.xpose.msra.mxu0 0
        %6253 = vmatprep.subr.bf16.mxu0 0
        %6254 = vmatpush1.bf16.xpose.msra.mxu0 0
        %6255 = vmatprep.subr.bf16.mxu0 0
        %6256 = vmatpush1.bf16.xpose.msra.mxu0 0
        %6257 = vmatprep.subr.bf16.mxu0 0
        %6258 = vmatpush1.bf16.xpose.msra.mxu0 0
        %6259 = vmatprep.subr.bf16.mxu0 0
        %6260 = vmatpush1.bf16.xpose.msra.mxu0 0
        %6261 = vmatprep.subr.bf16.mxu0 0
        %6262 = vmatpush1.bf16.xpose.msra.mxu0 0
        %6263 = vmatprep.subr.bf16.mxu0 0
        %6264 = vmatpush1.bf16.xpose.msra.mxu0 0
        %6265 = vmatprep.subr.bf16.mxu0 0
        %6266 = vmatpush1.bf16.xpose.msra.mxu0 0
        %6267 = vmatprep.subr.bf16.mxu0 0
        %6268 = vmatpush1.bf16.xpose.msra.mxu0 0
        %6269 = vmatprep.mubr.bf16.mxu0 0
        %6270 = vmatmul.mubr.bf16.gmra.mrb[0].mxu0 %v6232
        %v6271 = vpop.f32.mrb[0].mxu0
        %v6272 = vadd.f32 0.0, %v6271
        %v6273 = vpop.f32.mrb[0].mxu0
        %v6274 = vpop.f32.mrb[0].mxu0
        %v6275 = vpop.f32.mrb[0].mxu0
        %6276 = vdwg.mxu0
        %v6277 = vmul.f32 %v6272, 0.35355338
        %v6278 = vsel %vm1184, %v6277, -inf
        %6279 = vmax.xlane.f32.xlu0 %v6278
        %v6280 = vpop.xlane.xlu0 %6279
        %v6281 = vsub.f32 %v6277, %v6280
        %v6282 = vmul.f32 %v6281, 1.442695
        %v6283 = vpow.pop %v6282
        %v6284 = vsel %vm1184, %v6283, 0.0
        %6285 = vadd.xlane.f32.xlu0 %v6284
        %v6286 = vpop.xlane.xlu0 %6285
        %v6287 = vrcp.pop %v6286
        %v6288 = vmul.f32 %v6283, %v6287
        %v6289 = vpack.c.bf16 %v6288, %v6288
        %v6290 = vpack.c.bf16 %v6216, %v6216
        %v6292 = vsel %vm1184, %v6289, 0
        %v6295 = vsel %vm1249, %v6290, 0
        %6297 = vmatprep.subr.bf16.mxu0 0
        %6298 = vmatpush1.bf16.msra.mxu0 %v6295
        %6299 = vmatprep.subr.bf16.mxu0 0
        %6300 = vmatpush1.bf16.msra.mxu0 0
        %6301 = vmatprep.subr.bf16.mxu0 0
        %6302 = vmatpush1.bf16.msra.mxu0 0
        %6303 = vmatprep.subr.bf16.mxu0 0
        %6304 = vmatpush1.bf16.msra.mxu0 0
        %6305 = vmatprep.subr.bf16.mxu0 0
        %6306 = vmatpush1.bf16.msra.mxu0 0
        %6307 = vmatprep.subr.bf16.mxu0 0
        %6308 = vmatpush1.bf16.msra.mxu0 0
        %6309 = vmatprep.subr.bf16.mxu0 0
        %6310 = vmatpush1.bf16.msra.mxu0 0
        %6311 = vmatprep.subr.bf16.mxu0 0
        %6312 = vmatpush1.bf16.msra.mxu0 0
        %6313 = vmatprep.subr.bf16.mxu0 0
        %6314 = vmatpush1.bf16.msra.mxu0 0
        %6315 = vmatprep.subr.bf16.mxu0 0
        %6316 = vmatpush1.bf16.msra.mxu0 0
        %6317 = vmatprep.subr.bf16.mxu0 0
        %6318 = vmatpush1.bf16.msra.mxu0 0
        %6319 = vmatprep.subr.bf16.mxu0 0
        %6320 = vmatpush1.bf16.msra.mxu0 0
        %6321 = vmatprep.subr.bf16.mxu0 0
        %6322 = vmatpush1.bf16.msra.mxu0 0
        %6323 = vmatprep.subr.bf16.mxu0 0
        %6324 = vmatpush1.bf16.msra.mxu0 0
        %6325 = vmatprep.subr.bf16.mxu0 0
        %6326 = vmatpush1.bf16.msra.mxu0 0
        %6327 = vmatprep.subr.bf16.mxu0 0
        %6328 = vmatpush1.bf16.msra.mxu0 0
        %6329 = vmatprep.mubr.bf16.mxu0 0
        %6330 = vmatmul.mubr.bf16.gmra.mrb[0].mxu0 %v6292
        %v6331 = vpop.f32.mrb[0].mxu0
        %v6332 = vadd.f32 0.0, %v6331
        %v6333 = vpop.f32.mrb[0].mxu0
        %v6334 = vpop.f32.mrb[0].mxu0
        %v6335 = vpop.f32.mrb[0].mxu0
        %6336 = vdwg.mxu0
        %v6337 = vpack.c.bf16 %v6332, %v6332
        %6338 = vrot.lane.b32.xlu0 %v6227, 120
        %v6339 = vpop.permute.xlu0 %6338
        %6340 = vrot.lane.b32.xlu0 %v6227, 88
        %v6341 = vpop.permute.xlu0 %6340
        %v6343 = vsel %vm1184, %v6339, 0
        %v6346 = vsel %vm1184, %v6341, 0
        %6348 = vmatprep.subr.bf16.mxu0 0
        %6349 = vmatpush1.bf16.xpose.msra.mxu0 %v6346
        %6350 = vmatprep.subr.bf16.mxu0 0
        %6351 = vmatpush1.bf16.xpose.msra.mxu0 0
        %6352 = vmatprep.subr.bf16.mxu0 0
        %6353 = vmatpush1.bf16.xpose.msra.mxu0 0
        %6354 = vmatprep.subr.bf16.mxu0 0
        %6355 = vmatpush1.bf16.xpose.msra.mxu0 0
        %6356 = vmatprep.subr.bf16.mxu0 0
        %6357 = vmatpush1.bf16.xpose.msra.mxu0 0
        %6358 = vmatprep.subr.bf16.mxu0 0
        %6359 = vmatpush1.bf16.xpose.msra.mxu0 0
        %6360 = vmatprep.subr.bf16.mxu0 0
        %6361 = vmatpush1.bf16.xpose.msra.mxu0 0
        %6362 = vmatprep.subr.bf16.mxu0 0
        %6363 = vmatpush1.bf16.xpose.msra.mxu0 0
        %6364 = vmatprep.subr.bf16.mxu0 0
        %6365 = vmatpush1.bf16.xpose.msra.mxu0 0
        %6366 = vmatprep.subr.bf16.mxu0 0
        %6367 = vmatpush1.bf16.xpose.msra.mxu0 0
        %6368 = vmatprep.subr.bf16.mxu0 0
        %6369 = vmatpush1.bf16.xpose.msra.mxu0 0
        %6370 = vmatprep.subr.bf16.mxu0 0
        %6371 = vmatpush1.bf16.xpose.msra.mxu0 0
        %6372 = vmatprep.subr.bf16.mxu0 0
        %6373 = vmatpush1.bf16.xpose.msra.mxu0 0
        %6374 = vmatprep.subr.bf16.mxu0 0
        %6375 = vmatpush1.bf16.xpose.msra.mxu0 0
        %6376 = vmatprep.subr.bf16.mxu0 0
        %6377 = vmatpush1.bf16.xpose.msra.mxu0 0
        %6378 = vmatprep.subr.bf16.mxu0 0
        %6379 = vmatpush1.bf16.xpose.msra.mxu0 0
        %6380 = vmatprep.mubr.bf16.mxu0 0
        %6381 = vmatmul.mubr.bf16.gmra.mrb[0].mxu0 %v6343
        %v6382 = vpop.f32.mrb[0].mxu0
        %v6383 = vadd.f32 0.0, %v6382
        %v6384 = vpop.f32.mrb[0].mxu0
        %v6385 = vpop.f32.mrb[0].mxu0
        %v6386 = vpop.f32.mrb[0].mxu0
        %6387 = vdwg.mxu0
        %v6388 = vmul.f32 %v6383, 0.35355338
        %v6389 = vsel %vm1184, %v6388, -inf
        %6390 = vmax.xlane.f32.xlu0 %v6389
        %v6391 = vpop.xlane.xlu0 %6390
        %v6392 = vsub.f32 %v6388, %v6391
        %v6393 = vmul.f32 %v6392, 1.442695
        %v6394 = vpow.pop %v6393
        %v6395 = vsel %vm1184, %v6394, 0.0
        %6396 = vadd.xlane.f32.xlu0 %v6395
        %v6397 = vpop.xlane.xlu0 %6396
        %v6398 = vrcp.pop %v6397
        %v6399 = vmul.f32 %v6394, %v6398
        %v6400 = vpack.c.bf16 %v6399, %v6399
        %6402 = vrot.lane.b32.xlu0 %v6290, 120
        %v6403 = vpop.permute.xlu0 %6402
        %v6405 = vsel %vm1184, %v6400, 0
        %v6408 = vsel %vm1249, %v6403, 0
        %6410 = vmatprep.subr.bf16.mxu0 0
        %6411 = vmatpush1.bf16.msra.mxu0 %v6408
        %6412 = vmatprep.subr.bf16.mxu0 0
        %6413 = vmatpush1.bf16.msra.mxu0 0
        %6414 = vmatprep.subr.bf16.mxu0 0
        %6415 = vmatpush1.bf16.msra.mxu0 0
        %6416 = vmatprep.subr.bf16.mxu0 0
        %6417 = vmatpush1.bf16.msra.mxu0 0
        %6418 = vmatprep.subr.bf16.mxu0 0
        %6419 = vmatpush1.bf16.msra.mxu0 0
        %6420 = vmatprep.subr.bf16.mxu0 0
        %6421 = vmatpush1.bf16.msra.mxu0 0
        %6422 = vmatprep.subr.bf16.mxu0 0
        %6423 = vmatpush1.bf16.msra.mxu0 0
        %6424 = vmatprep.subr.bf16.mxu0 0
        %6425 = vmatpush1.bf16.msra.mxu0 0
        %6426 = vmatprep.subr.bf16.mxu0 0
        %6427 = vmatpush1.bf16.msra.mxu0 0
        %6428 = vmatprep.subr.bf16.mxu0 0
        %6429 = vmatpush1.bf16.msra.mxu0 0
        %6430 = vmatprep.subr.bf16.mxu0 0
        %6431 = vmatpush1.bf16.msra.mxu0 0
        %6432 = vmatprep.subr.bf16.mxu0 0
        %6433 = vmatpush1.bf16.msra.mxu0 0
        %6434 = vmatprep.subr.bf16.mxu0 0
        %6435 = vmatpush1.bf16.msra.mxu0 0
        %6436 = vmatprep.subr.bf16.mxu0 0
        %6437 = vmatpush1.bf16.msra.mxu0 0
        %6438 = vmatprep.subr.bf16.mxu0 0
        %6439 = vmatpush1.bf16.msra.mxu0 0
        %6440 = vmatprep.subr.bf16.mxu0 0
        %6441 = vmatpush1.bf16.msra.mxu0 0
        %6442 = vmatprep.mubr.bf16.mxu0 0
        %6443 = vmatmul.mubr.bf16.gmra.mrb[0].mxu0 %v6405
        %v6444 = vpop.f32.mrb[0].mxu0
        %v6445 = vadd.f32 0.0, %v6444
        %v6446 = vpop.f32.mrb[0].mxu0
        %v6447 = vpop.f32.mrb[0].mxu0
        %v6448 = vpop.f32.mrb[0].mxu0
        %6449 = vdwg.mxu0
        %v6450 = vpack.c.bf16 %v6445, %v6445
        %v6452 = vsel %vm1184, %v6450, 0
        %v6455 = vsel %vm1249, %v6224, 0
        %6457 = vmatprep.subr.bf16.mxu0 0
        %6458 = vmatpush1.bf16.msra.mxu0 %v6455
        %6459 = vmatprep.subr.bf16.mxu0 0
        %6460 = vmatpush1.bf16.msra.mxu0 0
        %6461 = vmatprep.subr.bf16.mxu0 0
        %6462 = vmatpush1.bf16.msra.mxu0 0
        %6463 = vmatprep.subr.bf16.mxu0 0
        %6464 = vmatpush1.bf16.msra.mxu0 0
        %6465 = vmatprep.subr.bf16.mxu0 0
        %6466 = vmatpush1.bf16.msra.mxu0 0
        %6467 = vmatprep.subr.bf16.mxu0 0
        %6468 = vmatpush1.bf16.msra.mxu0 0
        %6469 = vmatprep.subr.bf16.mxu0 0
        %6470 = vmatpush1.bf16.msra.mxu0 0
        %6471 = vmatprep.subr.bf16.mxu0 0
        %6472 = vmatpush1.bf16.msra.mxu0 0
        %6473 = vmatprep.subr.bf16.mxu0 0
        %6474 = vmatpush1.bf16.msra.mxu0 0
        %6475 = vmatprep.subr.bf16.mxu0 0
        %6476 = vmatpush1.bf16.msra.mxu0 0
        %6477 = vmatprep.subr.bf16.mxu0 0
        %6478 = vmatpush1.bf16.msra.mxu0 0
        %6479 = vmatprep.subr.bf16.mxu0 0
        %6480 = vmatpush1.bf16.msra.mxu0 0
        %6481 = vmatprep.subr.bf16.mxu0 0
        %6482 = vmatpush1.bf16.msra.mxu0 0
        %6483 = vmatprep.subr.bf16.mxu0 0
        %6484 = vmatpush1.bf16.msra.mxu0 0
        %6485 = vmatprep.subr.bf16.mxu0 0
        %6486 = vmatpush1.bf16.msra.mxu0 0
        %6487 = vmatprep.subr.bf16.mxu0 0
        %6488 = vmatpush1.bf16.msra.mxu0 0
        %6489 = vmatprep.mubr.bf16.mxu0 0
        %6490 = vmatmul.mubr.bf16.gmra.mrb[0].mxu0 %v6452
        %v6491 = vpop.f32.mrb[0].mxu0
        %v6492 = vadd.f32 0.0, %v6491
        %v6493 = vpop.f32.mrb[0].mxu0
        %v6494 = vpop.f32.mrb[0].mxu0
        %v6495 = vpop.f32.mrb[0].mxu0
        %6496 = vdwg.mxu0
        %v6498 = vsel %vm1184, %v6337, 0
        %v6501 = vsel %vm1249, %v6223, 0
        %6503 = vmatprep.subr.bf16.mxu0 0
        %6504 = vmatpush1.bf16.msra.mxu0 %v6501
        %6505 = vmatprep.subr.bf16.mxu0 0
        %6506 = vmatpush1.bf16.msra.mxu0 0
        %6507 = vmatprep.subr.bf16.mxu0 0
        %6508 = vmatpush1.bf16.msra.mxu0 0
        %6509 = vmatprep.subr.bf16.mxu0 0
        %6510 = vmatpush1.bf16.msra.mxu0 0
        %6511 = vmatprep.subr.bf16.mxu0 0
        %6512 = vmatpush1.bf16.msra.mxu0 0
        %6513 = vmatprep.subr.bf16.mxu0 0
        %6514 = vmatpush1.bf16.msra.mxu0 0
        %6515 = vmatprep.subr.bf16.mxu0 0
        %6516 = vmatpush1.bf16.msra.mxu0 0
        %6517 = vmatprep.subr.bf16.mxu0 0
        %6518 = vmatpush1.bf16.msra.mxu0 0
        %6519 = vmatprep.subr.bf16.mxu0 0
        %6520 = vmatpush1.bf16.msra.mxu0 0
        %6521 = vmatprep.subr.bf16.mxu0 0
        %6522 = vmatpush1.bf16.msra.mxu0 0
        %6523 = vmatprep.subr.bf16.mxu0 0
        %6524 = vmatpush1.bf16.msra.mxu0 0
        %6525 = vmatprep.subr.bf16.mxu0 0
        %6526 = vmatpush1.bf16.msra.mxu0 0
        %6527 = vmatprep.subr.bf16.mxu0 0
        %6528 = vmatpush1.bf16.msra.mxu0 0
        %6529 = vmatprep.subr.bf16.mxu0 0
        %6530 = vmatpush1.bf16.msra.mxu0 0
        %6531 = vmatprep.subr.bf16.mxu0 0
        %6532 = vmatpush1.bf16.msra.mxu0 0
        %6533 = vmatprep.subr.bf16.mxu0 0
        %6534 = vmatpush1.bf16.msra.mxu0 0
        %6535 = vmatprep.mubr.bf16.mxu0 0
        %6536 = vmatmul.mubr.bf16.gmra.mrb[0].mxu0 %v6498
        %v6537 = vpop.f32.mrb[0].mxu0
        %v6538 = vadd.f32 %v6492, %v6537
        %v6539 = vpop.f32.mrb[0].mxu0
        %v6540 = vpop.f32.mrb[0].mxu0
        %v6541 = vpop.f32.mrb[0].mxu0
        %6542 = vdwg.mxu0
        %6543 = vrot.lane.b32.xlu0 %v6227, 112
        %v6544 = vpop.permute.xlu0 %6543
        %6545 = vrot.lane.b32.xlu0 %v6227, 80
        %v6546 = vpop.permute.xlu0 %6545
        %v6548 = vsel %vm1184, %v6544, 0
        %v6551 = vsel %vm1184, %v6546, 0
        %6553 = vmatprep.subr.bf16.mxu0 0
        %6554 = vmatpush1.bf16.xpose.msra.mxu0 %v6551
        %6555 = vmatprep.subr.bf16.mxu0 0
        %6556 = vmatpush1.bf16.xpose.msra.mxu0 0
        %6557 = vmatprep.subr.bf16.mxu0 0
        %6558 = vmatpush1.bf16.xpose.msra.mxu0 0
        %6559 = vmatprep.subr.bf16.mxu0 0
        %6560 = vmatpush1.bf16.xpose.msra.mxu0 0
        %6561 = vmatprep.subr.bf16.mxu0 0
        %6562 = vmatpush1.bf16.xpose.msra.mxu0 0
        %6563 = vmatprep.subr.bf16.mxu0 0
        %6564 = vmatpush1.bf16.xpose.msra.mxu0 0
        %6565 = vmatprep.subr.bf16.mxu0 0
        %6566 = vmatpush1.bf16.xpose.msra.mxu0 0
        %6567 = vmatprep.subr.bf16.mxu0 0
        %6568 = vmatpush1.bf16.xpose.msra.mxu0 0
        %6569 = vmatprep.subr.bf16.mxu0 0
        %6570 = vmatpush1.bf16.xpose.msra.mxu0 0
        %6571 = vmatprep.subr.bf16.mxu0 0
        %6572 = vmatpush1.bf16.xpose.msra.mxu0 0
        %6573 = vmatprep.subr.bf16.mxu0 0
        %6574 = vmatpush1.bf16.xpose.msra.mxu0 0
        %6575 = vmatprep.subr.bf16.mxu0 0
        %6576 = vmatpush1.bf16.xpose.msra.mxu0 0
        %6577 = vmatprep.subr.bf16.mxu0 0
        %6578 = vmatpush1.bf16.xpose.msra.mxu0 0
        %6579 = vmatprep.subr.bf16.mxu0 0
        %6580 = vmatpush1.bf16.xpose.msra.mxu0 0
        %6581 = vmatprep.subr.bf16.mxu0 0
        %6582 = vmatpush1.bf16.xpose.msra.mxu0 0
        %6583 = vmatprep.subr.bf16.mxu0 0
        %6584 = vmatpush1.bf16.xpose.msra.mxu0 0
        %6585 = vmatprep.mubr.bf16.mxu0 0
        %6586 = vmatmul.mubr.bf16.gmra.mrb[0].mxu0 %v6548
        %v6587 = vpop.f32.mrb[0].mxu0
        %v6588 = vadd.f32 0.0, %v6587
        %v6589 = vpop.f32.mrb[0].mxu0
        %v6590 = vpop.f32.mrb[0].mxu0
        %v6591 = vpop.f32.mrb[0].mxu0
        %6592 = vdwg.mxu0
        %v6593 = vmul.f32 %v6588, 0.35355338
        %v6594 = vsel %vm1184, %v6593, -inf
        %6595 = vmax.xlane.f32.xlu0 %v6594
        %v6596 = vpop.xlane.xlu0 %6595
        %v6597 = vsub.f32 %v6593, %v6596
        %v6598 = vmul.f32 %v6597, 1.442695
        %v6599 = vpow.pop %v6598
        %v6600 = vsel %vm1184, %v6599, 0.0
        %6601 = vadd.xlane.f32.xlu0 %v6600
        %v6602 = vpop.xlane.xlu0 %6601
        %v6603 = vrcp.pop %v6602
        %v6604 = vmul.f32 %v6599, %v6603
        %v6605 = vpack.c.bf16 %v6604, %v6604
        %6606 = vrot.lane.b32.xlu0 %v6290, 112
        %v6607 = vpop.permute.xlu0 %6606
        %v6609 = vsel %vm1184, %v6605, 0
        %v6612 = vsel %vm1249, %v6607, 0
        %6614 = vmatprep.subr.bf16.mxu0 0
        %6615 = vmatpush1.bf16.msra.mxu0 %v6612
        %6616 = vmatprep.subr.bf16.mxu0 0
        %6617 = vmatpush1.bf16.msra.mxu0 0
        %6618 = vmatprep.subr.bf16.mxu0 0
        %6619 = vmatpush1.bf16.msra.mxu0 0
        %6620 = vmatprep.subr.bf16.mxu0 0
        %6621 = vmatpush1.bf16.msra.mxu0 0
        %6622 = vmatprep.subr.bf16.mxu0 0
        %6623 = vmatpush1.bf16.msra.mxu0 0
        %6624 = vmatprep.subr.bf16.mxu0 0
        %6625 = vmatpush1.bf16.msra.mxu0 0
        %6626 = vmatprep.subr.bf16.mxu0 0
        %6627 = vmatpush1.bf16.msra.mxu0 0
        %6628 = vmatprep.subr.bf16.mxu0 0
        %6629 = vmatpush1.bf16.msra.mxu0 0
        %6630 = vmatprep.subr.bf16.mxu0 0
        %6631 = vmatpush1.bf16.msra.mxu0 0
        %6632 = vmatprep.subr.bf16.mxu0 0
        %6633 = vmatpush1.bf16.msra.mxu0 0
        %6634 = vmatprep.subr.bf16.mxu0 0
        %6635 = vmatpush1.bf16.msra.mxu0 0
        %6636 = vmatprep.subr.bf16.mxu0 0
        %6637 = vmatpush1.bf16.msra.mxu0 0
        %6638 = vmatprep.subr.bf16.mxu0 0
        %6639 = vmatpush1.bf16.msra.mxu0 0
        %6640 = vmatprep.subr.bf16.mxu0 0
        %6641 = vmatpush1.bf16.msra.mxu0 0
        %6642 = vmatprep.subr.bf16.mxu0 0
        %6643 = vmatpush1.bf16.msra.mxu0 0
        %6644 = vmatprep.subr.bf16.mxu0 0
        %6645 = vmatpush1.bf16.msra.mxu0 0
        %6646 = vmatprep.mubr.bf16.mxu0 0
        %6647 = vmatmul.mubr.bf16.gmra.mrb[0].mxu0 %v6609
        %v6648 = vpop.f32.mrb[0].mxu0
        %v6649 = vadd.f32 0.0, %v6648
        %v6650 = vpop.f32.mrb[0].mxu0
        %v6651 = vpop.f32.mrb[0].mxu0
        %v6652 = vpop.f32.mrb[0].mxu0
        %6653 = vdwg.mxu0
        %v6654 = vpack.c.bf16 %v6649, %v6649
        %v6656 = vsel %vm1184, %v6654, 0
        %v6659 = vsel %vm1249, %v6225, 0
        %6661 = vmatprep.subr.bf16.mxu0 0
        %6662 = vmatpush1.bf16.msra.mxu0 %v6659
        %6663 = vmatprep.subr.bf16.mxu0 0
        %6664 = vmatpush1.bf16.msra.mxu0 0
        %6665 = vmatprep.subr.bf16.mxu0 0
        %6666 = vmatpush1.bf16.msra.mxu0 0
        %6667 = vmatprep.subr.bf16.mxu0 0
        %6668 = vmatpush1.bf16.msra.mxu0 0
        %6669 = vmatprep.subr.bf16.mxu0 0
        %6670 = vmatpush1.bf16.msra.mxu0 0
        %6671 = vmatprep.subr.bf16.mxu0 0
        %6672 = vmatpush1.bf16.msra.mxu0 0
        %6673 = vmatprep.subr.bf16.mxu0 0
        %6674 = vmatpush1.bf16.msra.mxu0 0
        %6675 = vmatprep.subr.bf16.mxu0 0
        %6676 = vmatpush1.bf16.msra.mxu0 0
        %6677 = vmatprep.subr.bf16.mxu0 0
        %6678 = vmatpush1.bf16.msra.mxu0 0
        %6679 = vmatprep.subr.bf16.mxu0 0
        %6680 = vmatpush1.bf16.msra.mxu0 0
        %6681 = vmatprep.subr.bf16.mxu0 0
        %6682 = vmatpush1.bf16.msra.mxu0 0
        %6683 = vmatprep.subr.bf16.mxu0 0
        %6684 = vmatpush1.bf16.msra.mxu0 0
        %6685 = vmatprep.subr.bf16.mxu0 0
        %6686 = vmatpush1.bf16.msra.mxu0 0
        %6687 = vmatprep.subr.bf16.mxu0 0
        %6688 = vmatpush1.bf16.msra.mxu0 0
        %6689 = vmatprep.subr.bf16.mxu0 0
        %6690 = vmatpush1.bf16.msra.mxu0 0
        %6691 = vmatprep.subr.bf16.mxu0 0
        %6692 = vmatpush1.bf16.msra.mxu0 0
        %6693 = vmatprep.mubr.bf16.mxu0 0
        %6694 = vmatmul.mubr.bf16.gmra.mrb[0].mxu0 %v6656
        %v6695 = vpop.f32.mrb[0].mxu0
        %v6696 = vadd.f32 0.0, %v6695
        %v6697 = vpop.f32.mrb[0].mxu0
        %v6698 = vpop.f32.mrb[0].mxu0
        %v6699 = vpop.f32.mrb[0].mxu0
        %6700 = vdwg.mxu0
        %v6701 = vadd.f32 %v6538, %v6696
        %6702 = vrot.lane.b32.xlu0 %v6227, 104
        %v6703 = vpop.permute.xlu0 %6702
        %6704 = vrot.lane.b32.xlu0 %v6227, 72
        %v6705 = vpop.permute.xlu0 %6704
        %v6707 = vsel %vm1184, %v6703, 0
        %v6710 = vsel %vm1184, %v6705, 0
        %6712 = vmatprep.subr.bf16.mxu0 0
        %6713 = vmatpush1.bf16.xpose.msra.mxu0 %v6710
        %6714 = vmatprep.subr.bf16.mxu0 0
        %6715 = vmatpush1.bf16.xpose.msra.mxu0 0
        %6716 = vmatprep.subr.bf16.mxu0 0
        %6717 = vmatpush1.bf16.xpose.msra.mxu0 0
        %6718 = vmatprep.subr.bf16.mxu0 0
        %6719 = vmatpush1.bf16.xpose.msra.mxu0 0
        %6720 = vmatprep.subr.bf16.mxu0 0
        %6721 = vmatpush1.bf16.xpose.msra.mxu0 0
        %6722 = vmatprep.subr.bf16.mxu0 0
        %6723 = vmatpush1.bf16.xpose.msra.mxu0 0
        %6724 = vmatprep.subr.bf16.mxu0 0
        %6725 = vmatpush1.bf16.xpose.msra.mxu0 0
        %6726 = vmatprep.subr.bf16.mxu0 0
        %6727 = vmatpush1.bf16.xpose.msra.mxu0 0
        %6728 = vmatprep.subr.bf16.mxu0 0
        %6729 = vmatpush1.bf16.xpose.msra.mxu0 0
        %6730 = vmatprep.subr.bf16.mxu0 0
        %6731 = vmatpush1.bf16.xpose.msra.mxu0 0
        %6732 = vmatprep.subr.bf16.mxu0 0
        %6733 = vmatpush1.bf16.xpose.msra.mxu0 0
        %6734 = vmatprep.subr.bf16.mxu0 0
        %6735 = vmatpush1.bf16.xpose.msra.mxu0 0
        %6736 = vmatprep.subr.bf16.mxu0 0
        %6737 = vmatpush1.bf16.xpose.msra.mxu0 0
        %6738 = vmatprep.subr.bf16.mxu0 0
        %6739 = vmatpush1.bf16.xpose.msra.mxu0 0
        %6740 = vmatprep.subr.bf16.mxu0 0
        %6741 = vmatpush1.bf16.xpose.msra.mxu0 0
        %6742 = vmatprep.subr.bf16.mxu0 0
        %6743 = vmatpush1.bf16.xpose.msra.mxu0 0
        %6744 = vmatprep.mubr.bf16.mxu0 0
        %6745 = vmatmul.mubr.bf16.gmra.mrb[0].mxu0 %v6707
        %v6746 = vpop.f32.mrb[0].mxu0
        %v6747 = vadd.f32 0.0, %v6746
        %v6748 = vpop.f32.mrb[0].mxu0
        %v6749 = vpop.f32.mrb[0].mxu0
        %v6750 = vpop.f32.mrb[0].mxu0
        %6751 = vdwg.mxu0
        %v6752 = vmul.f32 %v6747, 0.35355338
        %v6753 = vsel %vm1184, %v6752, -inf
        %6754 = vmax.xlane.f32.xlu0 %v6753
        %v6755 = vpop.xlane.xlu0 %6754
        %v6756 = vsub.f32 %v6752, %v6755
        %v6757 = vmul.f32 %v6756, 1.442695
        %v6758 = vpow.pop %v6757
        %v6759 = vsel %vm1184, %v6758, 0.0
        %6760 = vadd.xlane.f32.xlu0 %v6759
        %v6761 = vpop.xlane.xlu0 %6760
        %v6762 = vrcp.pop %v6761
        %v6763 = vmul.f32 %v6758, %v6762
        %v6764 = vpack.c.bf16 %v6763, %v6763
        %6765 = vrot.lane.b32.xlu0 %v6290, 104
        %v6766 = vpop.permute.xlu0 %6765
        %v6768 = vsel %vm1184, %v6764, 0
        %v6771 = vsel %vm1249, %v6766, 0
        %6773 = vmatprep.subr.bf16.mxu0 0
        %6774 = vmatpush1.bf16.msra.mxu0 %v6771
        %6775 = vmatprep.subr.bf16.mxu0 0
        %6776 = vmatpush1.bf16.msra.mxu0 0
        %6777 = vmatprep.subr.bf16.mxu0 0
        %6778 = vmatpush1.bf16.msra.mxu0 0
        %6779 = vmatprep.subr.bf16.mxu0 0
        %6780 = vmatpush1.bf16.msra.mxu0 0
        %6781 = vmatprep.subr.bf16.mxu0 0
        %6782 = vmatpush1.bf16.msra.mxu0 0
        %6783 = vmatprep.subr.bf16.mxu0 0
        %6784 = vmatpush1.bf16.msra.mxu0 0
        %6785 = vmatprep.subr.bf16.mxu0 0
        %6786 = vmatpush1.bf16.msra.mxu0 0
        %6787 = vmatprep.subr.bf16.mxu0 0
        %6788 = vmatpush1.bf16.msra.mxu0 0
        %6789 = vmatprep.subr.bf16.mxu0 0
        %6790 = vmatpush1.bf16.msra.mxu0 0
        %6791 = vmatprep.subr.bf16.mxu0 0
        %6792 = vmatpush1.bf16.msra.mxu0 0
        %6793 = vmatprep.subr.bf16.mxu0 0
        %6794 = vmatpush1.bf16.msra.mxu0 0
        %6795 = vmatprep.subr.bf16.mxu0 0
        %6796 = vmatpush1.bf16.msra.mxu0 0
        %6797 = vmatprep.subr.bf16.mxu0 0
        %6798 = vmatpush1.bf16.msra.mxu0 0
        %6799 = vmatprep.subr.bf16.mxu0 0
        %6800 = vmatpush1.bf16.msra.mxu0 0
        %6801 = vmatprep.subr.bf16.mxu0 0
        %6802 = vmatpush1.bf16.msra.mxu0 0
        %6803 = vmatprep.subr.bf16.mxu0 0
        %6804 = vmatpush1.bf16.msra.mxu0 0
        %6805 = vmatprep.mubr.bf16.mxu0 0
        %6806 = vmatmul.mubr.bf16.gmra.mrb[0].mxu0 %v6768
        %v6807 = vpop.f32.mrb[0].mxu0
        %v6808 = vadd.f32 0.0, %v6807
        %v6809 = vpop.f32.mrb[0].mxu0
        %v6810 = vpop.f32.mrb[0].mxu0
        %v6811 = vpop.f32.mrb[0].mxu0
        %6812 = vdwg.mxu0
        %v6813 = vpack.c.bf16 %v6808, %v6808
        %v6815 = vsel %vm1184, %v6813, 0
        %v6818 = vsel %vm1249, %v6226, 0
        %6820 = vmatprep.subr.bf16.mxu0 0
        %6821 = vmatpush1.bf16.msra.mxu0 %v6818
        %6822 = vmatprep.subr.bf16.mxu0 0
        %6823 = vmatpush1.bf16.msra.mxu0 0
        %6824 = vmatprep.subr.bf16.mxu0 0
        %6825 = vmatpush1.bf16.msra.mxu0 0
        %6826 = vmatprep.subr.bf16.mxu0 0
        %6827 = vmatpush1.bf16.msra.mxu0 0
        %6828 = vmatprep.subr.bf16.mxu0 0
        %6829 = vmatpush1.bf16.msra.mxu0 0
        %6830 = vmatprep.subr.bf16.mxu0 0
        %6831 = vmatpush1.bf16.msra.mxu0 0
        %6832 = vmatprep.subr.bf16.mxu0 0
        %6833 = vmatpush1.bf16.msra.mxu0 0
        %6834 = vmatprep.subr.bf16.mxu0 0
        %6835 = vmatpush1.bf16.msra.mxu0 0
        %6836 = vmatprep.subr.bf16.mxu0 0
        %6837 = vmatpush1.bf16.msra.mxu0 0
        %6838 = vmatprep.subr.bf16.mxu0 0
        %6839 = vmatpush1.bf16.msra.mxu0 0
        %6840 = vmatprep.subr.bf16.mxu0 0
        %6841 = vmatpush1.bf16.msra.mxu0 0
        %6842 = vmatprep.subr.bf16.mxu0 0
        %6843 = vmatpush1.bf16.msra.mxu0 0
        %6844 = vmatprep.subr.bf16.mxu0 0
        %6845 = vmatpush1.bf16.msra.mxu0 0
        %6846 = vmatprep.subr.bf16.mxu0 0
        %6847 = vmatpush1.bf16.msra.mxu0 0
        %6848 = vmatprep.subr.bf16.mxu0 0
        %6849 = vmatpush1.bf16.msra.mxu0 0
        %6850 = vmatprep.subr.bf16.mxu0 0
        %6851 = vmatpush1.bf16.msra.mxu0 0
        %6852 = vmatprep.mubr.bf16.mxu0 0
        %6853 = vmatmul.mubr.bf16.gmra.mrb[0].mxu0 %v6815
        %v6854 = vpop.f32.mrb[0].mxu0
        %v6855 = vadd.f32 0.0, %v6854
        %v6856 = vpop.f32.mrb[0].mxu0
        %v6857 = vpop.f32.mrb[0].mxu0
        %v6858 = vpop.f32.mrb[0].mxu0
        %6859 = vdwg.mxu0
        %v6860 = vadd.f32 %v6701, %v6855
        %v6861 = vpack.c.bf16 %v6165, %v6165
        %6863 = vrot.lane.b32.xlu0 %v6861, 96
        %v6864 = vpop.permute.xlu0 %6863
        %v6866 = vsel %vm1184, %v6861, 0
        %v6869 = vsel %vm1184, %v6864, 0
        %6871 = vmatprep.subr.bf16.mxu0 0
        %6872 = vmatpush1.bf16.xpose.msra.mxu0 %v6869
        %6873 = vmatprep.subr.bf16.mxu0 0
        %6874 = vmatpush1.bf16.xpose.msra.mxu0 0
        %6875 = vmatprep.subr.bf16.mxu0 0
        %6876 = vmatpush1.bf16.xpose.msra.mxu0 0
        %6877 = vmatprep.subr.bf16.mxu0 0
        %6878 = vmatpush1.bf16.xpose.msra.mxu0 0
        %6879 = vmatprep.subr.bf16.mxu0 0
        %6880 = vmatpush1.bf16.xpose.msra.mxu0 0
        %6881 = vmatprep.subr.bf16.mxu0 0
        %6882 = vmatpush1.bf16.xpose.msra.mxu0 0
        %6883 = vmatprep.subr.bf16.mxu0 0
        %6884 = vmatpush1.bf16.xpose.msra.mxu0 0
        %6885 = vmatprep.subr.bf16.mxu0 0
        %6886 = vmatpush1.bf16.xpose.msra.mxu0 0
        %6887 = vmatprep.subr.bf16.mxu0 0
        %6888 = vmatpush1.bf16.xpose.msra.mxu0 0
        %6889 = vmatprep.subr.bf16.mxu0 0
        %6890 = vmatpush1.bf16.xpose.msra.mxu0 0
        %6891 = vmatprep.subr.bf16.mxu0 0
        %6892 = vmatpush1.bf16.xpose.msra.mxu0 0
        %6893 = vmatprep.subr.bf16.mxu0 0
        %6894 = vmatpush1.bf16.xpose.msra.mxu0 0
        %6895 = vmatprep.subr.bf16.mxu0 0
        %6896 = vmatpush1.bf16.xpose.msra.mxu0 0
        %6897 = vmatprep.subr.bf16.mxu0 0
        %6898 = vmatpush1.bf16.xpose.msra.mxu0 0
        %6899 = vmatprep.subr.bf16.mxu0 0
        %6900 = vmatpush1.bf16.xpose.msra.mxu0 0
        %6901 = vmatprep.subr.bf16.mxu0 0
        %6902 = vmatpush1.bf16.xpose.msra.mxu0 0
        %6903 = vmatprep.mubr.bf16.mxu0 0
        %6904 = vmatmul.mubr.bf16.gmra.mrb[0].mxu0 %v6866
        %v6905 = vpop.f32.mrb[0].mxu0
        %v6906 = vadd.f32 0.0, %v6905
        %v6907 = vpop.f32.mrb[0].mxu0
        %v6908 = vpop.f32.mrb[0].mxu0
        %v6909 = vpop.f32.mrb[0].mxu0
        %6910 = vdwg.mxu0
        %v6911 = vmul.f32 %v6906, 0.35355338
        %v6912 = vsel %vm1184, %v6911, -inf
        %6913 = vmax.xlane.f32.xlu0 %v6912
        %v6914 = vpop.xlane.xlu0 %6913
        %v6915 = vsub.f32 %v6911, %v6914
        %v6916 = vmul.f32 %v6915, 1.442695
        %v6917 = vpow.pop %v6916
        %v6918 = vsel %vm1184, %v6917, 0.0
        %6919 = vadd.xlane.f32.xlu0 %v6918
        %v6920 = vpop.xlane.xlu0 %6919
        %v6921 = vrcp.pop %v6920
        %v6922 = vmul.f32 %v6917, %v6921
        %v6923 = vpack.c.bf16 %v6922, %v6922
        %v6924 = vpack.c.bf16 %v6219, %v6219
        %v6926 = vsel %vm1184, %v6923, 0
        %v6929 = vsel %vm1249, %v6924, 0
        %6931 = vmatprep.subr.bf16.mxu0 0
        %6932 = vmatpush1.bf16.msra.mxu0 %v6929
        %6933 = vmatprep.subr.bf16.mxu0 0
        %6934 = vmatpush1.bf16.msra.mxu0 0
        %6935 = vmatprep.subr.bf16.mxu0 0
        %6936 = vmatpush1.bf16.msra.mxu0 0
        %6937 = vmatprep.subr.bf16.mxu0 0
        %6938 = vmatpush1.bf16.msra.mxu0 0
        %6939 = vmatprep.subr.bf16.mxu0 0
        %6940 = vmatpush1.bf16.msra.mxu0 0
        %6941 = vmatprep.subr.bf16.mxu0 0
        %6942 = vmatpush1.bf16.msra.mxu0 0
        %6943 = vmatprep.subr.bf16.mxu0 0
        %6944 = vmatpush1.bf16.msra.mxu0 0
        %6945 = vmatprep.subr.bf16.mxu0 0
        %6946 = vmatpush1.bf16.msra.mxu0 0
        %6947 = vmatprep.subr.bf16.mxu0 0
        %6948 = vmatpush1.bf16.msra.mxu0 0
        %6949 = vmatprep.subr.bf16.mxu0 0
        %6950 = vmatpush1.bf16.msra.mxu0 0
        %6951 = vmatprep.subr.bf16.mxu0 0
        %6952 = vmatpush1.bf16.msra.mxu0 0
        %6953 = vmatprep.subr.bf16.mxu0 0
        %6954 = vmatpush1.bf16.msra.mxu0 0
        %6955 = vmatprep.subr.bf16.mxu0 0
        %6956 = vmatpush1.bf16.msra.mxu0 0
        %6957 = vmatprep.subr.bf16.mxu0 0
        %6958 = vmatpush1.bf16.msra.mxu0 0
        %6959 = vmatprep.subr.bf16.mxu0 0
        %6960 = vmatpush1.bf16.msra.mxu0 0
        %6961 = vmatprep.subr.bf16.mxu0 0
        %6962 = vmatpush1.bf16.msra.mxu0 0
        %6963 = vmatprep.mubr.bf16.mxu0 0
        %6964 = vmatmul.mubr.bf16.gmra.mrb[0].mxu0 %v6926
        %v6965 = vpop.f32.mrb[0].mxu0
        %v6966 = vadd.f32 0.0, %v6965
        %v6967 = vpop.f32.mrb[0].mxu0
        %v6968 = vpop.f32.mrb[0].mxu0
        %v6969 = vpop.f32.mrb[0].mxu0
        %6970 = vdwg.mxu0
        %v6971 = vpack.c.bf16 %v6966, %v6966
        %6972 = vrot.lane.b32.xlu0 %v6861, 120
        %v6973 = vpop.permute.xlu0 %6972
        %6974 = vrot.lane.b32.xlu0 %v6861, 88
        %v6975 = vpop.permute.xlu0 %6974
        %v6977 = vsel %vm1184, %v6973, 0
        %v6980 = vsel %vm1184, %v6975, 0
        %6982 = vmatprep.subr.bf16.mxu0 0
        %6983 = vmatpush1.bf16.xpose.msra.mxu0 %v6980
        %6984 = vmatprep.subr.bf16.mxu0 0
        %6985 = vmatpush1.bf16.xpose.msra.mxu0 0
        %6986 = vmatprep.subr.bf16.mxu0 0
        %6987 = vmatpush1.bf16.xpose.msra.mxu0 0
        %6988 = vmatprep.subr.bf16.mxu0 0
        %6989 = vmatpush1.bf16.xpose.msra.mxu0 0
        %6990 = vmatprep.subr.bf16.mxu0 0
        %6991 = vmatpush1.bf16.xpose.msra.mxu0 0
        %6992 = vmatprep.subr.bf16.mxu0 0
        %6993 = vmatpush1.bf16.xpose.msra.mxu0 0
        %6994 = vmatprep.subr.bf16.mxu0 0
        %6995 = vmatpush1.bf16.xpose.msra.mxu0 0
        %6996 = vmatprep.subr.bf16.mxu0 0
        %6997 = vmatpush1.bf16.xpose.msra.mxu0 0
        %6998 = vmatprep.subr.bf16.mxu0 0
        %6999 = vmatpush1.bf16.xpose.msra.mxu0 0
        %7000 = vmatprep.subr.bf16.mxu0 0
        %7001 = vmatpush1.bf16.xpose.msra.mxu0 0
        %7002 = vmatprep.subr.bf16.mxu0 0
        %7003 = vmatpush1.bf16.xpose.msra.mxu0 0
        %7004 = vmatprep.subr.bf16.mxu0 0
        %7005 = vmatpush1.bf16.xpose.msra.mxu0 0
        %7006 = vmatprep.subr.bf16.mxu0 0
        %7007 = vmatpush1.bf16.xpose.msra.mxu0 0
        %7008 = vmatprep.subr.bf16.mxu0 0
        %7009 = vmatpush1.bf16.xpose.msra.mxu0 0
        %7010 = vmatprep.subr.bf16.mxu0 0
        %7011 = vmatpush1.bf16.xpose.msra.mxu0 0
        %7012 = vmatprep.subr.bf16.mxu0 0
        %7013 = vmatpush1.bf16.xpose.msra.mxu0 0
        %7014 = vmatprep.mubr.bf16.mxu0 0
        %7015 = vmatmul.mubr.bf16.gmra.mrb[0].mxu0 %v6977
        %v7016 = vpop.f32.mrb[0].mxu0
        %v7017 = vadd.f32 0.0, %v7016
        %v7018 = vpop.f32.mrb[0].mxu0
        %v7019 = vpop.f32.mrb[0].mxu0
        %v7020 = vpop.f32.mrb[0].mxu0
        %7021 = vdwg.mxu0
        %v7022 = vmul.f32 %v7017, 0.35355338
        %v7023 = vsel %vm1184, %v7022, -inf
        %7024 = vmax.xlane.f32.xlu0 %v7023
        %v7025 = vpop.xlane.xlu0 %7024
        %v7026 = vsub.f32 %v7022, %v7025
        %v7027 = vmul.f32 %v7026, 1.442695
        %v7028 = vpow.pop %v7027
        %v7029 = vsel %vm1184, %v7028, 0.0
        %7030 = vadd.xlane.f32.xlu0 %v7029
        %v7031 = vpop.xlane.xlu0 %7030
        %v7032 = vrcp.pop %v7031
        %v7033 = vmul.f32 %v7028, %v7032
        %v7034 = vpack.c.bf16 %v7033, %v7033
        %7036 = vrot.lane.b32.xlu0 %v6924, 120
        %v7037 = vpop.permute.xlu0 %7036
        %v7039 = vsel %vm1184, %v7034, 0
        %v7042 = vsel %vm1249, %v7037, 0
        %7044 = vmatprep.subr.bf16.mxu0 0
        %7045 = vmatpush1.bf16.msra.mxu0 %v7042
        %7046 = vmatprep.subr.bf16.mxu0 0
        %7047 = vmatpush1.bf16.msra.mxu0 0
        %7048 = vmatprep.subr.bf16.mxu0 0
        %7049 = vmatpush1.bf16.msra.mxu0 0
        %7050 = vmatprep.subr.bf16.mxu0 0
        %7051 = vmatpush1.bf16.msra.mxu0 0
        %7052 = vmatprep.subr.bf16.mxu0 0
        %7053 = vmatpush1.bf16.msra.mxu0 0
        %7054 = vmatprep.subr.bf16.mxu0 0
        %7055 = vmatpush1.bf16.msra.mxu0 0
        %7056 = vmatprep.subr.bf16.mxu0 0
        %7057 = vmatpush1.bf16.msra.mxu0 0
        %7058 = vmatprep.subr.bf16.mxu0 0
        %7059 = vmatpush1.bf16.msra.mxu0 0
        %7060 = vmatprep.subr.bf16.mxu0 0
        %7061 = vmatpush1.bf16.msra.mxu0 0
        %7062 = vmatprep.subr.bf16.mxu0 0
        %7063 = vmatpush1.bf16.msra.mxu0 0
        %7064 = vmatprep.subr.bf16.mxu0 0
        %7065 = vmatpush1.bf16.msra.mxu0 0
        %7066 = vmatprep.subr.bf16.mxu0 0
        %7067 = vmatpush1.bf16.msra.mxu0 0
        %7068 = vmatprep.subr.bf16.mxu0 0
        %7069 = vmatpush1.bf16.msra.mxu0 0
        %7070 = vmatprep.subr.bf16.mxu0 0
        %7071 = vmatpush1.bf16.msra.mxu0 0
        %7072 = vmatprep.subr.bf16.mxu0 0
        %7073 = vmatpush1.bf16.msra.mxu0 0
        %7074 = vmatprep.subr.bf16.mxu0 0
        %7075 = vmatpush1.bf16.msra.mxu0 0
        %7076 = vmatprep.mubr.bf16.mxu0 0
        %7077 = vmatmul.mubr.bf16.gmra.mrb[0].mxu0 %v7039
        %v7078 = vpop.f32.mrb[0].mxu0
        %v7079 = vadd.f32 0.0, %v7078
        %v7080 = vpop.f32.mrb[0].mxu0
        %v7081 = vpop.f32.mrb[0].mxu0
        %v7082 = vpop.f32.mrb[0].mxu0
        %7083 = vdwg.mxu0
        %v7084 = vpack.c.bf16 %v7079, %v7079
        %v7086 = vsel %vm1184, %v7084, 0
        %7088 = vmatprep.subr.bf16.mxu0 0
        %7089 = vmatpush1.bf16.msra.mxu0 %v6455
        %7090 = vmatprep.subr.bf16.mxu0 0
        %7091 = vmatpush1.bf16.msra.mxu0 0
        %7092 = vmatprep.subr.bf16.mxu0 0
        %7093 = vmatpush1.bf16.msra.mxu0 0
        %7094 = vmatprep.subr.bf16.mxu0 0
        %7095 = vmatpush1.bf16.msra.mxu0 0
        %7096 = vmatprep.subr.bf16.mxu0 0
        %7097 = vmatpush1.bf16.msra.mxu0 0
        %7098 = vmatprep.subr.bf16.mxu0 0
        %7099 = vmatpush1.bf16.msra.mxu0 0
        %7100 = vmatprep.subr.bf16.mxu0 0
        %7101 = vmatpush1.bf16.msra.mxu0 0
        %7102 = vmatprep.subr.bf16.mxu0 0
        %7103 = vmatpush1.bf16.msra.mxu0 0
        %7104 = vmatprep.subr.bf16.mxu0 0
        %7105 = vmatpush1.bf16.msra.mxu0 0
        %7106 = vmatprep.subr.bf16.mxu0 0
        %7107 = vmatpush1.bf16.msra.mxu0 0
        %7108 = vmatprep.subr.bf16.mxu0 0
        %7109 = vmatpush1.bf16.msra.mxu0 0
        %7110 = vmatprep.subr.bf16.mxu0 0
        %7111 = vmatpush1.bf16.msra.mxu0 0
        %7112 = vmatprep.subr.bf16.mxu0 0
        %7113 = vmatpush1.bf16.msra.mxu0 0
        %7114 = vmatprep.subr.bf16.mxu0 0
        %7115 = vmatpush1.bf16.msra.mxu0 0
        %7116 = vmatprep.subr.bf16.mxu0 0
        %7117 = vmatpush1.bf16.msra.mxu0 0
        %7118 = vmatprep.subr.bf16.mxu0 0
        %7119 = vmatpush1.bf16.msra.mxu0 0
        %7120 = vmatprep.mubr.bf16.mxu0 0
        %7121 = vmatmul.mubr.bf16.gmra.mrb[0].mxu0 %v7086
        %v7122 = vpop.f32.mrb[0].mxu0
        %v7123 = vadd.f32 0.0, %v7122
        %v7124 = vpop.f32.mrb[0].mxu0
        %v7125 = vpop.f32.mrb[0].mxu0
        %v7126 = vpop.f32.mrb[0].mxu0
        %7127 = vdwg.mxu0
        %v7129 = vsel %vm1184, %v6971, 0
        %7131 = vmatprep.subr.bf16.mxu0 0
        %7132 = vmatpush1.bf16.msra.mxu0 %v6501
        %7133 = vmatprep.subr.bf16.mxu0 0
        %7134 = vmatpush1.bf16.msra.mxu0 0
        %7135 = vmatprep.subr.bf16.mxu0 0
        %7136 = vmatpush1.bf16.msra.mxu0 0
        %7137 = vmatprep.subr.bf16.mxu0 0
        %7138 = vmatpush1.bf16.msra.mxu0 0
        %7139 = vmatprep.subr.bf16.mxu0 0
        %7140 = vmatpush1.bf16.msra.mxu0 0
        %7141 = vmatprep.subr.bf16.mxu0 0
        %7142 = vmatpush1.bf16.msra.mxu0 0
        %7143 = vmatprep.subr.bf16.mxu0 0
        %7144 = vmatpush1.bf16.msra.mxu0 0
        %7145 = vmatprep.subr.bf16.mxu0 0
        %7146 = vmatpush1.bf16.msra.mxu0 0
        %7147 = vmatprep.subr.bf16.mxu0 0
        %7148 = vmatpush1.bf16.msra.mxu0 0
        %7149 = vmatprep.subr.bf16.mxu0 0
        %7150 = vmatpush1.bf16.msra.mxu0 0
        %7151 = vmatprep.subr.bf16.mxu0 0
        %7152 = vmatpush1.bf16.msra.mxu0 0
        %7153 = vmatprep.subr.bf16.mxu0 0
        %7154 = vmatpush1.bf16.msra.mxu0 0
        %7155 = vmatprep.subr.bf16.mxu0 0
        %7156 = vmatpush1.bf16.msra.mxu0 0
        %7157 = vmatprep.subr.bf16.mxu0 0
        %7158 = vmatpush1.bf16.msra.mxu0 0
        %7159 = vmatprep.subr.bf16.mxu0 0
        %7160 = vmatpush1.bf16.msra.mxu0 0
        %7161 = vmatprep.subr.bf16.mxu0 0
        %7162 = vmatpush1.bf16.msra.mxu0 0
        %7163 = vmatprep.mubr.bf16.mxu0 0
        %7164 = vmatmul.mubr.bf16.gmra.mrb[0].mxu0 %v7129
        %v7165 = vpop.f32.mrb[0].mxu0
        %v7166 = vadd.f32 %v7123, %v7165
        %v7167 = vpop.f32.mrb[0].mxu0
        %v7168 = vpop.f32.mrb[0].mxu0
        %v7169 = vpop.f32.mrb[0].mxu0
        %7170 = vdwg.mxu0
        %7171 = vrot.lane.b32.xlu0 %v6861, 112
        %v7172 = vpop.permute.xlu0 %7171
        %7173 = vrot.lane.b32.xlu0 %v6861, 80
        %v7174 = vpop.permute.xlu0 %7173
        %v7176 = vsel %vm1184, %v7172, 0
        %v7179 = vsel %vm1184, %v7174, 0
        %7181 = vmatprep.subr.bf16.mxu0 0
        %7182 = vmatpush1.bf16.xpose.msra.mxu0 %v7179
        %7183 = vmatprep.subr.bf16.mxu0 0
        %7184 = vmatpush1.bf16.xpose.msra.mxu0 0
        %7185 = vmatprep.subr.bf16.mxu0 0
        %7186 = vmatpush1.bf16.xpose.msra.mxu0 0
        %7187 = vmatprep.subr.bf16.mxu0 0
        %7188 = vmatpush1.bf16.xpose.msra.mxu0 0
        %7189 = vmatprep.subr.bf16.mxu0 0
        %7190 = vmatpush1.bf16.xpose.msra.mxu0 0
        %7191 = vmatprep.subr.bf16.mxu0 0
        %7192 = vmatpush1.bf16.xpose.msra.mxu0 0
        %7193 = vmatprep.subr.bf16.mxu0 0
        %7194 = vmatpush1.bf16.xpose.msra.mxu0 0
        %7195 = vmatprep.subr.bf16.mxu0 0
        %7196 = vmatpush1.bf16.xpose.msra.mxu0 0
        %7197 = vmatprep.subr.bf16.mxu0 0
        %7198 = vmatpush1.bf16.xpose.msra.mxu0 0
        %7199 = vmatprep.subr.bf16.mxu0 0
        %7200 = vmatpush1.bf16.xpose.msra.mxu0 0
        %7201 = vmatprep.subr.bf16.mxu0 0
        %7202 = vmatpush1.bf16.xpose.msra.mxu0 0
        %7203 = vmatprep.subr.bf16.mxu0 0
        %7204 = vmatpush1.bf16.xpose.msra.mxu0 0
        %7205 = vmatprep.subr.bf16.mxu0 0
        %7206 = vmatpush1.bf16.xpose.msra.mxu0 0
        %7207 = vmatprep.subr.bf16.mxu0 0
        %7208 = vmatpush1.bf16.xpose.msra.mxu0 0
        %7209 = vmatprep.subr.bf16.mxu0 0
        %7210 = vmatpush1.bf16.xpose.msra.mxu0 0
        %7211 = vmatprep.subr.bf16.mxu0 0
        %7212 = vmatpush1.bf16.xpose.msra.mxu0 0
        %7213 = vmatprep.mubr.bf16.mxu0 0
        %7214 = vmatmul.mubr.bf16.gmra.mrb[0].mxu0 %v7176
        %v7215 = vpop.f32.mrb[0].mxu0
        %v7216 = vadd.f32 0.0, %v7215
        %v7217 = vpop.f32.mrb[0].mxu0
        %v7218 = vpop.f32.mrb[0].mxu0
        %v7219 = vpop.f32.mrb[0].mxu0
        %7220 = vdwg.mxu0
        %v7221 = vmul.f32 %v7216, 0.35355338
        %v7222 = vsel %vm1184, %v7221, -inf
        %7223 = vmax.xlane.f32.xlu0 %v7222
        %v7224 = vpop.xlane.xlu0 %7223
        %v7225 = vsub.f32 %v7221, %v7224
        %v7226 = vmul.f32 %v7225, 1.442695
        %v7227 = vpow.pop %v7226
        %v7228 = vsel %vm1184, %v7227, 0.0
        %7229 = vadd.xlane.f32.xlu0 %v7228
        %v7230 = vpop.xlane.xlu0 %7229
        %v7231 = vrcp.pop %v7230
        %v7232 = vmul.f32 %v7227, %v7231
        %v7233 = vpack.c.bf16 %v7232, %v7232
        %7234 = vrot.lane.b32.xlu0 %v6924, 112
        %v7235 = vpop.permute.xlu0 %7234
        %v7237 = vsel %vm1184, %v7233, 0
        %v7240 = vsel %vm1249, %v7235, 0
        %7242 = vmatprep.subr.bf16.mxu0 0
        %7243 = vmatpush1.bf16.msra.mxu0 %v7240
        %7244 = vmatprep.subr.bf16.mxu0 0
        %7245 = vmatpush1.bf16.msra.mxu0 0
        %7246 = vmatprep.subr.bf16.mxu0 0
        %7247 = vmatpush1.bf16.msra.mxu0 0
        %7248 = vmatprep.subr.bf16.mxu0 0
        %7249 = vmatpush1.bf16.msra.mxu0 0
        %7250 = vmatprep.subr.bf16.mxu0 0
        %7251 = vmatpush1.bf16.msra.mxu0 0
        %7252 = vmatprep.subr.bf16.mxu0 0
        %7253 = vmatpush1.bf16.msra.mxu0 0
        %7254 = vmatprep.subr.bf16.mxu0 0
        %7255 = vmatpush1.bf16.msra.mxu0 0
        %7256 = vmatprep.subr.bf16.mxu0 0
        %7257 = vmatpush1.bf16.msra.mxu0 0
        %7258 = vmatprep.subr.bf16.mxu0 0
        %7259 = vmatpush1.bf16.msra.mxu0 0
        %7260 = vmatprep.subr.bf16.mxu0 0
        %7261 = vmatpush1.bf16.msra.mxu0 0
        %7262 = vmatprep.subr.bf16.mxu0 0
        %7263 = vmatpush1.bf16.msra.mxu0 0
        %7264 = vmatprep.subr.bf16.mxu0 0
        %7265 = vmatpush1.bf16.msra.mxu0 0
        %7266 = vmatprep.subr.bf16.mxu0 0
        %7267 = vmatpush1.bf16.msra.mxu0 0
        %7268 = vmatprep.subr.bf16.mxu0 0
        %7269 = vmatpush1.bf16.msra.mxu0 0
        %7270 = vmatprep.subr.bf16.mxu0 0
        %7271 = vmatpush1.bf16.msra.mxu0 0
        %7272 = vmatprep.subr.bf16.mxu0 0
        %7273 = vmatpush1.bf16.msra.mxu0 0
        %7274 = vmatprep.mubr.bf16.mxu0 0
        %7275 = vmatmul.mubr.bf16.gmra.mrb[0].mxu0 %v7237
        %v7276 = vpop.f32.mrb[0].mxu0
        %v7277 = vadd.f32 0.0, %v7276
        %v7278 = vpop.f32.mrb[0].mxu0
        %v7279 = vpop.f32.mrb[0].mxu0
        %v7280 = vpop.f32.mrb[0].mxu0
        %7281 = vdwg.mxu0
        %v7282 = vpack.c.bf16 %v7277, %v7277
        %v7284 = vsel %vm1184, %v7282, 0
        %7286 = vmatprep.subr.bf16.mxu0 0
        %7287 = vmatpush1.bf16.msra.mxu0 %v6659
        %7288 = vmatprep.subr.bf16.mxu0 0
        %7289 = vmatpush1.bf16.msra.mxu0 0
        %7290 = vmatprep.subr.bf16.mxu0 0
        %7291 = vmatpush1.bf16.msra.mxu0 0
        %7292 = vmatprep.subr.bf16.mxu0 0
        %7293 = vmatpush1.bf16.msra.mxu0 0
        %7294 = vmatprep.subr.bf16.mxu0 0
        %7295 = vmatpush1.bf16.msra.mxu0 0
        %7296 = vmatprep.subr.bf16.mxu0 0
        %7297 = vmatpush1.bf16.msra.mxu0 0
        %7298 = vmatprep.subr.bf16.mxu0 0
        %7299 = vmatpush1.bf16.msra.mxu0 0
        %7300 = vmatprep.subr.bf16.mxu0 0
        %7301 = vmatpush1.bf16.msra.mxu0 0
        %7302 = vmatprep.subr.bf16.mxu0 0
        %7303 = vmatpush1.bf16.msra.mxu0 0
        %7304 = vmatprep.subr.bf16.mxu0 0
        %7305 = vmatpush1.bf16.msra.mxu0 0
        %7306 = vmatprep.subr.bf16.mxu0 0
        %7307 = vmatpush1.bf16.msra.mxu0 0
        %7308 = vmatprep.subr.bf16.mxu0 0
        %7309 = vmatpush1.bf16.msra.mxu0 0
        %7310 = vmatprep.subr.bf16.mxu0 0
        %7311 = vmatpush1.bf16.msra.mxu0 0
        %7312 = vmatprep.subr.bf16.mxu0 0
        %7313 = vmatpush1.bf16.msra.mxu0 0
        %7314 = vmatprep.subr.bf16.mxu0 0
        %7315 = vmatpush1.bf16.msra.mxu0 0
        %7316 = vmatprep.subr.bf16.mxu0 0
        %7317 = vmatpush1.bf16.msra.mxu0 0
        %7318 = vmatprep.mubr.bf16.mxu0 0
        %7319 = vmatmul.mubr.bf16.gmra.mrb[0].mxu0 %v7284
        %v7320 = vpop.f32.mrb[0].mxu0
        %v7321 = vadd.f32 0.0, %v7320
        %v7322 = vpop.f32.mrb[0].mxu0
        %v7323 = vpop.f32.mrb[0].mxu0
        %v7324 = vpop.f32.mrb[0].mxu0
        %7325 = vdwg.mxu0
        %v7326 = vadd.f32 %v7166, %v7321
        %7327 = vrot.lane.b32.xlu0 %v6861, 104
        %v7328 = vpop.permute.xlu0 %7327
        %7329 = vrot.lane.b32.xlu0 %v6861, 72
        %v7330 = vpop.permute.xlu0 %7329
        %v7332 = vsel %vm1184, %v7328, 0
        %v7335 = vsel %vm1184, %v7330, 0
        %7337 = vmatprep.subr.bf16.mxu0 0
        %7338 = vmatpush1.bf16.xpose.msra.mxu0 %v7335
        %7339 = vmatprep.subr.bf16.mxu0 0
        %7340 = vmatpush1.bf16.xpose.msra.mxu0 0
        %7341 = vmatprep.subr.bf16.mxu0 0
        %7342 = vmatpush1.bf16.xpose.msra.mxu0 0
        %7343 = vmatprep.subr.bf16.mxu0 0
        %7344 = vmatpush1.bf16.xpose.msra.mxu0 0
        %7345 = vmatprep.subr.bf16.mxu0 0
        %7346 = vmatpush1.bf16.xpose.msra.mxu0 0
        %7347 = vmatprep.subr.bf16.mxu0 0
        %7348 = vmatpush1.bf16.xpose.msra.mxu0 0
        %7349 = vmatprep.subr.bf16.mxu0 0
        %7350 = vmatpush1.bf16.xpose.msra.mxu0 0
        %7351 = vmatprep.subr.bf16.mxu0 0
        %7352 = vmatpush1.bf16.xpose.msra.mxu0 0
        %7353 = vmatprep.subr.bf16.mxu0 0
        %7354 = vmatpush1.bf16.xpose.msra.mxu0 0
        %7355 = vmatprep.subr.bf16.mxu0 0
        %7356 = vmatpush1.bf16.xpose.msra.mxu0 0
        %7357 = vmatprep.subr.bf16.mxu0 0
        %7358 = vmatpush1.bf16.xpose.msra.mxu0 0
        %7359 = vmatprep.subr.bf16.mxu0 0
        %7360 = vmatpush1.bf16.xpose.msra.mxu0 0
        %7361 = vmatprep.subr.bf16.mxu0 0
        %7362 = vmatpush1.bf16.xpose.msra.mxu0 0
        %7363 = vmatprep.subr.bf16.mxu0 0
        %7364 = vmatpush1.bf16.xpose.msra.mxu0 0
        %7365 = vmatprep.subr.bf16.mxu0 0
        %7366 = vmatpush1.bf16.xpose.msra.mxu0 0
        %7367 = vmatprep.subr.bf16.mxu0 0
        %7368 = vmatpush1.bf16.xpose.msra.mxu0 0
        %7369 = vmatprep.mubr.bf16.mxu0 0
        %7370 = vmatmul.mubr.bf16.gmra.mrb[0].mxu0 %v7332
        %v7371 = vpop.f32.mrb[0].mxu0
        %v7372 = vadd.f32 0.0, %v7371
        %v7373 = vpop.f32.mrb[0].mxu0
        %v7374 = vpop.f32.mrb[0].mxu0
        %v7375 = vpop.f32.mrb[0].mxu0
        %7376 = vdwg.mxu0
        %v7377 = vmul.f32 %v7372, 0.35355338
        %v7378 = vsel %vm1184, %v7377, -inf
        %7379 = vmax.xlane.f32.xlu0 %v7378
        %v7380 = vpop.xlane.xlu0 %7379
        %v7381 = vsub.f32 %v7377, %v7380
        %v7382 = vmul.f32 %v7381, 1.442695
        %v7383 = vpow.pop %v7382
        %v7384 = vsel %vm1184, %v7383, 0.0
        %7385 = vadd.xlane.f32.xlu0 %v7384
        %v7386 = vpop.xlane.xlu0 %7385
        %v7387 = vrcp.pop %v7386
        %v7388 = vmul.f32 %v7383, %v7387
        %v7389 = vpack.c.bf16 %v7388, %v7388
        %7390 = vrot.lane.b32.xlu0 %v6924, 104
        %v7391 = vpop.permute.xlu0 %7390
        %v7393 = vsel %vm1184, %v7389, 0
        %v7396 = vsel %vm1249, %v7391, 0
        %7398 = vmatprep.subr.bf16.mxu0 0
        %7399 = vmatpush1.bf16.msra.mxu0 %v7396
        %7400 = vmatprep.subr.bf16.mxu0 0
        %7401 = vmatpush1.bf16.msra.mxu0 0
        %7402 = vmatprep.subr.bf16.mxu0 0
        %7403 = vmatpush1.bf16.msra.mxu0 0
        %7404 = vmatprep.subr.bf16.mxu0 0
        %7405 = vmatpush1.bf16.msra.mxu0 0
        %7406 = vmatprep.subr.bf16.mxu0 0
        %7407 = vmatpush1.bf16.msra.mxu0 0
        %7408 = vmatprep.subr.bf16.mxu0 0
        %7409 = vmatpush1.bf16.msra.mxu0 0
        %7410 = vmatprep.subr.bf16.mxu0 0
        %7411 = vmatpush1.bf16.msra.mxu0 0
        %7412 = vmatprep.subr.bf16.mxu0 0
        %7413 = vmatpush1.bf16.msra.mxu0 0
        %7414 = vmatprep.subr.bf16.mxu0 0
        %7415 = vmatpush1.bf16.msra.mxu0 0
        %7416 = vmatprep.subr.bf16.mxu0 0
        %7417 = vmatpush1.bf16.msra.mxu0 0
        %7418 = vmatprep.subr.bf16.mxu0 0
        %7419 = vmatpush1.bf16.msra.mxu0 0
        %7420 = vmatprep.subr.bf16.mxu0 0
        %7421 = vmatpush1.bf16.msra.mxu0 0
        %7422 = vmatprep.subr.bf16.mxu0 0
        %7423 = vmatpush1.bf16.msra.mxu0 0
        %7424 = vmatprep.subr.bf16.mxu0 0
        %7425 = vmatpush1.bf16.msra.mxu0 0
        %7426 = vmatprep.subr.bf16.mxu0 0
        %7427 = vmatpush1.bf16.msra.mxu0 0
        %7428 = vmatprep.subr.bf16.mxu0 0
        %7429 = vmatpush1.bf16.msra.mxu0 0
        %7430 = vmatprep.mubr.bf16.mxu0 0
        %7431 = vmatmul.mubr.bf16.gmra.mrb[0].mxu0 %v7393
        %v7432 = vpop.f32.mrb[0].mxu0
        %v7433 = vadd.f32 0.0, %v7432
        %v7434 = vpop.f32.mrb[0].mxu0
        %v7435 = vpop.f32.mrb[0].mxu0
        %v7436 = vpop.f32.mrb[0].mxu0
        %7437 = vdwg.mxu0
        %v7438 = vpack.c.bf16 %v7433, %v7433
        %v7440 = vsel %vm1184, %v7438, 0
        %7442 = vmatprep.subr.bf16.mxu0 0
        %7443 = vmatpush1.bf16.msra.mxu0 %v6818
        %7444 = vmatprep.subr.bf16.mxu0 0
        %7445 = vmatpush1.bf16.msra.mxu0 0
        %7446 = vmatprep.subr.bf16.mxu0 0
        %7447 = vmatpush1.bf16.msra.mxu0 0
        %7448 = vmatprep.subr.bf16.mxu0 0
        %7449 = vmatpush1.bf16.msra.mxu0 0
        %7450 = vmatprep.subr.bf16.mxu0 0
        %7451 = vmatpush1.bf16.msra.mxu0 0
        %7452 = vmatprep.subr.bf16.mxu0 0
        %7453 = vmatpush1.bf16.msra.mxu0 0
        %7454 = vmatprep.subr.bf16.mxu0 0
        %7455 = vmatpush1.bf16.msra.mxu0 0
        %7456 = vmatprep.subr.bf16.mxu0 0
        %7457 = vmatpush1.bf16.msra.mxu0 0
        %7458 = vmatprep.subr.bf16.mxu0 0
        %7459 = vmatpush1.bf16.msra.mxu0 0
        %7460 = vmatprep.subr.bf16.mxu0 0
        %7461 = vmatpush1.bf16.msra.mxu0 0
        %7462 = vmatprep.subr.bf16.mxu0 0
        %7463 = vmatpush1.bf16.msra.mxu0 0
        %7464 = vmatprep.subr.bf16.mxu0 0
        %7465 = vmatpush1.bf16.msra.mxu0 0
        %7466 = vmatprep.subr.bf16.mxu0 0
        %7467 = vmatpush1.bf16.msra.mxu0 0
        %7468 = vmatprep.subr.bf16.mxu0 0
        %7469 = vmatpush1.bf16.msra.mxu0 0
        %7470 = vmatprep.subr.bf16.mxu0 0
        %7471 = vmatpush1.bf16.msra.mxu0 0
        %7472 = vmatprep.subr.bf16.mxu0 0
        %7473 = vmatpush1.bf16.msra.mxu0 0
        %7474 = vmatprep.mubr.bf16.mxu0 0
        %7475 = vmatmul.mubr.bf16.gmra.mrb[0].mxu0 %v7440
        %v7476 = vpop.f32.mrb[0].mxu0
        %v7477 = vadd.f32 0.0, %v7476
        %v7478 = vpop.f32.mrb[0].mxu0
        %v7479 = vpop.f32.mrb[0].mxu0
        %v7480 = vpop.f32.mrb[0].mxu0
        %7481 = vdwg.mxu0
        %v7482 = vadd.f32 %v7326, %v7477
        %s7483 = scalar_lea.vmem %s1031, 3
        %v7484 = vld [vmem:[%s7483] sm:$0x1]
        %v7486 = vlaneseq
        %v7487 = vshrl.u32 %v7486, 7
        %v7488 = vsub.s32 0, %v7487
        %v7489 = vrot.slane %v7484, %v7488
        %v7491 = vadd.f32 %v6860, %v7489
        %v7492 = vadd.f32 %v7482, %v7489
        %s7493 = scalar_lea.vmem %s1035, 3
        %v7494 = vld [vmem:[%s7493] sm:$0x1]
        %s7495 = scalar_lea.vmem %s1039, 3
        %v7496 = vld [vmem:[%s7495] sm:$0x1]
        %v7497 = vadd.f32 %v1103, %v7491
        %v7498 = vadd.f32 %v1104, %v7492
        %v7499 = vsel %vm1131, %v7497, 0.0
        %7500 = vadd.xlane.f32.xlu0 %v7499
        %v7501 = vpop.xlane.xlu0 %7500
        %v7502 = vsel %vm1131, %v7498, 0.0
        %7503 = vadd.xlane.f32.xlu0 %v7502
        %v7504 = vpop.xlane.xlu0 %7503
        %v7505 = vmul.f32 %v7501, %v2457
        %v7506 = vmul.f32 %v7504, %v2457
        %v7507 = vsub.f32 %v7497, %v7505
        %v7508 = vsub.f32 %v7498, %v7506
        %v7509 = vmul.f32 %v7507, %v7507
        %v7510 = vmul.f32 %v7508, %v7508
        %v7511 = vsel %vm1131, %v7509, 0.0
        %7512 = vadd.xlane.f32.xlu0 %v7511
        %v7513 = vpop.xlane.xlu0 %7512
        %v7514 = vsel %vm1131, %v7510, 0.0
        %7515 = vadd.xlane.f32.xlu0 %v7514
        %v7516 = vpop.xlane.xlu0 %7515
        %v7517 = vmul.f32 %v7513, %v2457
        %v7518 = vmul.f32 %v7516, %v2457
        %v7519 = vadd.f32 %v7517, 1e-05
        %v7520 = vadd.f32 %v7518, 1e-05
        %v7521 = vrsqrt.pop %v7519
        %v7522 = vrsqrt.pop %v7520
        %v7523 = vmul.f32 %v7507, %v7521
        %v7524 = vmul.f32 %v7508, %v7522
        %v7526 = vlaneseq
        %v7527 = vshrl.u32 %v7526, 7
        %v7528 = vsub.s32 0, %v7527
        %v7529 = vrot.slane %v7494, %v7528
        %v7531 = vmul.f32 %v7523, %v7529
        %v7532 = vmul.f32 %v7524, %v7529
        %v7534 = vlaneseq
        %v7535 = vshrl.u32 %v7534, 7
        %v7536 = vsub.s32 0, %v7535
        %v7537 = vrot.slane %v7496, %v7536
        %v7539 = vadd.f32 %v7531, %v7537
        %v7540 = vadd.f32 %v7532, %v7537
        %s7541 = scalar_lea.vmem %s1044, 16
        %v7542 = vld [vmem:[%s7541] sm:$0xf]
        %v7543 = vld [vmem:[%s7541 + $0x4] sm:$0xf]
        %v7544 = vld [vmem:[%s7541 + $0x8] sm:$0xf]
        %v7545 = vld [vmem:[%s7541 + $0xc] sm:$0xf]
        %v7546 = vpack.c.bf16 %v7540, %v7539
        %s7547 = scalar_lea.vmem %s1048, 1
        %v7548 = vld [vmem:[%s7547] sm:$0x1]
        %v7550 = vlaneseq
        %v7551 = vshrl.u32 %v7550, 7
        %v7552 = vsub.s32 0, %v7551
        %v7553 = vrot.slane %v7548, %v7552
        %v7559 = vunpack.c.l.b16 %v7542
        %v7560 = vunpack.c.l.b16 %v7543
        %v7561 = vunpack.c.l.b16 %v7544
        %v7562 = vunpack.c.l.b16 %v7545
        %v7563 = vpack.c.b16 %v7560, %v7559
        %v7564 = vpack.c.b16 %v7562, %v7561
        %v7568 = vsel %vm1131, %v7546, 0
        %7570 = vmatprep.subr.bf16.mxu0 0
        %7571 = vmatpush1.bf16.msra.mxu0 %v7563
        %7572 = vmatprep.subr.bf16.mxu0 0
        %7573 = vmatpush1.bf16.msra.mxu0 %v7564
        %7574 = vmatprep.subr.bf16.mxu0 0
        %7575 = vmatpush1.bf16.msra.mxu0 0
        %7576 = vmatprep.subr.bf16.mxu0 0
        %7577 = vmatpush1.bf16.msra.mxu0 0
        %7578 = vmatprep.subr.bf16.mxu0 0
        %7579 = vmatpush1.bf16.msra.mxu0 0
        %7580 = vmatprep.subr.bf16.mxu0 0
        %7581 = vmatpush1.bf16.msra.mxu0 0
        %7582 = vmatprep.subr.bf16.mxu0 0
        %7583 = vmatpush1.bf16.msra.mxu0 0
        %7584 = vmatprep.subr.bf16.mxu0 0
        %7585 = vmatpush1.bf16.msra.mxu0 0
        %7586 = vmatprep.subr.bf16.mxu0 0
        %7587 = vmatpush1.bf16.msra.mxu0 0
        %7588 = vmatprep.subr.bf16.mxu0 0
        %7589 = vmatpush1.bf16.msra.mxu0 0
        %7590 = vmatprep.subr.bf16.mxu0 0
        %7591 = vmatpush1.bf16.msra.mxu0 0
        %7592 = vmatprep.subr.bf16.mxu0 0
        %7593 = vmatpush1.bf16.msra.mxu0 0
        %7594 = vmatprep.subr.bf16.mxu0 0
        %7595 = vmatpush1.bf16.msra.mxu0 0
        %7596 = vmatprep.subr.bf16.mxu0 0
        %7597 = vmatpush1.bf16.msra.mxu0 0
        %7598 = vmatprep.subr.bf16.mxu0 0
        %7599 = vmatpush1.bf16.msra.mxu0 0
        %7600 = vmatprep.subr.bf16.mxu0 0
        %7601 = vmatpush1.bf16.msra.mxu0 0
        %7602 = vmatprep.mubr.bf16.mxu0 0
        %7603 = vmatmul.mubr.bf16.gmra.mrb[0].mxu0 %v7568
        %v7604 = vpop.f32.mrb[0].mxu0
        %v7605 = vadd.f32 %v7553, %v7604
        %v7606 = vpop.f32.mrb[0].mxu0
        %v7607 = vpop.f32.mrb[0].mxu0
        %v7608 = vadd.f32 %v7553, %v7607
        %v7609 = vpop.f32.mrb[0].mxu0
        %7610 = vdwg.mxu0
        %v7611 = vmax.f32 %v7605, 0.0
        %v7612 = vmax.f32 %v7608, 0.0
        %s7613 = scalar_lea.vmem %s1053, 32
        %v7614 = vld [vmem:[%s7613] sm:$0xf]
        %v7615 = vld [vmem:[%s7613 + $0x4] sm:$0xf]
        %v7616 = vld [vmem:[%s7613 + $0x8] sm:$0xf]
        %v7617 = vld [vmem:[%s7613 + $0xc] sm:$0xf]
        %v7618 = vld [vmem:[%s7613 + $0x10] sm:$0xf]
        %v7619 = vld [vmem:[%s7613 + $0x14] sm:$0xf]
        %v7620 = vld [vmem:[%s7613 + $0x18] sm:$0xf]
        %v7621 = vld [vmem:[%s7613 + $0x1c] sm:$0xf]
        %v7622 = vpack.c.bf16 %v7612, %v7611
        %s7623 = scalar_lea.vmem %s1057, 1
        %v7624 = vld [vmem:[%s7623] sm:$0x1]
        %v7626 = vlaneseq
        %v7627 = vshrl.u32 %v7626, 7
        %v7628 = vsub.s32 0, %v7627
        %v7629 = vrot.slane %v7624, %v7628
        %v7639 = vunpack.c.l.b16 %v7614
        %v7640 = vunpack.c.l.b16 %v7615
        %v7641 = vunpack.c.l.b16 %v7616
        %v7642 = vunpack.c.l.b16 %v7617
        %v7643 = vunpack.c.l.b16 %v7618
        %v7644 = vunpack.c.l.b16 %v7619
        %v7645 = vunpack.c.l.b16 %v7620
        %v7646 = vunpack.c.l.b16 %v7621
        %v7647 = vpack.c.b16 %v7640, %v7639
        %v7648 = vpack.c.b16 %v7642, %v7641
        %v7649 = vpack.c.b16 %v7644, %v7643
        %v7650 = vpack.c.b16 %v7646, %v7645
        %v7656 = vsel %vm4303, %v7622, 0
        %7658 = vmatprep.subr.bf16.mxu0 0
        %7659 = vmatpush1.bf16.msra.mxu0 %v7647
        %7660 = vmatprep.subr.bf16.mxu0 0
        %7661 = vmatpush1.bf16.msra.mxu0 %v7648
        %7662 = vmatprep.subr.bf16.mxu0 0
        %7663 = vmatpush1.bf16.msra.mxu0 %v7649
        %7664 = vmatprep.subr.bf16.mxu0 0
        %7665 = vmatpush1.bf16.msra.mxu0 %v7650
        %7666 = vmatprep.subr.bf16.mxu0 0
        %7667 = vmatpush1.bf16.msra.mxu0 0
        %7668 = vmatprep.subr.bf16.mxu0 0
        %7669 = vmatpush1.bf16.msra.mxu0 0
        %7670 = vmatprep.subr.bf16.mxu0 0
        %7671 = vmatpush1.bf16.msra.mxu0 0
        %7672 = vmatprep.subr.bf16.mxu0 0
        %7673 = vmatpush1.bf16.msra.mxu0 0
        %7674 = vmatprep.subr.bf16.mxu0 0
        %7675 = vmatpush1.bf16.msra.mxu0 0
        %7676 = vmatprep.subr.bf16.mxu0 0
        %7677 = vmatpush1.bf16.msra.mxu0 0
        %7678 = vmatprep.subr.bf16.mxu0 0
        %7679 = vmatpush1.bf16.msra.mxu0 0
        %7680 = vmatprep.subr.bf16.mxu0 0
        %7681 = vmatpush1.bf16.msra.mxu0 0
        %7682 = vmatprep.subr.bf16.mxu0 0
        %7683 = vmatpush1.bf16.msra.mxu0 0
        %7684 = vmatprep.subr.bf16.mxu0 0
        %7685 = vmatpush1.bf16.msra.mxu0 0
        %7686 = vmatprep.subr.bf16.mxu0 0
        %7687 = vmatpush1.bf16.msra.mxu0 0
        %7688 = vmatprep.subr.bf16.mxu0 0
        %7689 = vmatpush1.bf16.msra.mxu0 0
        %7690 = vmatprep.mubr.bf16.mxu0 0
        %7691 = vmatmul.mubr.bf16.gmra.mrb[0].mxu0 %v7656
        %v7692 = vpop.f32.mrb[0].mxu0
        %v7693 = vadd.f32 %v7629, %v7692
        %v7694 = vpop.f32.mrb[0].mxu0
        %v7695 = vpop.f32.mrb[0].mxu0
        %v7696 = vadd.f32 %v7629, %v7695
        %v7697 = vpop.f32.mrb[0].mxu0
        %7698 = vdwg.mxu0
        %s7699 = scalar_lea.vmem %s1061, 1
        %v7700 = vld [vmem:[%s7699] sm:$0x1]
        %s7701 = scalar_lea.vmem %s1065, 1
        %v7702 = vld [vmem:[%s7701] sm:$0x1]
        %v7703 = vadd.f32 %v7539, %v7693
        %v7704 = vadd.f32 %v7540, %v7696
        %v7705 = vsel %vm1131, %v7703, 0.0
        %7706 = vadd.xlane.f32.xlu0 %v7705
        %v7707 = vpop.xlane.xlu0 %7706
        %v7708 = vsel %vm1131, %v7704, 0.0
        %7709 = vadd.xlane.f32.xlu0 %v7708
        %v7710 = vpop.xlane.xlu0 %7709
        %v7711 = vmul.f32 %v7707, %v2457
        %v7712 = vmul.f32 %v7710, %v2457
        %v7713 = vsub.f32 %v7703, %v7711
        %v7714 = vsub.f32 %v7704, %v7712
        %v7715 = vmul.f32 %v7713, %v7713
        %v7716 = vmul.f32 %v7714, %v7714
        %v7717 = vsel %vm1131, %v7715, 0.0
        %7718 = vadd.xlane.f32.xlu0 %v7717
        %v7719 = vpop.xlane.xlu0 %7718
        %v7720 = vsel %vm1131, %v7716, 0.0
        %7721 = vadd.xlane.f32.xlu0 %v7720
        %v7722 = vpop.xlane.xlu0 %7721
        %v7723 = vmul.f32 %v7719, %v2457
        %v7724 = vmul.f32 %v7722, %v2457
        %v7725 = vadd.f32 %v7723, 1e-05
        %v7726 = vadd.f32 %v7724, 1e-05
        %v7727 = vrsqrt.pop %v7725
        %v7728 = vrsqrt.pop %v7726
        %v7729 = vmul.f32 %v7713, %v7727
        %v7730 = vmul.f32 %v7714, %v7728
        %v7732 = vlaneseq
        %v7733 = vshrl.u32 %v7732, 7
        %v7734 = vsub.s32 0, %v7733
        %v7735 = vrot.slane %v7700, %v7734
        %v7737 = vmul.f32 %v7729, %v7735
        %v7738 = vmul.f32 %v7730, %v7735
        %v7740 = vlaneseq
        %v7741 = vshrl.u32 %v7740, 7
        %v7742 = vsub.s32 0, %v7741
        %v7743 = vrot.slane %v7702, %v7742
        %v7745 = vadd.f32 %v7737, %v7743
        %v7746 = vadd.f32 %v7738, %v7743
        %7747 = vst.msk [vmem:[%s987] sm:$0xff] %vm1131, %v7745
        %7748 = vst.msk [vmem:[%s987 + $0x8] sm:$0xff] %vm1131, %v7746
        %s7749 = sand.u32 %s628, 1
        %s7750 = scalar_lea.sflag [#allocation3], %s7749
        %s7751 = sand.u32 %s628, 1
        %s7752 = smul.addr %s7751, 16
        %s7753 = scalar_lea.vmem [#allocation2], %s7752
        // Predicated region
        $region113: #{decoder_forward.1} parent=107 // pred_check
          %p7754 = pneg %p638
        $region114: #{decoder_forward.1} parent=107 // pred_check_branch
          %7756 = sbr.rel (%p7754) target = $region116
        $region115: #{decoder_forward.1} parent=107 // pred_region
          %s7757 = smul.u32 2, %s40
          %s7759 = ssub.s32 256, 256
          %7760 = vsyncadd %s7750, %s7759
          %s7761 = smul.addr %s7757, 128
          %s7762 = scalar_lea.hbm %s22, %s7761
          %s7763 = sshll.u32 %s7753, 4
          %s7764 = int_to_ptr.vmem [resolvable:$true] %s7763
          %7769 = dma.vmem_to_hbm [thread:$0]  %s7764, 256, %s7762, %s7750, 128, 128, 8
        $region116: #{decoder_forward.1} parent=107 // pred_fallthru
          _
      $region108: #{decoder_forward.1} parent=5 // pred_fallthru
        _
      %p7770 = scmp.le.s32.totalorder 2, %s31
      // Predicated region
      $region117: #{decoder_forward.1} parent=5 // pred_check
        %p7771 = pneg %p7770
      $region118: #{decoder_forward.1} parent=5 // pred_check_branch
        %7773 = sbr.rel (%p7771) target = $region120
      $region119: #{decoder_forward.1} parent=5 // pred_region
        %s7774 = ssub.s32 %s31, 2
        // Predicated region
        $region121: #{decoder_forward.1} parent=119 // pred_check
          %p7775 = pneg %p644
        $region122: #{decoder_forward.1} parent=119 // pred_check_branch
          %7777 = sbr.rel (%p7775) target = $region124
        $region123: #{decoder_forward.1} parent=119 // pred_region
          %s7778 = sand.u32 %s629, 1
          %s7779 = scalar_lea.sflag [#allocation3], %s7778
          %s7780 = sand.u32 %s629, 1
          %s7781 = smul.addr %s7780, 16
          %s7782 = scalar_lea.vmem [#allocation2], %s7781
          %7783 = dma.done %s7779, 256
        $region124: #{decoder_forward.1} parent=119 // pred_fallthru
          _
      $region120: #{decoder_forward.1} parent=5 // pred_fallthru
        _
    $region6: #{decoder_forward.1} parent=1 // loop_footer
      %s35 = sadd.s32 1, %s31
    $region7: #{decoder_forward.1} parent=1 // loop_footer_branch
      %30 = sbr.rel target = $region3
    $region8: #{decoder_forward.1} parent=1 // loop_exit
      _
    %7784 = vsyncpa [#allocation3], 1
    %s7785 = scalar_lea.sflag [#allocation3], 1
    %7786 = vsyncpa %s7785, 1

</llo_original>
